<compile_context>
chip_gen: v7x
topology: tpu7x:2x2x1
jax: 0.10.0
libtpu: 0.0.40
codegen_flags: <defaults>
</compile_context>

<pallas_src>
import jax
import jax.numpy as jnp
from jax import lax
from jax.experimental import pallas as pl
from jax.experimental.pallas import tpu as pltpu

# ----------------- config (synthetic, small) -----------------
VOCAB = 124          # vocab size
EMB = 16             # config.emb_size
HID = 32             # config.hidden_size
PAD = 0
UNK = 1
MAX_OOV = 4          # max(len_oovs)
VEXT = VOCAB + MAX_OOV   # 128 -> lane aligned extended vocab
B_PAD = 8            # pad batch to a full sublane group


def _vmem():
    return pl.BlockSpec(memory_space=pltpu.MemorySpace.VMEM)


# ----------------- fully fused PGN kernel -----------------
def pgn_kernel(src_ids_ref, len_ref, src_emb_ref, dec_emb_ref,
               e_wi_ref, e_wh_ref, e_bi_ref, e_bh_ref, e_lw_ref, e_lb_ref,
               wa_enc_ref, wa_s_ref, wa_cov_ref, ba_ref, vw_ref, vb_ref,
               d_wie_ref, d_wic_ref, d_whh_ref, d_bi_ref, d_bh_ref,
               w_ohc_ref, woe_ref, bo_ref,
               wgh_ref, wgc_ref, wge_ref, bg_ref,
               dec_out_ref, attn_ref, cov_ref):
    f32 = jnp.float32
    B, S, E = src_emb_ref.shape
    Tm1 = dec_emb_ref.shape[0]
    H = e_lw_ref.shape[0]

    lengths = len_ref[...]                                   # (B,1) int32
    src_ids = src_ids_ref[...]                               # (B,S) int32

    # ================= encoder =================
    # Input-gate matmul hoisted out of the recurrence: one (B*S,E)@(E,3H) matmul.
    src_emb = src_emb_ref[...]                               # (B,S,E)
    gi_all = (jnp.dot(src_emb.reshape(B * S, E), e_wi_ref[...],
                      preferred_element_type=f32)
              + e_bi_ref[...]).reshape(B, S, 3 * H)          # (B,S,3H), gates (r,z,n)
    e_wh = e_wh_ref[...]
    e_bh = e_bh_ref[...]

    h = jnp.zeros((B, H), f32)
    outs = []
    for t in range(S):                                       # serial GRU recurrence
        gi = gi_all[:, t, :]                                 # (B,3H)
        gh = jnp.dot(h, e_wh, preferred_element_type=f32) + e_bh
        r = jax.nn.sigmoid(gi[:, :H] + gh[:, :H])
        z = jax.nn.sigmoid(gi[:, H:2 * H] + gh[:, H:2 * H])
        n = jnp.tanh(gi[:, 2 * H:] + r * gh[:, 2 * H:])
        h_new = (1.0 - z) * n + z * h
        valid = t < lengths                                  # (B,1)
        h = jnp.where(valid, h_new, h)                       # hold last valid hidden
        outs.append(jnp.where(valid, h_new, 0.0))            # pad_packed zeros

    # Batched post-recurrence projections: Linear/ReLU + attention pre-projection.
    out_flat = jnp.stack(outs, axis=1).reshape(B * S, H)     # (B*S,H)
    enc_flat = jnp.maximum(
        jnp.dot(out_flat, e_lw_ref[...], preferred_element_type=f32)
        + e_lb_ref[...], 0.0)
    encp_flat = jnp.dot(enc_flat, wa_enc_ref[...], preferred_element_type=f32)
    enc_output = enc_flat.reshape(B, S, H)                   # (B,S,H)
    enc_part = encp_flat.reshape(B, S, H)                    # enc_output @ W_att_enc

    # `h` is now the encoder final hidden == decoder initial hidden (no HBM trip).

    # ================= decoder loop invariants =================
    # All embedding-only matmuls hoisted & batched over the T-1 steps.
    dec_emb_flat = dec_emb_ref[...].reshape(Tm1 * B, E)      # (Tm1*B,E)
    s_part_all = jnp.dot(dec_emb_flat, wa_s_ref[...],
                         preferred_element_type=f32).reshape(Tm1, B, H)
    gie_all = (jnp.dot(dec_emb_flat, d_wie_ref[...], preferred_element_type=f32)
               + d_bi_ref[...]).reshape(Tm1, B, 3 * H)
    oe_all = jnp.dot(dec_emb_flat, woe_ref[...],
                     preferred_element_type=f32).reshape(Tm1, B, VEXT)
    ge_all = jnp.sum(dec_emb_flat * wge_ref[...], axis=-1,
                     keepdims=True).reshape(Tm1, B, 1)        # VPU (Linear E->1)

    # Coverage feature reduced to a rank-1 update (coverage is replicated across the
    # H inputs of the attention Linear, so its contribution is cov * colsum(W_cov)).
    wa_covsum = jnp.sum(wa_cov_ref[...], axis=0, keepdims=True)   # (1,H)

    # Pointer one-hot built in-kernel from src ids (scatter_add -> weighted sum).
    onehot = (src_ids[:, :, None] ==
              lax.broadcasted_iota(jnp.int32, (B, S, VEXT), 2)).astype(f32)
    pos = lax.broadcasted_iota(jnp.int32, (B, S), 1)
    neg_mask = pos >= lengths                                 # (B,S) attention mask

    d_wic, d_whh, d_bh = d_wic_ref[...], d_whh_ref[...], d_bh_ref[...]
    ba, vw, vb = ba_ref[...], vw_ref[...], vb_ref[...]
    w_ohc, bo = w_ohc_ref[...], bo_ref[...]                   # (2H,VEXT), (1,VEXT)
    wgh, wgc, bg = wgh_ref[...], wgc_ref[...], bg_ref[...]

    cov = jnp.zeros((B, S), f32)
    attn = jnp.zeros((B, S), f32)

    # ================= decoder time loop (teacher-forced, unrolled) =================
    for t in range(Tm1):
        # ---- attention (query = decoder input embedding, hoisted term s_part) ----
        feat = jnp.tanh(enc_part + s_part_all[t][:, None, :]
                        + cov[:, :, None] * wa_covsum + ba)           # (B,S,H)
        scores = jnp.sum(feat * vw, axis=-1) + vb                      # (B,S)
        scores = jnp.where(neg_mask, -1e30, scores)
        m = jnp.max(scores, axis=-1, keepdims=True)
        p = jnp.exp(scores - m)
        attn = p / jnp.sum(p, axis=-1, keepdims=True)                  # (B,S)
        cov = cov + attn

        # ---- context & pointer scatter on the VPU/XLU (no M=1 MXU matvecs) ----
        c = jnp.sum(attn[:, :, None] * enc_output, axis=1)             # (B,H)
        ptr = jnp.sum(attn[:, :, None] * onehot, axis=1)               # (B,VEXT)

        # ---- GRU cell on [emb, c]; emb-part hoisted into gie_all ----
        gi = gie_all[t] + jnp.dot(c, d_wic, preferred_element_type=f32)
        gh = jnp.dot(h, d_whh, preferred_element_type=f32) + d_bh
        r = jax.nn.sigmoid(gi[:, :H] + gh[:, :H])
        z = jax.nn.sigmoid(gi[:, H:2 * H] + gh[:, H:2 * H])
        n = jnp.tanh(gi[:, 2 * H:] + r * gh[:, 2 * H:])
        h = (1.0 - z) * n + z * h                                      # (B,H)

        # ---- vocab logits on [h, c, emb] (no softmax, matching reference);
        #      weights zero-padded to VEXT columns; emb term hoisted ----
        hc = jnp.concatenate([h, c], axis=-1)                          # (B,2H)
        logits = (jnp.dot(hc, w_ohc, preferred_element_type=f32)
                  + oe_all[t] + bo)                                    # (B,VEXT)

        # ---- pointer gate on the VPU ----
        p_gen = jax.nn.sigmoid(jnp.sum(h * wgh, axis=-1, keepdims=True)
                               + jnp.sum(c * wgc, axis=-1, keepdims=True)
                               + ge_all[t] + bg)                       # (B,1)
        p_gen = jnp.clip(p_gen, 0.001, 0.999)

        dec_out_ref[:, t, :] = p_gen * logits + (1.0 - p_gen) * ptr

    dec_out_ref[:, Tm1, :] = jnp.zeros((B, VEXT), f32)   # last step never written (ref)
    attn_ref[...] = attn                                  # last-step attention
    cov_ref[...] = cov                                    # final coverage


def run_pgn(params, src_ids, lengths_b1, src_emb, dec_embs):
    Bp, S, _ = src_emb.shape
    Tm1 = dec_embs.shape[0]
    T = Tm1 + 1
    args = (src_ids, lengths_b1, src_emb, dec_embs,
            params['e_wi'], params['e_wh'], params['e_bi'], params['e_bh'],
            params['e_lw'], params['e_lb'],
            params['wa_enc'], params['wa_s'], params['wa_cov'], params['ba'],
            params['vw'], params['vb'],
            params['d_wie'], params['d_wic'], params['d_whh'],
            params['d_bi'], params['d_bh'],
            params['w_ohc'], params['woe'], params['bo'],
            params['wgh'], params['wgc'], params['wge'], params['bg'])
    return pl.pallas_call(
        pgn_kernel,
        out_shape=(jax.ShapeDtypeStruct((Bp, T, VEXT), jnp.float32),  # final distributions
                   jax.ShapeDtypeStruct((Bp, S), jnp.float32),        # last attention
                   jax.ShapeDtypeStruct((Bp, S), jnp.float32)),       # coverage
        in_specs=[_vmem()] * len(args),
        out_specs=(_vmem(), _vmem(), _vmem()),
    )(*args)


# ----------------- parameter init (deterministic, synthetic) -----------------
def init_params(key):
    keys = jax.random.split(key, 32)
    it = iter(keys)

    def nrm(shape, scale=0.1):
        return (scale * jax.random.normal(next(it), shape)).astype(jnp.float32)

    p = {}
    p['enc_emb'] = nrm((VOCAB, EMB)).at[PAD].set(0.0)      # padding_idx row = 0
    p['dec_emb'] = nrm((VOCAB, EMB)).at[PAD].set(0.0)
    # encoder GRU, gates stacked (r,z,n) along output columns
    p['e_wi'] = nrm((EMB, 3 * HID))
    p['e_wh'] = nrm((HID, 3 * HID))
    p['e_bi'] = nrm((1, 3 * HID))
    p['e_bh'] = nrm((1, 3 * HID))
    # encoder output projection
    p['e_lw'] = nrm((HID, HID))
    p['e_lb'] = nrm((1, HID))
    # attention Linear(2H+E -> H) split by the cat order [enc, s(=emb), coverage]
    p['wa_enc'] = nrm((HID, HID))
    p['wa_s'] = nrm((EMB, HID))
    p['wa_cov'] = nrm((HID, HID))
    p['ba'] = nrm((1, HID))
    p['vw'] = nrm((1, HID))
    p['vb'] = nrm((1, 1))
    # decoder GRU on [emb, c], gates stacked (r,z,n)
    p['d_wie'] = nrm((EMB, 3 * HID))
    p['d_wic'] = nrm((HID, 3 * HID))
    p['d_whh'] = nrm((HID, 3 * HID))
    p['d_bi'] = nrm((1, 3 * HID))
    p['d_bh'] = nrm((1, 3 * HID))
    # decoder vocab Linear(E+2H -> V), split by cat order [h, c, emb]:
    # rows for [h, c] stored pre-stacked as one (2H, VEXT) matrix; all weights are
    # zero-padded out to VEXT columns so the extension region contributes 0.
    p['w_ohc'] = nrm((2 * HID, VEXT)).at[:, VOCAB:].set(0.0)
    p['woe'] = nrm((EMB, VEXT)).at[:, VOCAB:].set(0.0)
    p['bo'] = nrm((1, VEXT)).at[:, VOCAB:].set(0.0)
    # w_gen: Linear(2H+E -> 1) split by cat order [h, c, emb], stored as row vectors
    p['wgh'] = nrm((1, HID))
    p['wgc'] = nrm((1, HID))
    p['wge'] = nrm((1, EMB))
    p['bg'] = nrm((1, 1))
    return p


def replace_oovs(ids):
    return jnp.where(ids >= VOCAB, UNK, ids)


# ----------------- full PGN forward -----------------
def pgn_forward(params, src, tgt, src_lengths, len_oovs):
    B, S = src.shape
    T = tgt.shape[1]
    assert max(len_oovs) == MAX_OOV
    assert B <= B_PAD
    pad = B_PAD - B

    # Pad batch to 8 sublanes (full vregs / unmasked stores); results sliced back.
    src_p = jnp.pad(src.astype(jnp.int32), ((0, pad), (0, 0)), constant_values=PAD)
    tgt_p = jnp.pad(tgt.astype(jnp.int32), ((0, pad), (0, 0)), constant_values=PAD)
    len_p = jnp.pad(src_lengths.astype(jnp.int32), (0, pad), constant_values=1)
    lengths_b1 = len_p.reshape(B_PAD, 1)

    # Embedding gathers (dropout = identity).  Teacher-forced decoder inputs for all
    # steps are pre-gathered: step 0 consumes tgt[:,0]; step t>=1 consumes tgt[:,t-1].
    src_emb = params['enc_emb'][replace_oovs(src_p)]                    # (B_PAD,S,E)
    cols = jnp.concatenate([tgt_p[:, :1], tgt_p[:, :T - 2]], axis=1)    # (B_PAD,T-1)
    dec_embs = params['dec_emb'][replace_oovs(cols).T]                  # (T-1,B_PAD,E)

    dec_out, attn, cov = run_pgn(params, src_p, lengths_b1, src_emb, dec_embs)
    return dec_out[:B], attn[:B], cov[:B]


# ----------------- main -----------------
if __name__ == "__main__":
    params = init_params(jax.random.PRNGKey(0))

    B, S, TGT = 2, 8, 4
    k1, k2 = jax.random.split(jax.random.PRNGKey(0), 2)
    # src may contain OOV ids in [VOCAB, VOCAB+MAX_OOV)
    src = jax.random.randint(k1, (B, S), 2, VOCAB + MAX_OOV, dtype=jnp.int32)
    tgt = jax.random.randint(k2, (B, TGT), 2, VOCAB, dtype=jnp.int32)
    src_lengths = jnp.array([8, 5], dtype=jnp.int32)
    len_oovs = (MAX_OOV, 2)

    fwd = jax.jit(pgn_forward, static_argnums=(4,))
    dec_outputs, attn_weights, coverage = fwd(params, src, tgt, src_lengths, len_oovs)
    jax.block_until_ready((dec_outputs, attn_weights, coverage))
    assert dec_outputs.shape == (B, TGT, VEXT)
    assert attn_weights.shape == (B, S)
    assert coverage.shape == (B, S)
    print("KERNEL_OK")
</pallas_src>

<mosaic_0001>
module attributes {stable_mosaic.version = 11 : i64} {
  func.func @pgn_kernel(%arg0: memref<8x8xi32, #tpu.memory_space<vmem>>, %arg1: memref<8x1xi32, #tpu.memory_space<vmem>>, %arg2: memref<8x8x16xf32, #tpu.memory_space<vmem>>, %arg3: memref<3x8x16xf32, #tpu.memory_space<vmem>>, %arg4: memref<16x96xf32, #tpu.memory_space<vmem>>, %arg5: memref<32x96xf32, #tpu.memory_space<vmem>>, %arg6: memref<1x96xf32, #tpu.memory_space<vmem>>, %arg7: memref<1x96xf32, #tpu.memory_space<vmem>>, %arg8: memref<32x32xf32, #tpu.memory_space<vmem>>, %arg9: memref<1x32xf32, #tpu.memory_space<vmem>>, %arg10: memref<32x32xf32, #tpu.memory_space<vmem>>, %arg11: memref<16x32xf32, #tpu.memory_space<vmem>>, %arg12: memref<32x32xf32, #tpu.memory_space<vmem>>, %arg13: memref<1x32xf32, #tpu.memory_space<vmem>>, %arg14: memref<1x32xf32, #tpu.memory_space<vmem>>, %arg15: memref<1x1xf32, #tpu.memory_space<vmem>>, %arg16: memref<16x96xf32, #tpu.memory_space<vmem>>, %arg17: memref<32x96xf32, #tpu.memory_space<vmem>>, %arg18: memref<32x96xf32, #tpu.memory_space<vmem>>, %arg19: memref<1x96xf32, #tpu.memory_space<vmem>>, %arg20: memref<1x96xf32, #tpu.memory_space<vmem>>, %arg21: memref<64x128xf32, #tpu.memory_space<vmem>>, %arg22: memref<16x128xf32, #tpu.memory_space<vmem>>, %arg23: memref<1x128xf32, #tpu.memory_space<vmem>>, %arg24: memref<1x32xf32, #tpu.memory_space<vmem>>, %arg25: memref<1x32xf32, #tpu.memory_space<vmem>>, %arg26: memref<1x16xf32, #tpu.memory_space<vmem>>, %arg27: memref<1x1xf32, #tpu.memory_space<vmem>>, %arg28: memref<8x4x128xf32, #tpu.memory_space<vmem>>, %arg29: memref<8x8xf32, #tpu.memory_space<vmem>>, %arg30: memref<8x8xf32, #tpu.memory_space<vmem>>) attributes {dimension_semantics = [], scalar_prefetch = 0 : i64, scratch_operands = 0 : i64, tpu.core_type = #tpu.core_type<tc>} {
    %c0 = arith.constant 0 : index
    %c0_0 = arith.constant 0 : index
    %0 = vector.load %arg1[%c0, %c0_0] : memref<8x1xi32, #tpu.memory_space<vmem>>, vector<8x1xi32>
    %c0_1 = arith.constant 0 : index
    %c0_2 = arith.constant 0 : index
    %1 = vector.load %arg0[%c0_1, %c0_2] : memref<8x8xi32, #tpu.memory_space<vmem>>, vector<8x8xi32>
    %c0_3 = arith.constant 0 : index
    %c0_4 = arith.constant 0 : index
    %c0_5 = arith.constant 0 : index
    %2 = vector.load %arg2[%c0_3, %c0_4, %c0_5] : memref<8x8x16xf32, #tpu.memory_space<vmem>>, vector<8x8x16xf32>
    %3 = vector.shape_cast %2 : vector<8x8x16xf32> to vector<64x16xf32>
    %c0_6 = arith.constant 0 : index
    %c0_7 = arith.constant 0 : index
    %4 = vector.load %arg4[%c0_6, %c0_7] : memref<16x96xf32, #tpu.memory_space<vmem>>, vector<16x96xf32>
    %cst = arith.constant dense<0.000000e+00> : vector<64x96xf32>
    %5 = tpu.matmul %3, %4, %cst {dimension_numbers = #tpu.dot_dimension_numbers<[1], [0], [0], [1], [0, 0, 1, 1], [], []>} : vector<64x16xf32>, vector<16x96xf32>, vector<64x96xf32> -> vector<64x96xf32>
    %c0_8 = arith.constant 0 : index
    %c0_9 = arith.constant 0 : index
    %6 = vector.load %arg6[%c0_8, %c0_9] : memref<1x96xf32, #tpu.memory_space<vmem>>, vector<1x96xf32>
    %7 = vector.broadcast %6 : vector<1x96xf32> to vector<64x96xf32>
    %8 = arith.addf %5, %7 : vector<64x96xf32>
    %9 = vector.shape_cast %8 : vector<64x96xf32> to vector<8x8x96xf32>
    %c0_10 = arith.constant 0 : index
    %c0_11 = arith.constant 0 : index
    %10 = vector.load %arg5[%c0_10, %c0_11] : memref<32x96xf32, #tpu.memory_space<vmem>>, vector<32x96xf32>
    %c0_12 = arith.constant 0 : index
    %c0_13 = arith.constant 0 : index
    %11 = vector.load %arg7[%c0_12, %c0_13] : memref<1x96xf32, #tpu.memory_space<vmem>>, vector<1x96xf32>
    %cst_14 = arith.constant 0.000000e+00 : f32
    %12 = vector.broadcast %cst_14 : f32 to vector<8x32xf32>
    %13 = vector.extract_strided_slice %9 {offsets = [0, 0, 0], sizes = [8, 1, 96], strides = [1, 1, 1]} : vector<8x8x96xf32> to vector<8x1x96xf32>
    %14 = vector.shape_cast %13 : vector<8x1x96xf32> to vector<8x96xf32>
    %cst_15 = arith.constant dense<0.000000e+00> : vector<8x96xf32>
    %15 = tpu.matmul %12, %10, %cst_15 {dimension_numbers = #tpu.dot_dimension_numbers<[1], [0], [0], [1], [0, 0, 1, 1], [], []>} : vector<8x32xf32>, vector<32x96xf32>, vector<8x96xf32> -> vector<8x96xf32>
    %16 = vector.broadcast %11 : vector<1x96xf32> to vector<8x96xf32>
    %17 = arith.addf %15, %16 : vector<8x96xf32>
    %18 = vector.extract_strided_slice %14 {offsets = [0, 0], sizes = [8, 32], strides = [1, 1]} : vector<8x96xf32> to vector<8x32xf32>
    %19 = vector.extract_strided_slice %17 {offsets = [0, 0], sizes = [8, 32], strides = [1, 1]} : vector<8x96xf32> to vector<8x32xf32>
    %20 = arith.addf %18, %19 : vector<8x32xf32>
    %21 = arith.negf %20 : vector<8x32xf32>
    %22 = math.exp %21 : vector<8x32xf32>
    %cst_16 = arith.constant 1.000000e+00 : f32
    %23 = vector.broadcast %cst_16 : f32 to vector<8x32xf32>
    %24 = arith.addf %23, %22 : vector<8x32xf32>
    %25 = arith.divf %23, %24 : vector<8x32xf32>
    %26 = vector.extract_strided_slice %14 {offsets = [0, 32], sizes = [8, 32], strides = [1, 1]} : vector<8x96xf32> to vector<8x32xf32>
    %27 = vector.extract_strided_slice %17 {offsets = [0, 32], sizes = [8, 32], strides = [1, 1]} : vector<8x96xf32> to vector<8x32xf32>
    %28 = arith.addf %26, %27 : vector<8x32xf32>
    %29 = arith.negf %28 : vector<8x32xf32>
    %30 = math.exp %29 : vector<8x32xf32>
    %cst_17 = arith.constant 1.000000e+00 : f32
    %31 = vector.broadcast %cst_17 : f32 to vector<8x32xf32>
    %32 = arith.addf %31, %30 : vector<8x32xf32>
    %33 = arith.divf %31, %32 : vector<8x32xf32>
    %34 = vector.extract_strided_slice %14 {offsets = [0, 64], sizes = [8, 32], strides = [1, 1]} : vector<8x96xf32> to vector<8x32xf32>
    %35 = vector.extract_strided_slice %17 {offsets = [0, 64], sizes = [8, 32], strides = [1, 1]} : vector<8x96xf32> to vector<8x32xf32>
    %36 = arith.mulf %25, %35 : vector<8x32xf32>
    %37 = arith.addf %34, %36 : vector<8x32xf32>
    %38 = math.tanh %37 : vector<8x32xf32>
    %cst_18 = arith.constant 1.000000e+00 : f32
    %39 = vector.broadcast %cst_18 : f32 to vector<8x32xf32>
    %40 = arith.subf %39, %33 : vector<8x32xf32>
    %41 = arith.mulf %40, %38 : vector<8x32xf32>
    %42 = arith.mulf %33, %12 : vector<8x32xf32>
    %43 = arith.addf %41, %42 : vector<8x32xf32>
    %c0_i32 = arith.constant 0 : i32
    %44 = vector.broadcast %c0_i32 : i32 to vector<8x1xi32>
    %45 = arith.cmpi sgt, %0, %44 : vector<8x1xi32>
    %46 = vector.shape_cast %45 : vector<8x1xi1> to vector<8x1xi1>
    %47 = vector.broadcast %46 : vector<8x1xi1> to vector<8x32xi1>
    %48 = arith.select %47, %43, %12 : vector<8x32xi1>, vector<8x32xf32>
    %cst_19 = arith.constant 0.000000e+00 : f32
    %49 = vector.shape_cast %45 : vector<8x1xi1> to vector<8x1xi1>
    %50 = vector.broadcast %49 : vector<8x1xi1> to vector<8x32xi1>
    %51 = vector.broadcast %cst_19 : f32 to vector<8x32xf32>
    %52 = arith.select %50, %43, %51 : vector<8x32xi1>, vector<8x32xf32>
    %53 = vector.extract_strided_slice %9 {offsets = [0, 1, 0], sizes = [8, 1, 96], strides = [1, 1, 1]} : vector<8x8x96xf32> to vector<8x1x96xf32>
    %54 = vector.shape_cast %53 : vector<8x1x96xf32> to vector<8x96xf32>
    %cst_20 = arith.constant dense<0.000000e+00> : vector<8x96xf32>
    %55 = tpu.matmul %48, %10, %cst_20 {dimension_numbers = #tpu.dot_dimension_numbers<[1], [0], [0], [1], [0, 0, 1, 1], [], []>} : vector<8x32xf32>, vector<32x96xf32>, vector<8x96xf32> -> vector<8x96xf32>
    %56 = vector.broadcast %11 : vector<1x96xf32> to vector<8x96xf32>
    %57 = arith.addf %55, %56 : vector<8x96xf32>
    %58 = vector.extract_strided_slice %54 {offsets = [0, 0], sizes = [8, 32], strides = [1, 1]} : vector<8x96xf32> to vector<8x32xf32>
    %59 = vector.extract_strided_slice %57 {offsets = [0, 0], sizes = [8, 32], strides = [1, 1]} : vector<8x96xf32> to vector<8x32xf32>
    %60 = arith.addf %58, %59 : vector<8x32xf32>
    %61 = arith.negf %60 : vector<8x32xf32>
    %62 = math.exp %61 : vector<8x32xf32>
    %cst_21 = arith.constant 1.000000e+00 : f32
    %63 = vector.broadcast %cst_21 : f32 to vector<8x32xf32>
    %64 = arith.addf %63, %62 : vector<8x32xf32>
    %65 = arith.divf %63, %64 : vector<8x32xf32>
    %66 = vector.extract_strided_slice %54 {offsets = [0, 32], sizes = [8, 32], strides = [1, 1]} : vector<8x96xf32> to vector<8x32xf32>
    %67 = vector.extract_strided_slice %57 {offsets = [0, 32], sizes = [8, 32], strides = [1, 1]} : vector<8x96xf32> to vector<8x32xf32>
    %68 = arith.addf %66, %67 : vector<8x32xf32>
    %69 = arith.negf %68 : vector<8x32xf32>
    %70 = math.exp %69 : vector<8x32xf32>
    %cst_22 = arith.constant 1.000000e+00 : f32
    %71 = vector.broadcast %cst_22 : f32 to vector<8x32xf32>
    %72 = arith.addf %71, %70 : vector<8x32xf32>
    %73 = arith.divf %71, %72 : vector<8x32xf32>
    %74 = vector.extract_strided_slice %54 {offsets = [0, 64], sizes = [8, 32], strides = [1, 1]} : vector<8x96xf32> to vector<8x32xf32>
    %75 = vector.extract_strided_slice %57 {offsets = [0, 64], sizes = [8, 32], strides = [1, 1]} : vector<8x96xf32> to vector<8x32xf32>
    %76 = arith.mulf %65, %75 : vector<8x32xf32>
    %77 = arith.addf %74, %76 : vector<8x32xf32>
    %78 = math.tanh %77 : vector<8x32xf32>
    %cst_23 = arith.constant 1.000000e+00 : f32
    %79 = vector.broadcast %cst_23 : f32 to vector<8x32xf32>
    %80 = arith.subf %79, %73 : vector<8x32xf32>
    %81 = arith.mulf %80, %78 : vector<8x32xf32>
    %82 = arith.mulf %73, %48 : vector<8x32xf32>
    %83 = arith.addf %81, %82 : vector<8x32xf32>
    %c1_i32 = arith.constant 1 : i32
    %84 = vector.broadcast %c1_i32 : i32 to vector<8x1xi32>
    %85 = arith.cmpi sgt, %0, %84 : vector<8x1xi32>
    %86 = vector.shape_cast %85 : vector<8x1xi1> to vector<8x1xi1>
    %87 = vector.broadcast %86 : vector<8x1xi1> to vector<8x32xi1>
    %88 = arith.select %87, %83, %48 : vector<8x32xi1>, vector<8x32xf32>
    %cst_24 = arith.constant 0.000000e+00 : f32
    %89 = vector.shape_cast %85 : vector<8x1xi1> to vector<8x1xi1>
    %90 = vector.broadcast %89 : vector<8x1xi1> to vector<8x32xi1>
    %91 = vector.broadcast %cst_24 : f32 to vector<8x32xf32>
    %92 = arith.select %90, %83, %91 : vector<8x32xi1>, vector<8x32xf32>
    %93 = vector.extract_strided_slice %9 {offsets = [0, 2, 0], sizes = [8, 1, 96], strides = [1, 1, 1]} : vector<8x8x96xf32> to vector<8x1x96xf32>
    %94 = vector.shape_cast %93 : vector<8x1x96xf32> to vector<8x96xf32>
    %cst_25 = arith.constant dense<0.000000e+00> : vector<8x96xf32>
    %95 = tpu.matmul %88, %10, %cst_25 {dimension_numbers = #tpu.dot_dimension_numbers<[1], [0], [0], [1], [0, 0, 1, 1], [], []>} : vector<8x32xf32>, vector<32x96xf32>, vector<8x96xf32> -> vector<8x96xf32>
    %96 = vector.broadcast %11 : vector<1x96xf32> to vector<8x96xf32>
    %97 = arith.addf %95, %96 : vector<8x96xf32>
    %98 = vector.extract_strided_slice %94 {offsets = [0, 0], sizes = [8, 32], strides = [1, 1]} : vector<8x96xf32> to vector<8x32xf32>
    %99 = vector.extract_strided_slice %97 {offsets = [0, 0], sizes = [8, 32], strides = [1, 1]} : vector<8x96xf32> to vector<8x32xf32>
    %100 = arith.addf %98, %99 : vector<8x32xf32>
    %101 = arith.negf %100 : vector<8x32xf32>
    %102 = math.exp %101 : vector<8x32xf32>
    %cst_26 = arith.constant 1.000000e+00 : f32
    %103 = vector.broadcast %cst_26 : f32 to vector<8x32xf32>
    %104 = arith.addf %103, %102 : vector<8x32xf32>
    %105 = arith.divf %103, %104 : vector<8x32xf32>
    %106 = vector.extract_strided_slice %94 {offsets = [0, 32], sizes = [8, 32], strides = [1, 1]} : vector<8x96xf32> to vector<8x32xf32>
    %107 = vector.extract_strided_slice %97 {offsets = [0, 32], sizes = [8, 32], strides = [1, 1]} : vector<8x96xf32> to vector<8x32xf32>
    %108 = arith.addf %106, %107 : vector<8x32xf32>
    %109 = arith.negf %108 : vector<8x32xf32>
    %110 = math.exp %109 : vector<8x32xf32>
    %cst_27 = arith.constant 1.000000e+00 : f32
    %111 = vector.broadcast %cst_27 : f32 to vector<8x32xf32>
    %112 = arith.addf %111, %110 : vector<8x32xf32>
    %113 = arith.divf %111, %112 : vector<8x32xf32>
    %114 = vector.extract_strided_slice %94 {offsets = [0, 64], sizes = [8, 32], strides = [1, 1]} : vector<8x96xf32> to vector<8x32xf32>
    %115 = vector.extract_strided_slice %97 {offsets = [0, 64], sizes = [8, 32], strides = [1, 1]} : vector<8x96xf32> to vector<8x32xf32>
    %116 = arith.mulf %105, %115 : vector<8x32xf32>
    %117 = arith.addf %114, %116 : vector<8x32xf32>
    %118 = math.tanh %117 : vector<8x32xf32>
    %cst_28 = arith.constant 1.000000e+00 : f32
    %119 = vector.broadcast %cst_28 : f32 to vector<8x32xf32>
    %120 = arith.subf %119, %113 : vector<8x32xf32>
    %121 = arith.mulf %120, %118 : vector<8x32xf32>
    %122 = arith.mulf %113, %88 : vector<8x32xf32>
    %123 = arith.addf %121, %122 : vector<8x32xf32>
    %c2_i32 = arith.constant 2 : i32
    %124 = vector.broadcast %c2_i32 : i32 to vector<8x1xi32>
    %125 = arith.cmpi sgt, %0, %124 : vector<8x1xi32>
    %126 = vector.shape_cast %125 : vector<8x1xi1> to vector<8x1xi1>
    %127 = vector.broadcast %126 : vector<8x1xi1> to vector<8x32xi1>
    %128 = arith.select %127, %123, %88 : vector<8x32xi1>, vector<8x32xf32>
    %cst_29 = arith.constant 0.000000e+00 : f32
    %129 = vector.shape_cast %125 : vector<8x1xi1> to vector<8x1xi1>
    %130 = vector.broadcast %129 : vector<8x1xi1> to vector<8x32xi1>
    %131 = vector.broadcast %cst_29 : f32 to vector<8x32xf32>
    %132 = arith.select %130, %123, %131 : vector<8x32xi1>, vector<8x32xf32>
    %133 = vector.extract_strided_slice %9 {offsets = [0, 3, 0], sizes = [8, 1, 96], strides = [1, 1, 1]} : vector<8x8x96xf32> to vector<8x1x96xf32>
    %134 = vector.shape_cast %133 : vector<8x1x96xf32> to vector<8x96xf32>
    %cst_30 = arith.constant dense<0.000000e+00> : vector<8x96xf32>
    %135 = tpu.matmul %128, %10, %cst_30 {dimension_numbers = #tpu.dot_dimension_numbers<[1], [0], [0], [1], [0, 0, 1, 1], [], []>} : vector<8x32xf32>, vector<32x96xf32>, vector<8x96xf32> -> vector<8x96xf32>
    %136 = vector.broadcast %11 : vector<1x96xf32> to vector<8x96xf32>
    %137 = arith.addf %135, %136 : vector<8x96xf32>
    %138 = vector.extract_strided_slice %134 {offsets = [0, 0], sizes = [8, 32], strides = [1, 1]} : vector<8x96xf32> to vector<8x32xf32>
    %139 = vector.extract_strided_slice %137 {offsets = [0, 0], sizes = [8, 32], strides = [1, 1]} : vector<8x96xf32> to vector<8x32xf32>
    %140 = arith.addf %138, %139 : vector<8x32xf32>
    %141 = arith.negf %140 : vector<8x32xf32>
    %142 = math.exp %141 : vector<8x32xf32>
    %cst_31 = arith.constant 1.000000e+00 : f32
    %143 = vector.broadcast %cst_31 : f32 to vector<8x32xf32>
    %144 = arith.addf %143, %142 : vector<8x32xf32>
    %145 = arith.divf %143, %144 : vector<8x32xf32>
    %146 = vector.extract_strided_slice %134 {offsets = [0, 32], sizes = [8, 32], strides = [1, 1]} : vector<8x96xf32> to vector<8x32xf32>
    %147 = vector.extract_strided_slice %137 {offsets = [0, 32], sizes = [8, 32], strides = [1, 1]} : vector<8x96xf32> to vector<8x32xf32>
    %148 = arith.addf %146, %147 : vector<8x32xf32>
    %149 = arith.negf %148 : vector<8x32xf32>
    %150 = math.exp %149 : vector<8x32xf32>
    %cst_32 = arith.constant 1.000000e+00 : f32
    %151 = vector.broadcast %cst_32 : f32 to vector<8x32xf32>
    %152 = arith.addf %151, %150 : vector<8x32xf32>
    %153 = arith.divf %151, %152 : vector<8x32xf32>
    %154 = vector.extract_strided_slice %134 {offsets = [0, 64], sizes = [8, 32], strides = [1, 1]} : vector<8x96xf32> to vector<8x32xf32>
    %155 = vector.extract_strided_slice %137 {offsets = [0, 64], sizes = [8, 32], strides = [1, 1]} : vector<8x96xf32> to vector<8x32xf32>
    %156 = arith.mulf %145, %155 : vector<8x32xf32>
    %157 = arith.addf %154, %156 : vector<8x32xf32>
    %158 = math.tanh %157 : vector<8x32xf32>
    %cst_33 = arith.constant 1.000000e+00 : f32
    %159 = vector.broadcast %cst_33 : f32 to vector<8x32xf32>
    %160 = arith.subf %159, %153 : vector<8x32xf32>
    %161 = arith.mulf %160, %158 : vector<8x32xf32>
    %162 = arith.mulf %153, %128 : vector<8x32xf32>
    %163 = arith.addf %161, %162 : vector<8x32xf32>
    %c3_i32 = arith.constant 3 : i32
    %164 = vector.broadcast %c3_i32 : i32 to vector<8x1xi32>
    %165 = arith.cmpi sgt, %0, %164 : vector<8x1xi32>
    %166 = vector.shape_cast %165 : vector<8x1xi1> to vector<8x1xi1>
    %167 = vector.broadcast %166 : vector<8x1xi1> to vector<8x32xi1>
    %168 = arith.select %167, %163, %128 : vector<8x32xi1>, vector<8x32xf32>
    %cst_34 = arith.constant 0.000000e+00 : f32
    %169 = vector.shape_cast %165 : vector<8x1xi1> to vector<8x1xi1>
    %170 = vector.broadcast %169 : vector<8x1xi1> to vector<8x32xi1>
    %171 = vector.broadcast %cst_34 : f32 to vector<8x32xf32>
    %172 = arith.select %170, %163, %171 : vector<8x32xi1>, vector<8x32xf32>
    %173 = vector.extract_strided_slice %9 {offsets = [0, 4, 0], sizes = [8, 1, 96], strides = [1, 1, 1]} : vector<8x8x96xf32> to vector<8x1x96xf32>
    %174 = vector.shape_cast %173 : vector<8x1x96xf32> to vector<8x96xf32>
    %cst_35 = arith.constant dense<0.000000e+00> : vector<8x96xf32>
    %175 = tpu.matmul %168, %10, %cst_35 {dimension_numbers = #tpu.dot_dimension_numbers<[1], [0], [0], [1], [0, 0, 1, 1], [], []>} : vector<8x32xf32>, vector<32x96xf32>, vector<8x96xf32> -> vector<8x96xf32>
    %176 = vector.broadcast %11 : vector<1x96xf32> to vector<8x96xf32>
    %177 = arith.addf %175, %176 : vector<8x96xf32>
    %178 = vector.extract_strided_slice %174 {offsets = [0, 0], sizes = [8, 32], strides = [1, 1]} : vector<8x96xf32> to vector<8x32xf32>
    %179 = vector.extract_strided_slice %177 {offsets = [0, 0], sizes = [8, 32], strides = [1, 1]} : vector<8x96xf32> to vector<8x32xf32>
    %180 = arith.addf %178, %179 : vector<8x32xf32>
    %181 = arith.negf %180 : vector<8x32xf32>
    %182 = math.exp %181 : vector<8x32xf32>
    %cst_36 = arith.constant 1.000000e+00 : f32
    %183 = vector.broadcast %cst_36 : f32 to vector<8x32xf32>
    %184 = arith.addf %183, %182 : vector<8x32xf32>
    %185 = arith.divf %183, %184 : vector<8x32xf32>
    %186 = vector.extract_strided_slice %174 {offsets = [0, 32], sizes = [8, 32], strides = [1, 1]} : vector<8x96xf32> to vector<8x32xf32>
    %187 = vector.extract_strided_slice %177 {offsets = [0, 32], sizes = [8, 32], strides = [1, 1]} : vector<8x96xf32> to vector<8x32xf32>
    %188 = arith.addf %186, %187 : vector<8x32xf32>
    %189 = arith.negf %188 : vector<8x32xf32>
    %190 = math.exp %189 : vector<8x32xf32>
    %cst_37 = arith.constant 1.000000e+00 : f32
    %191 = vector.broadcast %cst_37 : f32 to vector<8x32xf32>
    %192 = arith.addf %191, %190 : vector<8x32xf32>
    %193 = arith.divf %191, %192 : vector<8x32xf32>
    %194 = vector.extract_strided_slice %174 {offsets = [0, 64], sizes = [8, 32], strides = [1, 1]} : vector<8x96xf32> to vector<8x32xf32>
    %195 = vector.extract_strided_slice %177 {offsets = [0, 64], sizes = [8, 32], strides = [1, 1]} : vector<8x96xf32> to vector<8x32xf32>
    %196 = arith.mulf %185, %195 : vector<8x32xf32>
    %197 = arith.addf %194, %196 : vector<8x32xf32>
    %198 = math.tanh %197 : vector<8x32xf32>
    %cst_38 = arith.constant 1.000000e+00 : f32
    %199 = vector.broadcast %cst_38 : f32 to vector<8x32xf32>
    %200 = arith.subf %199, %193 : vector<8x32xf32>
    %201 = arith.mulf %200, %198 : vector<8x32xf32>
    %202 = arith.mulf %193, %168 : vector<8x32xf32>
    %203 = arith.addf %201, %202 : vector<8x32xf32>
    %c4_i32 = arith.constant 4 : i32
    %204 = vector.broadcast %c4_i32 : i32 to vector<8x1xi32>
    %205 = arith.cmpi sgt, %0, %204 : vector<8x1xi32>
    %206 = vector.shape_cast %205 : vector<8x1xi1> to vector<8x1xi1>
    %207 = vector.broadcast %206 : vector<8x1xi1> to vector<8x32xi1>
    %208 = arith.select %207, %203, %168 : vector<8x32xi1>, vector<8x32xf32>
    %cst_39 = arith.constant 0.000000e+00 : f32
    %209 = vector.shape_cast %205 : vector<8x1xi1> to vector<8x1xi1>
    %210 = vector.broadcast %209 : vector<8x1xi1> to vector<8x32xi1>
    %211 = vector.broadcast %cst_39 : f32 to vector<8x32xf32>
    %212 = arith.select %210, %203, %211 : vector<8x32xi1>, vector<8x32xf32>
    %213 = vector.extract_strided_slice %9 {offsets = [0, 5, 0], sizes = [8, 1, 96], strides = [1, 1, 1]} : vector<8x8x96xf32> to vector<8x1x96xf32>
    %214 = vector.shape_cast %213 : vector<8x1x96xf32> to vector<8x96xf32>
    %cst_40 = arith.constant dense<0.000000e+00> : vector<8x96xf32>
    %215 = tpu.matmul %208, %10, %cst_40 {dimension_numbers = #tpu.dot_dimension_numbers<[1], [0], [0], [1], [0, 0, 1, 1], [], []>} : vector<8x32xf32>, vector<32x96xf32>, vector<8x96xf32> -> vector<8x96xf32>
    %216 = vector.broadcast %11 : vector<1x96xf32> to vector<8x96xf32>
    %217 = arith.addf %215, %216 : vector<8x96xf32>
    %218 = vector.extract_strided_slice %214 {offsets = [0, 0], sizes = [8, 32], strides = [1, 1]} : vector<8x96xf32> to vector<8x32xf32>
    %219 = vector.extract_strided_slice %217 {offsets = [0, 0], sizes = [8, 32], strides = [1, 1]} : vector<8x96xf32> to vector<8x32xf32>
    %220 = arith.addf %218, %219 : vector<8x32xf32>
    %221 = arith.negf %220 : vector<8x32xf32>
    %222 = math.exp %221 : vector<8x32xf32>
    %cst_41 = arith.constant 1.000000e+00 : f32
    %223 = vector.broadcast %cst_41 : f32 to vector<8x32xf32>
    %224 = arith.addf %223, %222 : vector<8x32xf32>
    %225 = arith.divf %223, %224 : vector<8x32xf32>
    %226 = vector.extract_strided_slice %214 {offsets = [0, 32], sizes = [8, 32], strides = [1, 1]} : vector<8x96xf32> to vector<8x32xf32>
    %227 = vector.extract_strided_slice %217 {offsets = [0, 32], sizes = [8, 32], strides = [1, 1]} : vector<8x96xf32> to vector<8x32xf32>
    %228 = arith.addf %226, %227 : vector<8x32xf32>
    %229 = arith.negf %228 : vector<8x32xf32>
    %230 = math.exp %229 : vector<8x32xf32>
    %cst_42 = arith.constant 1.000000e+00 : f32
    %231 = vector.broadcast %cst_42 : f32 to vector<8x32xf32>
    %232 = arith.addf %231, %230 : vector<8x32xf32>
    %233 = arith.divf %231, %232 : vector<8x32xf32>
    %234 = vector.extract_strided_slice %214 {offsets = [0, 64], sizes = [8, 32], strides = [1, 1]} : vector<8x96xf32> to vector<8x32xf32>
    %235 = vector.extract_strided_slice %217 {offsets = [0, 64], sizes = [8, 32], strides = [1, 1]} : vector<8x96xf32> to vector<8x32xf32>
    %236 = arith.mulf %225, %235 : vector<8x32xf32>
    %237 = arith.addf %234, %236 : vector<8x32xf32>
    %238 = math.tanh %237 : vector<8x32xf32>
    %cst_43 = arith.constant 1.000000e+00 : f32
    %239 = vector.broadcast %cst_43 : f32 to vector<8x32xf32>
    %240 = arith.subf %239, %233 : vector<8x32xf32>
    %241 = arith.mulf %240, %238 : vector<8x32xf32>
    %242 = arith.mulf %233, %208 : vector<8x32xf32>
    %243 = arith.addf %241, %242 : vector<8x32xf32>
    %c5_i32 = arith.constant 5 : i32
    %244 = vector.broadcast %c5_i32 : i32 to vector<8x1xi32>
    %245 = arith.cmpi sgt, %0, %244 : vector<8x1xi32>
    %246 = vector.shape_cast %245 : vector<8x1xi1> to vector<8x1xi1>
    %247 = vector.broadcast %246 : vector<8x1xi1> to vector<8x32xi1>
    %248 = arith.select %247, %243, %208 : vector<8x32xi1>, vector<8x32xf32>
    %cst_44 = arith.constant 0.000000e+00 : f32
    %249 = vector.shape_cast %245 : vector<8x1xi1> to vector<8x1xi1>
    %250 = vector.broadcast %249 : vector<8x1xi1> to vector<8x32xi1>
    %251 = vector.broadcast %cst_44 : f32 to vector<8x32xf32>
    %252 = arith.select %250, %243, %251 : vector<8x32xi1>, vector<8x32xf32>
    %253 = vector.extract_strided_slice %9 {offsets = [0, 6, 0], sizes = [8, 1, 96], strides = [1, 1, 1]} : vector<8x8x96xf32> to vector<8x1x96xf32>
    %254 = vector.shape_cast %253 : vector<8x1x96xf32> to vector<8x96xf32>
    %cst_45 = arith.constant dense<0.000000e+00> : vector<8x96xf32>
    %255 = tpu.matmul %248, %10, %cst_45 {dimension_numbers = #tpu.dot_dimension_numbers<[1], [0], [0], [1], [0, 0, 1, 1], [], []>} : vector<8x32xf32>, vector<32x96xf32>, vector<8x96xf32> -> vector<8x96xf32>
    %256 = vector.broadcast %11 : vector<1x96xf32> to vector<8x96xf32>
    %257 = arith.addf %255, %256 : vector<8x96xf32>
    %258 = vector.extract_strided_slice %254 {offsets = [0, 0], sizes = [8, 32], strides = [1, 1]} : vector<8x96xf32> to vector<8x32xf32>
    %259 = vector.extract_strided_slice %257 {offsets = [0, 0], sizes = [8, 32], strides = [1, 1]} : vector<8x96xf32> to vector<8x32xf32>
    %260 = arith.addf %258, %259 : vector<8x32xf32>
    %261 = arith.negf %260 : vector<8x32xf32>
    %262 = math.exp %261 : vector<8x32xf32>
    %cst_46 = arith.constant 1.000000e+00 : f32
    %263 = vector.broadcast %cst_46 : f32 to vector<8x32xf32>
    %264 = arith.addf %263, %262 : vector<8x32xf32>
    %265 = arith.divf %263, %264 : vector<8x32xf32>
    %266 = vector.extract_strided_slice %254 {offsets = [0, 32], sizes = [8, 32], strides = [1, 1]} : vector<8x96xf32> to vector<8x32xf32>
    %267 = vector.extract_strided_slice %257 {offsets = [0, 32], sizes = [8, 32], strides = [1, 1]} : vector<8x96xf32> to vector<8x32xf32>
    %268 = arith.addf %266, %267 : vector<8x32xf32>
    %269 = arith.negf %268 : vector<8x32xf32>
    %270 = math.exp %269 : vector<8x32xf32>
    %cst_47 = arith.constant 1.000000e+00 : f32
    %271 = vector.broadcast %cst_47 : f32 to vector<8x32xf32>
    %272 = arith.addf %271, %270 : vector<8x32xf32>
    %273 = arith.divf %271, %272 : vector<8x32xf32>
    %274 = vector.extract_strided_slice %254 {offsets = [0, 64], sizes = [8, 32], strides = [1, 1]} : vector<8x96xf32> to vector<8x32xf32>
    %275 = vector.extract_strided_slice %257 {offsets = [0, 64], sizes = [8, 32], strides = [1, 1]} : vector<8x96xf32> to vector<8x32xf32>
    %276 = arith.mulf %265, %275 : vector<8x32xf32>
    %277 = arith.addf %274, %276 : vector<8x32xf32>
    %278 = math.tanh %277 : vector<8x32xf32>
    %cst_48 = arith.constant 1.000000e+00 : f32
    %279 = vector.broadcast %cst_48 : f32 to vector<8x32xf32>
    %280 = arith.subf %279, %273 : vector<8x32xf32>
    %281 = arith.mulf %280, %278 : vector<8x32xf32>
    %282 = arith.mulf %273, %248 : vector<8x32xf32>
    %283 = arith.addf %281, %282 : vector<8x32xf32>
    %c6_i32 = arith.constant 6 : i32
    %284 = vector.broadcast %c6_i32 : i32 to vector<8x1xi32>
    %285 = arith.cmpi sgt, %0, %284 : vector<8x1xi32>
    %286 = vector.shape_cast %285 : vector<8x1xi1> to vector<8x1xi1>
    %287 = vector.broadcast %286 : vector<8x1xi1> to vector<8x32xi1>
    %288 = arith.select %287, %283, %248 : vector<8x32xi1>, vector<8x32xf32>
    %cst_49 = arith.constant 0.000000e+00 : f32
    %289 = vector.shape_cast %285 : vector<8x1xi1> to vector<8x1xi1>
    %290 = vector.broadcast %289 : vector<8x1xi1> to vector<8x32xi1>
    %291 = vector.broadcast %cst_49 : f32 to vector<8x32xf32>
    %292 = arith.select %290, %283, %291 : vector<8x32xi1>, vector<8x32xf32>
    %293 = vector.extract_strided_slice %9 {offsets = [0, 7, 0], sizes = [8, 1, 96], strides = [1, 1, 1]} : vector<8x8x96xf32> to vector<8x1x96xf32>
    %294 = vector.shape_cast %293 : vector<8x1x96xf32> to vector<8x96xf32>
    %cst_50 = arith.constant dense<0.000000e+00> : vector<8x96xf32>
    %295 = tpu.matmul %288, %10, %cst_50 {dimension_numbers = #tpu.dot_dimension_numbers<[1], [0], [0], [1], [0, 0, 1, 1], [], []>} : vector<8x32xf32>, vector<32x96xf32>, vector<8x96xf32> -> vector<8x96xf32>
    %296 = vector.broadcast %11 : vector<1x96xf32> to vector<8x96xf32>
    %297 = arith.addf %295, %296 : vector<8x96xf32>
    %298 = vector.extract_strided_slice %294 {offsets = [0, 0], sizes = [8, 32], strides = [1, 1]} : vector<8x96xf32> to vector<8x32xf32>
    %299 = vector.extract_strided_slice %297 {offsets = [0, 0], sizes = [8, 32], strides = [1, 1]} : vector<8x96xf32> to vector<8x32xf32>
    %300 = arith.addf %298, %299 : vector<8x32xf32>
    %301 = arith.negf %300 : vector<8x32xf32>
    %302 = math.exp %301 : vector<8x32xf32>
    %cst_51 = arith.constant 1.000000e+00 : f32
    %303 = vector.broadcast %cst_51 : f32 to vector<8x32xf32>
    %304 = arith.addf %303, %302 : vector<8x32xf32>
    %305 = arith.divf %303, %304 : vector<8x32xf32>
    %306 = vector.extract_strided_slice %294 {offsets = [0, 32], sizes = [8, 32], strides = [1, 1]} : vector<8x96xf32> to vector<8x32xf32>
    %307 = vector.extract_strided_slice %297 {offsets = [0, 32], sizes = [8, 32], strides = [1, 1]} : vector<8x96xf32> to vector<8x32xf32>
    %308 = arith.addf %306, %307 : vector<8x32xf32>
    %309 = arith.negf %308 : vector<8x32xf32>
    %310 = math.exp %309 : vector<8x32xf32>
    %cst_52 = arith.constant 1.000000e+00 : f32
    %311 = vector.broadcast %cst_52 : f32 to vector<8x32xf32>
    %312 = arith.addf %311, %310 : vector<8x32xf32>
    %313 = arith.divf %311, %312 : vector<8x32xf32>
    %314 = vector.extract_strided_slice %294 {offsets = [0, 64], sizes = [8, 32], strides = [1, 1]} : vector<8x96xf32> to vector<8x32xf32>
    %315 = vector.extract_strided_slice %297 {offsets = [0, 64], sizes = [8, 32], strides = [1, 1]} : vector<8x96xf32> to vector<8x32xf32>
    %316 = arith.mulf %305, %315 : vector<8x32xf32>
    %317 = arith.addf %314, %316 : vector<8x32xf32>
    %318 = math.tanh %317 : vector<8x32xf32>
    %cst_53 = arith.constant 1.000000e+00 : f32
    %319 = vector.broadcast %cst_53 : f32 to vector<8x32xf32>
    %320 = arith.subf %319, %313 : vector<8x32xf32>
    %321 = arith.mulf %320, %318 : vector<8x32xf32>
    %322 = arith.mulf %313, %288 : vector<8x32xf32>
    %323 = arith.addf %321, %322 : vector<8x32xf32>
    %c7_i32 = arith.constant 7 : i32
    %324 = vector.broadcast %c7_i32 : i32 to vector<8x1xi32>
    %325 = arith.cmpi sgt, %0, %324 : vector<8x1xi32>
    %326 = vector.shape_cast %325 : vector<8x1xi1> to vector<8x1xi1>
    %327 = vector.broadcast %326 : vector<8x1xi1> to vector<8x32xi1>
    %328 = arith.select %327, %323, %288 : vector<8x32xi1>, vector<8x32xf32>
    %cst_54 = arith.constant 0.000000e+00 : f32
    %329 = vector.shape_cast %325 : vector<8x1xi1> to vector<8x1xi1>
    %330 = vector.broadcast %329 : vector<8x1xi1> to vector<8x32xi1>
    %331 = vector.broadcast %cst_54 : f32 to vector<8x32xf32>
    %332 = arith.select %330, %323, %331 : vector<8x32xi1>, vector<8x32xf32>
    %333 = vector.shape_cast %52 : vector<8x32xf32> to vector<8x1x32xf32>
    %334 = vector.shape_cast %92 : vector<8x32xf32> to vector<8x1x32xf32>
    %335 = vector.shape_cast %132 : vector<8x32xf32> to vector<8x1x32xf32>
    %336 = vector.shape_cast %172 : vector<8x32xf32> to vector<8x1x32xf32>
    %337 = vector.shape_cast %212 : vector<8x32xf32> to vector<8x1x32xf32>
    %338 = vector.shape_cast %252 : vector<8x32xf32> to vector<8x1x32xf32>
    %339 = vector.shape_cast %292 : vector<8x32xf32> to vector<8x1x32xf32>
    %340 = vector.shape_cast %332 : vector<8x32xf32> to vector<8x1x32xf32>
    %341 = tpu.concatenate %333, %334, %335, %336, %337, %338, %339, %340 in 1 : vector<8x1x32xf32>, vector<8x1x32xf32>, vector<8x1x32xf32>, vector<8x1x32xf32>, vector<8x1x32xf32>, vector<8x1x32xf32>, vector<8x1x32xf32>, vector<8x1x32xf32> -> vector<8x8x32xf32>
    %342 = vector.shape_cast %341 : vector<8x8x32xf32> to vector<64x32xf32>
    %c0_55 = arith.constant 0 : index
    %c0_56 = arith.constant 0 : index
    %343 = vector.load %arg8[%c0_55, %c0_56] : memref<32x32xf32, #tpu.memory_space<vmem>>, vector<32x32xf32>
    %cst_57 = arith.constant dense<0.000000e+00> : vector<64x32xf32>
    %344 = tpu.matmul %342, %343, %cst_57 {dimension_numbers = #tpu.dot_dimension_numbers<[1], [0], [0], [1], [0, 0, 1, 1], [], []>} : vector<64x32xf32>, vector<32x32xf32>, vector<64x32xf32> -> vector<64x32xf32>
    %c0_58 = arith.constant 0 : index
    %c0_59 = arith.constant 0 : index
    %345 = vector.load %arg9[%c0_58, %c0_59] : memref<1x32xf32, #tpu.memory_space<vmem>>, vector<1x32xf32>
    %346 = vector.broadcast %345 : vector<1x32xf32> to vector<64x32xf32>
    %347 = arith.addf %344, %346 : vector<64x32xf32>
    %cst_60 = arith.constant 0.000000e+00 : f32
    %348 = vector.broadcast %cst_60 : f32 to vector<64x32xf32>
    %349 = arith.maximumf %347, %348 : vector<64x32xf32>
    %c0_61 = arith.constant 0 : index
    %c0_62 = arith.constant 0 : index
    %350 = vector.load %arg10[%c0_61, %c0_62] : memref<32x32xf32, #tpu.memory_space<vmem>>, vector<32x32xf32>
    %cst_63 = arith.constant dense<0.000000e+00> : vector<64x32xf32>
    %351 = tpu.matmul %349, %350, %cst_63 {dimension_numbers = #tpu.dot_dimension_numbers<[1], [0], [0], [1], [0, 0, 1, 1], [], []>} : vector<64x32xf32>, vector<32x32xf32>, vector<64x32xf32> -> vector<64x32xf32>
    %352 = vector.shape_cast %349 : vector<64x32xf32> to vector<8x8x32xf32>
    %353 = vector.shape_cast %351 : vector<64x32xf32> to vector<8x8x32xf32>
    %c0_64 = arith.constant 0 : index
    %c0_65 = arith.constant 0 : index
    %c0_66 = arith.constant 0 : index
    %354 = vector.load %arg3[%c0_64, %c0_65, %c0_66] : memref<3x8x16xf32, #tpu.memory_space<vmem>>, vector<3x8x16xf32>
    %355 = vector.shape_cast %354 : vector<3x8x16xf32> to vector<24x16xf32>
    %c0_67 = arith.constant 0 : index
    %c0_68 = arith.constant 0 : index
    %356 = vector.load %arg11[%c0_67, %c0_68] : memref<16x32xf32, #tpu.memory_space<vmem>>, vector<16x32xf32>
    %cst_69 = arith.constant dense<0.000000e+00> : vector<24x32xf32>
    %357 = tpu.matmul %355, %356, %cst_69 {dimension_numbers = #tpu.dot_dimension_numbers<[1], [0], [0], [1], [0, 0, 1, 1], [], []>} : vector<24x16xf32>, vector<16x32xf32>, vector<24x32xf32> -> vector<24x32xf32>
    %358 = vector.shape_cast %357 : vector<24x32xf32> to vector<3x8x32xf32>
    %c0_70 = arith.constant 0 : index
    %c0_71 = arith.constant 0 : index
    %359 = vector.load %arg16[%c0_70, %c0_71] : memref<16x96xf32, #tpu.memory_space<vmem>>, vector<16x96xf32>
    %cst_72 = arith.constant dense<0.000000e+00> : vector<24x96xf32>
    %360 = tpu.matmul %355, %359, %cst_72 {dimension_numbers = #tpu.dot_dimension_numbers<[1], [0], [0], [1], [0, 0, 1, 1], [], []>} : vector<24x16xf32>, vector<16x96xf32>, vector<24x96xf32> -> vector<24x96xf32>
    %c0_73 = arith.constant 0 : index
    %c0_74 = arith.constant 0 : index
    %361 = vector.load %arg19[%c0_73, %c0_74] : memref<1x96xf32, #tpu.memory_space<vmem>>, vector<1x96xf32>
    %362 = vector.broadcast %361 : vector<1x96xf32> to vector<24x96xf32>
    %363 = arith.addf %360, %362 : vector<24x96xf32>
    %364 = vector.shape_cast %363 : vector<24x96xf32> to vector<3x8x96xf32>
    %c0_75 = arith.constant 0 : index
    %c0_76 = arith.constant 0 : index
    %365 = vector.load %arg22[%c0_75, %c0_76] : memref<16x128xf32, #tpu.memory_space<vmem>>, vector<16x128xf32>
    %cst_77 = arith.constant dense<0.000000e+00> : vector<24x128xf32>
    %366 = tpu.matmul %355, %365, %cst_77 {dimension_numbers = #tpu.dot_dimension_numbers<[1], [0], [0], [1], [0, 0, 1, 1], [], []>} : vector<24x16xf32>, vector<16x128xf32>, vector<24x128xf32> -> vector<24x128xf32>
    %367 = vector.shape_cast %366 : vector<24x128xf32> to vector<3x8x128xf32>
    %c0_78 = arith.constant 0 : index
    %c0_79 = arith.constant 0 : index
    %368 = vector.load %arg26[%c0_78, %c0_79] : memref<1x16xf32, #tpu.memory_space<vmem>>, vector<1x16xf32>
    %369 = vector.broadcast %368 : vector<1x16xf32> to vector<24x16xf32>
    %370 = arith.mulf %355, %369 : vector<24x16xf32>
    %cst_80 = arith.constant dense<0.000000e+00> : vector<24xf32>
    %371 = vector.multi_reduction <add>, %370, %cst_80 [1] : vector<24x16xf32> to vector<24xf32>
    %372 = vector.shape_cast %371 : vector<24xf32> to vector<24x1xf32>
    %373 = vector.shape_cast %372 : vector<24x1xf32> to vector<3x8x1xf32>
    %c0_81 = arith.constant 0 : index
    %c0_82 = arith.constant 0 : index
    %374 = vector.load %arg12[%c0_81, %c0_82] : memref<32x32xf32, #tpu.memory_space<vmem>>, vector<32x32xf32>
    %cst_83 = arith.constant dense<0.000000e+00> : vector<32xf32>
    %375 = vector.multi_reduction <add>, %374, %cst_83 [0] : vector<32x32xf32> to vector<32xf32>
    %376 = vector.shape_cast %375 : vector<32xf32> to vector<1x32xf32>
    %377 = vector.shape_cast %1 : vector<8x8xi32> to vector<8x8x1xi32>
    %378 = tpu.iota {dimensions = array<i32: 2>} : vector<8x8x128xi32>
    %379 = vector.broadcast %377 : vector<8x8x1xi32> to vector<8x8x128xi32>
    %380 = arith.cmpi eq, %379, %378 : vector<8x8x128xi32>
    %381 = arith.extui %380 : vector<8x8x128xi1> to vector<8x8x128xi32>
    %382 = arith.sitofp %381 : vector<8x8x128xi32> to vector<8x8x128xf32>
    %383 = tpu.iota {dimensions = array<i32: 1>} : vector<8x8xi32>
    %384 = vector.broadcast %0 : vector<8x1xi32> to vector<8x8xi32>
    %385 = arith.cmpi sge, %383, %384 : vector<8x8xi32>
    %c0_84 = arith.constant 0 : index
    %c0_85 = arith.constant 0 : index
    %386 = vector.load %arg17[%c0_84, %c0_85] : memref<32x96xf32, #tpu.memory_space<vmem>>, vector<32x96xf32>
    %c0_86 = arith.constant 0 : index
    %c0_87 = arith.constant 0 : index
    %387 = vector.load %arg18[%c0_86, %c0_87] : memref<32x96xf32, #tpu.memory_space<vmem>>, vector<32x96xf32>
    %c0_88 = arith.constant 0 : index
    %c0_89 = arith.constant 0 : index
    %388 = vector.load %arg20[%c0_88, %c0_89] : memref<1x96xf32, #tpu.memory_space<vmem>>, vector<1x96xf32>
    %c0_90 = arith.constant 0 : index
    %c0_91 = arith.constant 0 : index
    %389 = vector.load %arg13[%c0_90, %c0_91] : memref<1x32xf32, #tpu.memory_space<vmem>>, vector<1x32xf32>
    %c0_92 = arith.constant 0 : index
    %c0_93 = arith.constant 0 : index
    %390 = vector.load %arg14[%c0_92, %c0_93] : memref<1x32xf32, #tpu.memory_space<vmem>>, vector<1x32xf32>
    %c0_94 = arith.constant 0 : index
    %c0_95 = arith.constant 0 : index
    %391 = vector.load %arg15[%c0_94, %c0_95] : memref<1x1xf32, #tpu.memory_space<vmem>>, vector<1x1xf32>
    %c0_96 = arith.constant 0 : index
    %c0_97 = arith.constant 0 : index
    %392 = vector.load %arg21[%c0_96, %c0_97] : memref<64x128xf32, #tpu.memory_space<vmem>>, vector<64x128xf32>
    %c0_98 = arith.constant 0 : index
    %c0_99 = arith.constant 0 : index
    %393 = vector.load %arg23[%c0_98, %c0_99] : memref<1x128xf32, #tpu.memory_space<vmem>>, vector<1x128xf32>
    %c0_100 = arith.constant 0 : index
    %c0_101 = arith.constant 0 : index
    %394 = vector.load %arg24[%c0_100, %c0_101] : memref<1x32xf32, #tpu.memory_space<vmem>>, vector<1x32xf32>
    %c0_102 = arith.constant 0 : index
    %c0_103 = arith.constant 0 : index
    %395 = vector.load %arg25[%c0_102, %c0_103] : memref<1x32xf32, #tpu.memory_space<vmem>>, vector<1x32xf32>
    %c0_104 = arith.constant 0 : index
    %c0_105 = arith.constant 0 : index
    %396 = vector.load %arg27[%c0_104, %c0_105] : memref<1x1xf32, #tpu.memory_space<vmem>>, vector<1x1xf32>
    %cst_106 = arith.constant 0.000000e+00 : f32
    %397 = vector.broadcast %cst_106 : f32 to vector<8x8xf32>
    %398 = vector.extract_strided_slice %358 {offsets = [0, 0, 0], sizes = [1, 8, 32], strides = [1, 1, 1]} : vector<3x8x32xf32> to vector<1x8x32xf32>
    %399 = vector.shape_cast %398 : vector<1x8x32xf32> to vector<8x32xf32>
    %400 = vector.shape_cast %399 : vector<8x32xf32> to vector<8x1x32xf32>
    %401 = vector.broadcast %400 : vector<8x1x32xf32> to vector<8x8x32xf32>
    %402 = arith.addf %353, %401 : vector<8x8x32xf32>
    %403 = vector.shape_cast %397 : vector<8x8xf32> to vector<8x8x1xf32>
    %404 = vector.shape_cast %376 : vector<1x32xf32> to vector<1x1x32xf32>
    %405 = vector.broadcast %403 : vector<8x8x1xf32> to vector<8x8x32xf32>
    %406 = vector.broadcast %404 : vector<1x1x32xf32> to vector<8x8x32xf32>
    %407 = arith.mulf %405, %406 : vector<8x8x32xf32>
    %408 = arith.addf %402, %407 : vector<8x8x32xf32>
    %409 = vector.shape_cast %389 : vector<1x32xf32> to vector<1x1x32xf32>
    %410 = vector.broadcast %409 : vector<1x1x32xf32> to vector<8x8x32xf32>
    %411 = arith.addf %408, %410 : vector<8x8x32xf32>
    %412 = math.tanh %411 : vector<8x8x32xf32>
    %413 = vector.shape_cast %390 : vector<1x32xf32> to vector<1x1x32xf32>
    %414 = vector.broadcast %413 : vector<1x1x32xf32> to vector<8x8x32xf32>
    %415 = arith.mulf %412, %414 : vector<8x8x32xf32>
    %cst_107 = arith.constant dense<0.000000e+00> : vector<8x8xf32>
    %416 = vector.multi_reduction <add>, %415, %cst_107 [2] : vector<8x8x32xf32> to vector<8x8xf32>
    %417 = vector.broadcast %391 : vector<1x1xf32> to vector<8x8xf32>
    %418 = arith.addf %416, %417 : vector<8x8xf32>
    %cst_108 = arith.constant -1.000000e+30 : f32
    %419 = vector.broadcast %cst_108 : f32 to vector<8x8xf32>
    %420 = arith.select %385, %419, %418 : vector<8x8xi1>, vector<8x8xf32>
    %cst_109 = arith.constant dense<0xFF800000> : vector<8xf32>
    %421 = vector.multi_reduction <maximumf>, %420, %cst_109 [1] : vector<8x8xf32> to vector<8xf32>
    %422 = vector.shape_cast %421 : vector<8xf32> to vector<8x1xf32>
    %423 = vector.broadcast %422 : vector<8x1xf32> to vector<8x8xf32>
    %424 = arith.subf %420, %423 : vector<8x8xf32>
    %425 = math.exp %424 : vector<8x8xf32>
    %cst_110 = arith.constant dense<0.000000e+00> : vector<8xf32>
    %426 = vector.multi_reduction <add>, %425, %cst_110 [1] : vector<8x8xf32> to vector<8xf32>
    %427 = vector.shape_cast %426 : vector<8xf32> to vector<8x1xf32>
    %428 = vector.broadcast %427 : vector<8x1xf32> to vector<8x8xf32>
    %429 = arith.divf %425, %428 : vector<8x8xf32>
    %430 = arith.addf %397, %429 : vector<8x8xf32>
    %431 = vector.shape_cast %429 : vector<8x8xf32> to vector<8x8x1xf32>
    %432 = vector.broadcast %431 : vector<8x8x1xf32> to vector<8x8x32xf32>
    %433 = arith.mulf %432, %352 : vector<8x8x32xf32>
    %cst_111 = arith.constant dense<0.000000e+00> : vector<8x32xf32>
    %434 = vector.multi_reduction <add>, %433, %cst_111 [1] : vector<8x8x32xf32> to vector<8x32xf32>
    %435 = vector.shape_cast %429 : vector<8x8xf32> to vector<8x8x1xf32>
    %436 = vector.broadcast %435 : vector<8x8x1xf32> to vector<8x8x128xf32>
    %437 = arith.mulf %436, %382 : vector<8x8x128xf32>
    %cst_112 = arith.constant dense<0.000000e+00> : vector<8x128xf32>
    %438 = vector.multi_reduction <add>, %437, %cst_112 [1] : vector<8x8x128xf32> to vector<8x128xf32>
    %439 = vector.extract_strided_slice %364 {offsets = [0, 0, 0], sizes = [1, 8, 96], strides = [1, 1, 1]} : vector<3x8x96xf32> to vector<1x8x96xf32>
    %440 = vector.shape_cast %439 : vector<1x8x96xf32> to vector<8x96xf32>
    %cst_113 = arith.constant dense<0.000000e+00> : vector<8x96xf32>
    %441 = tpu.matmul %434, %386, %cst_113 {dimension_numbers = #tpu.dot_dimension_numbers<[1], [0], [0], [1], [0, 0, 1, 1], [], []>} : vector<8x32xf32>, vector<32x96xf32>, vector<8x96xf32> -> vector<8x96xf32>
    %442 = arith.addf %440, %441 : vector<8x96xf32>
    %cst_114 = arith.constant dense<0.000000e+00> : vector<8x96xf32>
    %443 = tpu.matmul %328, %387, %cst_114 {dimension_numbers = #tpu.dot_dimension_numbers<[1], [0], [0], [1], [0, 0, 1, 1], [], []>} : vector<8x32xf32>, vector<32x96xf32>, vector<8x96xf32> -> vector<8x96xf32>
    %444 = vector.broadcast %388 : vector<1x96xf32> to vector<8x96xf32>
    %445 = arith.addf %443, %444 : vector<8x96xf32>
    %446 = vector.extract_strided_slice %442 {offsets = [0, 0], sizes = [8, 32], strides = [1, 1]} : vector<8x96xf32> to vector<8x32xf32>
    %447 = vector.extract_strided_slice %445 {offsets = [0, 0], sizes = [8, 32], strides = [1, 1]} : vector<8x96xf32> to vector<8x32xf32>
    %448 = arith.addf %446, %447 : vector<8x32xf32>
    %449 = arith.negf %448 : vector<8x32xf32>
    %450 = math.exp %449 : vector<8x32xf32>
    %cst_115 = arith.constant 1.000000e+00 : f32
    %451 = vector.broadcast %cst_115 : f32 to vector<8x32xf32>
    %452 = arith.addf %451, %450 : vector<8x32xf32>
    %453 = arith.divf %451, %452 : vector<8x32xf32>
    %454 = vector.extract_strided_slice %442 {offsets = [0, 32], sizes = [8, 32], strides = [1, 1]} : vector<8x96xf32> to vector<8x32xf32>
    %455 = vector.extract_strided_slice %445 {offsets = [0, 32], sizes = [8, 32], strides = [1, 1]} : vector<8x96xf32> to vector<8x32xf32>
    %456 = arith.addf %454, %455 : vector<8x32xf32>
    %457 = arith.negf %456 : vector<8x32xf32>
    %458 = math.exp %457 : vector<8x32xf32>
    %cst_116 = arith.constant 1.000000e+00 : f32
    %459 = vector.broadcast %cst_116 : f32 to vector<8x32xf32>
    %460 = arith.addf %459, %458 : vector<8x32xf32>
    %461 = arith.divf %459, %460 : vector<8x32xf32>
    %462 = vector.extract_strided_slice %442 {offsets = [0, 64], sizes = [8, 32], strides = [1, 1]} : vector<8x96xf32> to vector<8x32xf32>
    %463 = vector.extract_strided_slice %445 {offsets = [0, 64], sizes = [8, 32], strides = [1, 1]} : vector<8x96xf32> to vector<8x32xf32>
    %464 = arith.mulf %453, %463 : vector<8x32xf32>
    %465 = arith.addf %462, %464 : vector<8x32xf32>
    %466 = math.tanh %465 : vector<8x32xf32>
    %cst_117 = arith.constant 1.000000e+00 : f32
    %467 = vector.broadcast %cst_117 : f32 to vector<8x32xf32>
    %468 = arith.subf %467, %461 : vector<8x32xf32>
    %469 = arith.mulf %468, %466 : vector<8x32xf32>
    %470 = arith.mulf %461, %328 : vector<8x32xf32>
    %471 = arith.addf %469, %470 : vector<8x32xf32>
    %472 = tpu.concatenate %471, %434 in 1 : vector<8x32xf32>, vector<8x32xf32> -> vector<8x64xf32>
    %cst_118 = arith.constant dense<0.000000e+00> : vector<8x128xf32>
    %473 = tpu.matmul %472, %392, %cst_118 {dimension_numbers = #tpu.dot_dimension_numbers<[1], [0], [0], [1], [0, 0, 1, 1], [], []>} : vector<8x64xf32>, vector<64x128xf32>, vector<8x128xf32> -> vector<8x128xf32>
    %474 = vector.extract_strided_slice %367 {offsets = [0, 0, 0], sizes = [1, 8, 128], strides = [1, 1, 1]} : vector<3x8x128xf32> to vector<1x8x128xf32>
    %475 = vector.shape_cast %474 : vector<1x8x128xf32> to vector<8x128xf32>
    %476 = arith.addf %473, %475 : vector<8x128xf32>
    %477 = vector.broadcast %393 : vector<1x128xf32> to vector<8x128xf32>
    %478 = arith.addf %476, %477 : vector<8x128xf32>
    %479 = vector.broadcast %394 : vector<1x32xf32> to vector<8x32xf32>
    %480 = arith.mulf %471, %479 : vector<8x32xf32>
    %cst_119 = arith.constant dense<0.000000e+00> : vector<8xf32>
    %481 = vector.multi_reduction <add>, %480, %cst_119 [1] : vector<8x32xf32> to vector<8xf32>
    %482 = vector.shape_cast %481 : vector<8xf32> to vector<8x1xf32>
    %483 = vector.broadcast %395 : vector<1x32xf32> to vector<8x32xf32>
    %484 = arith.mulf %434, %483 : vector<8x32xf32>
    %cst_120 = arith.constant dense<0.000000e+00> : vector<8xf32>
    %485 = vector.multi_reduction <add>, %484, %cst_120 [1] : vector<8x32xf32> to vector<8xf32>
    %486 = vector.shape_cast %485 : vector<8xf32> to vector<8x1xf32>
    %487 = arith.addf %482, %486 : vector<8x1xf32>
    %488 = vector.extract_strided_slice %373 {offsets = [0, 0, 0], sizes = [1, 8, 1], strides = [1, 1, 1]} : vector<3x8x1xf32> to vector<1x8x1xf32>
    %489 = vector.shape_cast %488 : vector<1x8x1xf32> to vector<8x1xf32>
    %490 = arith.addf %487, %489 : vector<8x1xf32>
    %491 = vector.broadcast %396 : vector<1x1xf32> to vector<8x1xf32>
    %492 = arith.addf %490, %491 : vector<8x1xf32>
    %493 = arith.negf %492 : vector<8x1xf32>
    %494 = math.exp %493 : vector<8x1xf32>
    %cst_121 = arith.constant 1.000000e+00 : f32
    %495 = vector.broadcast %cst_121 : f32 to vector<8x1xf32>
    %496 = arith.addf %495, %494 : vector<8x1xf32>
    %497 = arith.divf %495, %496 : vector<8x1xf32>
    %cst_122 = arith.constant 1.000000e-03 : f32
    %cst_123 = arith.constant 9.990000e-01 : f32
    %498 = vector.broadcast %cst_122 : f32 to vector<8x1xf32>
    %499 = arith.maximumf %498, %497 : vector<8x1xf32>
    %500 = vector.broadcast %cst_123 : f32 to vector<8x1xf32>
    %501 = arith.minimumf %500, %499 : vector<8x1xf32>
    %502 = vector.broadcast %501 : vector<8x1xf32> to vector<8x128xf32>
    %503 = arith.mulf %502, %478 : vector<8x128xf32>
    %cst_124 = arith.constant 1.000000e+00 : f32
    %504 = vector.broadcast %cst_124 : f32 to vector<8x1xf32>
    %505 = arith.subf %504, %501 : vector<8x1xf32>
    %506 = vector.broadcast %505 : vector<8x1xf32> to vector<8x128xf32>
    %507 = arith.mulf %506, %438 : vector<8x128xf32>
    %508 = arith.addf %503, %507 : vector<8x128xf32>
    %c0_125 = arith.constant 0 : index
    %c0_126 = arith.constant 0 : index
    %c0_127 = arith.constant 0 : index
    %509 = vector.load %arg28[%c0_125, %c0_126, %c0_127] : memref<8x4x128xf32, #tpu.memory_space<vmem>>, vector<8x1x128xf32>
    %510 = vector.shape_cast %509 : vector<8x1x128xf32> to vector<8x128xf32>
    %511 = vector.shape_cast %508 : vector<8x128xf32> to vector<8x1x128xf32>
    tpu.vector_store %arg28[%c0_125, %c0_126, %c0_127], %511 {strides = array<i32>} : memref<8x4x128xf32, #tpu.memory_space<vmem>>, vector<8x1x128xf32>,
    %512 = vector.extract_strided_slice %358 {offsets = [1, 0, 0], sizes = [1, 8, 32], strides = [1, 1, 1]} : vector<3x8x32xf32> to vector<1x8x32xf32>
    %513 = vector.shape_cast %512 : vector<1x8x32xf32> to vector<8x32xf32>
    %514 = vector.shape_cast %513 : vector<8x32xf32> to vector<8x1x32xf32>
    %515 = vector.broadcast %514 : vector<8x1x32xf32> to vector<8x8x32xf32>
    %516 = arith.addf %353, %515 : vector<8x8x32xf32>
    %517 = vector.shape_cast %430 : vector<8x8xf32> to vector<8x8x1xf32>
    %518 = vector.shape_cast %376 : vector<1x32xf32> to vector<1x1x32xf32>
    %519 = vector.broadcast %517 : vector<8x8x1xf32> to vector<8x8x32xf32>
    %520 = vector.broadcast %518 : vector<1x1x32xf32> to vector<8x8x32xf32>
    %521 = arith.mulf %519, %520 : vector<8x8x32xf32>
    %522 = arith.addf %516, %521 : vector<8x8x32xf32>
    %523 = vector.shape_cast %389 : vector<1x32xf32> to vector<1x1x32xf32>
    %524 = vector.broadcast %523 : vector<1x1x32xf32> to vector<8x8x32xf32>
    %525 = arith.addf %522, %524 : vector<8x8x32xf32>
    %526 = math.tanh %525 : vector<8x8x32xf32>
    %527 = vector.shape_cast %390 : vector<1x32xf32> to vector<1x1x32xf32>
    %528 = vector.broadcast %527 : vector<1x1x32xf32> to vector<8x8x32xf32>
    %529 = arith.mulf %526, %528 : vector<8x8x32xf32>
    %cst_128 = arith.constant dense<0.000000e+00> : vector<8x8xf32>
    %530 = vector.multi_reduction <add>, %529, %cst_128 [2] : vector<8x8x32xf32> to vector<8x8xf32>
    %531 = vector.broadcast %391 : vector<1x1xf32> to vector<8x8xf32>
    %532 = arith.addf %530, %531 : vector<8x8xf32>
    %cst_129 = arith.constant -1.000000e+30 : f32
    %533 = vector.broadcast %cst_129 : f32 to vector<8x8xf32>
    %534 = arith.select %385, %533, %532 : vector<8x8xi1>, vector<8x8xf32>
    %cst_130 = arith.constant dense<0xFF800000> : vector<8xf32>
    %535 = vector.multi_reduction <maximumf>, %534, %cst_130 [1] : vector<8x8xf32> to vector<8xf32>
    %536 = vector.shape_cast %535 : vector<8xf32> to vector<8x1xf32>
    %537 = vector.broadcast %536 : vector<8x1xf32> to vector<8x8xf32>
    %538 = arith.subf %534, %537 : vector<8x8xf32>
    %539 = math.exp %538 : vector<8x8xf32>
    %cst_131 = arith.constant dense<0.000000e+00> : vector<8xf32>
    %540 = vector.multi_reduction <add>, %539, %cst_131 [1] : vector<8x8xf32> to vector<8xf32>
    %541 = vector.shape_cast %540 : vector<8xf32> to vector<8x1xf32>
    %542 = vector.broadcast %541 : vector<8x1xf32> to vector<8x8xf32>
    %543 = arith.divf %539, %542 : vector<8x8xf32>
    %544 = arith.addf %430, %543 : vector<8x8xf32>
    %545 = vector.shape_cast %543 : vector<8x8xf32> to vector<8x8x1xf32>
    %546 = vector.broadcast %545 : vector<8x8x1xf32> to vector<8x8x32xf32>
    %547 = arith.mulf %546, %352 : vector<8x8x32xf32>
    %cst_132 = arith.constant dense<0.000000e+00> : vector<8x32xf32>
    %548 = vector.multi_reduction <add>, %547, %cst_132 [1] : vector<8x8x32xf32> to vector<8x32xf32>
    %549 = vector.shape_cast %543 : vector<8x8xf32> to vector<8x8x1xf32>
    %550 = vector.broadcast %549 : vector<8x8x1xf32> to vector<8x8x128xf32>
    %551 = arith.mulf %550, %382 : vector<8x8x128xf32>
    %cst_133 = arith.constant dense<0.000000e+00> : vector<8x128xf32>
    %552 = vector.multi_reduction <add>, %551, %cst_133 [1] : vector<8x8x128xf32> to vector<8x128xf32>
    %553 = vector.extract_strided_slice %364 {offsets = [1, 0, 0], sizes = [1, 8, 96], strides = [1, 1, 1]} : vector<3x8x96xf32> to vector<1x8x96xf32>
    %554 = vector.shape_cast %553 : vector<1x8x96xf32> to vector<8x96xf32>
    %cst_134 = arith.constant dense<0.000000e+00> : vector<8x96xf32>
    %555 = tpu.matmul %548, %386, %cst_134 {dimension_numbers = #tpu.dot_dimension_numbers<[1], [0], [0], [1], [0, 0, 1, 1], [], []>} : vector<8x32xf32>, vector<32x96xf32>, vector<8x96xf32> -> vector<8x96xf32>
    %556 = arith.addf %554, %555 : vector<8x96xf32>
    %cst_135 = arith.constant dense<0.000000e+00> : vector<8x96xf32>
    %557 = tpu.matmul %471, %387, %cst_135 {dimension_numbers = #tpu.dot_dimension_numbers<[1], [0], [0], [1], [0, 0, 1, 1], [], []>} : vector<8x32xf32>, vector<32x96xf32>, vector<8x96xf32> -> vector<8x96xf32>
    %558 = vector.broadcast %388 : vector<1x96xf32> to vector<8x96xf32>
    %559 = arith.addf %557, %558 : vector<8x96xf32>
    %560 = vector.extract_strided_slice %556 {offsets = [0, 0], sizes = [8, 32], strides = [1, 1]} : vector<8x96xf32> to vector<8x32xf32>
    %561 = vector.extract_strided_slice %559 {offsets = [0, 0], sizes = [8, 32], strides = [1, 1]} : vector<8x96xf32> to vector<8x32xf32>
    %562 = arith.addf %560, %561 : vector<8x32xf32>
    %563 = arith.negf %562 : vector<8x32xf32>
    %564 = math.exp %563 : vector<8x32xf32>
    %cst_136 = arith.constant 1.000000e+00 : f32
    %565 = vector.broadcast %cst_136 : f32 to vector<8x32xf32>
    %566 = arith.addf %565, %564 : vector<8x32xf32>
    %567 = arith.divf %565, %566 : vector<8x32xf32>
    %568 = vector.extract_strided_slice %556 {offsets = [0, 32], sizes = [8, 32], strides = [1, 1]} : vector<8x96xf32> to vector<8x32xf32>
    %569 = vector.extract_strided_slice %559 {offsets = [0, 32], sizes = [8, 32], strides = [1, 1]} : vector<8x96xf32> to vector<8x32xf32>
    %570 = arith.addf %568, %569 : vector<8x32xf32>
    %571 = arith.negf %570 : vector<8x32xf32>
    %572 = math.exp %571 : vector<8x32xf32>
    %cst_137 = arith.constant 1.000000e+00 : f32
    %573 = vector.broadcast %cst_137 : f32 to vector<8x32xf32>
    %574 = arith.addf %573, %572 : vector<8x32xf32>
    %575 = arith.divf %573, %574 : vector<8x32xf32>
    %576 = vector.extract_strided_slice %556 {offsets = [0, 64], sizes = [8, 32], strides = [1, 1]} : vector<8x96xf32> to vector<8x32xf32>
    %577 = vector.extract_strided_slice %559 {offsets = [0, 64], sizes = [8, 32], strides = [1, 1]} : vector<8x96xf32> to vector<8x32xf32>
    %578 = arith.mulf %567, %577 : vector<8x32xf32>
    %579 = arith.addf %576, %578 : vector<8x32xf32>
    %580 = math.tanh %579 : vector<8x32xf32>
    %cst_138 = arith.constant 1.000000e+00 : f32
    %581 = vector.broadcast %cst_138 : f32 to vector<8x32xf32>
    %582 = arith.subf %581, %575 : vector<8x32xf32>
    %583 = arith.mulf %582, %580 : vector<8x32xf32>
    %584 = arith.mulf %575, %471 : vector<8x32xf32>
    %585 = arith.addf %583, %584 : vector<8x32xf32>
    %586 = tpu.concatenate %585, %548 in 1 : vector<8x32xf32>, vector<8x32xf32> -> vector<8x64xf32>
    %cst_139 = arith.constant dense<0.000000e+00> : vector<8x128xf32>
    %587 = tpu.matmul %586, %392, %cst_139 {dimension_numbers = #tpu.dot_dimension_numbers<[1], [0], [0], [1], [0, 0, 1, 1], [], []>} : vector<8x64xf32>, vector<64x128xf32>, vector<8x128xf32> -> vector<8x128xf32>
    %588 = vector.extract_strided_slice %367 {offsets = [1, 0, 0], sizes = [1, 8, 128], strides = [1, 1, 1]} : vector<3x8x128xf32> to vector<1x8x128xf32>
    %589 = vector.shape_cast %588 : vector<1x8x128xf32> to vector<8x128xf32>
    %590 = arith.addf %587, %589 : vector<8x128xf32>
    %591 = vector.broadcast %393 : vector<1x128xf32> to vector<8x128xf32>
    %592 = arith.addf %590, %591 : vector<8x128xf32>
    %593 = vector.broadcast %394 : vector<1x32xf32> to vector<8x32xf32>
    %594 = arith.mulf %585, %593 : vector<8x32xf32>
    %cst_140 = arith.constant dense<0.000000e+00> : vector<8xf32>
    %595 = vector.multi_reduction <add>, %594, %cst_140 [1] : vector<8x32xf32> to vector<8xf32>
    %596 = vector.shape_cast %595 : vector<8xf32> to vector<8x1xf32>
    %597 = vector.broadcast %395 : vector<1x32xf32> to vector<8x32xf32>
    %598 = arith.mulf %548, %597 : vector<8x32xf32>
    %cst_141 = arith.constant dense<0.000000e+00> : vector<8xf32>
    %599 = vector.multi_reduction <add>, %598, %cst_141 [1] : vector<8x32xf32> to vector<8xf32>
    %600 = vector.shape_cast %599 : vector<8xf32> to vector<8x1xf32>
    %601 = arith.addf %596, %600 : vector<8x1xf32>
    %602 = vector.extract_strided_slice %373 {offsets = [1, 0, 0], sizes = [1, 8, 1], strides = [1, 1, 1]} : vector<3x8x1xf32> to vector<1x8x1xf32>
    %603 = vector.shape_cast %602 : vector<1x8x1xf32> to vector<8x1xf32>
    %604 = arith.addf %601, %603 : vector<8x1xf32>
    %605 = vector.broadcast %396 : vector<1x1xf32> to vector<8x1xf32>
    %606 = arith.addf %604, %605 : vector<8x1xf32>
    %607 = arith.negf %606 : vector<8x1xf32>
    %608 = math.exp %607 : vector<8x1xf32>
    %cst_142 = arith.constant 1.000000e+00 : f32
    %609 = vector.broadcast %cst_142 : f32 to vector<8x1xf32>
    %610 = arith.addf %609, %608 : vector<8x1xf32>
    %611 = arith.divf %609, %610 : vector<8x1xf32>
    %cst_143 = arith.constant 1.000000e-03 : f32
    %cst_144 = arith.constant 9.990000e-01 : f32
    %612 = vector.broadcast %cst_143 : f32 to vector<8x1xf32>
    %613 = arith.maximumf %612, %611 : vector<8x1xf32>
    %614 = vector.broadcast %cst_144 : f32 to vector<8x1xf32>
    %615 = arith.minimumf %614, %613 : vector<8x1xf32>
    %616 = vector.broadcast %615 : vector<8x1xf32> to vector<8x128xf32>
    %617 = arith.mulf %616, %592 : vector<8x128xf32>
    %cst_145 = arith.constant 1.000000e+00 : f32
    %618 = vector.broadcast %cst_145 : f32 to vector<8x1xf32>
    %619 = arith.subf %618, %615 : vector<8x1xf32>
    %620 = vector.broadcast %619 : vector<8x1xf32> to vector<8x128xf32>
    %621 = arith.mulf %620, %552 : vector<8x128xf32>
    %622 = arith.addf %617, %621 : vector<8x128xf32>
    %c0_146 = arith.constant 0 : index
    %c1 = arith.constant 1 : index
    %c0_147 = arith.constant 0 : index
    %623 = vector.load %arg28[%c0_146, %c1, %c0_147] : memref<8x4x128xf32, #tpu.memory_space<vmem>>, vector<8x1x128xf32>
    %624 = vector.shape_cast %623 : vector<8x1x128xf32> to vector<8x128xf32>
    %625 = vector.shape_cast %622 : vector<8x128xf32> to vector<8x1x128xf32>
    tpu.vector_store %arg28[%c0_146, %c1, %c0_147], %625 {strides = array<i32>} : memref<8x4x128xf32, #tpu.memory_space<vmem>>, vector<8x1x128xf32>,
    %626 = vector.extract_strided_slice %358 {offsets = [2, 0, 0], sizes = [1, 8, 32], strides = [1, 1, 1]} : vector<3x8x32xf32> to vector<1x8x32xf32>
    %627 = vector.shape_cast %626 : vector<1x8x32xf32> to vector<8x32xf32>
    %628 = vector.shape_cast %627 : vector<8x32xf32> to vector<8x1x32xf32>
    %629 = vector.broadcast %628 : vector<8x1x32xf32> to vector<8x8x32xf32>
    %630 = arith.addf %353, %629 : vector<8x8x32xf32>
    %631 = vector.shape_cast %544 : vector<8x8xf32> to vector<8x8x1xf32>
    %632 = vector.shape_cast %376 : vector<1x32xf32> to vector<1x1x32xf32>
    %633 = vector.broadcast %631 : vector<8x8x1xf32> to vector<8x8x32xf32>
    %634 = vector.broadcast %632 : vector<1x1x32xf32> to vector<8x8x32xf32>
    %635 = arith.mulf %633, %634 : vector<8x8x32xf32>
    %636 = arith.addf %630, %635 : vector<8x8x32xf32>
    %637 = vector.shape_cast %389 : vector<1x32xf32> to vector<1x1x32xf32>
    %638 = vector.broadcast %637 : vector<1x1x32xf32> to vector<8x8x32xf32>
    %639 = arith.addf %636, %638 : vector<8x8x32xf32>
    %640 = math.tanh %639 : vector<8x8x32xf32>
    %641 = vector.shape_cast %390 : vector<1x32xf32> to vector<1x1x32xf32>
    %642 = vector.broadcast %641 : vector<1x1x32xf32> to vector<8x8x32xf32>
    %643 = arith.mulf %640, %642 : vector<8x8x32xf32>
    %cst_148 = arith.constant dense<0.000000e+00> : vector<8x8xf32>
    %644 = vector.multi_reduction <add>, %643, %cst_148 [2] : vector<8x8x32xf32> to vector<8x8xf32>
    %645 = vector.broadcast %391 : vector<1x1xf32> to vector<8x8xf32>
    %646 = arith.addf %644, %645 : vector<8x8xf32>
    %cst_149 = arith.constant -1.000000e+30 : f32
    %647 = vector.broadcast %cst_149 : f32 to vector<8x8xf32>
    %648 = arith.select %385, %647, %646 : vector<8x8xi1>, vector<8x8xf32>
    %cst_150 = arith.constant dense<0xFF800000> : vector<8xf32>
    %649 = vector.multi_reduction <maximumf>, %648, %cst_150 [1] : vector<8x8xf32> to vector<8xf32>
    %650 = vector.shape_cast %649 : vector<8xf32> to vector<8x1xf32>
    %651 = vector.broadcast %650 : vector<8x1xf32> to vector<8x8xf32>
    %652 = arith.subf %648, %651 : vector<8x8xf32>
    %653 = math.exp %652 : vector<8x8xf32>
    %cst_151 = arith.constant dense<0.000000e+00> : vector<8xf32>
    %654 = vector.multi_reduction <add>, %653, %cst_151 [1] : vector<8x8xf32> to vector<8xf32>
    %655 = vector.shape_cast %654 : vector<8xf32> to vector<8x1xf32>
    %656 = vector.broadcast %655 : vector<8x1xf32> to vector<8x8xf32>
    %657 = arith.divf %653, %656 : vector<8x8xf32>
    %658 = arith.addf %544, %657 : vector<8x8xf32>
    %659 = vector.shape_cast %657 : vector<8x8xf32> to vector<8x8x1xf32>
    %660 = vector.broadcast %659 : vector<8x8x1xf32> to vector<8x8x32xf32>
    %661 = arith.mulf %660, %352 : vector<8x8x32xf32>
    %cst_152 = arith.constant dense<0.000000e+00> : vector<8x32xf32>
    %662 = vector.multi_reduction <add>, %661, %cst_152 [1] : vector<8x8x32xf32> to vector<8x32xf32>
    %663 = vector.shape_cast %657 : vector<8x8xf32> to vector<8x8x1xf32>
    %664 = vector.broadcast %663 : vector<8x8x1xf32> to vector<8x8x128xf32>
    %665 = arith.mulf %664, %382 : vector<8x8x128xf32>
    %cst_153 = arith.constant dense<0.000000e+00> : vector<8x128xf32>
    %666 = vector.multi_reduction <add>, %665, %cst_153 [1] : vector<8x8x128xf32> to vector<8x128xf32>
    %667 = vector.extract_strided_slice %364 {offsets = [2, 0, 0], sizes = [1, 8, 96], strides = [1, 1, 1]} : vector<3x8x96xf32> to vector<1x8x96xf32>
    %668 = vector.shape_cast %667 : vector<1x8x96xf32> to vector<8x96xf32>
    %cst_154 = arith.constant dense<0.000000e+00> : vector<8x96xf32>
    %669 = tpu.matmul %662, %386, %cst_154 {dimension_numbers = #tpu.dot_dimension_numbers<[1], [0], [0], [1], [0, 0, 1, 1], [], []>} : vector<8x32xf32>, vector<32x96xf32>, vector<8x96xf32> -> vector<8x96xf32>
    %670 = arith.addf %668, %669 : vector<8x96xf32>
    %cst_155 = arith.constant dense<0.000000e+00> : vector<8x96xf32>
    %671 = tpu.matmul %585, %387, %cst_155 {dimension_numbers = #tpu.dot_dimension_numbers<[1], [0], [0], [1], [0, 0, 1, 1], [], []>} : vector<8x32xf32>, vector<32x96xf32>, vector<8x96xf32> -> vector<8x96xf32>
    %672 = vector.broadcast %388 : vector<1x96xf32> to vector<8x96xf32>
    %673 = arith.addf %671, %672 : vector<8x96xf32>
    %674 = vector.extract_strided_slice %670 {offsets = [0, 0], sizes = [8, 32], strides = [1, 1]} : vector<8x96xf32> to vector<8x32xf32>
    %675 = vector.extract_strided_slice %673 {offsets = [0, 0], sizes = [8, 32], strides = [1, 1]} : vector<8x96xf32> to vector<8x32xf32>
    %676 = arith.addf %674, %675 : vector<8x32xf32>
    %677 = arith.negf %676 : vector<8x32xf32>
    %678 = math.exp %677 : vector<8x32xf32>
    %cst_156 = arith.constant 1.000000e+00 : f32
    %679 = vector.broadcast %cst_156 : f32 to vector<8x32xf32>
    %680 = arith.addf %679, %678 : vector<8x32xf32>
    %681 = arith.divf %679, %680 : vector<8x32xf32>
    %682 = vector.extract_strided_slice %670 {offsets = [0, 32], sizes = [8, 32], strides = [1, 1]} : vector<8x96xf32> to vector<8x32xf32>
    %683 = vector.extract_strided_slice %673 {offsets = [0, 32], sizes = [8, 32], strides = [1, 1]} : vector<8x96xf32> to vector<8x32xf32>
    %684 = arith.addf %682, %683 : vector<8x32xf32>
    %685 = arith.negf %684 : vector<8x32xf32>
    %686 = math.exp %685 : vector<8x32xf32>
    %cst_157 = arith.constant 1.000000e+00 : f32
    %687 = vector.broadcast %cst_157 : f32 to vector<8x32xf32>
    %688 = arith.addf %687, %686 : vector<8x32xf32>
    %689 = arith.divf %687, %688 : vector<8x32xf32>
    %690 = vector.extract_strided_slice %670 {offsets = [0, 64], sizes = [8, 32], strides = [1, 1]} : vector<8x96xf32> to vector<8x32xf32>
    %691 = vector.extract_strided_slice %673 {offsets = [0, 64], sizes = [8, 32], strides = [1, 1]} : vector<8x96xf32> to vector<8x32xf32>
    %692 = arith.mulf %681, %691 : vector<8x32xf32>
    %693 = arith.addf %690, %692 : vector<8x32xf32>
    %694 = math.tanh %693 : vector<8x32xf32>
    %cst_158 = arith.constant 1.000000e+00 : f32
    %695 = vector.broadcast %cst_158 : f32 to vector<8x32xf32>
    %696 = arith.subf %695, %689 : vector<8x32xf32>
    %697 = arith.mulf %696, %694 : vector<8x32xf32>
    %698 = arith.mulf %689, %585 : vector<8x32xf32>
    %699 = arith.addf %697, %698 : vector<8x32xf32>
    %700 = tpu.concatenate %699, %662 in 1 : vector<8x32xf32>, vector<8x32xf32> -> vector<8x64xf32>
    %cst_159 = arith.constant dense<0.000000e+00> : vector<8x128xf32>
    %701 = tpu.matmul %700, %392, %cst_159 {dimension_numbers = #tpu.dot_dimension_numbers<[1], [0], [0], [1], [0, 0, 1, 1], [], []>} : vector<8x64xf32>, vector<64x128xf32>, vector<8x128xf32> -> vector<8x128xf32>
    %702 = vector.extract_strided_slice %367 {offsets = [2, 0, 0], sizes = [1, 8, 128], strides = [1, 1, 1]} : vector<3x8x128xf32> to vector<1x8x128xf32>
    %703 = vector.shape_cast %702 : vector<1x8x128xf32> to vector<8x128xf32>
    %704 = arith.addf %701, %703 : vector<8x128xf32>
    %705 = vector.broadcast %393 : vector<1x128xf32> to vector<8x128xf32>
    %706 = arith.addf %704, %705 : vector<8x128xf32>
    %707 = vector.broadcast %394 : vector<1x32xf32> to vector<8x32xf32>
    %708 = arith.mulf %699, %707 : vector<8x32xf32>
    %cst_160 = arith.constant dense<0.000000e+00> : vector<8xf32>
    %709 = vector.multi_reduction <add>, %708, %cst_160 [1] : vector<8x32xf32> to vector<8xf32>
    %710 = vector.shape_cast %709 : vector<8xf32> to vector<8x1xf32>
    %711 = vector.broadcast %395 : vector<1x32xf32> to vector<8x32xf32>
    %712 = arith.mulf %662, %711 : vector<8x32xf32>
    %cst_161 = arith.constant dense<0.000000e+00> : vector<8xf32>
    %713 = vector.multi_reduction <add>, %712, %cst_161 [1] : vector<8x32xf32> to vector<8xf32>
    %714 = vector.shape_cast %713 : vector<8xf32> to vector<8x1xf32>
    %715 = arith.addf %710, %714 : vector<8x1xf32>
    %716 = vector.extract_strided_slice %373 {offsets = [2, 0, 0], sizes = [1, 8, 1], strides = [1, 1, 1]} : vector<3x8x1xf32> to vector<1x8x1xf32>
    %717 = vector.shape_cast %716 : vector<1x8x1xf32> to vector<8x1xf32>
    %718 = arith.addf %715, %717 : vector<8x1xf32>
    %719 = vector.broadcast %396 : vector<1x1xf32> to vector<8x1xf32>
    %720 = arith.addf %718, %719 : vector<8x1xf32>
    %721 = arith.negf %720 : vector<8x1xf32>
    %722 = math.exp %721 : vector<8x1xf32>
    %cst_162 = arith.constant 1.000000e+00 : f32
    %723 = vector.broadcast %cst_162 : f32 to vector<8x1xf32>
    %724 = arith.addf %723, %722 : vector<8x1xf32>
    %725 = arith.divf %723, %724 : vector<8x1xf32>
    %cst_163 = arith.constant 1.000000e-03 : f32
    %cst_164 = arith.constant 9.990000e-01 : f32
    %726 = vector.broadcast %cst_163 : f32 to vector<8x1xf32>
    %727 = arith.maximumf %726, %725 : vector<8x1xf32>
    %728 = vector.broadcast %cst_164 : f32 to vector<8x1xf32>
    %729 = arith.minimumf %728, %727 : vector<8x1xf32>
    %730 = vector.broadcast %729 : vector<8x1xf32> to vector<8x128xf32>
    %731 = arith.mulf %730, %706 : vector<8x128xf32>
    %cst_165 = arith.constant 1.000000e+00 : f32
    %732 = vector.broadcast %cst_165 : f32 to vector<8x1xf32>
    %733 = arith.subf %732, %729 : vector<8x1xf32>
    %734 = vector.broadcast %733 : vector<8x1xf32> to vector<8x128xf32>
    %735 = arith.mulf %734, %666 : vector<8x128xf32>
    %736 = arith.addf %731, %735 : vector<8x128xf32>
    %c0_166 = arith.constant 0 : index
    %c2 = arith.constant 2 : index
    %c0_167 = arith.constant 0 : index
    %737 = vector.load %arg28[%c0_166, %c2, %c0_167] : memref<8x4x128xf32, #tpu.memory_space<vmem>>, vector<8x1x128xf32>
    %738 = vector.shape_cast %737 : vector<8x1x128xf32> to vector<8x128xf32>
    %739 = vector.shape_cast %736 : vector<8x128xf32> to vector<8x1x128xf32>
    tpu.vector_store %arg28[%c0_166, %c2, %c0_167], %739 {strides = array<i32>} : memref<8x4x128xf32, #tpu.memory_space<vmem>>, vector<8x1x128xf32>,
    %cst_168 = arith.constant 0.000000e+00 : f32
    %740 = vector.broadcast %cst_168 : f32 to vector<8x128xf32>
    %c0_169 = arith.constant 0 : index
    %c3 = arith.constant 3 : index
    %c0_170 = arith.constant 0 : index
    %741 = vector.load %arg28[%c0_169, %c3, %c0_170] : memref<8x4x128xf32, #tpu.memory_space<vmem>>, vector<8x1x128xf32>
    %742 = vector.shape_cast %741 : vector<8x1x128xf32> to vector<8x128xf32>
    %743 = vector.shape_cast %740 : vector<8x128xf32> to vector<8x1x128xf32>
    tpu.vector_store %arg28[%c0_169, %c3, %c0_170], %743 {strides = array<i32>} : memref<8x4x128xf32, #tpu.memory_space<vmem>>, vector<8x1x128xf32>,
    %c0_171 = arith.constant 0 : index
    %c0_172 = arith.constant 0 : index
    %744 = vector.load %arg29[%c0_171, %c0_172] : memref<8x8xf32, #tpu.memory_space<vmem>>, vector<8x8xf32>
    tpu.vector_store %arg29[%c0_171, %c0_172], %657 {strides = array<i32>} : memref<8x8xf32, #tpu.memory_space<vmem>>, vector<8x8xf32>,
    %c0_173 = arith.constant 0 : index
    %c0_174 = arith.constant 0 : index
    %745 = vector.load %arg30[%c0_173, %c0_174] : memref<8x8xf32, #tpu.memory_space<vmem>>, vector<8x8xf32>
    tpu.vector_store %arg30[%c0_173, %c0_174], %658 {strides = array<i32>} : memref<8x8xf32, #tpu.memory_space<vmem>>, vector<8x8xf32>,
    return
  }
}

</mosaic_0001>

<llo_original>
// kernel: pgn_forward.1
$region0: #{pgn_forward.1}
  #allocation0 [shape = 'u32[]', space=smem, size = 0x4, offset = 0x4, fixed_abs, tag = 'smem constant byte address 0x4 - core index']
  #allocation1 [shape = 'u32[144,128]{1,0:T(1,128)}', space=vmem, size = 0x12000, scoped, tag = 'internal scratch']
  #allocation2 [shape = 'f32[1,1]{1,0:T(1,128)S(1)}', space=vmem, size = 0x200, scoped, tag = 'scoped memory for pgn_forward.1']
  #allocation3 [shape = 'f32[1,1]{1,0:T(1,128)S(1)}', space=vmem, size = 0x200, scoped, tag = 'scoped memory for pgn_forward.1']
  %s0 = inlined_call_operand.smem [shape: u32[31], index: -1, kind: input, shape index: {}]
  %s1 = sld [smem:[%s0]]
  %s2 = scalar_lea.smem %s0, 1
  %s3 = sld [smem:[%s2]]
  %s4 = scalar_lea.smem %s0, 2
  %s5 = sld [smem:[%s4]]
  %s6 = scalar_lea.smem %s0, 3
  %s7 = sld [smem:[%s6]]
  %s8 = scalar_lea.smem %s0, 4
  %s9 = sld [smem:[%s8]]
  %s10 = scalar_lea.smem %s0, 5
  %s11 = sld [smem:[%s10]]
  %s12 = scalar_lea.smem %s0, 6
  %s13 = sld [smem:[%s12]]
  %s14 = scalar_lea.smem %s0, 7
  %s15 = sld [smem:[%s14]]
  %s16 = scalar_lea.smem %s0, 8
  %s17 = sld [smem:[%s16]]
  %s18 = scalar_lea.smem %s0, 9
  %s19 = sld [smem:[%s18]]
  %s20 = scalar_lea.smem %s0, 10
  %s21 = sld [smem:[%s20]]
  %s22 = scalar_lea.smem %s0, 11
  %s23 = sld [smem:[%s22]]
  %s24 = scalar_lea.smem %s0, 12
  %s25 = sld [smem:[%s24]]
  %s26 = scalar_lea.smem %s0, 13
  %s27 = sld [smem:[%s26]]
  %s28 = scalar_lea.smem %s0, 14
  %s29 = sld [smem:[%s28]]
  %s30 = scalar_lea.smem %s0, 15
  %s31 = sld [smem:[%s30]]
  %s32 = scalar_lea.smem %s0, 16
  %s33 = sld [smem:[%s32]]
  %s34 = scalar_lea.smem %s0, 17
  %s35 = sld [smem:[%s34]]
  %s36 = scalar_lea.smem %s0, 18
  %s37 = sld [smem:[%s36]]
  %s38 = scalar_lea.smem %s0, 19
  %s39 = sld [smem:[%s38]]
  %s40 = scalar_lea.smem %s0, 20
  %s41 = sld [smem:[%s40]]
  %s42 = scalar_lea.smem %s0, 21
  %s43 = sld [smem:[%s42]]
  %s44 = scalar_lea.smem %s0, 22
  %s45 = sld [smem:[%s44]]
  %s46 = scalar_lea.smem %s0, 23
  %s47 = sld [smem:[%s46]]
  %s48 = scalar_lea.smem %s0, 24
  %s49 = sld [smem:[%s48]]
  %s50 = scalar_lea.smem %s0, 25
  %s51 = sld [smem:[%s50]]
  %s52 = scalar_lea.smem %s0, 26
  %s53 = sld [smem:[%s52]]
  %s54 = scalar_lea.smem %s0, 27
  %s55 = sld [smem:[%s54]]
  %s56 = scalar_lea.smem %s0, 28
  %s57 = sld [smem:[%s56]]
  %s58 = scalar_lea.smem %s0, 29
  %s59 = sld [smem:[%s58]]
  %s60 = scalar_lea.smem %s0, 30
  %s61 = sld [smem:[%s60]]
  %62 = xla_tuple %s57, %s59, %s61
  %s63 = sld [smem:[#allocation0]]
  $region138: #{pgn_forward.1} parent=0
    _
  %s65 = ssub.s32 1, %s63
  %s66 = scalar_select 0, %s65, %s63
  %v67 = vstv %s31
  %68 = vst [vmem:[#allocation2] sm:$0x1] %v67
  %v69 = vstv %s55
  %70 = vst [vmem:[#allocation3] sm:$0x1] %v69
  // Predicated region
  $region2: #{pgn_forward.1} parent=0 // pred_check
    _
  $region3: #{pgn_forward.1} parent=0 // pred_check_branch
    %72 = sbr.rel (0) target = $region5
  $region4: #{pgn_forward.1} parent=0 // pred_region
    _
  $region5: #{pgn_forward.1} parent=0 // pred_fallthru
    _
  // Predicated region
  $region6: #{pgn_forward.1} parent=0 // pred_check
    _
  $region7: #{pgn_forward.1} parent=0 // pred_check_branch
    %74 = sbr.rel (0) target = $region9
  $region8: #{pgn_forward.1} parent=0 // pred_region
    _
  $region9: #{pgn_forward.1} parent=0 // pred_fallthru
    _
  // Predicated region
  $region10: #{pgn_forward.1} parent=0 // pred_check
    _
  $region11: #{pgn_forward.1} parent=0 // pred_check_branch
    %76 = sbr.rel (0) target = $region13
  $region12: #{pgn_forward.1} parent=0 // pred_region
    _
  $region13: #{pgn_forward.1} parent=0 // pred_fallthru
    _
  // Predicated region
  $region14: #{pgn_forward.1} parent=0 // pred_check
    _
  $region15: #{pgn_forward.1} parent=0 // pred_check_branch
    %78 = sbr.rel (0) target = $region17
  $region16: #{pgn_forward.1} parent=0 // pred_region
    _
  $region17: #{pgn_forward.1} parent=0 // pred_fallthru
    _
  // Predicated region
  $region18: #{pgn_forward.1} parent=0 // pred_check
    _
  $region19: #{pgn_forward.1} parent=0 // pred_check_branch
    %80 = sbr.rel (0) target = $region21
  $region20: #{pgn_forward.1} parent=0 // pred_region
    _
  $region21: #{pgn_forward.1} parent=0 // pred_fallthru
    _
  // Predicated region
  $region22: #{pgn_forward.1} parent=0 // pred_check
    _
  $region23: #{pgn_forward.1} parent=0 // pred_check_branch
    %82 = sbr.rel (0) target = $region25
  $region24: #{pgn_forward.1} parent=0 // pred_region
    _
  $region25: #{pgn_forward.1} parent=0 // pred_fallthru
    _
  // Predicated region
  $region26: #{pgn_forward.1} parent=0 // pred_check
    _
  $region27: #{pgn_forward.1} parent=0 // pred_check_branch
    %84 = sbr.rel (0) target = $region29
  $region28: #{pgn_forward.1} parent=0 // pred_region
    _
  $region29: #{pgn_forward.1} parent=0 // pred_fallthru
    _
  // Predicated region
  $region30: #{pgn_forward.1} parent=0 // pred_check
    _
  $region31: #{pgn_forward.1} parent=0 // pred_check_branch
    %86 = sbr.rel (0) target = $region33
  $region32: #{pgn_forward.1} parent=0 // pred_region
    _
  $region33: #{pgn_forward.1} parent=0 // pred_fallthru
    _
  // Predicated region
  $region34: #{pgn_forward.1} parent=0 // pred_check
    _
  $region35: #{pgn_forward.1} parent=0 // pred_check_branch
    %88 = sbr.rel (0) target = $region37
  $region36: #{pgn_forward.1} parent=0 // pred_region
    _
  $region37: #{pgn_forward.1} parent=0 // pred_fallthru
    _
  // Predicated region
  $region38: #{pgn_forward.1} parent=0 // pred_check
    _
  $region39: #{pgn_forward.1} parent=0 // pred_check_branch
    %90 = sbr.rel (0) target = $region41
  $region40: #{pgn_forward.1} parent=0 // pred_region
    _
  $region41: #{pgn_forward.1} parent=0 // pred_fallthru
    _
  // Predicated region
  $region42: #{pgn_forward.1} parent=0 // pred_check
    _
  $region43: #{pgn_forward.1} parent=0 // pred_check_branch
    %92 = sbr.rel (0) target = $region45
  $region44: #{pgn_forward.1} parent=0 // pred_region
    _
  $region45: #{pgn_forward.1} parent=0 // pred_fallthru
    _
  // Predicated region
  $region46: #{pgn_forward.1} parent=0 // pred_check
    _
  $region47: #{pgn_forward.1} parent=0 // pred_check_branch
    %94 = sbr.rel (0) target = $region49
  $region48: #{pgn_forward.1} parent=0 // pred_region
    _
  $region49: #{pgn_forward.1} parent=0 // pred_fallthru
    _
  // Predicated region
  $region50: #{pgn_forward.1} parent=0 // pred_check
    _
  $region51: #{pgn_forward.1} parent=0 // pred_check_branch
    %96 = sbr.rel (0) target = $region53
  $region52: #{pgn_forward.1} parent=0 // pred_region
    _
  $region53: #{pgn_forward.1} parent=0 // pred_fallthru
    _
  // Predicated region
  $region54: #{pgn_forward.1} parent=0 // pred_check
    _
  $region55: #{pgn_forward.1} parent=0 // pred_check_branch
    %98 = sbr.rel (0) target = $region57
  $region56: #{pgn_forward.1} parent=0 // pred_region
    _
  $region57: #{pgn_forward.1} parent=0 // pred_fallthru
    _
  // Predicated region
  $region58: #{pgn_forward.1} parent=0 // pred_check
    _
  $region59: #{pgn_forward.1} parent=0 // pred_check_branch
    %100 = sbr.rel (0) target = $region61
  $region60: #{pgn_forward.1} parent=0 // pred_region
    _
  $region61: #{pgn_forward.1} parent=0 // pred_fallthru
    _
  // Predicated region
  $region62: #{pgn_forward.1} parent=0 // pred_check
    _
  $region63: #{pgn_forward.1} parent=0 // pred_check_branch
    %102 = sbr.rel (0) target = $region65
  $region64: #{pgn_forward.1} parent=0 // pred_region
    _
  $region65: #{pgn_forward.1} parent=0 // pred_fallthru
    _
  // Predicated region
  $region66: #{pgn_forward.1} parent=0 // pred_check
    _
  $region67: #{pgn_forward.1} parent=0 // pred_check_branch
    %104 = sbr.rel (0) target = $region69
  $region68: #{pgn_forward.1} parent=0 // pred_region
    _
  $region69: #{pgn_forward.1} parent=0 // pred_fallthru
    _
  // Predicated region
  $region70: #{pgn_forward.1} parent=0 // pred_check
    _
  $region71: #{pgn_forward.1} parent=0 // pred_check_branch
    %106 = sbr.rel (0) target = $region73
  $region72: #{pgn_forward.1} parent=0 // pred_region
    _
  $region73: #{pgn_forward.1} parent=0 // pred_fallthru
    _
  // Predicated region
  $region74: #{pgn_forward.1} parent=0 // pred_check
    _
  $region75: #{pgn_forward.1} parent=0 // pred_check_branch
    %108 = sbr.rel (0) target = $region77
  $region76: #{pgn_forward.1} parent=0 // pred_region
    _
  $region77: #{pgn_forward.1} parent=0 // pred_fallthru
    _
  // Predicated region
  $region78: #{pgn_forward.1} parent=0 // pred_check
    _
  $region79: #{pgn_forward.1} parent=0 // pred_check_branch
    %110 = sbr.rel (0) target = $region81
  $region80: #{pgn_forward.1} parent=0 // pred_region
    _
  $region81: #{pgn_forward.1} parent=0 // pred_fallthru
    _
  // Predicated region
  $region82: #{pgn_forward.1} parent=0 // pred_check
    _
  $region83: #{pgn_forward.1} parent=0 // pred_check_branch
    %112 = sbr.rel (0) target = $region85
  $region84: #{pgn_forward.1} parent=0 // pred_region
    _
  $region85: #{pgn_forward.1} parent=0 // pred_fallthru
    _
  // Predicated region
  $region86: #{pgn_forward.1} parent=0 // pred_check
    _
  $region87: #{pgn_forward.1} parent=0 // pred_check_branch
    %114 = sbr.rel (0) target = $region89
  $region88: #{pgn_forward.1} parent=0 // pred_region
    _
  $region89: #{pgn_forward.1} parent=0 // pred_fallthru
    _
  // Predicated region
  $region90: #{pgn_forward.1} parent=0 // pred_check
    _
  $region91: #{pgn_forward.1} parent=0 // pred_check_branch
    %116 = sbr.rel (0) target = $region93
  $region92: #{pgn_forward.1} parent=0 // pred_region
    _
  $region93: #{pgn_forward.1} parent=0 // pred_fallthru
    _
  // Predicated region
  $region94: #{pgn_forward.1} parent=0 // pred_check
    _
  $region95: #{pgn_forward.1} parent=0 // pred_check_branch
    %118 = sbr.rel (0) target = $region97
  $region96: #{pgn_forward.1} parent=0 // pred_region
    _
  $region97: #{pgn_forward.1} parent=0 // pred_fallthru
    _
  // Predicated region
  $region98: #{pgn_forward.1} parent=0 // pred_check
    _
  $region99: #{pgn_forward.1} parent=0 // pred_check_branch
    %120 = sbr.rel (0) target = $region101
  $region100: #{pgn_forward.1} parent=0 // pred_region
    _
  $region101: #{pgn_forward.1} parent=0 // pred_fallthru
    _
  // Predicated region
  $region102: #{pgn_forward.1} parent=0 // pred_check
    _
  $region103: #{pgn_forward.1} parent=0 // pred_check_branch
    %122 = sbr.rel (0) target = $region105
  $region104: #{pgn_forward.1} parent=0 // pred_region
    _
  $region105: #{pgn_forward.1} parent=0 // pred_fallthru
    _
  // Predicated region
  $region106: #{pgn_forward.1} parent=0 // pred_check
    _
  $region107: #{pgn_forward.1} parent=0 // pred_check_branch
    %124 = sbr.rel (0) target = $region109
  $region108: #{pgn_forward.1} parent=0 // pred_region
    _
  $region109: #{pgn_forward.1} parent=0 // pred_fallthru
    _
  // Predicated region
  $region110: #{pgn_forward.1} parent=0 // pred_check
    _
  $region111: #{pgn_forward.1} parent=0 // pred_check_branch
    %126 = sbr.rel (0) target = $region113
  $region112: #{pgn_forward.1} parent=0 // pred_region
    _
  $region113: #{pgn_forward.1} parent=0 // pred_fallthru
    _
  %v127 = vld [vmem:[%s3] sm:$0xff]
  %v128 = vld [vmem:[%s1] sm:$0xff]
  %v129 = vld [vmem:[%s5] sm:$0xff]
  %v130 = vld [vmem:[%s5 + $0x8] sm:$0xff]
  %v131 = vld [vmem:[%s5 + $0x10] sm:$0xff]
  %v132 = vld [vmem:[%s5 + $0x18] sm:$0xff]
  %v133 = vld [vmem:[%s5 + $0x20] sm:$0xff]
  %v134 = vld [vmem:[%s5 + $0x28] sm:$0xff]
  %v135 = vld [vmem:[%s5 + $0x30] sm:$0xff]
  %v136 = vld [vmem:[%s5 + $0x38] sm:$0xff]
  %v137 = vld [vmem:[%s9] sm:$0xff]
  %v138 = vld [vmem:[%s9 + $0x8] sm:$0xff]
  %v139 = vld [vmem:[%s13] sm:$0x1]
  %v141 = vlaneseq
  %v142 = vshrl.u32 %v141, 7
  %v143 = vsub.s32 0, %v142
  %v144 = vrot.slane %v139, %v143
  %vm146 = vcmask 130048
  %v148 = vsel %vm146, %v129, 0
  %v151 = vsel %vm146, %v130, 0
  %v154 = vsel %vm146, %v131, 0
  %v157 = vsel %vm146, %v132, 0
  %v160 = vsel %vm146, %v133, 0
  %v163 = vsel %vm146, %v134, 0
  %v166 = vsel %vm146, %v135, 0
  %v169 = vsel %vm146, %v136, 0
  %171 = vmatprep.subr.mxu0 0.0
  %172 = vmatpush1.msra.mxu0 %v137
  %173 = vmatprep.subr.mxu0 0.0
  %174 = vmatpush1.msra.mxu0 %v138
  %175 = vmatprep.subr.mxu0 0.0
  %176 = vmatpush1.msra.mxu0 0.0
  %177 = vmatprep.subr.mxu0 0.0
  %178 = vmatpush1.msra.mxu0 0.0
  %179 = vmatprep.subr.mxu0 0.0
  %180 = vmatpush1.msra.mxu0 0.0
  %181 = vmatprep.subr.mxu0 0.0
  %182 = vmatpush1.msra.mxu0 0.0
  %183 = vmatprep.subr.mxu0 0.0
  %184 = vmatpush1.msra.mxu0 0.0
  %185 = vmatprep.subr.mxu0 0.0
  %186 = vmatpush1.msra.mxu0 0.0
  %187 = vmatprep.subr.mxu0 0.0
  %188 = vmatpush1.msra.mxu0 0.0
  %189 = vmatprep.subr.mxu0 0.0
  %190 = vmatpush1.msra.mxu0 0.0
  %191 = vmatprep.subr.mxu0 0.0
  %192 = vmatpush1.msra.mxu0 0.0
  %193 = vmatprep.subr.mxu0 0.0
  %194 = vmatpush1.msra.mxu0 0.0
  %195 = vmatprep.subr.mxu0 0.0
  %196 = vmatpush1.msra.mxu0 0.0
  %197 = vmatprep.subr.mxu0 0.0
  %198 = vmatpush1.msra.mxu0 0.0
  %199 = vmatprep.subr.mxu0 0.0
  %200 = vmatpush1.msra.mxu0 0.0
  %201 = vmatprep.subr.mxu0 0.0
  %202 = vmatpush1.msra.mxu0 0.0
  %203 = vmatprep.subr.mxu0 0.0
  %204 = vmatpush1.msra.mxu0 0.0
  %205 = vmatprep.subr.mxu0 0.0
  %206 = vmatpush1.msra.mxu0 0.0
  %207 = vmatprep.subr.mxu0 0.0
  %208 = vmatpush1.msra.mxu0 0.0
  %209 = vmatprep.subr.mxu0 0.0
  %210 = vmatpush1.msra.mxu0 0.0
  %211 = vmatprep.subr.mxu0 0.0
  %212 = vmatpush1.msra.mxu0 0.0
  %213 = vmatprep.subr.mxu0 0.0
  %214 = vmatpush1.msra.mxu0 0.0
  %215 = vmatprep.subr.mxu0 0.0
  %216 = vmatpush1.msra.mxu0 0.0
  %217 = vmatprep.subr.mxu0 0.0
  %218 = vmatpush1.msra.mxu0 0.0
  %219 = vmatprep.subr.mxu0 0.0
  %220 = vmatpush1.msra.mxu0 0.0
  %221 = vmatprep.subr.mxu0 0.0
  %222 = vmatpush1.msra.mxu0 0.0
  %223 = vmatprep.subr.mxu0 0.0
  %224 = vmatpush1.msra.mxu0 0.0
  %225 = vmatprep.subr.mxu0 0.0
  %226 = vmatpush1.msra.mxu0 0.0
  %227 = vmatprep.subr.mxu0 0.0
  %228 = vmatpush1.msra.mxu0 0.0
  %229 = vmatprep.subr.mxu0 0.0
  %230 = vmatpush1.msra.mxu0 0.0
  %231 = vmatprep.subr.mxu0 0.0
  %232 = vmatpush1.msra.mxu0 0.0
  %233 = vmatprep.subr.mxu0 0.0
  %234 = vmatpush1.msra.mxu0 0.0
  %235 = vmatprep.mubr.f32.mxu0 0.0
  %236 = vmatmul.mubr.f32.gmra.mrb[0].mxu0 %v148
  %v237 = vpop.f32.mrb[0].mxu0
  %v238 = vadd.f32 %v144, %v237
  %v239 = vpop.f32.mrb[0].mxu0
  %240 = vmatprep.mubr.f32.mxu0 0.0
  %241 = vmatmul.mubr.f32.gmra.mrb[0].mxu0 %v151
  %v242 = vpop.f32.mrb[0].mxu0
  %v243 = vadd.f32 %v144, %v242
  %v244 = vpop.f32.mrb[0].mxu0
  %245 = vmatprep.mubr.f32.mxu0 0.0
  %246 = vmatmul.mubr.f32.gmra.mrb[0].mxu0 %v154
  %v247 = vpop.f32.mrb[0].mxu0
  %v248 = vadd.f32 %v144, %v247
  %v249 = vpop.f32.mrb[0].mxu0
  %250 = vmatprep.mubr.f32.mxu0 0.0
  %251 = vmatmul.mubr.f32.gmra.mrb[0].mxu0 %v157
  %v252 = vpop.f32.mrb[0].mxu0
  %v253 = vadd.f32 %v144, %v252
  %v254 = vpop.f32.mrb[0].mxu0
  %255 = vmatprep.mubr.f32.mxu0 0.0
  %256 = vmatmul.mubr.f32.gmra.mrb[0].mxu0 %v160
  %v257 = vpop.f32.mrb[0].mxu0
  %v258 = vadd.f32 %v144, %v257
  %v259 = vpop.f32.mrb[0].mxu0
  %260 = vmatprep.mubr.f32.mxu0 0.0
  %261 = vmatmul.mubr.f32.gmra.mrb[0].mxu0 %v163
  %v262 = vpop.f32.mrb[0].mxu0
  %v263 = vadd.f32 %v144, %v262
  %v264 = vpop.f32.mrb[0].mxu0
  %265 = vmatprep.mubr.f32.mxu0 0.0
  %266 = vmatmul.mubr.f32.gmra.mrb[0].mxu0 %v166
  %v267 = vpop.f32.mrb[0].mxu0
  %v268 = vadd.f32 %v144, %v267
  %v269 = vpop.f32.mrb[0].mxu0
  %270 = vmatprep.mubr.f32.mxu0 0.0
  %271 = vmatmul.mubr.f32.gmra.mrb[0].mxu0 %v169
  %v272 = vpop.f32.mrb[0].mxu0
  %v273 = vadd.f32 %v144, %v272
  %v274 = vpop.f32.mrb[0].mxu0
  %275 = vdwg.mxu0
  %v276 = vld [vmem:[%s11] sm:$0xff]
  %v277 = vld [vmem:[%s11 + $0x8] sm:$0xff]
  %v278 = vld [vmem:[%s11 + $0x10] sm:$0xff]
  %v279 = vld [vmem:[%s11 + $0x18] sm:$0xff]
  %v280 = vld [vmem:[%s15] sm:$0x1]
  %v282 = vlaneseq
  %v283 = vshrl.u32 %v282, 7
  %v284 = vsub.s32 0, %v283
  %v285 = vrot.slane %v280, %v284
  %vm287 = vcmask 261120
  %v289 = vsel %vm287, 0.0, 0
  %291 = vmatprep.subr.mxu0 0.0
  %292 = vmatpush1.msra.mxu0 %v276
  %293 = vmatprep.subr.mxu0 0.0
  %294 = vmatpush1.msra.mxu0 %v277
  %295 = vmatprep.subr.mxu0 0.0
  %296 = vmatpush1.msra.mxu0 %v278
  %297 = vmatprep.subr.mxu0 0.0
  %298 = vmatpush1.msra.mxu0 %v279
  %299 = vmatprep.subr.mxu0 0.0
  %300 = vmatpush1.msra.mxu0 0.0
  %301 = vmatprep.subr.mxu0 0.0
  %302 = vmatpush1.msra.mxu0 0.0
  %303 = vmatprep.subr.mxu0 0.0
  %304 = vmatpush1.msra.mxu0 0.0
  %305 = vmatprep.subr.mxu0 0.0
  %306 = vmatpush1.msra.mxu0 0.0
  %307 = vmatprep.subr.mxu0 0.0
  %308 = vmatpush1.msra.mxu0 0.0
  %309 = vmatprep.subr.mxu0 0.0
  %310 = vmatpush1.msra.mxu0 0.0
  %311 = vmatprep.subr.mxu0 0.0
  %312 = vmatpush1.msra.mxu0 0.0
  %313 = vmatprep.subr.mxu0 0.0
  %314 = vmatpush1.msra.mxu0 0.0
  %315 = vmatprep.subr.mxu0 0.0
  %316 = vmatpush1.msra.mxu0 0.0
  %317 = vmatprep.subr.mxu0 0.0
  %318 = vmatpush1.msra.mxu0 0.0
  %319 = vmatprep.subr.mxu0 0.0
  %320 = vmatpush1.msra.mxu0 0.0
  %321 = vmatprep.subr.mxu0 0.0
  %322 = vmatpush1.msra.mxu0 0.0
  %323 = vmatprep.subr.mxu0 0.0
  %324 = vmatpush1.msra.mxu0 0.0
  %325 = vmatprep.subr.mxu0 0.0
  %326 = vmatpush1.msra.mxu0 0.0
  %327 = vmatprep.subr.mxu0 0.0
  %328 = vmatpush1.msra.mxu0 0.0
  %329 = vmatprep.subr.mxu0 0.0
  %330 = vmatpush1.msra.mxu0 0.0
  %331 = vmatprep.subr.mxu0 0.0
  %332 = vmatpush1.msra.mxu0 0.0
  %333 = vmatprep.subr.mxu0 0.0
  %334 = vmatpush1.msra.mxu0 0.0
  %335 = vmatprep.subr.mxu0 0.0
  %336 = vmatpush1.msra.mxu0 0.0
  %337 = vmatprep.subr.mxu0 0.0
  %338 = vmatpush1.msra.mxu0 0.0
  %339 = vmatprep.subr.mxu0 0.0
  %340 = vmatpush1.msra.mxu0 0.0
  %341 = vmatprep.subr.mxu0 0.0
  %342 = vmatpush1.msra.mxu0 0.0
  %343 = vmatprep.subr.mxu0 0.0
  %344 = vmatpush1.msra.mxu0 0.0
  %345 = vmatprep.subr.mxu0 0.0
  %346 = vmatpush1.msra.mxu0 0.0
  %347 = vmatprep.subr.mxu0 0.0
  %348 = vmatpush1.msra.mxu0 0.0
  %349 = vmatprep.subr.mxu0 0.0
  %350 = vmatpush1.msra.mxu0 0.0
  %351 = vmatprep.subr.mxu0 0.0
  %352 = vmatpush1.msra.mxu0 0.0
  %353 = vmatprep.subr.mxu0 0.0
  %354 = vmatpush1.msra.mxu0 0.0
  %355 = vmatprep.mubr.f32.mxu0 0.0
  %356 = vmatmul.mubr.f32.gmra.mrb[0].mxu0 %v289
  %v357 = vpop.f32.mrb[0].mxu0
  %v358 = vadd.f32 %v285, %v357
  %v359 = vpop.f32.mrb[0].mxu0
  %360 = vdwg.mxu0
  %v362 = vrot.slane %v358, 1
  %v363 = vrot.slane %v358, 2
  %v364 = vrot.slane %v358, 3
  %v365 = vrot.slane %v358, 4
  %v366 = vrot.slane %v358, 5
  %v367 = vrot.slane %v358, 6
  %v368 = vrot.slane %v358, 7
  %v377 = vadd.f32 %v238, %v358
  %v378 = vadd.f32 %v243, %v362
  %v379 = vadd.f32 %v248, %v363
  %v380 = vadd.f32 %v253, %v364
  %v381 = vadd.f32 %v258, %v365
  %v382 = vadd.f32 %v263, %v366
  %v383 = vadd.f32 %v268, %v367
  %v384 = vadd.f32 %v273, %v368
  %v385 = vxor.u32 %v377, 2147483648
  %v386 = vxor.u32 %v378, 2147483648
  %v387 = vxor.u32 %v379, 2147483648
  %v388 = vxor.u32 %v380, 2147483648
  %v389 = vxor.u32 %v381, 2147483648
  %v390 = vxor.u32 %v382, 2147483648
  %v391 = vxor.u32 %v383, 2147483648
  %v392 = vxor.u32 %v384, 2147483648
  %v393 = vmul.f32 %v385, 1.442695
  %v394 = vpow.pop %v393
  %v395 = vmul.f32 %v386, 1.442695
  %v396 = vpow.pop %v395
  %v397 = vmul.f32 %v387, 1.442695
  %v398 = vpow.pop %v397
  %v399 = vmul.f32 %v388, 1.442695
  %v400 = vpow.pop %v399
  %v401 = vmul.f32 %v389, 1.442695
  %v402 = vpow.pop %v401
  %v403 = vmul.f32 %v390, 1.442695
  %v404 = vpow.pop %v403
  %v405 = vmul.f32 %v391, 1.442695
  %v406 = vpow.pop %v405
  %v407 = vmul.f32 %v392, 1.442695
  %v408 = vpow.pop %v407
  %v409 = vadd.f32 %v394, 1.0
  %v410 = vadd.f32 %v396, 1.0
  %v411 = vadd.f32 %v398, 1.0
  %v412 = vadd.f32 %v400, 1.0
  %v413 = vadd.f32 %v402, 1.0
  %v414 = vadd.f32 %v404, 1.0
  %v415 = vadd.f32 %v406, 1.0
  %v416 = vadd.f32 %v408, 1.0
  %v417 = vrcp.pop %v409
  %v418 = vmul.f32 1.0, %v417
  %v419 = vrcp.pop %v410
  %v420 = vmul.f32 1.0, %v419
  %v421 = vrcp.pop %v411
  %v422 = vmul.f32 1.0, %v421
  %v423 = vrcp.pop %v412
  %v424 = vmul.f32 1.0, %v423
  %v425 = vrcp.pop %v413
  %v426 = vmul.f32 1.0, %v425
  %v427 = vrcp.pop %v414
  %v428 = vmul.f32 1.0, %v427
  %v429 = vrcp.pop %v415
  %v430 = vmul.f32 1.0, %v429
  %v431 = vrcp.pop %v416
  %v432 = vmul.f32 1.0, %v431
  %433 = vrot.lane.b32.xlu0 %v358, 64
  %v434 = vpop.permute.xlu0 %433
  %435 = vrot.lane.b32.xlu0 %v362, 64
  %v436 = vpop.permute.xlu0 %435
  %437 = vrot.lane.b32.xlu0 %v363, 64
  %v438 = vpop.permute.xlu0 %437
  %439 = vrot.lane.b32.xlu0 %v364, 64
  %v440 = vpop.permute.xlu0 %439
  %441 = vrot.lane.b32.xlu0 %v365, 64
  %v442 = vpop.permute.xlu0 %441
  %443 = vrot.lane.b32.xlu0 %v366, 64
  %v444 = vpop.permute.xlu0 %443
  %445 = vrot.lane.b32.xlu0 %v367, 64
  %v446 = vpop.permute.xlu0 %445
  %447 = vrot.lane.b32.xlu0 %v368, 64
  %v448 = vpop.permute.xlu0 %447
  %v457 = vmul.f32 %v418, %v434
  %v458 = vmul.f32 %v420, %v436
  %v459 = vmul.f32 %v422, %v438
  %v460 = vmul.f32 %v424, %v440
  %v461 = vmul.f32 %v426, %v442
  %v462 = vmul.f32 %v428, %v444
  %v463 = vmul.f32 %v430, %v446
  %v464 = vmul.f32 %v432, %v448
  %473 = vrot.lane.b32.xlu0 %v457, 64
  %v474 = vpop.permute.xlu0 %473
  %475 = vrot.lane.b32.xlu0 %v458, 64
  %v476 = vpop.permute.xlu0 %475
  %477 = vrot.lane.b32.xlu0 %v459, 64
  %v478 = vpop.permute.xlu0 %477
  %479 = vrot.lane.b32.xlu0 %v460, 64
  %v480 = vpop.permute.xlu0 %479
  %481 = vrot.lane.b32.xlu0 %v461, 64
  %v482 = vpop.permute.xlu0 %481
  %483 = vrot.lane.b32.xlu0 %v462, 64
  %v484 = vpop.permute.xlu0 %483
  %485 = vrot.lane.b32.xlu0 %v463, 64
  %v486 = vpop.permute.xlu0 %485
  %487 = vrot.lane.b32.xlu0 %v464, 64
  %v488 = vpop.permute.xlu0 %487
  %v497 = vadd.f32 %v238, %v474
  %v498 = vadd.f32 %v243, %v476
  %v499 = vadd.f32 %v248, %v478
  %v500 = vadd.f32 %v253, %v480
  %v501 = vadd.f32 %v258, %v482
  %v502 = vadd.f32 %v263, %v484
  %v503 = vadd.f32 %v268, %v486
  %v504 = vadd.f32 %v273, %v488
  %v505 = vtanh.pop %v497
  %v506 = vtanh.pop %v498
  %v507 = vtanh.pop %v499
  %v508 = vtanh.pop %v500
  %v509 = vtanh.pop %v501
  %v510 = vtanh.pop %v502
  %v511 = vtanh.pop %v503
  %v512 = vtanh.pop %v504
  %v513 = vsub.f32 1.0, %v418
  %v514 = vsub.f32 1.0, %v420
  %v515 = vsub.f32 1.0, %v422
  %v516 = vsub.f32 1.0, %v424
  %v517 = vsub.f32 1.0, %v426
  %v518 = vsub.f32 1.0, %v428
  %v519 = vsub.f32 1.0, %v430
  %v520 = vsub.f32 1.0, %v432
  %529 = vrot.lane.b32.xlu0 %v505, 96
  %v530 = vpop.permute.xlu0 %529
  %531 = vrot.lane.b32.xlu0 %v506, 96
  %v532 = vpop.permute.xlu0 %531
  %533 = vrot.lane.b32.xlu0 %v507, 96
  %v534 = vpop.permute.xlu0 %533
  %535 = vrot.lane.b32.xlu0 %v508, 96
  %v536 = vpop.permute.xlu0 %535
  %537 = vrot.lane.b32.xlu0 %v509, 96
  %v538 = vpop.permute.xlu0 %537
  %539 = vrot.lane.b32.xlu0 %v510, 96
  %v540 = vpop.permute.xlu0 %539
  %541 = vrot.lane.b32.xlu0 %v511, 96
  %v542 = vpop.permute.xlu0 %541
  %543 = vrot.lane.b32.xlu0 %v512, 96
  %v544 = vpop.permute.xlu0 %543
  %v553 = vmul.f32 %v513, %v530
  %v554 = vmul.f32 %v514, %v532
  %v555 = vmul.f32 %v515, %v534
  %v556 = vmul.f32 %v516, %v536
  %v557 = vmul.f32 %v517, %v538
  %v558 = vmul.f32 %v518, %v540
  %v559 = vmul.f32 %v519, %v542
  %v560 = vmul.f32 %v520, %v544
  %v561 = vmul.f32 %v418, 0.0
  %v562 = vmul.f32 %v420, 0.0
  %v563 = vmul.f32 %v422, 0.0
  %v564 = vmul.f32 %v424, 0.0
  %v565 = vmul.f32 %v426, 0.0
  %v566 = vmul.f32 %v428, 0.0
  %v567 = vmul.f32 %v430, 0.0
  %v568 = vmul.f32 %v432, 0.0
  %v569 = vadd.f32 %v553, %v561
  %v570 = vadd.f32 %v554, %v562
  %v571 = vadd.f32 %v555, %v563
  %v572 = vadd.f32 %v556, %v564
  %v573 = vadd.f32 %v557, %v565
  %v574 = vadd.f32 %v558, %v566
  %v575 = vadd.f32 %v559, %v567
  %v576 = vadd.f32 %v560, %v568
  %vm577 = vcmp.gt.s32.totalorder %v127, 0
  %v578 = vsel %vm577, 1, 0
  %579 = vset.pattern.permute.xlu0 0
  %580 = vperm.xlu0 %579, %v578
  %v581 = vpop.permute.xlu0 %580
  %vm582 = vcmp.eq.s32.totalorder %v581, 1
  %v591 = vrot.slane %v570, 7
  %vm592 = vcmask 1041409
  %v593 = vsel %vm592, %v591, %v569
  %v594 = vrot.slane %v571, 6
  %vm595 = vcmask 1042434
  %v596 = vsel %vm595, %v594, %v593
  %v597 = vrot.slane %v572, 5
  %vm598 = vcmask 1043459
  %v599 = vsel %vm598, %v597, %v596
  %v600 = vrot.slane %v573, 4
  %vm601 = vcmask 1044484
  %v602 = vsel %vm601, %v600, %v599
  %v603 = vrot.slane %v574, 3
  %vm604 = vcmask 1045509
  %v605 = vsel %vm604, %v603, %v602
  %v606 = vrot.slane %v575, 2
  %vm607 = vcmask 1046534
  %v608 = vsel %vm607, %v606, %v605
  %v609 = vrot.slane %v576, 1
  %vm610 = vcmask 1047559
  %v611 = vsel %vm610, %v609, %v608
  %612 = vrot.lane.b32.xlu0 %v611, 96
  %v613 = vpop.permute.xlu0 %612
  %v615 = vsel %vm582, %v613, 0.0
  %v617 = vsel %vm287, %v615, 0
  %619 = vmatprep.subr.mxu0 0.0
  %620 = vmatpush1.msra.mxu0 %v276
  %621 = vmatprep.subr.mxu0 0.0
  %622 = vmatpush1.msra.mxu0 %v277
  %623 = vmatprep.subr.mxu0 0.0
  %624 = vmatpush1.msra.mxu0 %v278
  %625 = vmatprep.subr.mxu0 0.0
  %626 = vmatpush1.msra.mxu0 %v279
  %627 = vmatprep.subr.mxu0 0.0
  %628 = vmatpush1.msra.mxu0 0.0
  %629 = vmatprep.subr.mxu0 0.0
  %630 = vmatpush1.msra.mxu0 0.0
  %631 = vmatprep.subr.mxu0 0.0
  %632 = vmatpush1.msra.mxu0 0.0
  %633 = vmatprep.subr.mxu0 0.0
  %634 = vmatpush1.msra.mxu0 0.0
  %635 = vmatprep.subr.mxu0 0.0
  %636 = vmatpush1.msra.mxu0 0.0
  %637 = vmatprep.subr.mxu0 0.0
  %638 = vmatpush1.msra.mxu0 0.0
  %639 = vmatprep.subr.mxu0 0.0
  %640 = vmatpush1.msra.mxu0 0.0
  %641 = vmatprep.subr.mxu0 0.0
  %642 = vmatpush1.msra.mxu0 0.0
  %643 = vmatprep.subr.mxu0 0.0
  %644 = vmatpush1.msra.mxu0 0.0
  %645 = vmatprep.subr.mxu0 0.0
  %646 = vmatpush1.msra.mxu0 0.0
  %647 = vmatprep.subr.mxu0 0.0
  %648 = vmatpush1.msra.mxu0 0.0
  %649 = vmatprep.subr.mxu0 0.0
  %650 = vmatpush1.msra.mxu0 0.0
  %651 = vmatprep.subr.mxu0 0.0
  %652 = vmatpush1.msra.mxu0 0.0
  %653 = vmatprep.subr.mxu0 0.0
  %654 = vmatpush1.msra.mxu0 0.0
  %655 = vmatprep.subr.mxu0 0.0
  %656 = vmatpush1.msra.mxu0 0.0
  %657 = vmatprep.subr.mxu0 0.0
  %658 = vmatpush1.msra.mxu0 0.0
  %659 = vmatprep.subr.mxu0 0.0
  %660 = vmatpush1.msra.mxu0 0.0
  %661 = vmatprep.subr.mxu0 0.0
  %662 = vmatpush1.msra.mxu0 0.0
  %663 = vmatprep.subr.mxu0 0.0
  %664 = vmatpush1.msra.mxu0 0.0
  %665 = vmatprep.subr.mxu0 0.0
  %666 = vmatpush1.msra.mxu0 0.0
  %667 = vmatprep.subr.mxu0 0.0
  %668 = vmatpush1.msra.mxu0 0.0
  %669 = vmatprep.subr.mxu0 0.0
  %670 = vmatpush1.msra.mxu0 0.0
  %671 = vmatprep.subr.mxu0 0.0
  %672 = vmatpush1.msra.mxu0 0.0
  %673 = vmatprep.subr.mxu0 0.0
  %674 = vmatpush1.msra.mxu0 0.0
  %675 = vmatprep.subr.mxu0 0.0
  %676 = vmatpush1.msra.mxu0 0.0
  %677 = vmatprep.subr.mxu0 0.0
  %678 = vmatpush1.msra.mxu0 0.0
  %679 = vmatprep.subr.mxu0 0.0
  %680 = vmatpush1.msra.mxu0 0.0
  %681 = vmatprep.subr.mxu0 0.0
  %682 = vmatpush1.msra.mxu0 0.0
  %683 = vmatprep.mubr.f32.mxu0 0.0
  %684 = vmatmul.mubr.f32.gmra.mrb[0].mxu0 %v617
  %v685 = vpop.f32.mrb[0].mxu0
  %v686 = vadd.f32 %v285, %v685
  %v687 = vpop.f32.mrb[0].mxu0
  %688 = vdwg.mxu0
  %v690 = vrot.slane %v686, 7
  %v691 = vrot.slane %v686, 1
  %v692 = vrot.slane %v686, 2
  %v693 = vrot.slane %v686, 3
  %v694 = vrot.slane %v686, 4
  %v695 = vrot.slane %v686, 5
  %v696 = vrot.slane %v686, 6
  %v705 = vadd.f32 %v238, %v690
  %v706 = vadd.f32 %v243, %v686
  %v707 = vadd.f32 %v248, %v691
  %v708 = vadd.f32 %v253, %v692
  %v709 = vadd.f32 %v258, %v693
  %v710 = vadd.f32 %v263, %v694
  %v711 = vadd.f32 %v268, %v695
  %v712 = vadd.f32 %v273, %v696
  %v713 = vxor.u32 %v705, 2147483648
  %v714 = vxor.u32 %v706, 2147483648
  %v715 = vxor.u32 %v707, 2147483648
  %v716 = vxor.u32 %v708, 2147483648
  %v717 = vxor.u32 %v709, 2147483648
  %v718 = vxor.u32 %v710, 2147483648
  %v719 = vxor.u32 %v711, 2147483648
  %v720 = vxor.u32 %v712, 2147483648
  %v721 = vmul.f32 %v713, 1.442695
  %v722 = vpow.pop %v721
  %v723 = vmul.f32 %v714, 1.442695
  %v724 = vpow.pop %v723
  %v725 = vmul.f32 %v715, 1.442695
  %v726 = vpow.pop %v725
  %v727 = vmul.f32 %v716, 1.442695
  %v728 = vpow.pop %v727
  %v729 = vmul.f32 %v717, 1.442695
  %v730 = vpow.pop %v729
  %v731 = vmul.f32 %v718, 1.442695
  %v732 = vpow.pop %v731
  %v733 = vmul.f32 %v719, 1.442695
  %v734 = vpow.pop %v733
  %v735 = vmul.f32 %v720, 1.442695
  %v736 = vpow.pop %v735
  %v737 = vadd.f32 %v722, 1.0
  %v738 = vadd.f32 %v724, 1.0
  %v739 = vadd.f32 %v726, 1.0
  %v740 = vadd.f32 %v728, 1.0
  %v741 = vadd.f32 %v730, 1.0
  %v742 = vadd.f32 %v732, 1.0
  %v743 = vadd.f32 %v734, 1.0
  %v744 = vadd.f32 %v736, 1.0
  %v745 = vrcp.pop %v737
  %v746 = vmul.f32 1.0, %v745
  %v747 = vrcp.pop %v738
  %v748 = vmul.f32 1.0, %v747
  %v749 = vrcp.pop %v739
  %v750 = vmul.f32 1.0, %v749
  %v751 = vrcp.pop %v740
  %v752 = vmul.f32 1.0, %v751
  %v753 = vrcp.pop %v741
  %v754 = vmul.f32 1.0, %v753
  %v755 = vrcp.pop %v742
  %v756 = vmul.f32 1.0, %v755
  %v757 = vrcp.pop %v743
  %v758 = vmul.f32 1.0, %v757
  %v759 = vrcp.pop %v744
  %v760 = vmul.f32 1.0, %v759
  %761 = vrot.lane.b32.xlu0 %v690, 64
  %v762 = vpop.permute.xlu0 %761
  %763 = vrot.lane.b32.xlu0 %v686, 64
  %v764 = vpop.permute.xlu0 %763
  %765 = vrot.lane.b32.xlu0 %v691, 64
  %v766 = vpop.permute.xlu0 %765
  %767 = vrot.lane.b32.xlu0 %v692, 64
  %v768 = vpop.permute.xlu0 %767
  %769 = vrot.lane.b32.xlu0 %v693, 64
  %v770 = vpop.permute.xlu0 %769
  %771 = vrot.lane.b32.xlu0 %v694, 64
  %v772 = vpop.permute.xlu0 %771
  %773 = vrot.lane.b32.xlu0 %v695, 64
  %v774 = vpop.permute.xlu0 %773
  %775 = vrot.lane.b32.xlu0 %v696, 64
  %v776 = vpop.permute.xlu0 %775
  %v785 = vmul.f32 %v746, %v762
  %v786 = vmul.f32 %v748, %v764
  %v787 = vmul.f32 %v750, %v766
  %v788 = vmul.f32 %v752, %v768
  %v789 = vmul.f32 %v754, %v770
  %v790 = vmul.f32 %v756, %v772
  %v791 = vmul.f32 %v758, %v774
  %v792 = vmul.f32 %v760, %v776
  %801 = vrot.lane.b32.xlu0 %v785, 64
  %v802 = vpop.permute.xlu0 %801
  %803 = vrot.lane.b32.xlu0 %v786, 64
  %v804 = vpop.permute.xlu0 %803
  %805 = vrot.lane.b32.xlu0 %v787, 64
  %v806 = vpop.permute.xlu0 %805
  %807 = vrot.lane.b32.xlu0 %v788, 64
  %v808 = vpop.permute.xlu0 %807
  %809 = vrot.lane.b32.xlu0 %v789, 64
  %v810 = vpop.permute.xlu0 %809
  %811 = vrot.lane.b32.xlu0 %v790, 64
  %v812 = vpop.permute.xlu0 %811
  %813 = vrot.lane.b32.xlu0 %v791, 64
  %v814 = vpop.permute.xlu0 %813
  %815 = vrot.lane.b32.xlu0 %v792, 64
  %v816 = vpop.permute.xlu0 %815
  %v825 = vadd.f32 %v238, %v802
  %v826 = vadd.f32 %v243, %v804
  %v827 = vadd.f32 %v248, %v806
  %v828 = vadd.f32 %v253, %v808
  %v829 = vadd.f32 %v258, %v810
  %v830 = vadd.f32 %v263, %v812
  %v831 = vadd.f32 %v268, %v814
  %v832 = vadd.f32 %v273, %v816
  %v833 = vtanh.pop %v825
  %v834 = vtanh.pop %v826
  %v835 = vtanh.pop %v827
  %v836 = vtanh.pop %v828
  %v837 = vtanh.pop %v829
  %v838 = vtanh.pop %v830
  %v839 = vtanh.pop %v831
  %v840 = vtanh.pop %v832
  %v841 = vsub.f32 1.0, %v746
  %v842 = vsub.f32 1.0, %v748
  %v843 = vsub.f32 1.0, %v750
  %v844 = vsub.f32 1.0, %v752
  %v845 = vsub.f32 1.0, %v754
  %v846 = vsub.f32 1.0, %v756
  %v847 = vsub.f32 1.0, %v758
  %v848 = vsub.f32 1.0, %v760
  %857 = vrot.lane.b32.xlu0 %v833, 96
  %v858 = vpop.permute.xlu0 %857
  %859 = vrot.lane.b32.xlu0 %v834, 96
  %v860 = vpop.permute.xlu0 %859
  %861 = vrot.lane.b32.xlu0 %v835, 96
  %v862 = vpop.permute.xlu0 %861
  %863 = vrot.lane.b32.xlu0 %v836, 96
  %v864 = vpop.permute.xlu0 %863
  %865 = vrot.lane.b32.xlu0 %v837, 96
  %v866 = vpop.permute.xlu0 %865
  %867 = vrot.lane.b32.xlu0 %v838, 96
  %v868 = vpop.permute.xlu0 %867
  %869 = vrot.lane.b32.xlu0 %v839, 96
  %v870 = vpop.permute.xlu0 %869
  %871 = vrot.lane.b32.xlu0 %v840, 96
  %v872 = vpop.permute.xlu0 %871
  %v881 = vmul.f32 %v841, %v858
  %v882 = vmul.f32 %v842, %v860
  %v883 = vmul.f32 %v843, %v862
  %v884 = vmul.f32 %v844, %v864
  %v885 = vmul.f32 %v845, %v866
  %v886 = vmul.f32 %v846, %v868
  %v887 = vmul.f32 %v847, %v870
  %v888 = vmul.f32 %v848, %v872
  %v889 = vrot.slane %v615, 7
  %v890 = vrot.slane %v615, 1
  %v891 = vrot.slane %v615, 2
  %v892 = vrot.slane %v615, 3
  %v893 = vrot.slane %v615, 4
  %v894 = vrot.slane %v615, 5
  %v895 = vrot.slane %v615, 6
  %896 = vrot.lane.b32.xlu0 %v889, 32
  %v897 = vpop.permute.xlu0 %896
  %898 = vrot.lane.b32.xlu0 %v615, 32
  %v899 = vpop.permute.xlu0 %898
  %900 = vrot.lane.b32.xlu0 %v890, 32
  %v901 = vpop.permute.xlu0 %900
  %902 = vrot.lane.b32.xlu0 %v891, 32
  %v903 = vpop.permute.xlu0 %902
  %904 = vrot.lane.b32.xlu0 %v892, 32
  %v905 = vpop.permute.xlu0 %904
  %906 = vrot.lane.b32.xlu0 %v893, 32
  %v907 = vpop.permute.xlu0 %906
  %908 = vrot.lane.b32.xlu0 %v894, 32
  %v909 = vpop.permute.xlu0 %908
  %910 = vrot.lane.b32.xlu0 %v895, 32
  %v911 = vpop.permute.xlu0 %910
  %v920 = vmul.f32 %v746, %v897
  %v921 = vmul.f32 %v748, %v899
  %v922 = vmul.f32 %v750, %v901
  %v923 = vmul.f32 %v752, %v903
  %v924 = vmul.f32 %v754, %v905
  %v925 = vmul.f32 %v756, %v907
  %v926 = vmul.f32 %v758, %v909
  %v927 = vmul.f32 %v760, %v911
  %v928 = vadd.f32 %v881, %v920
  %v929 = vadd.f32 %v882, %v921
  %v930 = vadd.f32 %v883, %v922
  %v931 = vadd.f32 %v884, %v923
  %v932 = vadd.f32 %v885, %v924
  %v933 = vadd.f32 %v886, %v925
  %v934 = vadd.f32 %v887, %v926
  %v935 = vadd.f32 %v888, %v927
  %vm936 = vcmp.gt.s32.totalorder %v127, 1
  %v937 = vsel %vm936, 1, 0
  %938 = vset.pattern.permute.xlu0 0
  %939 = vperm.xlu0 %938, %v937
  %v940 = vpop.permute.xlu0 %939
  %vm941 = vcmp.eq.s32.totalorder %v940, 1
  %v950 = vrot.slane %v928, 1
  %v951 = vsel %vm592, %v929, %v950
  %v952 = vrot.slane %v930, 7
  %v953 = vsel %vm595, %v952, %v951
  %v954 = vrot.slane %v931, 6
  %v955 = vsel %vm598, %v954, %v953
  %v956 = vrot.slane %v932, 5
  %v957 = vsel %vm601, %v956, %v955
  %v958 = vrot.slane %v933, 4
  %v959 = vsel %vm604, %v958, %v957
  %v960 = vrot.slane %v934, 3
  %v961 = vsel %vm607, %v960, %v959
  %v962 = vrot.slane %v935, 2
  %v963 = vsel %vm610, %v962, %v961
  %964 = vrot.lane.b32.xlu0 %v963, 96
  %v965 = vpop.permute.xlu0 %964
  %v967 = vsel %vm941, %v965, %v615
  %v968 = vsel %vm941, %v965, 0.0
  %v970 = vsel %vm287, %v967, 0
  %972 = vmatprep.subr.mxu0 0.0
  %973 = vmatpush1.msra.mxu0 %v276
  %974 = vmatprep.subr.mxu0 0.0
  %975 = vmatpush1.msra.mxu0 %v277
  %976 = vmatprep.subr.mxu0 0.0
  %977 = vmatpush1.msra.mxu0 %v278
  %978 = vmatprep.subr.mxu0 0.0
  %979 = vmatpush1.msra.mxu0 %v279
  %980 = vmatprep.subr.mxu0 0.0
  %981 = vmatpush1.msra.mxu0 0.0
  %982 = vmatprep.subr.mxu0 0.0
  %983 = vmatpush1.msra.mxu0 0.0
  %984 = vmatprep.subr.mxu0 0.0
  %985 = vmatpush1.msra.mxu0 0.0
  %986 = vmatprep.subr.mxu0 0.0
  %987 = vmatpush1.msra.mxu0 0.0
  %988 = vmatprep.subr.mxu0 0.0
  %989 = vmatpush1.msra.mxu0 0.0
  %990 = vmatprep.subr.mxu0 0.0
  %991 = vmatpush1.msra.mxu0 0.0
  %992 = vmatprep.subr.mxu0 0.0
  %993 = vmatpush1.msra.mxu0 0.0
  %994 = vmatprep.subr.mxu0 0.0
  %995 = vmatpush1.msra.mxu0 0.0
  %996 = vmatprep.subr.mxu0 0.0
  %997 = vmatpush1.msra.mxu0 0.0
  %998 = vmatprep.subr.mxu0 0.0
  %999 = vmatpush1.msra.mxu0 0.0
  %1000 = vmatprep.subr.mxu0 0.0
  %1001 = vmatpush1.msra.mxu0 0.0
  %1002 = vmatprep.subr.mxu0 0.0
  %1003 = vmatpush1.msra.mxu0 0.0
  %1004 = vmatprep.subr.mxu0 0.0
  %1005 = vmatpush1.msra.mxu0 0.0
  %1006 = vmatprep.subr.mxu0 0.0
  %1007 = vmatpush1.msra.mxu0 0.0
  %1008 = vmatprep.subr.mxu0 0.0
  %1009 = vmatpush1.msra.mxu0 0.0
  %1010 = vmatprep.subr.mxu0 0.0
  %1011 = vmatpush1.msra.mxu0 0.0
  %1012 = vmatprep.subr.mxu0 0.0
  %1013 = vmatpush1.msra.mxu0 0.0
  %1014 = vmatprep.subr.mxu0 0.0
  %1015 = vmatpush1.msra.mxu0 0.0
  %1016 = vmatprep.subr.mxu0 0.0
  %1017 = vmatpush1.msra.mxu0 0.0
  %1018 = vmatprep.subr.mxu0 0.0
  %1019 = vmatpush1.msra.mxu0 0.0
  %1020 = vmatprep.subr.mxu0 0.0
  %1021 = vmatpush1.msra.mxu0 0.0
  %1022 = vmatprep.subr.mxu0 0.0
  %1023 = vmatpush1.msra.mxu0 0.0
  %1024 = vmatprep.subr.mxu0 0.0
  %1025 = vmatpush1.msra.mxu0 0.0
  %1026 = vmatprep.subr.mxu0 0.0
  %1027 = vmatpush1.msra.mxu0 0.0
  %1028 = vmatprep.subr.mxu0 0.0
  %1029 = vmatpush1.msra.mxu0 0.0
  %1030 = vmatprep.subr.mxu0 0.0
  %1031 = vmatpush1.msra.mxu0 0.0
  %1032 = vmatprep.subr.mxu0 0.0
  %1033 = vmatpush1.msra.mxu0 0.0
  %1034 = vmatprep.subr.mxu0 0.0
  %1035 = vmatpush1.msra.mxu0 0.0
  %1036 = vmatprep.mubr.f32.mxu0 0.0
  %1037 = vmatmul.mubr.f32.gmra.mrb[0].mxu0 %v970
  %v1038 = vpop.f32.mrb[0].mxu0
  %v1039 = vadd.f32 %v285, %v1038
  %v1040 = vpop.f32.mrb[0].mxu0
  %1041 = vdwg.mxu0
  %v1043 = vrot.slane %v1039, 6
  %v1044 = vrot.slane %v1039, 7
  %v1045 = vrot.slane %v1039, 1
  %v1046 = vrot.slane %v1039, 2
  %v1047 = vrot.slane %v1039, 3
  %v1048 = vrot.slane %v1039, 4
  %v1049 = vrot.slane %v1039, 5
  %v1058 = vadd.f32 %v238, %v1043
  %v1059 = vadd.f32 %v243, %v1044
  %v1060 = vadd.f32 %v248, %v1039
  %v1061 = vadd.f32 %v253, %v1045
  %v1062 = vadd.f32 %v258, %v1046
  %v1063 = vadd.f32 %v263, %v1047
  %v1064 = vadd.f32 %v268, %v1048
  %v1065 = vadd.f32 %v273, %v1049
  %v1066 = vxor.u32 %v1058, 2147483648
  %v1067 = vxor.u32 %v1059, 2147483648
  %v1068 = vxor.u32 %v1060, 2147483648
  %v1069 = vxor.u32 %v1061, 2147483648
  %v1070 = vxor.u32 %v1062, 2147483648
  %v1071 = vxor.u32 %v1063, 2147483648
  %v1072 = vxor.u32 %v1064, 2147483648
  %v1073 = vxor.u32 %v1065, 2147483648
  %v1074 = vmul.f32 %v1066, 1.442695
  %v1075 = vpow.pop %v1074
  %v1076 = vmul.f32 %v1067, 1.442695
  %v1077 = vpow.pop %v1076
  %v1078 = vmul.f32 %v1068, 1.442695
  %v1079 = vpow.pop %v1078
  %v1080 = vmul.f32 %v1069, 1.442695
  %v1081 = vpow.pop %v1080
  %v1082 = vmul.f32 %v1070, 1.442695
  %v1083 = vpow.pop %v1082
  %v1084 = vmul.f32 %v1071, 1.442695
  %v1085 = vpow.pop %v1084
  %v1086 = vmul.f32 %v1072, 1.442695
  %v1087 = vpow.pop %v1086
  %v1088 = vmul.f32 %v1073, 1.442695
  %v1089 = vpow.pop %v1088
  %v1090 = vadd.f32 %v1075, 1.0
  %v1091 = vadd.f32 %v1077, 1.0
  %v1092 = vadd.f32 %v1079, 1.0
  %v1093 = vadd.f32 %v1081, 1.0
  %v1094 = vadd.f32 %v1083, 1.0
  %v1095 = vadd.f32 %v1085, 1.0
  %v1096 = vadd.f32 %v1087, 1.0
  %v1097 = vadd.f32 %v1089, 1.0
  %v1098 = vrcp.pop %v1090
  %v1099 = vmul.f32 1.0, %v1098
  %v1100 = vrcp.pop %v1091
  %v1101 = vmul.f32 1.0, %v1100
  %v1102 = vrcp.pop %v1092
  %v1103 = vmul.f32 1.0, %v1102
  %v1104 = vrcp.pop %v1093
  %v1105 = vmul.f32 1.0, %v1104
  %v1106 = vrcp.pop %v1094
  %v1107 = vmul.f32 1.0, %v1106
  %v1108 = vrcp.pop %v1095
  %v1109 = vmul.f32 1.0, %v1108
  %v1110 = vrcp.pop %v1096
  %v1111 = vmul.f32 1.0, %v1110
  %v1112 = vrcp.pop %v1097
  %v1113 = vmul.f32 1.0, %v1112
  %1114 = vrot.lane.b32.xlu0 %v1043, 64
  %v1115 = vpop.permute.xlu0 %1114
  %1116 = vrot.lane.b32.xlu0 %v1044, 64
  %v1117 = vpop.permute.xlu0 %1116
  %1118 = vrot.lane.b32.xlu0 %v1039, 64
  %v1119 = vpop.permute.xlu0 %1118
  %1120 = vrot.lane.b32.xlu0 %v1045, 64
  %v1121 = vpop.permute.xlu0 %1120
  %1122 = vrot.lane.b32.xlu0 %v1046, 64
  %v1123 = vpop.permute.xlu0 %1122
  %1124 = vrot.lane.b32.xlu0 %v1047, 64
  %v1125 = vpop.permute.xlu0 %1124
  %1126 = vrot.lane.b32.xlu0 %v1048, 64
  %v1127 = vpop.permute.xlu0 %1126
  %1128 = vrot.lane.b32.xlu0 %v1049, 64
  %v1129 = vpop.permute.xlu0 %1128
  %v1138 = vmul.f32 %v1099, %v1115
  %v1139 = vmul.f32 %v1101, %v1117
  %v1140 = vmul.f32 %v1103, %v1119
  %v1141 = vmul.f32 %v1105, %v1121
  %v1142 = vmul.f32 %v1107, %v1123
  %v1143 = vmul.f32 %v1109, %v1125
  %v1144 = vmul.f32 %v1111, %v1127
  %v1145 = vmul.f32 %v1113, %v1129
  %1154 = vrot.lane.b32.xlu0 %v1138, 64
  %v1155 = vpop.permute.xlu0 %1154
  %1156 = vrot.lane.b32.xlu0 %v1139, 64
  %v1157 = vpop.permute.xlu0 %1156
  %1158 = vrot.lane.b32.xlu0 %v1140, 64
  %v1159 = vpop.permute.xlu0 %1158
  %1160 = vrot.lane.b32.xlu0 %v1141, 64
  %v1161 = vpop.permute.xlu0 %1160
  %1162 = vrot.lane.b32.xlu0 %v1142, 64
  %v1163 = vpop.permute.xlu0 %1162
  %1164 = vrot.lane.b32.xlu0 %v1143, 64
  %v1165 = vpop.permute.xlu0 %1164
  %1166 = vrot.lane.b32.xlu0 %v1144, 64
  %v1167 = vpop.permute.xlu0 %1166
  %1168 = vrot.lane.b32.xlu0 %v1145, 64
  %v1169 = vpop.permute.xlu0 %1168
  %v1178 = vadd.f32 %v238, %v1155
  %v1179 = vadd.f32 %v243, %v1157
  %v1180 = vadd.f32 %v248, %v1159
  %v1181 = vadd.f32 %v253, %v1161
  %v1182 = vadd.f32 %v258, %v1163
  %v1183 = vadd.f32 %v263, %v1165
  %v1184 = vadd.f32 %v268, %v1167
  %v1185 = vadd.f32 %v273, %v1169
  %v1186 = vtanh.pop %v1178
  %v1187 = vtanh.pop %v1179
  %v1188 = vtanh.pop %v1180
  %v1189 = vtanh.pop %v1181
  %v1190 = vtanh.pop %v1182
  %v1191 = vtanh.pop %v1183
  %v1192 = vtanh.pop %v1184
  %v1193 = vtanh.pop %v1185
  %v1194 = vsub.f32 1.0, %v1099
  %v1195 = vsub.f32 1.0, %v1101
  %v1196 = vsub.f32 1.0, %v1103
  %v1197 = vsub.f32 1.0, %v1105
  %v1198 = vsub.f32 1.0, %v1107
  %v1199 = vsub.f32 1.0, %v1109
  %v1200 = vsub.f32 1.0, %v1111
  %v1201 = vsub.f32 1.0, %v1113
  %1210 = vrot.lane.b32.xlu0 %v1186, 96
  %v1211 = vpop.permute.xlu0 %1210
  %1212 = vrot.lane.b32.xlu0 %v1187, 96
  %v1213 = vpop.permute.xlu0 %1212
  %1214 = vrot.lane.b32.xlu0 %v1188, 96
  %v1215 = vpop.permute.xlu0 %1214
  %1216 = vrot.lane.b32.xlu0 %v1189, 96
  %v1217 = vpop.permute.xlu0 %1216
  %1218 = vrot.lane.b32.xlu0 %v1190, 96
  %v1219 = vpop.permute.xlu0 %1218
  %1220 = vrot.lane.b32.xlu0 %v1191, 96
  %v1221 = vpop.permute.xlu0 %1220
  %1222 = vrot.lane.b32.xlu0 %v1192, 96
  %v1223 = vpop.permute.xlu0 %1222
  %1224 = vrot.lane.b32.xlu0 %v1193, 96
  %v1225 = vpop.permute.xlu0 %1224
  %v1234 = vmul.f32 %v1194, %v1211
  %v1235 = vmul.f32 %v1195, %v1213
  %v1236 = vmul.f32 %v1196, %v1215
  %v1237 = vmul.f32 %v1197, %v1217
  %v1238 = vmul.f32 %v1198, %v1219
  %v1239 = vmul.f32 %v1199, %v1221
  %v1240 = vmul.f32 %v1200, %v1223
  %v1241 = vmul.f32 %v1201, %v1225
  %v1242 = vrot.slane %v967, 6
  %v1243 = vrot.slane %v967, 7
  %v1244 = vrot.slane %v967, 1
  %v1245 = vrot.slane %v967, 2
  %v1246 = vrot.slane %v967, 3
  %v1247 = vrot.slane %v967, 4
  %v1248 = vrot.slane %v967, 5
  %1249 = vrot.lane.b32.xlu0 %v1242, 32
  %v1250 = vpop.permute.xlu0 %1249
  %1251 = vrot.lane.b32.xlu0 %v1243, 32
  %v1252 = vpop.permute.xlu0 %1251
  %1253 = vrot.lane.b32.xlu0 %v967, 32
  %v1254 = vpop.permute.xlu0 %1253
  %1255 = vrot.lane.b32.xlu0 %v1244, 32
  %v1256 = vpop.permute.xlu0 %1255
  %1257 = vrot.lane.b32.xlu0 %v1245, 32
  %v1258 = vpop.permute.xlu0 %1257
  %1259 = vrot.lane.b32.xlu0 %v1246, 32
  %v1260 = vpop.permute.xlu0 %1259
  %1261 = vrot.lane.b32.xlu0 %v1247, 32
  %v1262 = vpop.permute.xlu0 %1261
  %1263 = vrot.lane.b32.xlu0 %v1248, 32
  %v1264 = vpop.permute.xlu0 %1263
  %v1273 = vmul.f32 %v1099, %v1250
  %v1274 = vmul.f32 %v1101, %v1252
  %v1275 = vmul.f32 %v1103, %v1254
  %v1276 = vmul.f32 %v1105, %v1256
  %v1277 = vmul.f32 %v1107, %v1258
  %v1278 = vmul.f32 %v1109, %v1260
  %v1279 = vmul.f32 %v1111, %v1262
  %v1280 = vmul.f32 %v1113, %v1264
  %v1281 = vadd.f32 %v1234, %v1273
  %v1282 = vadd.f32 %v1235, %v1274
  %v1283 = vadd.f32 %v1236, %v1275
  %v1284 = vadd.f32 %v1237, %v1276
  %v1285 = vadd.f32 %v1238, %v1277
  %v1286 = vadd.f32 %v1239, %v1278
  %v1287 = vadd.f32 %v1240, %v1279
  %v1288 = vadd.f32 %v1241, %v1280
  %vm1289 = vcmp.gt.s32.totalorder %v127, 2
  %v1290 = vsel %vm1289, 1, 0
  %1291 = vset.pattern.permute.xlu0 0
  %1292 = vperm.xlu0 %1291, %v1290
  %v1293 = vpop.permute.xlu0 %1292
  %vm1294 = vcmp.eq.s32.totalorder %v1293, 1
  %v1303 = vrot.slane %v1281, 2
  %v1304 = vrot.slane %v1282, 1
  %v1305 = vsel %vm592, %v1304, %v1303
  %v1306 = vsel %vm595, %v1283, %v1305
  %v1307 = vrot.slane %v1284, 7
  %v1308 = vsel %vm598, %v1307, %v1306
  %v1309 = vrot.slane %v1285, 6
  %v1310 = vsel %vm601, %v1309, %v1308
  %v1311 = vrot.slane %v1286, 5
  %v1312 = vsel %vm604, %v1311, %v1310
  %v1313 = vrot.slane %v1287, 4
  %v1314 = vsel %vm607, %v1313, %v1312
  %v1315 = vrot.slane %v1288, 3
  %v1316 = vsel %vm610, %v1315, %v1314
  %1317 = vrot.lane.b32.xlu0 %v1316, 96
  %v1318 = vpop.permute.xlu0 %1317
  %v1320 = vsel %vm1294, %v1318, %v967
  %v1321 = vsel %vm1294, %v1318, 0.0
  %v1323 = vsel %vm287, %v1320, 0
  %1325 = vmatprep.subr.mxu0 0.0
  %1326 = vmatpush1.msra.mxu0 %v276
  %1327 = vmatprep.subr.mxu0 0.0
  %1328 = vmatpush1.msra.mxu0 %v277
  %1329 = vmatprep.subr.mxu0 0.0
  %1330 = vmatpush1.msra.mxu0 %v278
  %1331 = vmatprep.subr.mxu0 0.0
  %1332 = vmatpush1.msra.mxu0 %v279
  %1333 = vmatprep.subr.mxu0 0.0
  %1334 = vmatpush1.msra.mxu0 0.0
  %1335 = vmatprep.subr.mxu0 0.0
  %1336 = vmatpush1.msra.mxu0 0.0
  %1337 = vmatprep.subr.mxu0 0.0
  %1338 = vmatpush1.msra.mxu0 0.0
  %1339 = vmatprep.subr.mxu0 0.0
  %1340 = vmatpush1.msra.mxu0 0.0
  %1341 = vmatprep.subr.mxu0 0.0
  %1342 = vmatpush1.msra.mxu0 0.0
  %1343 = vmatprep.subr.mxu0 0.0
  %1344 = vmatpush1.msra.mxu0 0.0
  %1345 = vmatprep.subr.mxu0 0.0
  %1346 = vmatpush1.msra.mxu0 0.0
  %1347 = vmatprep.subr.mxu0 0.0
  %1348 = vmatpush1.msra.mxu0 0.0
  %1349 = vmatprep.subr.mxu0 0.0
  %1350 = vmatpush1.msra.mxu0 0.0
  %1351 = vmatprep.subr.mxu0 0.0
  %1352 = vmatpush1.msra.mxu0 0.0
  %1353 = vmatprep.subr.mxu0 0.0
  %1354 = vmatpush1.msra.mxu0 0.0
  %1355 = vmatprep.subr.mxu0 0.0
  %1356 = vmatpush1.msra.mxu0 0.0
  %1357 = vmatprep.subr.mxu0 0.0
  %1358 = vmatpush1.msra.mxu0 0.0
  %1359 = vmatprep.subr.mxu0 0.0
  %1360 = vmatpush1.msra.mxu0 0.0
  %1361 = vmatprep.subr.mxu0 0.0
  %1362 = vmatpush1.msra.mxu0 0.0
  %1363 = vmatprep.subr.mxu0 0.0
  %1364 = vmatpush1.msra.mxu0 0.0
  %1365 = vmatprep.subr.mxu0 0.0
  %1366 = vmatpush1.msra.mxu0 0.0
  %1367 = vmatprep.subr.mxu0 0.0
  %1368 = vmatpush1.msra.mxu0 0.0
  %1369 = vmatprep.subr.mxu0 0.0
  %1370 = vmatpush1.msra.mxu0 0.0
  %1371 = vmatprep.subr.mxu0 0.0
  %1372 = vmatpush1.msra.mxu0 0.0
  %1373 = vmatprep.subr.mxu0 0.0
  %1374 = vmatpush1.msra.mxu0 0.0
  %1375 = vmatprep.subr.mxu0 0.0
  %1376 = vmatpush1.msra.mxu0 0.0
  %1377 = vmatprep.subr.mxu0 0.0
  %1378 = vmatpush1.msra.mxu0 0.0
  %1379 = vmatprep.subr.mxu0 0.0
  %1380 = vmatpush1.msra.mxu0 0.0
  %1381 = vmatprep.subr.mxu0 0.0
  %1382 = vmatpush1.msra.mxu0 0.0
  %1383 = vmatprep.subr.mxu0 0.0
  %1384 = vmatpush1.msra.mxu0 0.0
  %1385 = vmatprep.subr.mxu0 0.0
  %1386 = vmatpush1.msra.mxu0 0.0
  %1387 = vmatprep.subr.mxu0 0.0
  %1388 = vmatpush1.msra.mxu0 0.0
  %1389 = vmatprep.mubr.f32.mxu0 0.0
  %1390 = vmatmul.mubr.f32.gmra.mrb[0].mxu0 %v1323
  %v1391 = vpop.f32.mrb[0].mxu0
  %v1392 = vadd.f32 %v285, %v1391
  %v1393 = vpop.f32.mrb[0].mxu0
  %1394 = vdwg.mxu0
  %v1396 = vrot.slane %v1392, 5
  %v1397 = vrot.slane %v1392, 6
  %v1398 = vrot.slane %v1392, 7
  %v1399 = vrot.slane %v1392, 1
  %v1400 = vrot.slane %v1392, 2
  %v1401 = vrot.slane %v1392, 3
  %v1402 = vrot.slane %v1392, 4
  %v1411 = vadd.f32 %v238, %v1396
  %v1412 = vadd.f32 %v243, %v1397
  %v1413 = vadd.f32 %v248, %v1398
  %v1414 = vadd.f32 %v253, %v1392
  %v1415 = vadd.f32 %v258, %v1399
  %v1416 = vadd.f32 %v263, %v1400
  %v1417 = vadd.f32 %v268, %v1401
  %v1418 = vadd.f32 %v273, %v1402
  %v1419 = vxor.u32 %v1411, 2147483648
  %v1420 = vxor.u32 %v1412, 2147483648
  %v1421 = vxor.u32 %v1413, 2147483648
  %v1422 = vxor.u32 %v1414, 2147483648
  %v1423 = vxor.u32 %v1415, 2147483648
  %v1424 = vxor.u32 %v1416, 2147483648
  %v1425 = vxor.u32 %v1417, 2147483648
  %v1426 = vxor.u32 %v1418, 2147483648
  %v1427 = vmul.f32 %v1419, 1.442695
  %v1428 = vpow.pop %v1427
  %v1429 = vmul.f32 %v1420, 1.442695
  %v1430 = vpow.pop %v1429
  %v1431 = vmul.f32 %v1421, 1.442695
  %v1432 = vpow.pop %v1431
  %v1433 = vmul.f32 %v1422, 1.442695
  %v1434 = vpow.pop %v1433
  %v1435 = vmul.f32 %v1423, 1.442695
  %v1436 = vpow.pop %v1435
  %v1437 = vmul.f32 %v1424, 1.442695
  %v1438 = vpow.pop %v1437
  %v1439 = vmul.f32 %v1425, 1.442695
  %v1440 = vpow.pop %v1439
  %v1441 = vmul.f32 %v1426, 1.442695
  %v1442 = vpow.pop %v1441
  %v1443 = vadd.f32 %v1428, 1.0
  %v1444 = vadd.f32 %v1430, 1.0
  %v1445 = vadd.f32 %v1432, 1.0
  %v1446 = vadd.f32 %v1434, 1.0
  %v1447 = vadd.f32 %v1436, 1.0
  %v1448 = vadd.f32 %v1438, 1.0
  %v1449 = vadd.f32 %v1440, 1.0
  %v1450 = vadd.f32 %v1442, 1.0
  %v1451 = vrcp.pop %v1443
  %v1452 = vmul.f32 1.0, %v1451
  %v1453 = vrcp.pop %v1444
  %v1454 = vmul.f32 1.0, %v1453
  %v1455 = vrcp.pop %v1445
  %v1456 = vmul.f32 1.0, %v1455
  %v1457 = vrcp.pop %v1446
  %v1458 = vmul.f32 1.0, %v1457
  %v1459 = vrcp.pop %v1447
  %v1460 = vmul.f32 1.0, %v1459
  %v1461 = vrcp.pop %v1448
  %v1462 = vmul.f32 1.0, %v1461
  %v1463 = vrcp.pop %v1449
  %v1464 = vmul.f32 1.0, %v1463
  %v1465 = vrcp.pop %v1450
  %v1466 = vmul.f32 1.0, %v1465
  %1467 = vrot.lane.b32.xlu0 %v1396, 64
  %v1468 = vpop.permute.xlu0 %1467
  %1469 = vrot.lane.b32.xlu0 %v1397, 64
  %v1470 = vpop.permute.xlu0 %1469
  %1471 = vrot.lane.b32.xlu0 %v1398, 64
  %v1472 = vpop.permute.xlu0 %1471
  %1473 = vrot.lane.b32.xlu0 %v1392, 64
  %v1474 = vpop.permute.xlu0 %1473
  %1475 = vrot.lane.b32.xlu0 %v1399, 64
  %v1476 = vpop.permute.xlu0 %1475
  %1477 = vrot.lane.b32.xlu0 %v1400, 64
  %v1478 = vpop.permute.xlu0 %1477
  %1479 = vrot.lane.b32.xlu0 %v1401, 64
  %v1480 = vpop.permute.xlu0 %1479
  %1481 = vrot.lane.b32.xlu0 %v1402, 64
  %v1482 = vpop.permute.xlu0 %1481
  %v1491 = vmul.f32 %v1452, %v1468
  %v1492 = vmul.f32 %v1454, %v1470
  %v1493 = vmul.f32 %v1456, %v1472
  %v1494 = vmul.f32 %v1458, %v1474
  %v1495 = vmul.f32 %v1460, %v1476
  %v1496 = vmul.f32 %v1462, %v1478
  %v1497 = vmul.f32 %v1464, %v1480
  %v1498 = vmul.f32 %v1466, %v1482
  %1507 = vrot.lane.b32.xlu0 %v1491, 64
  %v1508 = vpop.permute.xlu0 %1507
  %1509 = vrot.lane.b32.xlu0 %v1492, 64
  %v1510 = vpop.permute.xlu0 %1509
  %1511 = vrot.lane.b32.xlu0 %v1493, 64
  %v1512 = vpop.permute.xlu0 %1511
  %1513 = vrot.lane.b32.xlu0 %v1494, 64
  %v1514 = vpop.permute.xlu0 %1513
  %1515 = vrot.lane.b32.xlu0 %v1495, 64
  %v1516 = vpop.permute.xlu0 %1515
  %1517 = vrot.lane.b32.xlu0 %v1496, 64
  %v1518 = vpop.permute.xlu0 %1517
  %1519 = vrot.lane.b32.xlu0 %v1497, 64
  %v1520 = vpop.permute.xlu0 %1519
  %1521 = vrot.lane.b32.xlu0 %v1498, 64
  %v1522 = vpop.permute.xlu0 %1521
  %v1531 = vadd.f32 %v238, %v1508
  %v1532 = vadd.f32 %v243, %v1510
  %v1533 = vadd.f32 %v248, %v1512
  %v1534 = vadd.f32 %v253, %v1514
  %v1535 = vadd.f32 %v258, %v1516
  %v1536 = vadd.f32 %v263, %v1518
  %v1537 = vadd.f32 %v268, %v1520
  %v1538 = vadd.f32 %v273, %v1522
  %v1539 = vtanh.pop %v1531
  %v1540 = vtanh.pop %v1532
  %v1541 = vtanh.pop %v1533
  %v1542 = vtanh.pop %v1534
  %v1543 = vtanh.pop %v1535
  %v1544 = vtanh.pop %v1536
  %v1545 = vtanh.pop %v1537
  %v1546 = vtanh.pop %v1538
  %v1547 = vsub.f32 1.0, %v1452
  %v1548 = vsub.f32 1.0, %v1454
  %v1549 = vsub.f32 1.0, %v1456
  %v1550 = vsub.f32 1.0, %v1458
  %v1551 = vsub.f32 1.0, %v1460
  %v1552 = vsub.f32 1.0, %v1462
  %v1553 = vsub.f32 1.0, %v1464
  %v1554 = vsub.f32 1.0, %v1466
  %1563 = vrot.lane.b32.xlu0 %v1539, 96
  %v1564 = vpop.permute.xlu0 %1563
  %1565 = vrot.lane.b32.xlu0 %v1540, 96
  %v1566 = vpop.permute.xlu0 %1565
  %1567 = vrot.lane.b32.xlu0 %v1541, 96
  %v1568 = vpop.permute.xlu0 %1567
  %1569 = vrot.lane.b32.xlu0 %v1542, 96
  %v1570 = vpop.permute.xlu0 %1569
  %1571 = vrot.lane.b32.xlu0 %v1543, 96
  %v1572 = vpop.permute.xlu0 %1571
  %1573 = vrot.lane.b32.xlu0 %v1544, 96
  %v1574 = vpop.permute.xlu0 %1573
  %1575 = vrot.lane.b32.xlu0 %v1545, 96
  %v1576 = vpop.permute.xlu0 %1575
  %1577 = vrot.lane.b32.xlu0 %v1546, 96
  %v1578 = vpop.permute.xlu0 %1577
  %v1587 = vmul.f32 %v1547, %v1564
  %v1588 = vmul.f32 %v1548, %v1566
  %v1589 = vmul.f32 %v1549, %v1568
  %v1590 = vmul.f32 %v1550, %v1570
  %v1591 = vmul.f32 %v1551, %v1572
  %v1592 = vmul.f32 %v1552, %v1574
  %v1593 = vmul.f32 %v1553, %v1576
  %v1594 = vmul.f32 %v1554, %v1578
  %v1595 = vrot.slane %v1320, 5
  %v1596 = vrot.slane %v1320, 6
  %v1597 = vrot.slane %v1320, 7
  %v1598 = vrot.slane %v1320, 1
  %v1599 = vrot.slane %v1320, 2
  %v1600 = vrot.slane %v1320, 3
  %v1601 = vrot.slane %v1320, 4
  %1602 = vrot.lane.b32.xlu0 %v1595, 32
  %v1603 = vpop.permute.xlu0 %1602
  %1604 = vrot.lane.b32.xlu0 %v1596, 32
  %v1605 = vpop.permute.xlu0 %1604
  %1606 = vrot.lane.b32.xlu0 %v1597, 32
  %v1607 = vpop.permute.xlu0 %1606
  %1608 = vrot.lane.b32.xlu0 %v1320, 32
  %v1609 = vpop.permute.xlu0 %1608
  %1610 = vrot.lane.b32.xlu0 %v1598, 32
  %v1611 = vpop.permute.xlu0 %1610
  %1612 = vrot.lane.b32.xlu0 %v1599, 32
  %v1613 = vpop.permute.xlu0 %1612
  %1614 = vrot.lane.b32.xlu0 %v1600, 32
  %v1615 = vpop.permute.xlu0 %1614
  %1616 = vrot.lane.b32.xlu0 %v1601, 32
  %v1617 = vpop.permute.xlu0 %1616
  %v1626 = vmul.f32 %v1452, %v1603
  %v1627 = vmul.f32 %v1454, %v1605
  %v1628 = vmul.f32 %v1456, %v1607
  %v1629 = vmul.f32 %v1458, %v1609
  %v1630 = vmul.f32 %v1460, %v1611
  %v1631 = vmul.f32 %v1462, %v1613
  %v1632 = vmul.f32 %v1464, %v1615
  %v1633 = vmul.f32 %v1466, %v1617
  %v1634 = vadd.f32 %v1587, %v1626
  %v1635 = vadd.f32 %v1588, %v1627
  %v1636 = vadd.f32 %v1589, %v1628
  %v1637 = vadd.f32 %v1590, %v1629
  %v1638 = vadd.f32 %v1591, %v1630
  %v1639 = vadd.f32 %v1592, %v1631
  %v1640 = vadd.f32 %v1593, %v1632
  %v1641 = vadd.f32 %v1594, %v1633
  %vm1642 = vcmp.gt.s32.totalorder %v127, 3
  %v1643 = vsel %vm1642, 1, 0
  %1644 = vset.pattern.permute.xlu0 0
  %1645 = vperm.xlu0 %1644, %v1643
  %v1646 = vpop.permute.xlu0 %1645
  %vm1647 = vcmp.eq.s32.totalorder %v1646, 1
  %v1656 = vrot.slane %v1634, 3
  %v1657 = vrot.slane %v1635, 2
  %v1658 = vsel %vm592, %v1657, %v1656
  %v1659 = vrot.slane %v1636, 1
  %v1660 = vsel %vm595, %v1659, %v1658
  %v1661 = vsel %vm598, %v1637, %v1660
  %v1662 = vrot.slane %v1638, 7
  %v1663 = vsel %vm601, %v1662, %v1661
  %v1664 = vrot.slane %v1639, 6
  %v1665 = vsel %vm604, %v1664, %v1663
  %v1666 = vrot.slane %v1640, 5
  %v1667 = vsel %vm607, %v1666, %v1665
  %v1668 = vrot.slane %v1641, 4
  %v1669 = vsel %vm610, %v1668, %v1667
  %1670 = vrot.lane.b32.xlu0 %v1669, 96
  %v1671 = vpop.permute.xlu0 %1670
  %v1673 = vsel %vm1647, %v1671, %v1320
  %v1674 = vsel %vm1647, %v1671, 0.0
  %v1676 = vsel %vm287, %v1673, 0
  %1678 = vmatprep.subr.mxu0 0.0
  %1679 = vmatpush1.msra.mxu0 %v276
  %1680 = vmatprep.subr.mxu0 0.0
  %1681 = vmatpush1.msra.mxu0 %v277
  %1682 = vmatprep.subr.mxu0 0.0
  %1683 = vmatpush1.msra.mxu0 %v278
  %1684 = vmatprep.subr.mxu0 0.0
  %1685 = vmatpush1.msra.mxu0 %v279
  %1686 = vmatprep.subr.mxu0 0.0
  %1687 = vmatpush1.msra.mxu0 0.0
  %1688 = vmatprep.subr.mxu0 0.0
  %1689 = vmatpush1.msra.mxu0 0.0
  %1690 = vmatprep.subr.mxu0 0.0
  %1691 = vmatpush1.msra.mxu0 0.0
  %1692 = vmatprep.subr.mxu0 0.0
  %1693 = vmatpush1.msra.mxu0 0.0
  %1694 = vmatprep.subr.mxu0 0.0
  %1695 = vmatpush1.msra.mxu0 0.0
  %1696 = vmatprep.subr.mxu0 0.0
  %1697 = vmatpush1.msra.mxu0 0.0
  %1698 = vmatprep.subr.mxu0 0.0
  %1699 = vmatpush1.msra.mxu0 0.0
  %1700 = vmatprep.subr.mxu0 0.0
  %1701 = vmatpush1.msra.mxu0 0.0
  %1702 = vmatprep.subr.mxu0 0.0
  %1703 = vmatpush1.msra.mxu0 0.0
  %1704 = vmatprep.subr.mxu0 0.0
  %1705 = vmatpush1.msra.mxu0 0.0
  %1706 = vmatprep.subr.mxu0 0.0
  %1707 = vmatpush1.msra.mxu0 0.0
  %1708 = vmatprep.subr.mxu0 0.0
  %1709 = vmatpush1.msra.mxu0 0.0
  %1710 = vmatprep.subr.mxu0 0.0
  %1711 = vmatpush1.msra.mxu0 0.0
  %1712 = vmatprep.subr.mxu0 0.0
  %1713 = vmatpush1.msra.mxu0 0.0
  %1714 = vmatprep.subr.mxu0 0.0
  %1715 = vmatpush1.msra.mxu0 0.0
  %1716 = vmatprep.subr.mxu0 0.0
  %1717 = vmatpush1.msra.mxu0 0.0
  %1718 = vmatprep.subr.mxu0 0.0
  %1719 = vmatpush1.msra.mxu0 0.0
  %1720 = vmatprep.subr.mxu0 0.0
  %1721 = vmatpush1.msra.mxu0 0.0
  %1722 = vmatprep.subr.mxu0 0.0
  %1723 = vmatpush1.msra.mxu0 0.0
  %1724 = vmatprep.subr.mxu0 0.0
  %1725 = vmatpush1.msra.mxu0 0.0
  %1726 = vmatprep.subr.mxu0 0.0
  %1727 = vmatpush1.msra.mxu0 0.0
  %1728 = vmatprep.subr.mxu0 0.0
  %1729 = vmatpush1.msra.mxu0 0.0
  %1730 = vmatprep.subr.mxu0 0.0
  %1731 = vmatpush1.msra.mxu0 0.0
  %1732 = vmatprep.subr.mxu0 0.0
  %1733 = vmatpush1.msra.mxu0 0.0
  %1734 = vmatprep.subr.mxu0 0.0
  %1735 = vmatpush1.msra.mxu0 0.0
  %1736 = vmatprep.subr.mxu0 0.0
  %1737 = vmatpush1.msra.mxu0 0.0
  %1738 = vmatprep.subr.mxu0 0.0
  %1739 = vmatpush1.msra.mxu0 0.0
  %1740 = vmatprep.subr.mxu0 0.0
  %1741 = vmatpush1.msra.mxu0 0.0
  %1742 = vmatprep.mubr.f32.mxu0 0.0
  %1743 = vmatmul.mubr.f32.gmra.mrb[0].mxu0 %v1676
  %v1744 = vpop.f32.mrb[0].mxu0
  %v1745 = vadd.f32 %v285, %v1744
  %v1746 = vpop.f32.mrb[0].mxu0
  %1747 = vdwg.mxu0
  %v1749 = vrot.slane %v1745, 4
  %v1750 = vrot.slane %v1745, 5
  %v1751 = vrot.slane %v1745, 6
  %v1752 = vrot.slane %v1745, 7
  %v1753 = vrot.slane %v1745, 1
  %v1754 = vrot.slane %v1745, 2
  %v1755 = vrot.slane %v1745, 3
  %v1764 = vadd.f32 %v238, %v1749
  %v1765 = vadd.f32 %v243, %v1750
  %v1766 = vadd.f32 %v248, %v1751
  %v1767 = vadd.f32 %v253, %v1752
  %v1768 = vadd.f32 %v258, %v1745
  %v1769 = vadd.f32 %v263, %v1753
  %v1770 = vadd.f32 %v268, %v1754
  %v1771 = vadd.f32 %v273, %v1755
  %v1772 = vxor.u32 %v1764, 2147483648
  %v1773 = vxor.u32 %v1765, 2147483648
  %v1774 = vxor.u32 %v1766, 2147483648
  %v1775 = vxor.u32 %v1767, 2147483648
  %v1776 = vxor.u32 %v1768, 2147483648
  %v1777 = vxor.u32 %v1769, 2147483648
  %v1778 = vxor.u32 %v1770, 2147483648
  %v1779 = vxor.u32 %v1771, 2147483648
  %v1780 = vmul.f32 %v1772, 1.442695
  %v1781 = vpow.pop %v1780
  %v1782 = vmul.f32 %v1773, 1.442695
  %v1783 = vpow.pop %v1782
  %v1784 = vmul.f32 %v1774, 1.442695
  %v1785 = vpow.pop %v1784
  %v1786 = vmul.f32 %v1775, 1.442695
  %v1787 = vpow.pop %v1786
  %v1788 = vmul.f32 %v1776, 1.442695
  %v1789 = vpow.pop %v1788
  %v1790 = vmul.f32 %v1777, 1.442695
  %v1791 = vpow.pop %v1790
  %v1792 = vmul.f32 %v1778, 1.442695
  %v1793 = vpow.pop %v1792
  %v1794 = vmul.f32 %v1779, 1.442695
  %v1795 = vpow.pop %v1794
  %v1796 = vadd.f32 %v1781, 1.0
  %v1797 = vadd.f32 %v1783, 1.0
  %v1798 = vadd.f32 %v1785, 1.0
  %v1799 = vadd.f32 %v1787, 1.0
  %v1800 = vadd.f32 %v1789, 1.0
  %v1801 = vadd.f32 %v1791, 1.0
  %v1802 = vadd.f32 %v1793, 1.0
  %v1803 = vadd.f32 %v1795, 1.0
  %v1804 = vrcp.pop %v1796
  %v1805 = vmul.f32 1.0, %v1804
  %v1806 = vrcp.pop %v1797
  %v1807 = vmul.f32 1.0, %v1806
  %v1808 = vrcp.pop %v1798
  %v1809 = vmul.f32 1.0, %v1808
  %v1810 = vrcp.pop %v1799
  %v1811 = vmul.f32 1.0, %v1810
  %v1812 = vrcp.pop %v1800
  %v1813 = vmul.f32 1.0, %v1812
  %v1814 = vrcp.pop %v1801
  %v1815 = vmul.f32 1.0, %v1814
  %v1816 = vrcp.pop %v1802
  %v1817 = vmul.f32 1.0, %v1816
  %v1818 = vrcp.pop %v1803
  %v1819 = vmul.f32 1.0, %v1818
  %1820 = vrot.lane.b32.xlu0 %v1749, 64
  %v1821 = vpop.permute.xlu0 %1820
  %1822 = vrot.lane.b32.xlu0 %v1750, 64
  %v1823 = vpop.permute.xlu0 %1822
  %1824 = vrot.lane.b32.xlu0 %v1751, 64
  %v1825 = vpop.permute.xlu0 %1824
  %1826 = vrot.lane.b32.xlu0 %v1752, 64
  %v1827 = vpop.permute.xlu0 %1826
  %1828 = vrot.lane.b32.xlu0 %v1745, 64
  %v1829 = vpop.permute.xlu0 %1828
  %1830 = vrot.lane.b32.xlu0 %v1753, 64
  %v1831 = vpop.permute.xlu0 %1830
  %1832 = vrot.lane.b32.xlu0 %v1754, 64
  %v1833 = vpop.permute.xlu0 %1832
  %1834 = vrot.lane.b32.xlu0 %v1755, 64
  %v1835 = vpop.permute.xlu0 %1834
  %v1844 = vmul.f32 %v1805, %v1821
  %v1845 = vmul.f32 %v1807, %v1823
  %v1846 = vmul.f32 %v1809, %v1825
  %v1847 = vmul.f32 %v1811, %v1827
  %v1848 = vmul.f32 %v1813, %v1829
  %v1849 = vmul.f32 %v1815, %v1831
  %v1850 = vmul.f32 %v1817, %v1833
  %v1851 = vmul.f32 %v1819, %v1835
  %1860 = vrot.lane.b32.xlu0 %v1844, 64
  %v1861 = vpop.permute.xlu0 %1860
  %1862 = vrot.lane.b32.xlu0 %v1845, 64
  %v1863 = vpop.permute.xlu0 %1862
  %1864 = vrot.lane.b32.xlu0 %v1846, 64
  %v1865 = vpop.permute.xlu0 %1864
  %1866 = vrot.lane.b32.xlu0 %v1847, 64
  %v1867 = vpop.permute.xlu0 %1866
  %1868 = vrot.lane.b32.xlu0 %v1848, 64
  %v1869 = vpop.permute.xlu0 %1868
  %1870 = vrot.lane.b32.xlu0 %v1849, 64
  %v1871 = vpop.permute.xlu0 %1870
  %1872 = vrot.lane.b32.xlu0 %v1850, 64
  %v1873 = vpop.permute.xlu0 %1872
  %1874 = vrot.lane.b32.xlu0 %v1851, 64
  %v1875 = vpop.permute.xlu0 %1874
  %v1884 = vadd.f32 %v238, %v1861
  %v1885 = vadd.f32 %v243, %v1863
  %v1886 = vadd.f32 %v248, %v1865
  %v1887 = vadd.f32 %v253, %v1867
  %v1888 = vadd.f32 %v258, %v1869
  %v1889 = vadd.f32 %v263, %v1871
  %v1890 = vadd.f32 %v268, %v1873
  %v1891 = vadd.f32 %v273, %v1875
  %v1892 = vtanh.pop %v1884
  %v1893 = vtanh.pop %v1885
  %v1894 = vtanh.pop %v1886
  %v1895 = vtanh.pop %v1887
  %v1896 = vtanh.pop %v1888
  %v1897 = vtanh.pop %v1889
  %v1898 = vtanh.pop %v1890
  %v1899 = vtanh.pop %v1891
  %v1900 = vsub.f32 1.0, %v1805
  %v1901 = vsub.f32 1.0, %v1807
  %v1902 = vsub.f32 1.0, %v1809
  %v1903 = vsub.f32 1.0, %v1811
  %v1904 = vsub.f32 1.0, %v1813
  %v1905 = vsub.f32 1.0, %v1815
  %v1906 = vsub.f32 1.0, %v1817
  %v1907 = vsub.f32 1.0, %v1819
  %1916 = vrot.lane.b32.xlu0 %v1892, 96
  %v1917 = vpop.permute.xlu0 %1916
  %1918 = vrot.lane.b32.xlu0 %v1893, 96
  %v1919 = vpop.permute.xlu0 %1918
  %1920 = vrot.lane.b32.xlu0 %v1894, 96
  %v1921 = vpop.permute.xlu0 %1920
  %1922 = vrot.lane.b32.xlu0 %v1895, 96
  %v1923 = vpop.permute.xlu0 %1922
  %1924 = vrot.lane.b32.xlu0 %v1896, 96
  %v1925 = vpop.permute.xlu0 %1924
  %1926 = vrot.lane.b32.xlu0 %v1897, 96
  %v1927 = vpop.permute.xlu0 %1926
  %1928 = vrot.lane.b32.xlu0 %v1898, 96
  %v1929 = vpop.permute.xlu0 %1928
  %1930 = vrot.lane.b32.xlu0 %v1899, 96
  %v1931 = vpop.permute.xlu0 %1930
  %v1940 = vmul.f32 %v1900, %v1917
  %v1941 = vmul.f32 %v1901, %v1919
  %v1942 = vmul.f32 %v1902, %v1921
  %v1943 = vmul.f32 %v1903, %v1923
  %v1944 = vmul.f32 %v1904, %v1925
  %v1945 = vmul.f32 %v1905, %v1927
  %v1946 = vmul.f32 %v1906, %v1929
  %v1947 = vmul.f32 %v1907, %v1931
  %v1948 = vrot.slane %v1673, 4
  %v1949 = vrot.slane %v1673, 5
  %v1950 = vrot.slane %v1673, 6
  %v1951 = vrot.slane %v1673, 7
  %v1952 = vrot.slane %v1673, 1
  %v1953 = vrot.slane %v1673, 2
  %v1954 = vrot.slane %v1673, 3
  %1955 = vrot.lane.b32.xlu0 %v1948, 32
  %v1956 = vpop.permute.xlu0 %1955
  %1957 = vrot.lane.b32.xlu0 %v1949, 32
  %v1958 = vpop.permute.xlu0 %1957
  %1959 = vrot.lane.b32.xlu0 %v1950, 32
  %v1960 = vpop.permute.xlu0 %1959
  %1961 = vrot.lane.b32.xlu0 %v1951, 32
  %v1962 = vpop.permute.xlu0 %1961
  %1963 = vrot.lane.b32.xlu0 %v1673, 32
  %v1964 = vpop.permute.xlu0 %1963
  %1965 = vrot.lane.b32.xlu0 %v1952, 32
  %v1966 = vpop.permute.xlu0 %1965
  %1967 = vrot.lane.b32.xlu0 %v1953, 32
  %v1968 = vpop.permute.xlu0 %1967
  %1969 = vrot.lane.b32.xlu0 %v1954, 32
  %v1970 = vpop.permute.xlu0 %1969
  %v1979 = vmul.f32 %v1805, %v1956
  %v1980 = vmul.f32 %v1807, %v1958
  %v1981 = vmul.f32 %v1809, %v1960
  %v1982 = vmul.f32 %v1811, %v1962
  %v1983 = vmul.f32 %v1813, %v1964
  %v1984 = vmul.f32 %v1815, %v1966
  %v1985 = vmul.f32 %v1817, %v1968
  %v1986 = vmul.f32 %v1819, %v1970
  %v1987 = vadd.f32 %v1940, %v1979
  %v1988 = vadd.f32 %v1941, %v1980
  %v1989 = vadd.f32 %v1942, %v1981
  %v1990 = vadd.f32 %v1943, %v1982
  %v1991 = vadd.f32 %v1944, %v1983
  %v1992 = vadd.f32 %v1945, %v1984
  %v1993 = vadd.f32 %v1946, %v1985
  %v1994 = vadd.f32 %v1947, %v1986
  %vm1995 = vcmp.gt.s32.totalorder %v127, 4
  %v1996 = vsel %vm1995, 1, 0
  %1997 = vset.pattern.permute.xlu0 0
  %1998 = vperm.xlu0 %1997, %v1996
  %v1999 = vpop.permute.xlu0 %1998
  %vm2000 = vcmp.eq.s32.totalorder %v1999, 1
  %v2009 = vrot.slane %v1987, 4
  %v2010 = vrot.slane %v1988, 3
  %v2011 = vsel %vm592, %v2010, %v2009
  %v2012 = vrot.slane %v1989, 2
  %v2013 = vsel %vm595, %v2012, %v2011
  %v2014 = vrot.slane %v1990, 1
  %v2015 = vsel %vm598, %v2014, %v2013
  %v2016 = vsel %vm601, %v1991, %v2015
  %v2017 = vrot.slane %v1992, 7
  %v2018 = vsel %vm604, %v2017, %v2016
  %v2019 = vrot.slane %v1993, 6
  %v2020 = vsel %vm607, %v2019, %v2018
  %v2021 = vrot.slane %v1994, 5
  %v2022 = vsel %vm610, %v2021, %v2020
  %2023 = vrot.lane.b32.xlu0 %v2022, 96
  %v2024 = vpop.permute.xlu0 %2023
  %v2026 = vsel %vm2000, %v2024, %v1673
  %v2027 = vsel %vm2000, %v2024, 0.0
  %v2029 = vsel %vm287, %v2026, 0
  %2031 = vmatprep.subr.mxu0 0.0
  %2032 = vmatpush1.msra.mxu0 %v276
  %2033 = vmatprep.subr.mxu0 0.0
  %2034 = vmatpush1.msra.mxu0 %v277
  %2035 = vmatprep.subr.mxu0 0.0
  %2036 = vmatpush1.msra.mxu0 %v278
  %2037 = vmatprep.subr.mxu0 0.0
  %2038 = vmatpush1.msra.mxu0 %v279
  %2039 = vmatprep.subr.mxu0 0.0
  %2040 = vmatpush1.msra.mxu0 0.0
  %2041 = vmatprep.subr.mxu0 0.0
  %2042 = vmatpush1.msra.mxu0 0.0
  %2043 = vmatprep.subr.mxu0 0.0
  %2044 = vmatpush1.msra.mxu0 0.0
  %2045 = vmatprep.subr.mxu0 0.0
  %2046 = vmatpush1.msra.mxu0 0.0
  %2047 = vmatprep.subr.mxu0 0.0
  %2048 = vmatpush1.msra.mxu0 0.0
  %2049 = vmatprep.subr.mxu0 0.0
  %2050 = vmatpush1.msra.mxu0 0.0
  %2051 = vmatprep.subr.mxu0 0.0
  %2052 = vmatpush1.msra.mxu0 0.0
  %2053 = vmatprep.subr.mxu0 0.0
  %2054 = vmatpush1.msra.mxu0 0.0
  %2055 = vmatprep.subr.mxu0 0.0
  %2056 = vmatpush1.msra.mxu0 0.0
  %2057 = vmatprep.subr.mxu0 0.0
  %2058 = vmatpush1.msra.mxu0 0.0
  %2059 = vmatprep.subr.mxu0 0.0
  %2060 = vmatpush1.msra.mxu0 0.0
  %2061 = vmatprep.subr.mxu0 0.0
  %2062 = vmatpush1.msra.mxu0 0.0
  %2063 = vmatprep.subr.mxu0 0.0
  %2064 = vmatpush1.msra.mxu0 0.0
  %2065 = vmatprep.subr.mxu0 0.0
  %2066 = vmatpush1.msra.mxu0 0.0
  %2067 = vmatprep.subr.mxu0 0.0
  %2068 = vmatpush1.msra.mxu0 0.0
  %2069 = vmatprep.subr.mxu0 0.0
  %2070 = vmatpush1.msra.mxu0 0.0
  %2071 = vmatprep.subr.mxu0 0.0
  %2072 = vmatpush1.msra.mxu0 0.0
  %2073 = vmatprep.subr.mxu0 0.0
  %2074 = vmatpush1.msra.mxu0 0.0
  %2075 = vmatprep.subr.mxu0 0.0
  %2076 = vmatpush1.msra.mxu0 0.0
  %2077 = vmatprep.subr.mxu0 0.0
  %2078 = vmatpush1.msra.mxu0 0.0
  %2079 = vmatprep.subr.mxu0 0.0
  %2080 = vmatpush1.msra.mxu0 0.0
  %2081 = vmatprep.subr.mxu0 0.0
  %2082 = vmatpush1.msra.mxu0 0.0
  %2083 = vmatprep.subr.mxu0 0.0
  %2084 = vmatpush1.msra.mxu0 0.0
  %2085 = vmatprep.subr.mxu0 0.0
  %2086 = vmatpush1.msra.mxu0 0.0
  %2087 = vmatprep.subr.mxu0 0.0
  %2088 = vmatpush1.msra.mxu0 0.0
  %2089 = vmatprep.subr.mxu0 0.0
  %2090 = vmatpush1.msra.mxu0 0.0
  %2091 = vmatprep.subr.mxu0 0.0
  %2092 = vmatpush1.msra.mxu0 0.0
  %2093 = vmatprep.subr.mxu0 0.0
  %2094 = vmatpush1.msra.mxu0 0.0
  %2095 = vmatprep.mubr.f32.mxu0 0.0
  %2096 = vmatmul.mubr.f32.gmra.mrb[0].mxu0 %v2029
  %v2097 = vpop.f32.mrb[0].mxu0
  %v2098 = vadd.f32 %v285, %v2097
  %v2099 = vpop.f32.mrb[0].mxu0
  %2100 = vdwg.mxu0
  %v2102 = vrot.slane %v2098, 3
  %v2103 = vrot.slane %v2098, 4
  %v2104 = vrot.slane %v2098, 5
  %v2105 = vrot.slane %v2098, 6
  %v2106 = vrot.slane %v2098, 7
  %v2107 = vrot.slane %v2098, 1
  %v2108 = vrot.slane %v2098, 2
  %v2117 = vadd.f32 %v238, %v2102
  %v2118 = vadd.f32 %v243, %v2103
  %v2119 = vadd.f32 %v248, %v2104
  %v2120 = vadd.f32 %v253, %v2105
  %v2121 = vadd.f32 %v258, %v2106
  %v2122 = vadd.f32 %v263, %v2098
  %v2123 = vadd.f32 %v268, %v2107
  %v2124 = vadd.f32 %v273, %v2108
  %v2125 = vxor.u32 %v2117, 2147483648
  %v2126 = vxor.u32 %v2118, 2147483648
  %v2127 = vxor.u32 %v2119, 2147483648
  %v2128 = vxor.u32 %v2120, 2147483648
  %v2129 = vxor.u32 %v2121, 2147483648
  %v2130 = vxor.u32 %v2122, 2147483648
  %v2131 = vxor.u32 %v2123, 2147483648
  %v2132 = vxor.u32 %v2124, 2147483648
  %v2133 = vmul.f32 %v2125, 1.442695
  %v2134 = vpow.pop %v2133
  %v2135 = vmul.f32 %v2126, 1.442695
  %v2136 = vpow.pop %v2135
  %v2137 = vmul.f32 %v2127, 1.442695
  %v2138 = vpow.pop %v2137
  %v2139 = vmul.f32 %v2128, 1.442695
  %v2140 = vpow.pop %v2139
  %v2141 = vmul.f32 %v2129, 1.442695
  %v2142 = vpow.pop %v2141
  %v2143 = vmul.f32 %v2130, 1.442695
  %v2144 = vpow.pop %v2143
  %v2145 = vmul.f32 %v2131, 1.442695
  %v2146 = vpow.pop %v2145
  %v2147 = vmul.f32 %v2132, 1.442695
  %v2148 = vpow.pop %v2147
  %v2149 = vadd.f32 %v2134, 1.0
  %v2150 = vadd.f32 %v2136, 1.0
  %v2151 = vadd.f32 %v2138, 1.0
  %v2152 = vadd.f32 %v2140, 1.0
  %v2153 = vadd.f32 %v2142, 1.0
  %v2154 = vadd.f32 %v2144, 1.0
  %v2155 = vadd.f32 %v2146, 1.0
  %v2156 = vadd.f32 %v2148, 1.0
  %v2157 = vrcp.pop %v2149
  %v2158 = vmul.f32 1.0, %v2157
  %v2159 = vrcp.pop %v2150
  %v2160 = vmul.f32 1.0, %v2159
  %v2161 = vrcp.pop %v2151
  %v2162 = vmul.f32 1.0, %v2161
  %v2163 = vrcp.pop %v2152
  %v2164 = vmul.f32 1.0, %v2163
  %v2165 = vrcp.pop %v2153
  %v2166 = vmul.f32 1.0, %v2165
  %v2167 = vrcp.pop %v2154
  %v2168 = vmul.f32 1.0, %v2167
  %v2169 = vrcp.pop %v2155
  %v2170 = vmul.f32 1.0, %v2169
  %v2171 = vrcp.pop %v2156
  %v2172 = vmul.f32 1.0, %v2171
  %2173 = vrot.lane.b32.xlu0 %v2102, 64
  %v2174 = vpop.permute.xlu0 %2173
  %2175 = vrot.lane.b32.xlu0 %v2103, 64
  %v2176 = vpop.permute.xlu0 %2175
  %2177 = vrot.lane.b32.xlu0 %v2104, 64
  %v2178 = vpop.permute.xlu0 %2177
  %2179 = vrot.lane.b32.xlu0 %v2105, 64
  %v2180 = vpop.permute.xlu0 %2179
  %2181 = vrot.lane.b32.xlu0 %v2106, 64
  %v2182 = vpop.permute.xlu0 %2181
  %2183 = vrot.lane.b32.xlu0 %v2098, 64
  %v2184 = vpop.permute.xlu0 %2183
  %2185 = vrot.lane.b32.xlu0 %v2107, 64
  %v2186 = vpop.permute.xlu0 %2185
  %2187 = vrot.lane.b32.xlu0 %v2108, 64
  %v2188 = vpop.permute.xlu0 %2187
  %v2197 = vmul.f32 %v2158, %v2174
  %v2198 = vmul.f32 %v2160, %v2176
  %v2199 = vmul.f32 %v2162, %v2178
  %v2200 = vmul.f32 %v2164, %v2180
  %v2201 = vmul.f32 %v2166, %v2182
  %v2202 = vmul.f32 %v2168, %v2184
  %v2203 = vmul.f32 %v2170, %v2186
  %v2204 = vmul.f32 %v2172, %v2188
  %2213 = vrot.lane.b32.xlu0 %v2197, 64
  %v2214 = vpop.permute.xlu0 %2213
  %2215 = vrot.lane.b32.xlu0 %v2198, 64
  %v2216 = vpop.permute.xlu0 %2215
  %2217 = vrot.lane.b32.xlu0 %v2199, 64
  %v2218 = vpop.permute.xlu0 %2217
  %2219 = vrot.lane.b32.xlu0 %v2200, 64
  %v2220 = vpop.permute.xlu0 %2219
  %2221 = vrot.lane.b32.xlu0 %v2201, 64
  %v2222 = vpop.permute.xlu0 %2221
  %2223 = vrot.lane.b32.xlu0 %v2202, 64
  %v2224 = vpop.permute.xlu0 %2223
  %2225 = vrot.lane.b32.xlu0 %v2203, 64
  %v2226 = vpop.permute.xlu0 %2225
  %2227 = vrot.lane.b32.xlu0 %v2204, 64
  %v2228 = vpop.permute.xlu0 %2227
  %v2237 = vadd.f32 %v238, %v2214
  %v2238 = vadd.f32 %v243, %v2216
  %v2239 = vadd.f32 %v248, %v2218
  %v2240 = vadd.f32 %v253, %v2220
  %v2241 = vadd.f32 %v258, %v2222
  %v2242 = vadd.f32 %v263, %v2224
  %v2243 = vadd.f32 %v268, %v2226
  %v2244 = vadd.f32 %v273, %v2228
  %v2245 = vtanh.pop %v2237
  %v2246 = vtanh.pop %v2238
  %v2247 = vtanh.pop %v2239
  %v2248 = vtanh.pop %v2240
  %v2249 = vtanh.pop %v2241
  %v2250 = vtanh.pop %v2242
  %v2251 = vtanh.pop %v2243
  %v2252 = vtanh.pop %v2244
  %v2253 = vsub.f32 1.0, %v2158
  %v2254 = vsub.f32 1.0, %v2160
  %v2255 = vsub.f32 1.0, %v2162
  %v2256 = vsub.f32 1.0, %v2164
  %v2257 = vsub.f32 1.0, %v2166
  %v2258 = vsub.f32 1.0, %v2168
  %v2259 = vsub.f32 1.0, %v2170
  %v2260 = vsub.f32 1.0, %v2172
  %2269 = vrot.lane.b32.xlu0 %v2245, 96
  %v2270 = vpop.permute.xlu0 %2269
  %2271 = vrot.lane.b32.xlu0 %v2246, 96
  %v2272 = vpop.permute.xlu0 %2271
  %2273 = vrot.lane.b32.xlu0 %v2247, 96
  %v2274 = vpop.permute.xlu0 %2273
  %2275 = vrot.lane.b32.xlu0 %v2248, 96
  %v2276 = vpop.permute.xlu0 %2275
  %2277 = vrot.lane.b32.xlu0 %v2249, 96
  %v2278 = vpop.permute.xlu0 %2277
  %2279 = vrot.lane.b32.xlu0 %v2250, 96
  %v2280 = vpop.permute.xlu0 %2279
  %2281 = vrot.lane.b32.xlu0 %v2251, 96
  %v2282 = vpop.permute.xlu0 %2281
  %2283 = vrot.lane.b32.xlu0 %v2252, 96
  %v2284 = vpop.permute.xlu0 %2283
  %v2293 = vmul.f32 %v2253, %v2270
  %v2294 = vmul.f32 %v2254, %v2272
  %v2295 = vmul.f32 %v2255, %v2274
  %v2296 = vmul.f32 %v2256, %v2276
  %v2297 = vmul.f32 %v2257, %v2278
  %v2298 = vmul.f32 %v2258, %v2280
  %v2299 = vmul.f32 %v2259, %v2282
  %v2300 = vmul.f32 %v2260, %v2284
  %v2301 = vrot.slane %v2026, 3
  %v2302 = vrot.slane %v2026, 4
  %v2303 = vrot.slane %v2026, 5
  %v2304 = vrot.slane %v2026, 6
  %v2305 = vrot.slane %v2026, 7
  %v2306 = vrot.slane %v2026, 1
  %v2307 = vrot.slane %v2026, 2
  %2308 = vrot.lane.b32.xlu0 %v2301, 32
  %v2309 = vpop.permute.xlu0 %2308
  %2310 = vrot.lane.b32.xlu0 %v2302, 32
  %v2311 = vpop.permute.xlu0 %2310
  %2312 = vrot.lane.b32.xlu0 %v2303, 32
  %v2313 = vpop.permute.xlu0 %2312
  %2314 = vrot.lane.b32.xlu0 %v2304, 32
  %v2315 = vpop.permute.xlu0 %2314
  %2316 = vrot.lane.b32.xlu0 %v2305, 32
  %v2317 = vpop.permute.xlu0 %2316
  %2318 = vrot.lane.b32.xlu0 %v2026, 32
  %v2319 = vpop.permute.xlu0 %2318
  %2320 = vrot.lane.b32.xlu0 %v2306, 32
  %v2321 = vpop.permute.xlu0 %2320
  %2322 = vrot.lane.b32.xlu0 %v2307, 32
  %v2323 = vpop.permute.xlu0 %2322
  %v2332 = vmul.f32 %v2158, %v2309
  %v2333 = vmul.f32 %v2160, %v2311
  %v2334 = vmul.f32 %v2162, %v2313
  %v2335 = vmul.f32 %v2164, %v2315
  %v2336 = vmul.f32 %v2166, %v2317
  %v2337 = vmul.f32 %v2168, %v2319
  %v2338 = vmul.f32 %v2170, %v2321
  %v2339 = vmul.f32 %v2172, %v2323
  %v2340 = vadd.f32 %v2293, %v2332
  %v2341 = vadd.f32 %v2294, %v2333
  %v2342 = vadd.f32 %v2295, %v2334
  %v2343 = vadd.f32 %v2296, %v2335
  %v2344 = vadd.f32 %v2297, %v2336
  %v2345 = vadd.f32 %v2298, %v2337
  %v2346 = vadd.f32 %v2299, %v2338
  %v2347 = vadd.f32 %v2300, %v2339
  %vm2348 = vcmp.gt.s32.totalorder %v127, 5
  %v2349 = vsel %vm2348, 1, 0
  %2350 = vset.pattern.permute.xlu0 0
  %2351 = vperm.xlu0 %2350, %v2349
  %v2352 = vpop.permute.xlu0 %2351
  %vm2353 = vcmp.eq.s32.totalorder %v2352, 1
  %v2362 = vrot.slane %v2340, 5
  %v2363 = vrot.slane %v2341, 4
  %v2364 = vsel %vm592, %v2363, %v2362
  %v2365 = vrot.slane %v2342, 3
  %v2366 = vsel %vm595, %v2365, %v2364
  %v2367 = vrot.slane %v2343, 2
  %v2368 = vsel %vm598, %v2367, %v2366
  %v2369 = vrot.slane %v2344, 1
  %v2370 = vsel %vm601, %v2369, %v2368
  %v2371 = vsel %vm604, %v2345, %v2370
  %v2372 = vrot.slane %v2346, 7
  %v2373 = vsel %vm607, %v2372, %v2371
  %v2374 = vrot.slane %v2347, 6
  %v2375 = vsel %vm610, %v2374, %v2373
  %2376 = vrot.lane.b32.xlu0 %v2375, 96
  %v2377 = vpop.permute.xlu0 %2376
  %v2379 = vsel %vm2353, %v2377, %v2026
  %v2380 = vsel %vm2353, %v2377, 0.0
  %v2382 = vsel %vm287, %v2379, 0
  %2384 = vmatprep.subr.mxu0 0.0
  %2385 = vmatpush1.msra.mxu0 %v276
  %2386 = vmatprep.subr.mxu0 0.0
  %2387 = vmatpush1.msra.mxu0 %v277
  %2388 = vmatprep.subr.mxu0 0.0
  %2389 = vmatpush1.msra.mxu0 %v278
  %2390 = vmatprep.subr.mxu0 0.0
  %2391 = vmatpush1.msra.mxu0 %v279
  %2392 = vmatprep.subr.mxu0 0.0
  %2393 = vmatpush1.msra.mxu0 0.0
  %2394 = vmatprep.subr.mxu0 0.0
  %2395 = vmatpush1.msra.mxu0 0.0
  %2396 = vmatprep.subr.mxu0 0.0
  %2397 = vmatpush1.msra.mxu0 0.0
  %2398 = vmatprep.subr.mxu0 0.0
  %2399 = vmatpush1.msra.mxu0 0.0
  %2400 = vmatprep.subr.mxu0 0.0
  %2401 = vmatpush1.msra.mxu0 0.0
  %2402 = vmatprep.subr.mxu0 0.0
  %2403 = vmatpush1.msra.mxu0 0.0
  %2404 = vmatprep.subr.mxu0 0.0
  %2405 = vmatpush1.msra.mxu0 0.0
  %2406 = vmatprep.subr.mxu0 0.0
  %2407 = vmatpush1.msra.mxu0 0.0
  %2408 = vmatprep.subr.mxu0 0.0
  %2409 = vmatpush1.msra.mxu0 0.0
  %2410 = vmatprep.subr.mxu0 0.0
  %2411 = vmatpush1.msra.mxu0 0.0
  %2412 = vmatprep.subr.mxu0 0.0
  %2413 = vmatpush1.msra.mxu0 0.0
  %2414 = vmatprep.subr.mxu0 0.0
  %2415 = vmatpush1.msra.mxu0 0.0
  %2416 = vmatprep.subr.mxu0 0.0
  %2417 = vmatpush1.msra.mxu0 0.0
  %2418 = vmatprep.subr.mxu0 0.0
  %2419 = vmatpush1.msra.mxu0 0.0
  %2420 = vmatprep.subr.mxu0 0.0
  %2421 = vmatpush1.msra.mxu0 0.0
  %2422 = vmatprep.subr.mxu0 0.0
  %2423 = vmatpush1.msra.mxu0 0.0
  %2424 = vmatprep.subr.mxu0 0.0
  %2425 = vmatpush1.msra.mxu0 0.0
  %2426 = vmatprep.subr.mxu0 0.0
  %2427 = vmatpush1.msra.mxu0 0.0
  %2428 = vmatprep.subr.mxu0 0.0
  %2429 = vmatpush1.msra.mxu0 0.0
  %2430 = vmatprep.subr.mxu0 0.0
  %2431 = vmatpush1.msra.mxu0 0.0
  %2432 = vmatprep.subr.mxu0 0.0
  %2433 = vmatpush1.msra.mxu0 0.0
  %2434 = vmatprep.subr.mxu0 0.0
  %2435 = vmatpush1.msra.mxu0 0.0
  %2436 = vmatprep.subr.mxu0 0.0
  %2437 = vmatpush1.msra.mxu0 0.0
  %2438 = vmatprep.subr.mxu0 0.0
  %2439 = vmatpush1.msra.mxu0 0.0
  %2440 = vmatprep.subr.mxu0 0.0
  %2441 = vmatpush1.msra.mxu0 0.0
  %2442 = vmatprep.subr.mxu0 0.0
  %2443 = vmatpush1.msra.mxu0 0.0
  %2444 = vmatprep.subr.mxu0 0.0
  %2445 = vmatpush1.msra.mxu0 0.0
  %2446 = vmatprep.subr.mxu0 0.0
  %2447 = vmatpush1.msra.mxu0 0.0
  %2448 = vmatprep.mubr.f32.mxu0 0.0
  %2449 = vmatmul.mubr.f32.gmra.mrb[0].mxu0 %v2382
  %v2450 = vpop.f32.mrb[0].mxu0
  %v2451 = vadd.f32 %v285, %v2450
  %v2452 = vpop.f32.mrb[0].mxu0
  %2453 = vdwg.mxu0
  %v2455 = vrot.slane %v2451, 2
  %v2456 = vrot.slane %v2451, 3
  %v2457 = vrot.slane %v2451, 4
  %v2458 = vrot.slane %v2451, 5
  %v2459 = vrot.slane %v2451, 6
  %v2460 = vrot.slane %v2451, 7
  %v2461 = vrot.slane %v2451, 1
  %v2470 = vadd.f32 %v238, %v2455
  %v2471 = vadd.f32 %v243, %v2456
  %v2472 = vadd.f32 %v248, %v2457
  %v2473 = vadd.f32 %v253, %v2458
  %v2474 = vadd.f32 %v258, %v2459
  %v2475 = vadd.f32 %v263, %v2460
  %v2476 = vadd.f32 %v268, %v2451
  %v2477 = vadd.f32 %v273, %v2461
  %v2478 = vxor.u32 %v2470, 2147483648
  %v2479 = vxor.u32 %v2471, 2147483648
  %v2480 = vxor.u32 %v2472, 2147483648
  %v2481 = vxor.u32 %v2473, 2147483648
  %v2482 = vxor.u32 %v2474, 2147483648
  %v2483 = vxor.u32 %v2475, 2147483648
  %v2484 = vxor.u32 %v2476, 2147483648
  %v2485 = vxor.u32 %v2477, 2147483648
  %v2486 = vmul.f32 %v2478, 1.442695
  %v2487 = vpow.pop %v2486
  %v2488 = vmul.f32 %v2479, 1.442695
  %v2489 = vpow.pop %v2488
  %v2490 = vmul.f32 %v2480, 1.442695
  %v2491 = vpow.pop %v2490
  %v2492 = vmul.f32 %v2481, 1.442695
  %v2493 = vpow.pop %v2492
  %v2494 = vmul.f32 %v2482, 1.442695
  %v2495 = vpow.pop %v2494
  %v2496 = vmul.f32 %v2483, 1.442695
  %v2497 = vpow.pop %v2496
  %v2498 = vmul.f32 %v2484, 1.442695
  %v2499 = vpow.pop %v2498
  %v2500 = vmul.f32 %v2485, 1.442695
  %v2501 = vpow.pop %v2500
  %v2502 = vadd.f32 %v2487, 1.0
  %v2503 = vadd.f32 %v2489, 1.0
  %v2504 = vadd.f32 %v2491, 1.0
  %v2505 = vadd.f32 %v2493, 1.0
  %v2506 = vadd.f32 %v2495, 1.0
  %v2507 = vadd.f32 %v2497, 1.0
  %v2508 = vadd.f32 %v2499, 1.0
  %v2509 = vadd.f32 %v2501, 1.0
  %v2510 = vrcp.pop %v2502
  %v2511 = vmul.f32 1.0, %v2510
  %v2512 = vrcp.pop %v2503
  %v2513 = vmul.f32 1.0, %v2512
  %v2514 = vrcp.pop %v2504
  %v2515 = vmul.f32 1.0, %v2514
  %v2516 = vrcp.pop %v2505
  %v2517 = vmul.f32 1.0, %v2516
  %v2518 = vrcp.pop %v2506
  %v2519 = vmul.f32 1.0, %v2518
  %v2520 = vrcp.pop %v2507
  %v2521 = vmul.f32 1.0, %v2520
  %v2522 = vrcp.pop %v2508
  %v2523 = vmul.f32 1.0, %v2522
  %v2524 = vrcp.pop %v2509
  %v2525 = vmul.f32 1.0, %v2524
  %2526 = vrot.lane.b32.xlu0 %v2455, 64
  %v2527 = vpop.permute.xlu0 %2526
  %2528 = vrot.lane.b32.xlu0 %v2456, 64
  %v2529 = vpop.permute.xlu0 %2528
  %2530 = vrot.lane.b32.xlu0 %v2457, 64
  %v2531 = vpop.permute.xlu0 %2530
  %2532 = vrot.lane.b32.xlu0 %v2458, 64
  %v2533 = vpop.permute.xlu0 %2532
  %2534 = vrot.lane.b32.xlu0 %v2459, 64
  %v2535 = vpop.permute.xlu0 %2534
  %2536 = vrot.lane.b32.xlu0 %v2460, 64
  %v2537 = vpop.permute.xlu0 %2536
  %2538 = vrot.lane.b32.xlu0 %v2451, 64
  %v2539 = vpop.permute.xlu0 %2538
  %2540 = vrot.lane.b32.xlu0 %v2461, 64
  %v2541 = vpop.permute.xlu0 %2540
  %v2550 = vmul.f32 %v2511, %v2527
  %v2551 = vmul.f32 %v2513, %v2529
  %v2552 = vmul.f32 %v2515, %v2531
  %v2553 = vmul.f32 %v2517, %v2533
  %v2554 = vmul.f32 %v2519, %v2535
  %v2555 = vmul.f32 %v2521, %v2537
  %v2556 = vmul.f32 %v2523, %v2539
  %v2557 = vmul.f32 %v2525, %v2541
  %2566 = vrot.lane.b32.xlu0 %v2550, 64
  %v2567 = vpop.permute.xlu0 %2566
  %2568 = vrot.lane.b32.xlu0 %v2551, 64
  %v2569 = vpop.permute.xlu0 %2568
  %2570 = vrot.lane.b32.xlu0 %v2552, 64
  %v2571 = vpop.permute.xlu0 %2570
  %2572 = vrot.lane.b32.xlu0 %v2553, 64
  %v2573 = vpop.permute.xlu0 %2572
  %2574 = vrot.lane.b32.xlu0 %v2554, 64
  %v2575 = vpop.permute.xlu0 %2574
  %2576 = vrot.lane.b32.xlu0 %v2555, 64
  %v2577 = vpop.permute.xlu0 %2576
  %2578 = vrot.lane.b32.xlu0 %v2556, 64
  %v2579 = vpop.permute.xlu0 %2578
  %2580 = vrot.lane.b32.xlu0 %v2557, 64
  %v2581 = vpop.permute.xlu0 %2580
  %v2590 = vadd.f32 %v238, %v2567
  %v2591 = vadd.f32 %v243, %v2569
  %v2592 = vadd.f32 %v248, %v2571
  %v2593 = vadd.f32 %v253, %v2573
  %v2594 = vadd.f32 %v258, %v2575
  %v2595 = vadd.f32 %v263, %v2577
  %v2596 = vadd.f32 %v268, %v2579
  %v2597 = vadd.f32 %v273, %v2581
  %v2598 = vtanh.pop %v2590
  %v2599 = vtanh.pop %v2591
  %v2600 = vtanh.pop %v2592
  %v2601 = vtanh.pop %v2593
  %v2602 = vtanh.pop %v2594
  %v2603 = vtanh.pop %v2595
  %v2604 = vtanh.pop %v2596
  %v2605 = vtanh.pop %v2597
  %v2606 = vsub.f32 1.0, %v2511
  %v2607 = vsub.f32 1.0, %v2513
  %v2608 = vsub.f32 1.0, %v2515
  %v2609 = vsub.f32 1.0, %v2517
  %v2610 = vsub.f32 1.0, %v2519
  %v2611 = vsub.f32 1.0, %v2521
  %v2612 = vsub.f32 1.0, %v2523
  %v2613 = vsub.f32 1.0, %v2525
  %2622 = vrot.lane.b32.xlu0 %v2598, 96
  %v2623 = vpop.permute.xlu0 %2622
  %2624 = vrot.lane.b32.xlu0 %v2599, 96
  %v2625 = vpop.permute.xlu0 %2624
  %2626 = vrot.lane.b32.xlu0 %v2600, 96
  %v2627 = vpop.permute.xlu0 %2626
  %2628 = vrot.lane.b32.xlu0 %v2601, 96
  %v2629 = vpop.permute.xlu0 %2628
  %2630 = vrot.lane.b32.xlu0 %v2602, 96
  %v2631 = vpop.permute.xlu0 %2630
  %2632 = vrot.lane.b32.xlu0 %v2603, 96
  %v2633 = vpop.permute.xlu0 %2632
  %2634 = vrot.lane.b32.xlu0 %v2604, 96
  %v2635 = vpop.permute.xlu0 %2634
  %2636 = vrot.lane.b32.xlu0 %v2605, 96
  %v2637 = vpop.permute.xlu0 %2636
  %v2646 = vmul.f32 %v2606, %v2623
  %v2647 = vmul.f32 %v2607, %v2625
  %v2648 = vmul.f32 %v2608, %v2627
  %v2649 = vmul.f32 %v2609, %v2629
  %v2650 = vmul.f32 %v2610, %v2631
  %v2651 = vmul.f32 %v2611, %v2633
  %v2652 = vmul.f32 %v2612, %v2635
  %v2653 = vmul.f32 %v2613, %v2637
  %v2654 = vrot.slane %v2379, 2
  %v2655 = vrot.slane %v2379, 3
  %v2656 = vrot.slane %v2379, 4
  %v2657 = vrot.slane %v2379, 5
  %v2658 = vrot.slane %v2379, 6
  %v2659 = vrot.slane %v2379, 7
  %v2660 = vrot.slane %v2379, 1
  %2661 = vrot.lane.b32.xlu0 %v2654, 32
  %v2662 = vpop.permute.xlu0 %2661
  %2663 = vrot.lane.b32.xlu0 %v2655, 32
  %v2664 = vpop.permute.xlu0 %2663
  %2665 = vrot.lane.b32.xlu0 %v2656, 32
  %v2666 = vpop.permute.xlu0 %2665
  %2667 = vrot.lane.b32.xlu0 %v2657, 32
  %v2668 = vpop.permute.xlu0 %2667
  %2669 = vrot.lane.b32.xlu0 %v2658, 32
  %v2670 = vpop.permute.xlu0 %2669
  %2671 = vrot.lane.b32.xlu0 %v2659, 32
  %v2672 = vpop.permute.xlu0 %2671
  %2673 = vrot.lane.b32.xlu0 %v2379, 32
  %v2674 = vpop.permute.xlu0 %2673
  %2675 = vrot.lane.b32.xlu0 %v2660, 32
  %v2676 = vpop.permute.xlu0 %2675
  %v2685 = vmul.f32 %v2511, %v2662
  %v2686 = vmul.f32 %v2513, %v2664
  %v2687 = vmul.f32 %v2515, %v2666
  %v2688 = vmul.f32 %v2517, %v2668
  %v2689 = vmul.f32 %v2519, %v2670
  %v2690 = vmul.f32 %v2521, %v2672
  %v2691 = vmul.f32 %v2523, %v2674
  %v2692 = vmul.f32 %v2525, %v2676
  %v2693 = vadd.f32 %v2646, %v2685
  %v2694 = vadd.f32 %v2647, %v2686
  %v2695 = vadd.f32 %v2648, %v2687
  %v2696 = vadd.f32 %v2649, %v2688
  %v2697 = vadd.f32 %v2650, %v2689
  %v2698 = vadd.f32 %v2651, %v2690
  %v2699 = vadd.f32 %v2652, %v2691
  %v2700 = vadd.f32 %v2653, %v2692
  %vm2701 = vcmp.gt.s32.totalorder %v127, 6
  %v2702 = vsel %vm2701, 1, 0
  %2703 = vset.pattern.permute.xlu0 0
  %2704 = vperm.xlu0 %2703, %v2702
  %v2705 = vpop.permute.xlu0 %2704
  %vm2706 = vcmp.eq.s32.totalorder %v2705, 1
  %v2715 = vrot.slane %v2693, 6
  %v2716 = vrot.slane %v2694, 5
  %v2717 = vsel %vm592, %v2716, %v2715
  %v2718 = vrot.slane %v2695, 4
  %v2719 = vsel %vm595, %v2718, %v2717
  %v2720 = vrot.slane %v2696, 3
  %v2721 = vsel %vm598, %v2720, %v2719
  %v2722 = vrot.slane %v2697, 2
  %v2723 = vsel %vm601, %v2722, %v2721
  %v2724 = vrot.slane %v2698, 1
  %v2725 = vsel %vm604, %v2724, %v2723
  %v2726 = vsel %vm607, %v2699, %v2725
  %v2727 = vrot.slane %v2700, 7
  %v2728 = vsel %vm610, %v2727, %v2726
  %2729 = vrot.lane.b32.xlu0 %v2728, 96
  %v2730 = vpop.permute.xlu0 %2729
  %v2732 = vsel %vm2706, %v2730, %v2379
  %v2733 = vsel %vm2706, %v2730, 0.0
  %v2735 = vsel %vm287, %v2732, 0
  %2737 = vmatprep.subr.mxu0 0.0
  %2738 = vmatpush1.msra.mxu0 %v276
  %2739 = vmatprep.subr.mxu0 0.0
  %2740 = vmatpush1.msra.mxu0 %v277
  %2741 = vmatprep.subr.mxu0 0.0
  %2742 = vmatpush1.msra.mxu0 %v278
  %2743 = vmatprep.subr.mxu0 0.0
  %2744 = vmatpush1.msra.mxu0 %v279
  %2745 = vmatprep.subr.mxu0 0.0
  %2746 = vmatpush1.msra.mxu0 0.0
  %2747 = vmatprep.subr.mxu0 0.0
  %2748 = vmatpush1.msra.mxu0 0.0
  %2749 = vmatprep.subr.mxu0 0.0
  %2750 = vmatpush1.msra.mxu0 0.0
  %2751 = vmatprep.subr.mxu0 0.0
  %2752 = vmatpush1.msra.mxu0 0.0
  %2753 = vmatprep.subr.mxu0 0.0
  %2754 = vmatpush1.msra.mxu0 0.0
  %2755 = vmatprep.subr.mxu0 0.0
  %2756 = vmatpush1.msra.mxu0 0.0
  %2757 = vmatprep.subr.mxu0 0.0
  %2758 = vmatpush1.msra.mxu0 0.0
  %2759 = vmatprep.subr.mxu0 0.0
  %2760 = vmatpush1.msra.mxu0 0.0
  %2761 = vmatprep.subr.mxu0 0.0
  %2762 = vmatpush1.msra.mxu0 0.0
  %2763 = vmatprep.subr.mxu0 0.0
  %2764 = vmatpush1.msra.mxu0 0.0
  %2765 = vmatprep.subr.mxu0 0.0
  %2766 = vmatpush1.msra.mxu0 0.0
  %2767 = vmatprep.subr.mxu0 0.0
  %2768 = vmatpush1.msra.mxu0 0.0
  %2769 = vmatprep.subr.mxu0 0.0
  %2770 = vmatpush1.msra.mxu0 0.0
  %2771 = vmatprep.subr.mxu0 0.0
  %2772 = vmatpush1.msra.mxu0 0.0
  %2773 = vmatprep.subr.mxu0 0.0
  %2774 = vmatpush1.msra.mxu0 0.0
  %2775 = vmatprep.subr.mxu0 0.0
  %2776 = vmatpush1.msra.mxu0 0.0
  %2777 = vmatprep.subr.mxu0 0.0
  %2778 = vmatpush1.msra.mxu0 0.0
  %2779 = vmatprep.subr.mxu0 0.0
  %2780 = vmatpush1.msra.mxu0 0.0
  %2781 = vmatprep.subr.mxu0 0.0
  %2782 = vmatpush1.msra.mxu0 0.0
  %2783 = vmatprep.subr.mxu0 0.0
  %2784 = vmatpush1.msra.mxu0 0.0
  %2785 = vmatprep.subr.mxu0 0.0
  %2786 = vmatpush1.msra.mxu0 0.0
  %2787 = vmatprep.subr.mxu0 0.0
  %2788 = vmatpush1.msra.mxu0 0.0
  %2789 = vmatprep.subr.mxu0 0.0
  %2790 = vmatpush1.msra.mxu0 0.0
  %2791 = vmatprep.subr.mxu0 0.0
  %2792 = vmatpush1.msra.mxu0 0.0
  %2793 = vmatprep.subr.mxu0 0.0
  %2794 = vmatpush1.msra.mxu0 0.0
  %2795 = vmatprep.subr.mxu0 0.0
  %2796 = vmatpush1.msra.mxu0 0.0
  %2797 = vmatprep.subr.mxu0 0.0
  %2798 = vmatpush1.msra.mxu0 0.0
  %2799 = vmatprep.subr.mxu0 0.0
  %2800 = vmatpush1.msra.mxu0 0.0
  %2801 = vmatprep.mubr.f32.mxu0 0.0
  %2802 = vmatmul.mubr.f32.gmra.mrb[0].mxu0 %v2735
  %v2803 = vpop.f32.mrb[0].mxu0
  %v2804 = vadd.f32 %v285, %v2803
  %v2805 = vpop.f32.mrb[0].mxu0
  %2806 = vdwg.mxu0
  %v2808 = vrot.slane %v2804, 1
  %v2809 = vrot.slane %v2804, 2
  %v2810 = vrot.slane %v2804, 3
  %v2811 = vrot.slane %v2804, 4
  %v2812 = vrot.slane %v2804, 5
  %v2813 = vrot.slane %v2804, 6
  %v2814 = vrot.slane %v2804, 7
  %v2823 = vadd.f32 %v238, %v2808
  %v2824 = vadd.f32 %v243, %v2809
  %v2825 = vadd.f32 %v248, %v2810
  %v2826 = vadd.f32 %v253, %v2811
  %v2827 = vadd.f32 %v258, %v2812
  %v2828 = vadd.f32 %v263, %v2813
  %v2829 = vadd.f32 %v268, %v2814
  %v2830 = vadd.f32 %v273, %v2804
  %v2831 = vxor.u32 %v2823, 2147483648
  %v2832 = vxor.u32 %v2824, 2147483648
  %v2833 = vxor.u32 %v2825, 2147483648
  %v2834 = vxor.u32 %v2826, 2147483648
  %v2835 = vxor.u32 %v2827, 2147483648
  %v2836 = vxor.u32 %v2828, 2147483648
  %v2837 = vxor.u32 %v2829, 2147483648
  %v2838 = vxor.u32 %v2830, 2147483648
  %v2839 = vmul.f32 %v2831, 1.442695
  %v2840 = vpow.pop %v2839
  %v2841 = vmul.f32 %v2832, 1.442695
  %v2842 = vpow.pop %v2841
  %v2843 = vmul.f32 %v2833, 1.442695
  %v2844 = vpow.pop %v2843
  %v2845 = vmul.f32 %v2834, 1.442695
  %v2846 = vpow.pop %v2845
  %v2847 = vmul.f32 %v2835, 1.442695
  %v2848 = vpow.pop %v2847
  %v2849 = vmul.f32 %v2836, 1.442695
  %v2850 = vpow.pop %v2849
  %v2851 = vmul.f32 %v2837, 1.442695
  %v2852 = vpow.pop %v2851
  %v2853 = vmul.f32 %v2838, 1.442695
  %v2854 = vpow.pop %v2853
  %v2855 = vadd.f32 %v2840, 1.0
  %v2856 = vadd.f32 %v2842, 1.0
  %v2857 = vadd.f32 %v2844, 1.0
  %v2858 = vadd.f32 %v2846, 1.0
  %v2859 = vadd.f32 %v2848, 1.0
  %v2860 = vadd.f32 %v2850, 1.0
  %v2861 = vadd.f32 %v2852, 1.0
  %v2862 = vadd.f32 %v2854, 1.0
  %v2863 = vrcp.pop %v2855
  %v2864 = vmul.f32 1.0, %v2863
  %v2865 = vrcp.pop %v2856
  %v2866 = vmul.f32 1.0, %v2865
  %v2867 = vrcp.pop %v2857
  %v2868 = vmul.f32 1.0, %v2867
  %v2869 = vrcp.pop %v2858
  %v2870 = vmul.f32 1.0, %v2869
  %v2871 = vrcp.pop %v2859
  %v2872 = vmul.f32 1.0, %v2871
  %v2873 = vrcp.pop %v2860
  %v2874 = vmul.f32 1.0, %v2873
  %v2875 = vrcp.pop %v2861
  %v2876 = vmul.f32 1.0, %v2875
  %v2877 = vrcp.pop %v2862
  %v2878 = vmul.f32 1.0, %v2877
  %2879 = vrot.lane.b32.xlu0 %v2808, 64
  %v2880 = vpop.permute.xlu0 %2879
  %2881 = vrot.lane.b32.xlu0 %v2809, 64
  %v2882 = vpop.permute.xlu0 %2881
  %2883 = vrot.lane.b32.xlu0 %v2810, 64
  %v2884 = vpop.permute.xlu0 %2883
  %2885 = vrot.lane.b32.xlu0 %v2811, 64
  %v2886 = vpop.permute.xlu0 %2885
  %2887 = vrot.lane.b32.xlu0 %v2812, 64
  %v2888 = vpop.permute.xlu0 %2887
  %2889 = vrot.lane.b32.xlu0 %v2813, 64
  %v2890 = vpop.permute.xlu0 %2889
  %2891 = vrot.lane.b32.xlu0 %v2814, 64
  %v2892 = vpop.permute.xlu0 %2891
  %2893 = vrot.lane.b32.xlu0 %v2804, 64
  %v2894 = vpop.permute.xlu0 %2893
  %v2903 = vmul.f32 %v2864, %v2880
  %v2904 = vmul.f32 %v2866, %v2882
  %v2905 = vmul.f32 %v2868, %v2884
  %v2906 = vmul.f32 %v2870, %v2886
  %v2907 = vmul.f32 %v2872, %v2888
  %v2908 = vmul.f32 %v2874, %v2890
  %v2909 = vmul.f32 %v2876, %v2892
  %v2910 = vmul.f32 %v2878, %v2894
  %2919 = vrot.lane.b32.xlu0 %v2903, 64
  %v2920 = vpop.permute.xlu0 %2919
  %2921 = vrot.lane.b32.xlu0 %v2904, 64
  %v2922 = vpop.permute.xlu0 %2921
  %2923 = vrot.lane.b32.xlu0 %v2905, 64
  %v2924 = vpop.permute.xlu0 %2923
  %2925 = vrot.lane.b32.xlu0 %v2906, 64
  %v2926 = vpop.permute.xlu0 %2925
  %2927 = vrot.lane.b32.xlu0 %v2907, 64
  %v2928 = vpop.permute.xlu0 %2927
  %2929 = vrot.lane.b32.xlu0 %v2908, 64
  %v2930 = vpop.permute.xlu0 %2929
  %2931 = vrot.lane.b32.xlu0 %v2909, 64
  %v2932 = vpop.permute.xlu0 %2931
  %2933 = vrot.lane.b32.xlu0 %v2910, 64
  %v2934 = vpop.permute.xlu0 %2933
  %v2943 = vadd.f32 %v238, %v2920
  %v2944 = vadd.f32 %v243, %v2922
  %v2945 = vadd.f32 %v248, %v2924
  %v2946 = vadd.f32 %v253, %v2926
  %v2947 = vadd.f32 %v258, %v2928
  %v2948 = vadd.f32 %v263, %v2930
  %v2949 = vadd.f32 %v268, %v2932
  %v2950 = vadd.f32 %v273, %v2934
  %v2951 = vtanh.pop %v2943
  %v2952 = vtanh.pop %v2944
  %v2953 = vtanh.pop %v2945
  %v2954 = vtanh.pop %v2946
  %v2955 = vtanh.pop %v2947
  %v2956 = vtanh.pop %v2948
  %v2957 = vtanh.pop %v2949
  %v2958 = vtanh.pop %v2950
  %v2959 = vsub.f32 1.0, %v2864
  %v2960 = vsub.f32 1.0, %v2866
  %v2961 = vsub.f32 1.0, %v2868
  %v2962 = vsub.f32 1.0, %v2870
  %v2963 = vsub.f32 1.0, %v2872
  %v2964 = vsub.f32 1.0, %v2874
  %v2965 = vsub.f32 1.0, %v2876
  %v2966 = vsub.f32 1.0, %v2878
  %2975 = vrot.lane.b32.xlu0 %v2951, 96
  %v2976 = vpop.permute.xlu0 %2975
  %2977 = vrot.lane.b32.xlu0 %v2952, 96
  %v2978 = vpop.permute.xlu0 %2977
  %2979 = vrot.lane.b32.xlu0 %v2953, 96
  %v2980 = vpop.permute.xlu0 %2979
  %2981 = vrot.lane.b32.xlu0 %v2954, 96
  %v2982 = vpop.permute.xlu0 %2981
  %2983 = vrot.lane.b32.xlu0 %v2955, 96
  %v2984 = vpop.permute.xlu0 %2983
  %2985 = vrot.lane.b32.xlu0 %v2956, 96
  %v2986 = vpop.permute.xlu0 %2985
  %2987 = vrot.lane.b32.xlu0 %v2957, 96
  %v2988 = vpop.permute.xlu0 %2987
  %2989 = vrot.lane.b32.xlu0 %v2958, 96
  %v2990 = vpop.permute.xlu0 %2989
  %v2999 = vmul.f32 %v2959, %v2976
  %v3000 = vmul.f32 %v2960, %v2978
  %v3001 = vmul.f32 %v2961, %v2980
  %v3002 = vmul.f32 %v2962, %v2982
  %v3003 = vmul.f32 %v2963, %v2984
  %v3004 = vmul.f32 %v2964, %v2986
  %v3005 = vmul.f32 %v2965, %v2988
  %v3006 = vmul.f32 %v2966, %v2990
  %v3007 = vrot.slane %v2732, 1
  %v3008 = vrot.slane %v2732, 2
  %v3009 = vrot.slane %v2732, 3
  %v3010 = vrot.slane %v2732, 4
  %v3011 = vrot.slane %v2732, 5
  %v3012 = vrot.slane %v2732, 6
  %v3013 = vrot.slane %v2732, 7
  %3014 = vrot.lane.b32.xlu0 %v3007, 32
  %v3015 = vpop.permute.xlu0 %3014
  %3016 = vrot.lane.b32.xlu0 %v3008, 32
  %v3017 = vpop.permute.xlu0 %3016
  %3018 = vrot.lane.b32.xlu0 %v3009, 32
  %v3019 = vpop.permute.xlu0 %3018
  %3020 = vrot.lane.b32.xlu0 %v3010, 32
  %v3021 = vpop.permute.xlu0 %3020
  %3022 = vrot.lane.b32.xlu0 %v3011, 32
  %v3023 = vpop.permute.xlu0 %3022
  %3024 = vrot.lane.b32.xlu0 %v3012, 32
  %v3025 = vpop.permute.xlu0 %3024
  %3026 = vrot.lane.b32.xlu0 %v3013, 32
  %v3027 = vpop.permute.xlu0 %3026
  %3028 = vrot.lane.b32.xlu0 %v2732, 32
  %v3029 = vpop.permute.xlu0 %3028
  %v3038 = vmul.f32 %v2864, %v3015
  %v3039 = vmul.f32 %v2866, %v3017
  %v3040 = vmul.f32 %v2868, %v3019
  %v3041 = vmul.f32 %v2870, %v3021
  %v3042 = vmul.f32 %v2872, %v3023
  %v3043 = vmul.f32 %v2874, %v3025
  %v3044 = vmul.f32 %v2876, %v3027
  %v3045 = vmul.f32 %v2878, %v3029
  %v3046 = vadd.f32 %v2999, %v3038
  %v3047 = vadd.f32 %v3000, %v3039
  %v3048 = vadd.f32 %v3001, %v3040
  %v3049 = vadd.f32 %v3002, %v3041
  %v3050 = vadd.f32 %v3003, %v3042
  %v3051 = vadd.f32 %v3004, %v3043
  %v3052 = vadd.f32 %v3005, %v3044
  %v3053 = vadd.f32 %v3006, %v3045
  %vm3054 = vcmp.gt.s32.totalorder %v127, 7
  %v3055 = vsel %vm3054, 1, 0
  %3056 = vset.pattern.permute.xlu0 0
  %3057 = vperm.xlu0 %3056, %v3055
  %v3058 = vpop.permute.xlu0 %3057
  %vm3059 = vcmp.eq.s32.totalorder %v3058, 1
  %v3068 = vrot.slane %v3046, 7
  %v3069 = vrot.slane %v3047, 6
  %v3070 = vsel %vm592, %v3069, %v3068
  %v3071 = vrot.slane %v3048, 5
  %v3072 = vsel %vm595, %v3071, %v3070
  %v3073 = vrot.slane %v3049, 4
  %v3074 = vsel %vm598, %v3073, %v3072
  %v3075 = vrot.slane %v3050, 3
  %v3076 = vsel %vm601, %v3075, %v3074
  %v3077 = vrot.slane %v3051, 2
  %v3078 = vsel %vm604, %v3077, %v3076
  %v3079 = vrot.slane %v3052, 1
  %v3080 = vsel %vm607, %v3079, %v3078
  %v3081 = vsel %vm610, %v3053, %v3080
  %3082 = vrot.lane.b32.xlu0 %v3081, 96
  %v3083 = vpop.permute.xlu0 %3082
  %v3085 = vsel %vm3059, %v3083, %v2732
  %v3086 = vsel %vm3059, %v3083, 0.0
  %v3087 = vcombine.high %v615, %v615
  %v3089 = vunpack.c.l.s4 1966171168
  %v3090 = vunpack.c.0.s8 %v3089
  %v3091 = vlaneseq
  %v3092 = vshrl.u32 %v3091, 7
  %v3093 = vsub.s32 %v3090, %v3092
  %v3094 = vrot.slane %v615, %v3093
  %v3096 = vunpack.c.l.s4 1966171168
  %v3097 = vunpack.c.0.s8 %v3096
  %v3098 = vlaneseq
  %v3099 = vshrl.u32 %v3098, 7
  %v3100 = vsub.s32 %v3097, %v3099
  %v3101 = vrot.slane %v3087, %v3100
  %v3102 = vcombine.high %v3094, %v3094
  %v3103 = vcombine.high %v3101, %v3101
  %v3105 = vunpack.c.l.s4 1966171168
  %v3106 = vunpack.c.0.s8 %v3105
  %v3107 = vlaneseq
  %v3108 = vshrl.u32 %v3107, 7
  %v3109 = vsub.s32 %v3106, %v3108
  %v3110 = vrot.slane %v3094, %v3109
  %v3112 = vunpack.c.l.s4 1966171168
  %v3113 = vunpack.c.0.s8 %v3112
  %v3114 = vlaneseq
  %v3115 = vshrl.u32 %v3114, 7
  %v3116 = vsub.s32 %v3113, %v3115
  %v3117 = vrot.slane %v3101, %v3116
  %v3119 = vunpack.c.l.s4 1966171168
  %v3120 = vunpack.c.0.s8 %v3119
  %v3121 = vlaneseq
  %v3122 = vshrl.u32 %v3121, 7
  %v3123 = vsub.s32 %v3120, %v3122
  %v3124 = vrot.slane %v3102, %v3123
  %v3126 = vunpack.c.l.s4 1966171168
  %v3127 = vunpack.c.0.s8 %v3126
  %v3128 = vlaneseq
  %v3129 = vshrl.u32 %v3128, 7
  %v3130 = vsub.s32 %v3127, %v3129
  %v3131 = vrot.slane %v3103, %v3130
  %v3132 = vcombine.high %v3110, %v3110
  %v3133 = vcombine.high %v3117, %v3117
  %v3134 = vcombine.high %v3124, %v3124
  %v3135 = vcombine.high %v3131, %v3131
  %v3145 = vcombine.high %v968, %v968
  %v3147 = vunpack.c.l.s4 1966171168
  %v3148 = vunpack.c.0.s8 %v3147
  %v3149 = vlaneseq
  %v3150 = vshrl.u32 %v3149, 7
  %v3151 = vsub.s32 %v3148, %v3150
  %v3152 = vrot.slane %v968, %v3151
  %v3154 = vunpack.c.l.s4 1966171168
  %v3155 = vunpack.c.0.s8 %v3154
  %v3156 = vlaneseq
  %v3157 = vshrl.u32 %v3156, 7
  %v3158 = vsub.s32 %v3155, %v3157
  %v3159 = vrot.slane %v3145, %v3158
  %v3160 = vcombine.high %v3152, %v3152
  %v3161 = vcombine.high %v3159, %v3159
  %v3163 = vunpack.c.l.s4 1966171168
  %v3164 = vunpack.c.0.s8 %v3163
  %v3165 = vlaneseq
  %v3166 = vshrl.u32 %v3165, 7
  %v3167 = vsub.s32 %v3164, %v3166
  %v3168 = vrot.slane %v3152, %v3167
  %v3170 = vunpack.c.l.s4 1966171168
  %v3171 = vunpack.c.0.s8 %v3170
  %v3172 = vlaneseq
  %v3173 = vshrl.u32 %v3172, 7
  %v3174 = vsub.s32 %v3171, %v3173
  %v3175 = vrot.slane %v3159, %v3174
  %v3177 = vunpack.c.l.s4 1966171168
  %v3178 = vunpack.c.0.s8 %v3177
  %v3179 = vlaneseq
  %v3180 = vshrl.u32 %v3179, 7
  %v3181 = vsub.s32 %v3178, %v3180
  %v3182 = vrot.slane %v3160, %v3181
  %v3184 = vunpack.c.l.s4 1966171168
  %v3185 = vunpack.c.0.s8 %v3184
  %v3186 = vlaneseq
  %v3187 = vshrl.u32 %v3186, 7
  %v3188 = vsub.s32 %v3185, %v3187
  %v3189 = vrot.slane %v3161, %v3188
  %v3190 = vcombine.high %v3168, %v3168
  %v3191 = vcombine.high %v3175, %v3175
  %v3192 = vcombine.high %v3182, %v3182
  %v3193 = vcombine.high %v3189, %v3189
  %v3195 = vcombine.high %v1321, %v1321
  %v3197 = vunpack.c.l.s4 1966171168
  %v3198 = vunpack.c.0.s8 %v3197
  %v3199 = vlaneseq
  %v3200 = vshrl.u32 %v3199, 7
  %v3201 = vsub.s32 %v3198, %v3200
  %v3202 = vrot.slane %v1321, %v3201
  %v3204 = vunpack.c.l.s4 1966171168
  %v3205 = vunpack.c.0.s8 %v3204
  %v3206 = vlaneseq
  %v3207 = vshrl.u32 %v3206, 7
  %v3208 = vsub.s32 %v3205, %v3207
  %v3209 = vrot.slane %v3195, %v3208
  %v3210 = vcombine.high %v3202, %v3202
  %v3211 = vcombine.high %v3209, %v3209
  %v3213 = vunpack.c.l.s4 1966171168
  %v3214 = vunpack.c.0.s8 %v3213
  %v3215 = vlaneseq
  %v3216 = vshrl.u32 %v3215, 7
  %v3217 = vsub.s32 %v3214, %v3216
  %v3218 = vrot.slane %v3202, %v3217
  %v3220 = vunpack.c.l.s4 1966171168
  %v3221 = vunpack.c.0.s8 %v3220
  %v3222 = vlaneseq
  %v3223 = vshrl.u32 %v3222, 7
  %v3224 = vsub.s32 %v3221, %v3223
  %v3225 = vrot.slane %v3209, %v3224
  %v3227 = vunpack.c.l.s4 1966171168
  %v3228 = vunpack.c.0.s8 %v3227
  %v3229 = vlaneseq
  %v3230 = vshrl.u32 %v3229, 7
  %v3231 = vsub.s32 %v3228, %v3230
  %v3232 = vrot.slane %v3210, %v3231
  %v3234 = vunpack.c.l.s4 1966171168
  %v3235 = vunpack.c.0.s8 %v3234
  %v3236 = vlaneseq
  %v3237 = vshrl.u32 %v3236, 7
  %v3238 = vsub.s32 %v3235, %v3237
  %v3239 = vrot.slane %v3211, %v3238
  %v3240 = vcombine.high %v3218, %v3218
  %v3241 = vcombine.high %v3225, %v3225
  %v3242 = vcombine.high %v3232, %v3232
  %v3243 = vcombine.high %v3239, %v3239
  %v3245 = vcombine.high %v1674, %v1674
  %v3247 = vunpack.c.l.s4 1966171168
  %v3248 = vunpack.c.0.s8 %v3247
  %v3249 = vlaneseq
  %v3250 = vshrl.u32 %v3249, 7
  %v3251 = vsub.s32 %v3248, %v3250
  %v3252 = vrot.slane %v1674, %v3251
  %v3254 = vunpack.c.l.s4 1966171168
  %v3255 = vunpack.c.0.s8 %v3254
  %v3256 = vlaneseq
  %v3257 = vshrl.u32 %v3256, 7
  %v3258 = vsub.s32 %v3255, %v3257
  %v3259 = vrot.slane %v3245, %v3258
  %v3260 = vcombine.high %v3252, %v3252
  %v3261 = vcombine.high %v3259, %v3259
  %v3263 = vunpack.c.l.s4 1966171168
  %v3264 = vunpack.c.0.s8 %v3263
  %v3265 = vlaneseq
  %v3266 = vshrl.u32 %v3265, 7
  %v3267 = vsub.s32 %v3264, %v3266
  %v3268 = vrot.slane %v3252, %v3267
  %v3270 = vunpack.c.l.s4 1966171168
  %v3271 = vunpack.c.0.s8 %v3270
  %v3272 = vlaneseq
  %v3273 = vshrl.u32 %v3272, 7
  %v3274 = vsub.s32 %v3271, %v3273
  %v3275 = vrot.slane %v3259, %v3274
  %v3277 = vunpack.c.l.s4 1966171168
  %v3278 = vunpack.c.0.s8 %v3277
  %v3279 = vlaneseq
  %v3280 = vshrl.u32 %v3279, 7
  %v3281 = vsub.s32 %v3278, %v3280
  %v3282 = vrot.slane %v3260, %v3281
  %v3284 = vunpack.c.l.s4 1966171168
  %v3285 = vunpack.c.0.s8 %v3284
  %v3286 = vlaneseq
  %v3287 = vshrl.u32 %v3286, 7
  %v3288 = vsub.s32 %v3285, %v3287
  %v3289 = vrot.slane %v3261, %v3288
  %v3290 = vcombine.high %v3268, %v3268
  %v3291 = vcombine.high %v3275, %v3275
  %v3292 = vcombine.high %v3282, %v3282
  %v3293 = vcombine.high %v3289, %v3289
  %v3295 = vcombine.high %v2027, %v2027
  %v3297 = vunpack.c.l.s4 1966171168
  %v3298 = vunpack.c.0.s8 %v3297
  %v3299 = vlaneseq
  %v3300 = vshrl.u32 %v3299, 7
  %v3301 = vsub.s32 %v3298, %v3300
  %v3302 = vrot.slane %v2027, %v3301
  %v3304 = vunpack.c.l.s4 1966171168
  %v3305 = vunpack.c.0.s8 %v3304
  %v3306 = vlaneseq
  %v3307 = vshrl.u32 %v3306, 7
  %v3308 = vsub.s32 %v3305, %v3307
  %v3309 = vrot.slane %v3295, %v3308
  %v3310 = vcombine.high %v3302, %v3302
  %v3311 = vcombine.high %v3309, %v3309
  %v3313 = vunpack.c.l.s4 1966171168
  %v3314 = vunpack.c.0.s8 %v3313
  %v3315 = vlaneseq
  %v3316 = vshrl.u32 %v3315, 7
  %v3317 = vsub.s32 %v3314, %v3316
  %v3318 = vrot.slane %v3302, %v3317
  %v3320 = vunpack.c.l.s4 1966171168
  %v3321 = vunpack.c.0.s8 %v3320
  %v3322 = vlaneseq
  %v3323 = vshrl.u32 %v3322, 7
  %v3324 = vsub.s32 %v3321, %v3323
  %v3325 = vrot.slane %v3309, %v3324
  %v3327 = vunpack.c.l.s4 1966171168
  %v3328 = vunpack.c.0.s8 %v3327
  %v3329 = vlaneseq
  %v3330 = vshrl.u32 %v3329, 7
  %v3331 = vsub.s32 %v3328, %v3330
  %v3332 = vrot.slane %v3310, %v3331
  %v3334 = vunpack.c.l.s4 1966171168
  %v3335 = vunpack.c.0.s8 %v3334
  %v3336 = vlaneseq
  %v3337 = vshrl.u32 %v3336, 7
  %v3338 = vsub.s32 %v3335, %v3337
  %v3339 = vrot.slane %v3311, %v3338
  %v3340 = vcombine.high %v3318, %v3318
  %v3341 = vcombine.high %v3325, %v3325
  %v3342 = vcombine.high %v3332, %v3332
  %v3343 = vcombine.high %v3339, %v3339
  %v3345 = vcombine.high %v2380, %v2380
  %v3347 = vunpack.c.l.s4 1966171168
  %v3348 = vunpack.c.0.s8 %v3347
  %v3349 = vlaneseq
  %v3350 = vshrl.u32 %v3349, 7
  %v3351 = vsub.s32 %v3348, %v3350
  %v3352 = vrot.slane %v2380, %v3351
  %v3354 = vunpack.c.l.s4 1966171168
  %v3355 = vunpack.c.0.s8 %v3354
  %v3356 = vlaneseq
  %v3357 = vshrl.u32 %v3356, 7
  %v3358 = vsub.s32 %v3355, %v3357
  %v3359 = vrot.slane %v3345, %v3358
  %v3360 = vcombine.high %v3352, %v3352
  %v3361 = vcombine.high %v3359, %v3359
  %v3363 = vunpack.c.l.s4 1966171168
  %v3364 = vunpack.c.0.s8 %v3363
  %v3365 = vlaneseq
  %v3366 = vshrl.u32 %v3365, 7
  %v3367 = vsub.s32 %v3364, %v3366
  %v3368 = vrot.slane %v3352, %v3367
  %v3370 = vunpack.c.l.s4 1966171168
  %v3371 = vunpack.c.0.s8 %v3370
  %v3372 = vlaneseq
  %v3373 = vshrl.u32 %v3372, 7
  %v3374 = vsub.s32 %v3371, %v3373
  %v3375 = vrot.slane %v3359, %v3374
  %v3377 = vunpack.c.l.s4 1966171168
  %v3378 = vunpack.c.0.s8 %v3377
  %v3379 = vlaneseq
  %v3380 = vshrl.u32 %v3379, 7
  %v3381 = vsub.s32 %v3378, %v3380
  %v3382 = vrot.slane %v3360, %v3381
  %v3384 = vunpack.c.l.s4 1966171168
  %v3385 = vunpack.c.0.s8 %v3384
  %v3386 = vlaneseq
  %v3387 = vshrl.u32 %v3386, 7
  %v3388 = vsub.s32 %v3385, %v3387
  %v3389 = vrot.slane %v3361, %v3388
  %v3390 = vcombine.high %v3368, %v3368
  %v3391 = vcombine.high %v3375, %v3375
  %v3392 = vcombine.high %v3382, %v3382
  %v3393 = vcombine.high %v3389, %v3389
  %v3395 = vcombine.high %v2733, %v2733
  %v3397 = vunpack.c.l.s4 1966171168
  %v3398 = vunpack.c.0.s8 %v3397
  %v3399 = vlaneseq
  %v3400 = vshrl.u32 %v3399, 7
  %v3401 = vsub.s32 %v3398, %v3400
  %v3402 = vrot.slane %v2733, %v3401
  %v3404 = vunpack.c.l.s4 1966171168
  %v3405 = vunpack.c.0.s8 %v3404
  %v3406 = vlaneseq
  %v3407 = vshrl.u32 %v3406, 7
  %v3408 = vsub.s32 %v3405, %v3407
  %v3409 = vrot.slane %v3395, %v3408
  %v3410 = vcombine.high %v3402, %v3402
  %v3411 = vcombine.high %v3409, %v3409
  %v3413 = vunpack.c.l.s4 1966171168
  %v3414 = vunpack.c.0.s8 %v3413
  %v3415 = vlaneseq
  %v3416 = vshrl.u32 %v3415, 7
  %v3417 = vsub.s32 %v3414, %v3416
  %v3418 = vrot.slane %v3402, %v3417
  %v3420 = vunpack.c.l.s4 1966171168
  %v3421 = vunpack.c.0.s8 %v3420
  %v3422 = vlaneseq
  %v3423 = vshrl.u32 %v3422, 7
  %v3424 = vsub.s32 %v3421, %v3423
  %v3425 = vrot.slane %v3409, %v3424
  %v3427 = vunpack.c.l.s4 1966171168
  %v3428 = vunpack.c.0.s8 %v3427
  %v3429 = vlaneseq
  %v3430 = vshrl.u32 %v3429, 7
  %v3431 = vsub.s32 %v3428, %v3430
  %v3432 = vrot.slane %v3410, %v3431
  %v3434 = vunpack.c.l.s4 1966171168
  %v3435 = vunpack.c.0.s8 %v3434
  %v3436 = vlaneseq
  %v3437 = vshrl.u32 %v3436, 7
  %v3438 = vsub.s32 %v3435, %v3437
  %v3439 = vrot.slane %v3411, %v3438
  %v3440 = vcombine.high %v3418, %v3418
  %v3441 = vcombine.high %v3425, %v3425
  %v3442 = vcombine.high %v3432, %v3432
  %v3443 = vcombine.high %v3439, %v3439
  %v3445 = vcombine.high %v3086, %v3086
  %v3447 = vunpack.c.l.s4 1966171168
  %v3448 = vunpack.c.0.s8 %v3447
  %v3449 = vlaneseq
  %v3450 = vshrl.u32 %v3449, 7
  %v3451 = vsub.s32 %v3448, %v3450
  %v3452 = vrot.slane %v3086, %v3451
  %v3454 = vunpack.c.l.s4 1966171168
  %v3455 = vunpack.c.0.s8 %v3454
  %v3456 = vlaneseq
  %v3457 = vshrl.u32 %v3456, 7
  %v3458 = vsub.s32 %v3455, %v3457
  %v3459 = vrot.slane %v3445, %v3458
  %v3460 = vcombine.high %v3452, %v3452
  %v3461 = vcombine.high %v3459, %v3459
  %v3463 = vunpack.c.l.s4 1966171168
  %v3464 = vunpack.c.0.s8 %v3463
  %v3465 = vlaneseq
  %v3466 = vshrl.u32 %v3465, 7
  %v3467 = vsub.s32 %v3464, %v3466
  %v3468 = vrot.slane %v3452, %v3467
  %v3470 = vunpack.c.l.s4 1966171168
  %v3471 = vunpack.c.0.s8 %v3470
  %v3472 = vlaneseq
  %v3473 = vshrl.u32 %v3472, 7
  %v3474 = vsub.s32 %v3471, %v3473
  %v3475 = vrot.slane %v3459, %v3474
  %v3477 = vunpack.c.l.s4 1966171168
  %v3478 = vunpack.c.0.s8 %v3477
  %v3479 = vlaneseq
  %v3480 = vshrl.u32 %v3479, 7
  %v3481 = vsub.s32 %v3478, %v3480
  %v3482 = vrot.slane %v3460, %v3481
  %v3484 = vunpack.c.l.s4 1966171168
  %v3485 = vunpack.c.0.s8 %v3484
  %v3486 = vlaneseq
  %v3487 = vshrl.u32 %v3486, 7
  %v3488 = vsub.s32 %v3485, %v3487
  %v3489 = vrot.slane %v3461, %v3488
  %v3490 = vcombine.high %v3468, %v3468
  %v3491 = vcombine.high %v3475, %v3475
  %v3492 = vcombine.high %v3482, %v3482
  %v3493 = vcombine.high %v3489, %v3489
  %v3494 = vlaneseq
  %v3495 = vshrl.u32 %v3494, 7
  %v3496 = vsub.s32 0, %v3495
  %v3497 = vrot.slane %v3168, %v3496
  %v3498 = vlaneseq
  %v3499 = vshrl.u32 %v3498, 7
  %v3500 = vsub.s32 0, %v3499
  %v3501 = vrot.slane %v3182, %v3500
  %v3502 = vlaneseq
  %v3503 = vshrl.u32 %v3502, 7
  %v3504 = vsub.s32 0, %v3503
  %v3505 = vrot.slane %v3190, %v3504
  %v3506 = vlaneseq
  %v3507 = vshrl.u32 %v3506, 7
  %v3508 = vsub.s32 0, %v3507
  %v3509 = vrot.slane %v3192, %v3508
  %v3510 = vlaneseq
  %v3511 = vshrl.u32 %v3510, 7
  %v3512 = vsub.s32 0, %v3511
  %v3513 = vrot.slane %v3175, %v3512
  %v3514 = vlaneseq
  %v3515 = vshrl.u32 %v3514, 7
  %v3516 = vsub.s32 0, %v3515
  %v3517 = vrot.slane %v3189, %v3516
  %v3518 = vlaneseq
  %v3519 = vshrl.u32 %v3518, 7
  %v3520 = vsub.s32 0, %v3519
  %v3521 = vrot.slane %v3191, %v3520
  %v3522 = vlaneseq
  %v3523 = vshrl.u32 %v3522, 7
  %v3524 = vsub.s32 0, %v3523
  %v3525 = vrot.slane %v3193, %v3524
  %v3534 = vlaneseq
  %v3535 = vshrl.u32 %v3534, 7
  %v3536 = vsub.s32 0, %v3535
  %v3537 = vrot.slane %v3218, %v3536
  %v3538 = vlaneseq
  %v3539 = vshrl.u32 %v3538, 7
  %v3540 = vsub.s32 0, %v3539
  %v3541 = vrot.slane %v3232, %v3540
  %v3542 = vlaneseq
  %v3543 = vshrl.u32 %v3542, 7
  %v3544 = vsub.s32 0, %v3543
  %v3545 = vrot.slane %v3240, %v3544
  %v3546 = vlaneseq
  %v3547 = vshrl.u32 %v3546, 7
  %v3548 = vsub.s32 0, %v3547
  %v3549 = vrot.slane %v3242, %v3548
  %v3550 = vlaneseq
  %v3551 = vshrl.u32 %v3550, 7
  %v3552 = vsub.s32 0, %v3551
  %v3553 = vrot.slane %v3225, %v3552
  %v3554 = vlaneseq
  %v3555 = vshrl.u32 %v3554, 7
  %v3556 = vsub.s32 0, %v3555
  %v3557 = vrot.slane %v3239, %v3556
  %v3558 = vlaneseq
  %v3559 = vshrl.u32 %v3558, 7
  %v3560 = vsub.s32 0, %v3559
  %v3561 = vrot.slane %v3241, %v3560
  %v3562 = vlaneseq
  %v3563 = vshrl.u32 %v3562, 7
  %v3564 = vsub.s32 0, %v3563
  %v3565 = vrot.slane %v3243, %v3564
  %v3574 = vlaneseq
  %v3575 = vshrl.u32 %v3574, 7
  %v3576 = vsub.s32 0, %v3575
  %v3577 = vrot.slane %v3268, %v3576
  %v3578 = vlaneseq
  %v3579 = vshrl.u32 %v3578, 7
  %v3580 = vsub.s32 0, %v3579
  %v3581 = vrot.slane %v3282, %v3580
  %v3582 = vlaneseq
  %v3583 = vshrl.u32 %v3582, 7
  %v3584 = vsub.s32 0, %v3583
  %v3585 = vrot.slane %v3290, %v3584
  %v3586 = vlaneseq
  %v3587 = vshrl.u32 %v3586, 7
  %v3588 = vsub.s32 0, %v3587
  %v3589 = vrot.slane %v3292, %v3588
  %v3590 = vlaneseq
  %v3591 = vshrl.u32 %v3590, 7
  %v3592 = vsub.s32 0, %v3591
  %v3593 = vrot.slane %v3275, %v3592
  %v3594 = vlaneseq
  %v3595 = vshrl.u32 %v3594, 7
  %v3596 = vsub.s32 0, %v3595
  %v3597 = vrot.slane %v3289, %v3596
  %v3598 = vlaneseq
  %v3599 = vshrl.u32 %v3598, 7
  %v3600 = vsub.s32 0, %v3599
  %v3601 = vrot.slane %v3291, %v3600
  %v3602 = vlaneseq
  %v3603 = vshrl.u32 %v3602, 7
  %v3604 = vsub.s32 0, %v3603
  %v3605 = vrot.slane %v3293, %v3604
  %v3614 = vlaneseq
  %v3615 = vshrl.u32 %v3614, 7
  %v3616 = vsub.s32 0, %v3615
  %v3617 = vrot.slane %v3318, %v3616
  %v3618 = vlaneseq
  %v3619 = vshrl.u32 %v3618, 7
  %v3620 = vsub.s32 0, %v3619
  %v3621 = vrot.slane %v3332, %v3620
  %v3622 = vlaneseq
  %v3623 = vshrl.u32 %v3622, 7
  %v3624 = vsub.s32 0, %v3623
  %v3625 = vrot.slane %v3340, %v3624
  %v3626 = vlaneseq
  %v3627 = vshrl.u32 %v3626, 7
  %v3628 = vsub.s32 0, %v3627
  %v3629 = vrot.slane %v3342, %v3628
  %v3630 = vlaneseq
  %v3631 = vshrl.u32 %v3630, 7
  %v3632 = vsub.s32 0, %v3631
  %v3633 = vrot.slane %v3325, %v3632
  %v3634 = vlaneseq
  %v3635 = vshrl.u32 %v3634, 7
  %v3636 = vsub.s32 0, %v3635
  %v3637 = vrot.slane %v3339, %v3636
  %v3638 = vlaneseq
  %v3639 = vshrl.u32 %v3638, 7
  %v3640 = vsub.s32 0, %v3639
  %v3641 = vrot.slane %v3341, %v3640
  %v3642 = vlaneseq
  %v3643 = vshrl.u32 %v3642, 7
  %v3644 = vsub.s32 0, %v3643
  %v3645 = vrot.slane %v3343, %v3644
  %v3654 = vlaneseq
  %v3655 = vshrl.u32 %v3654, 7
  %v3656 = vsub.s32 0, %v3655
  %v3657 = vrot.slane %v3368, %v3656
  %v3658 = vlaneseq
  %v3659 = vshrl.u32 %v3658, 7
  %v3660 = vsub.s32 0, %v3659
  %v3661 = vrot.slane %v3382, %v3660
  %v3662 = vlaneseq
  %v3663 = vshrl.u32 %v3662, 7
  %v3664 = vsub.s32 0, %v3663
  %v3665 = vrot.slane %v3390, %v3664
  %v3666 = vlaneseq
  %v3667 = vshrl.u32 %v3666, 7
  %v3668 = vsub.s32 0, %v3667
  %v3669 = vrot.slane %v3392, %v3668
  %v3670 = vlaneseq
  %v3671 = vshrl.u32 %v3670, 7
  %v3672 = vsub.s32 0, %v3671
  %v3673 = vrot.slane %v3375, %v3672
  %v3674 = vlaneseq
  %v3675 = vshrl.u32 %v3674, 7
  %v3676 = vsub.s32 0, %v3675
  %v3677 = vrot.slane %v3389, %v3676
  %v3678 = vlaneseq
  %v3679 = vshrl.u32 %v3678, 7
  %v3680 = vsub.s32 0, %v3679
  %v3681 = vrot.slane %v3391, %v3680
  %v3682 = vlaneseq
  %v3683 = vshrl.u32 %v3682, 7
  %v3684 = vsub.s32 0, %v3683
  %v3685 = vrot.slane %v3393, %v3684
  %v3694 = vlaneseq
  %v3695 = vshrl.u32 %v3694, 7
  %v3696 = vsub.s32 0, %v3695
  %v3697 = vrot.slane %v3418, %v3696
  %v3698 = vlaneseq
  %v3699 = vshrl.u32 %v3698, 7
  %v3700 = vsub.s32 0, %v3699
  %v3701 = vrot.slane %v3432, %v3700
  %v3702 = vlaneseq
  %v3703 = vshrl.u32 %v3702, 7
  %v3704 = vsub.s32 0, %v3703
  %v3705 = vrot.slane %v3440, %v3704
  %v3706 = vlaneseq
  %v3707 = vshrl.u32 %v3706, 7
  %v3708 = vsub.s32 0, %v3707
  %v3709 = vrot.slane %v3442, %v3708
  %v3710 = vlaneseq
  %v3711 = vshrl.u32 %v3710, 7
  %v3712 = vsub.s32 0, %v3711
  %v3713 = vrot.slane %v3425, %v3712
  %v3714 = vlaneseq
  %v3715 = vshrl.u32 %v3714, 7
  %v3716 = vsub.s32 0, %v3715
  %v3717 = vrot.slane %v3439, %v3716
  %v3718 = vlaneseq
  %v3719 = vshrl.u32 %v3718, 7
  %v3720 = vsub.s32 0, %v3719
  %v3721 = vrot.slane %v3441, %v3720
  %v3722 = vlaneseq
  %v3723 = vshrl.u32 %v3722, 7
  %v3724 = vsub.s32 0, %v3723
  %v3725 = vrot.slane %v3443, %v3724
  %v3734 = vlaneseq
  %v3735 = vshrl.u32 %v3734, 7
  %v3736 = vsub.s32 0, %v3735
  %v3737 = vrot.slane %v3468, %v3736
  %v3738 = vlaneseq
  %v3739 = vshrl.u32 %v3738, 7
  %v3740 = vsub.s32 0, %v3739
  %v3741 = vrot.slane %v3482, %v3740
  %v3742 = vlaneseq
  %v3743 = vshrl.u32 %v3742, 7
  %v3744 = vsub.s32 0, %v3743
  %v3745 = vrot.slane %v3490, %v3744
  %v3746 = vlaneseq
  %v3747 = vshrl.u32 %v3746, 7
  %v3748 = vsub.s32 0, %v3747
  %v3749 = vrot.slane %v3492, %v3748
  %v3750 = vlaneseq
  %v3751 = vshrl.u32 %v3750, 7
  %v3752 = vsub.s32 0, %v3751
  %v3753 = vrot.slane %v3475, %v3752
  %v3754 = vlaneseq
  %v3755 = vshrl.u32 %v3754, 7
  %v3756 = vsub.s32 0, %v3755
  %v3757 = vrot.slane %v3489, %v3756
  %v3758 = vlaneseq
  %v3759 = vshrl.u32 %v3758, 7
  %v3760 = vsub.s32 0, %v3759
  %v3761 = vrot.slane %v3491, %v3760
  %v3762 = vlaneseq
  %v3763 = vshrl.u32 %v3762, 7
  %v3764 = vsub.s32 0, %v3763
  %v3765 = vrot.slane %v3493, %v3764
  %vm3774 = vcmask 1040384
  %v3775 = vsel %vm3774, %v3110, %v3497
  %v3776 = vsel %vm3774, %v3124, %v3501
  %v3777 = vsel %vm3774, %v3132, %v3505
  %v3778 = vsel %vm3774, %v3134, %v3509
  %v3779 = vsel %vm3774, %v3117, %v3513
  %v3780 = vsel %vm3774, %v3131, %v3517
  %v3781 = vsel %vm3774, %v3133, %v3521
  %v3782 = vsel %vm3774, %v3135, %v3525
  %vm3783 = vcmask 1041408
  %v3784 = vsel %vm3783, %v3775, %v3537
  %v3785 = vsel %vm3783, %v3776, %v3541
  %v3786 = vsel %vm3783, %v3777, %v3545
  %v3787 = vsel %vm3783, %v3778, %v3549
  %v3788 = vsel %vm3783, %v3779, %v3553
  %v3789 = vsel %vm3783, %v3780, %v3557
  %v3790 = vsel %vm3783, %v3781, %v3561
  %v3791 = vsel %vm3783, %v3782, %v3565
  %vm3792 = vcmask 1042432
  %v3793 = vsel %vm3792, %v3784, %v3577
  %v3794 = vsel %vm3792, %v3785, %v3581
  %v3795 = vsel %vm3792, %v3786, %v3585
  %v3796 = vsel %vm3792, %v3787, %v3589
  %v3797 = vsel %vm3792, %v3788, %v3593
  %v3798 = vsel %vm3792, %v3789, %v3597
  %v3799 = vsel %vm3792, %v3790, %v3601
  %v3800 = vsel %vm3792, %v3791, %v3605
  %vm3801 = vcmask 1043456
  %v3802 = vsel %vm3801, %v3793, %v3617
  %v3803 = vsel %vm3801, %v3794, %v3621
  %v3804 = vsel %vm3801, %v3795, %v3625
  %v3805 = vsel %vm3801, %v3796, %v3629
  %v3806 = vsel %vm3801, %v3797, %v3633
  %v3807 = vsel %vm3801, %v3798, %v3637
  %v3808 = vsel %vm3801, %v3799, %v3641
  %v3809 = vsel %vm3801, %v3800, %v3645
  %vm3810 = vcmask 1044480
  %v3811 = vsel %vm3810, %v3802, %v3657
  %v3812 = vsel %vm3810, %v3803, %v3661
  %v3813 = vsel %vm3810, %v3804, %v3665
  %v3814 = vsel %vm3810, %v3805, %v3669
  %v3815 = vsel %vm3810, %v3806, %v3673
  %v3816 = vsel %vm3810, %v3807, %v3677
  %v3817 = vsel %vm3810, %v3808, %v3681
  %v3818 = vsel %vm3810, %v3809, %v3685
  %vm3819 = vcmask 1045504
  %v3820 = vsel %vm3819, %v3811, %v3697
  %v3821 = vsel %vm3819, %v3812, %v3701
  %v3822 = vsel %vm3819, %v3813, %v3705
  %v3823 = vsel %vm3819, %v3814, %v3709
  %v3824 = vsel %vm3819, %v3815, %v3713
  %v3825 = vsel %vm3819, %v3816, %v3717
  %v3826 = vsel %vm3819, %v3817, %v3721
  %v3827 = vsel %vm3819, %v3818, %v3725
  %vm3828 = vcmask 1046528
  %v3829 = vsel %vm3828, %v3820, %v3737
  %v3830 = vsel %vm3828, %v3821, %v3741
  %v3831 = vsel %vm3828, %v3822, %v3745
  %v3832 = vsel %vm3828, %v3823, %v3749
  %v3833 = vsel %vm3828, %v3824, %v3753
  %v3834 = vsel %vm3828, %v3825, %v3757
  %v3835 = vsel %vm3828, %v3826, %v3761
  %v3836 = vsel %vm3828, %v3827, %v3765
  %v3837 = vld [vmem:[%s17] sm:$0xff]
  %v3838 = vld [vmem:[%s17 + $0x8] sm:$0xff]
  %v3839 = vld [vmem:[%s17 + $0x10] sm:$0xff]
  %v3840 = vld [vmem:[%s17 + $0x18] sm:$0xff]
  %v3841 = vld [vmem:[%s19] sm:$0x1]
  %v3843 = vlaneseq
  %v3844 = vshrl.u32 %v3843, 7
  %v3845 = vsub.s32 0, %v3844
  %v3846 = vrot.slane %v3841, %v3845
  %v3849 = vsel %vm287, %v3829, 0
  %v3852 = vsel %vm287, %v3830, 0
  %v3855 = vsel %vm287, %v3831, 0
  %v3858 = vsel %vm287, %v3832, 0
  %v3861 = vsel %vm287, %v3833, 0
  %v3864 = vsel %vm287, %v3834, 0
  %v3867 = vsel %vm287, %v3835, 0
  %v3870 = vsel %vm287, %v3836, 0
  %3872 = vmatprep.subr.mxu0 0.0
  %3873 = vmatpush1.msra.mxu0 %v3837
  %3874 = vmatprep.subr.mxu0 0.0
  %3875 = vmatpush1.msra.mxu0 %v3838
  %3876 = vmatprep.subr.mxu0 0.0
  %3877 = vmatpush1.msra.mxu0 %v3839
  %3878 = vmatprep.subr.mxu0 0.0
  %3879 = vmatpush1.msra.mxu0 %v3840
  %3880 = vmatprep.subr.mxu0 0.0
  %3881 = vmatpush1.msra.mxu0 0.0
  %3882 = vmatprep.subr.mxu0 0.0
  %3883 = vmatpush1.msra.mxu0 0.0
  %3884 = vmatprep.subr.mxu0 0.0
  %3885 = vmatpush1.msra.mxu0 0.0
  %3886 = vmatprep.subr.mxu0 0.0
  %3887 = vmatpush1.msra.mxu0 0.0
  %3888 = vmatprep.subr.mxu0 0.0
  %3889 = vmatpush1.msra.mxu0 0.0
  %3890 = vmatprep.subr.mxu0 0.0
  %3891 = vmatpush1.msra.mxu0 0.0
  %3892 = vmatprep.subr.mxu0 0.0
  %3893 = vmatpush1.msra.mxu0 0.0
  %3894 = vmatprep.subr.mxu0 0.0
  %3895 = vmatpush1.msra.mxu0 0.0
  %3896 = vmatprep.subr.mxu0 0.0
  %3897 = vmatpush1.msra.mxu0 0.0
  %3898 = vmatprep.subr.mxu0 0.0
  %3899 = vmatpush1.msra.mxu0 0.0
  %3900 = vmatprep.subr.mxu0 0.0
  %3901 = vmatpush1.msra.mxu0 0.0
  %3902 = vmatprep.subr.mxu0 0.0
  %3903 = vmatpush1.msra.mxu0 0.0
  %3904 = vmatprep.subr.mxu0 0.0
  %3905 = vmatpush1.msra.mxu0 0.0
  %3906 = vmatprep.subr.mxu0 0.0
  %3907 = vmatpush1.msra.mxu0 0.0
  %3908 = vmatprep.subr.mxu0 0.0
  %3909 = vmatpush1.msra.mxu0 0.0
  %3910 = vmatprep.subr.mxu0 0.0
  %3911 = vmatpush1.msra.mxu0 0.0
  %3912 = vmatprep.subr.mxu0 0.0
  %3913 = vmatpush1.msra.mxu0 0.0
  %3914 = vmatprep.subr.mxu0 0.0
  %3915 = vmatpush1.msra.mxu0 0.0
  %3916 = vmatprep.subr.mxu0 0.0
  %3917 = vmatpush1.msra.mxu0 0.0
  %3918 = vmatprep.subr.mxu0 0.0
  %3919 = vmatpush1.msra.mxu0 0.0
  %3920 = vmatprep.subr.mxu0 0.0
  %3921 = vmatpush1.msra.mxu0 0.0
  %3922 = vmatprep.subr.mxu0 0.0
  %3923 = vmatpush1.msra.mxu0 0.0
  %3924 = vmatprep.subr.mxu0 0.0
  %3925 = vmatpush1.msra.mxu0 0.0
  %3926 = vmatprep.subr.mxu0 0.0
  %3927 = vmatpush1.msra.mxu0 0.0
  %3928 = vmatprep.subr.mxu0 0.0
  %3929 = vmatpush1.msra.mxu0 0.0
  %3930 = vmatprep.subr.mxu0 0.0
  %3931 = vmatpush1.msra.mxu0 0.0
  %3932 = vmatprep.subr.mxu0 0.0
  %3933 = vmatpush1.msra.mxu0 0.0
  %3934 = vmatprep.subr.mxu0 0.0
  %3935 = vmatpush1.msra.mxu0 0.0
  %3936 = vmatprep.mubr.f32.mxu0 0.0
  %3937 = vmatmul.mubr.f32.gmra.mrb[0].mxu0 %v3849
  %v3938 = vpop.f32.mrb[0].mxu0
  %v3939 = vadd.f32 %v3846, %v3938
  %v3940 = vpop.f32.mrb[0].mxu0
  %3941 = vmatprep.mubr.f32.mxu0 0.0
  %3942 = vmatmul.mubr.f32.gmra.mrb[0].mxu0 %v3852
  %v3943 = vpop.f32.mrb[0].mxu0
  %v3944 = vadd.f32 %v3846, %v3943
  %v3945 = vpop.f32.mrb[0].mxu0
  %3946 = vmatprep.mubr.f32.mxu0 0.0
  %3947 = vmatmul.mubr.f32.gmra.mrb[0].mxu0 %v3855
  %v3948 = vpop.f32.mrb[0].mxu0
  %v3949 = vadd.f32 %v3846, %v3948
  %v3950 = vpop.f32.mrb[0].mxu0
  %3951 = vmatprep.mubr.f32.mxu0 0.0
  %3952 = vmatmul.mubr.f32.gmra.mrb[0].mxu0 %v3858
  %v3953 = vpop.f32.mrb[0].mxu0
  %v3954 = vadd.f32 %v3846, %v3953
  %v3955 = vpop.f32.mrb[0].mxu0
  %3956 = vmatprep.mubr.f32.mxu0 0.0
  %3957 = vmatmul.mubr.f32.gmra.mrb[0].mxu0 %v3861
  %v3958 = vpop.f32.mrb[0].mxu0
  %v3959 = vadd.f32 %v3846, %v3958
  %v3960 = vpop.f32.mrb[0].mxu0
  %3961 = vmatprep.mubr.f32.mxu0 0.0
  %3962 = vmatmul.mubr.f32.gmra.mrb[0].mxu0 %v3864
  %v3963 = vpop.f32.mrb[0].mxu0
  %v3964 = vadd.f32 %v3846, %v3963
  %v3965 = vpop.f32.mrb[0].mxu0
  %3966 = vmatprep.mubr.f32.mxu0 0.0
  %3967 = vmatmul.mubr.f32.gmra.mrb[0].mxu0 %v3867
  %v3968 = vpop.f32.mrb[0].mxu0
  %v3969 = vadd.f32 %v3846, %v3968
  %v3970 = vpop.f32.mrb[0].mxu0
  %3971 = vmatprep.mubr.f32.mxu0 0.0
  %3972 = vmatmul.mubr.f32.gmra.mrb[0].mxu0 %v3870
  %v3973 = vpop.f32.mrb[0].mxu0
  %v3974 = vadd.f32 %v3846, %v3973
  %v3975 = vpop.f32.mrb[0].mxu0
  %3976 = vdwg.mxu0
  %v3977 = vmax.f32 %v3939, 0.0
  %v3978 = vmax.f32 %v3944, 0.0
  %v3979 = vmax.f32 %v3949, 0.0
  %v3980 = vmax.f32 %v3954, 0.0
  %v3981 = vmax.f32 %v3959, 0.0
  %v3982 = vmax.f32 %v3964, 0.0
  %v3983 = vmax.f32 %v3969, 0.0
  %v3984 = vmax.f32 %v3974, 0.0
  %v3985 = vld [vmem:[%s21] sm:$0xff]
  %v3986 = vld [vmem:[%s21 + $0x8] sm:$0xff]
  %v3987 = vld [vmem:[%s21 + $0x10] sm:$0xff]
  %v3988 = vld [vmem:[%s21 + $0x18] sm:$0xff]
  %v3990 = vsel %vm287, %v3977, 0
  %v3993 = vsel %vm287, %v3978, 0
  %v3996 = vsel %vm287, %v3979, 0
  %v3999 = vsel %vm287, %v3980, 0
  %v4002 = vsel %vm287, %v3981, 0
  %v4005 = vsel %vm287, %v3982, 0
  %v4008 = vsel %vm287, %v3983, 0
  %v4011 = vsel %vm287, %v3984, 0
  %4013 = vmatprep.subr.mxu0 0.0
  %4014 = vmatpush1.msra.mxu0 %v3985
  %4015 = vmatprep.subr.mxu0 0.0
  %4016 = vmatpush1.msra.mxu0 %v3986
  %4017 = vmatprep.subr.mxu0 0.0
  %4018 = vmatpush1.msra.mxu0 %v3987
  %4019 = vmatprep.subr.mxu0 0.0
  %4020 = vmatpush1.msra.mxu0 %v3988
  %4021 = vmatprep.subr.mxu0 0.0
  %4022 = vmatpush1.msra.mxu0 0.0
  %4023 = vmatprep.subr.mxu0 0.0
  %4024 = vmatpush1.msra.mxu0 0.0
  %4025 = vmatprep.subr.mxu0 0.0
  %4026 = vmatpush1.msra.mxu0 0.0
  %4027 = vmatprep.subr.mxu0 0.0
  %4028 = vmatpush1.msra.mxu0 0.0
  %4029 = vmatprep.subr.mxu0 0.0
  %4030 = vmatpush1.msra.mxu0 0.0
  %4031 = vmatprep.subr.mxu0 0.0
  %4032 = vmatpush1.msra.mxu0 0.0
  %4033 = vmatprep.subr.mxu0 0.0
  %4034 = vmatpush1.msra.mxu0 0.0
  %4035 = vmatprep.subr.mxu0 0.0
  %4036 = vmatpush1.msra.mxu0 0.0
  %4037 = vmatprep.subr.mxu0 0.0
  %4038 = vmatpush1.msra.mxu0 0.0
  %4039 = vmatprep.subr.mxu0 0.0
  %4040 = vmatpush1.msra.mxu0 0.0
  %4041 = vmatprep.subr.mxu0 0.0
  %4042 = vmatpush1.msra.mxu0 0.0
  %4043 = vmatprep.subr.mxu0 0.0
  %4044 = vmatpush1.msra.mxu0 0.0
  %4045 = vmatprep.subr.mxu0 0.0
  %4046 = vmatpush1.msra.mxu0 0.0
  %4047 = vmatprep.subr.mxu0 0.0
  %4048 = vmatpush1.msra.mxu0 0.0
  %4049 = vmatprep.subr.mxu0 0.0
  %4050 = vmatpush1.msra.mxu0 0.0
  %4051 = vmatprep.subr.mxu0 0.0
  %4052 = vmatpush1.msra.mxu0 0.0
  %4053 = vmatprep.subr.mxu0 0.0
  %4054 = vmatpush1.msra.mxu0 0.0
  %4055 = vmatprep.subr.mxu0 0.0
  %4056 = vmatpush1.msra.mxu0 0.0
  %4057 = vmatprep.subr.mxu0 0.0
  %4058 = vmatpush1.msra.mxu0 0.0
  %4059 = vmatprep.subr.mxu0 0.0
  %4060 = vmatpush1.msra.mxu0 0.0
  %4061 = vmatprep.subr.mxu0 0.0
  %4062 = vmatpush1.msra.mxu0 0.0
  %4063 = vmatprep.subr.mxu0 0.0
  %4064 = vmatpush1.msra.mxu0 0.0
  %4065 = vmatprep.subr.mxu0 0.0
  %4066 = vmatpush1.msra.mxu0 0.0
  %4067 = vmatprep.subr.mxu0 0.0
  %4068 = vmatpush1.msra.mxu0 0.0
  %4069 = vmatprep.subr.mxu0 0.0
  %4070 = vmatpush1.msra.mxu0 0.0
  %4071 = vmatprep.subr.mxu0 0.0
  %4072 = vmatpush1.msra.mxu0 0.0
  %4073 = vmatprep.subr.mxu0 0.0
  %4074 = vmatpush1.msra.mxu0 0.0
  %4075 = vmatprep.subr.mxu0 0.0
  %4076 = vmatpush1.msra.mxu0 0.0
  %4077 = vmatprep.mubr.f32.mxu0 0.0
  %4078 = vmatmul.mubr.f32.gmra.mrb[0].mxu0 %v3990
  %v4079 = vpop.f32.mrb[0].mxu0
  %v4080 = vadd.f32 0.0, %v4079
  %v4081 = vpop.f32.mrb[0].mxu0
  %4082 = vmatprep.mubr.f32.mxu0 0.0
  %4083 = vmatmul.mubr.f32.gmra.mrb[0].mxu0 %v3993
  %v4084 = vpop.f32.mrb[0].mxu0
  %v4085 = vadd.f32 0.0, %v4084
  %v4086 = vpop.f32.mrb[0].mxu0
  %4087 = vmatprep.mubr.f32.mxu0 0.0
  %4088 = vmatmul.mubr.f32.gmra.mrb[0].mxu0 %v3996
  %v4089 = vpop.f32.mrb[0].mxu0
  %v4090 = vadd.f32 0.0, %v4089
  %v4091 = vpop.f32.mrb[0].mxu0
  %4092 = vmatprep.mubr.f32.mxu0 0.0
  %4093 = vmatmul.mubr.f32.gmra.mrb[0].mxu0 %v3999
  %v4094 = vpop.f32.mrb[0].mxu0
  %v4095 = vadd.f32 0.0, %v4094
  %v4096 = vpop.f32.mrb[0].mxu0
  %4097 = vmatprep.mubr.f32.mxu0 0.0
  %4098 = vmatmul.mubr.f32.gmra.mrb[0].mxu0 %v4002
  %v4099 = vpop.f32.mrb[0].mxu0
  %v4100 = vadd.f32 0.0, %v4099
  %v4101 = vpop.f32.mrb[0].mxu0
  %4102 = vmatprep.mubr.f32.mxu0 0.0
  %4103 = vmatmul.mubr.f32.gmra.mrb[0].mxu0 %v4005
  %v4104 = vpop.f32.mrb[0].mxu0
  %v4105 = vadd.f32 0.0, %v4104
  %v4106 = vpop.f32.mrb[0].mxu0
  %4107 = vmatprep.mubr.f32.mxu0 0.0
  %4108 = vmatmul.mubr.f32.gmra.mrb[0].mxu0 %v4008
  %v4109 = vpop.f32.mrb[0].mxu0
  %v4110 = vadd.f32 0.0, %v4109
  %v4111 = vpop.f32.mrb[0].mxu0
  %4112 = vmatprep.mubr.f32.mxu0 0.0
  %4113 = vmatmul.mubr.f32.gmra.mrb[0].mxu0 %v4011
  %v4114 = vpop.f32.mrb[0].mxu0
  %v4115 = vadd.f32 0.0, %v4114
  %v4116 = vpop.f32.mrb[0].mxu0
  %4117 = vdwg.mxu0
  %v4118 = vld [vmem:[%s7] sm:$0xff]
  %v4119 = vld [vmem:[%s7 + $0x8] sm:$0xff]
  %v4120 = vld [vmem:[%s7 + $0x10] sm:$0xff]
  %v4121 = vld [vmem:[%s23] sm:$0xff]
  %v4122 = vld [vmem:[%s23 + $0x8] sm:$0xff]
  %v4124 = vsel %vm146, %v4118, 0
  %v4127 = vsel %vm146, %v4119, 0
  %v4130 = vsel %vm146, %v4120, 0
  %4132 = vmatprep.subr.mxu0 0.0
  %4133 = vmatpush1.msra.mxu0 %v4121
  %4134 = vmatprep.subr.mxu0 0.0
  %4135 = vmatpush1.msra.mxu0 %v4122
  %4136 = vmatprep.subr.mxu0 0.0
  %4137 = vmatpush1.msra.mxu0 0.0
  %4138 = vmatprep.subr.mxu0 0.0
  %4139 = vmatpush1.msra.mxu0 0.0
  %4140 = vmatprep.subr.mxu0 0.0
  %4141 = vmatpush1.msra.mxu0 0.0
  %4142 = vmatprep.subr.mxu0 0.0
  %4143 = vmatpush1.msra.mxu0 0.0
  %4144 = vmatprep.subr.mxu0 0.0
  %4145 = vmatpush1.msra.mxu0 0.0
  %4146 = vmatprep.subr.mxu0 0.0
  %4147 = vmatpush1.msra.mxu0 0.0
  %4148 = vmatprep.subr.mxu0 0.0
  %4149 = vmatpush1.msra.mxu0 0.0
  %4150 = vmatprep.subr.mxu0 0.0
  %4151 = vmatpush1.msra.mxu0 0.0
  %4152 = vmatprep.subr.mxu0 0.0
  %4153 = vmatpush1.msra.mxu0 0.0
  %4154 = vmatprep.subr.mxu0 0.0
  %4155 = vmatpush1.msra.mxu0 0.0
  %4156 = vmatprep.subr.mxu0 0.0
  %4157 = vmatpush1.msra.mxu0 0.0
  %4158 = vmatprep.subr.mxu0 0.0
  %4159 = vmatpush1.msra.mxu0 0.0
  %4160 = vmatprep.subr.mxu0 0.0
  %4161 = vmatpush1.msra.mxu0 0.0
  %4162 = vmatprep.subr.mxu0 0.0
  %4163 = vmatpush1.msra.mxu0 0.0
  %4164 = vmatprep.subr.mxu0 0.0
  %4165 = vmatpush1.msra.mxu0 0.0
  %4166 = vmatprep.subr.mxu0 0.0
  %4167 = vmatpush1.msra.mxu0 0.0
  %4168 = vmatprep.subr.mxu0 0.0
  %4169 = vmatpush1.msra.mxu0 0.0
  %4170 = vmatprep.subr.mxu0 0.0
  %4171 = vmatpush1.msra.mxu0 0.0
  %4172 = vmatprep.subr.mxu0 0.0
  %4173 = vmatpush1.msra.mxu0 0.0
  %4174 = vmatprep.subr.mxu0 0.0
  %4175 = vmatpush1.msra.mxu0 0.0
  %4176 = vmatprep.subr.mxu0 0.0
  %4177 = vmatpush1.msra.mxu0 0.0
  %4178 = vmatprep.subr.mxu0 0.0
  %4179 = vmatpush1.msra.mxu0 0.0
  %4180 = vmatprep.subr.mxu0 0.0
  %4181 = vmatpush1.msra.mxu0 0.0
  %4182 = vmatprep.subr.mxu0 0.0
  %4183 = vmatpush1.msra.mxu0 0.0
  %4184 = vmatprep.subr.mxu0 0.0
  %4185 = vmatpush1.msra.mxu0 0.0
  %4186 = vmatprep.subr.mxu0 0.0
  %4187 = vmatpush1.msra.mxu0 0.0
  %4188 = vmatprep.subr.mxu0 0.0
  %4189 = vmatpush1.msra.mxu0 0.0
  %4190 = vmatprep.subr.mxu0 0.0
  %4191 = vmatpush1.msra.mxu0 0.0
  %4192 = vmatprep.subr.mxu0 0.0
  %4193 = vmatpush1.msra.mxu0 0.0
  %4194 = vmatprep.subr.mxu0 0.0
  %4195 = vmatpush1.msra.mxu0 0.0
  %4196 = vmatprep.mubr.f32.mxu0 0.0
  %4197 = vmatmul.mubr.f32.gmra.mrb[0].mxu0 %v4124
  %v4198 = vpop.f32.mrb[0].mxu0
  %v4199 = vadd.f32 0.0, %v4198
  %v4200 = vpop.f32.mrb[0].mxu0
  %4201 = vmatprep.mubr.f32.mxu0 0.0
  %4202 = vmatmul.mubr.f32.gmra.mrb[0].mxu0 %v4127
  %v4203 = vpop.f32.mrb[0].mxu0
  %v4204 = vadd.f32 0.0, %v4203
  %v4205 = vpop.f32.mrb[0].mxu0
  %4206 = vmatprep.mubr.f32.mxu0 0.0
  %4207 = vmatmul.mubr.f32.gmra.mrb[0].mxu0 %v4130
  %v4208 = vpop.f32.mrb[0].mxu0
  %v4209 = vadd.f32 0.0, %v4208
  %v4210 = vpop.f32.mrb[0].mxu0
  %4211 = vdwg.mxu0
  %v4212 = vld [vmem:[%s33] sm:$0xff]
  %v4213 = vld [vmem:[%s33 + $0x8] sm:$0xff]
  %v4214 = vld [vmem:[%s39] sm:$0x1]
  %v4216 = vlaneseq
  %v4217 = vshrl.u32 %v4216, 7
  %v4218 = vsub.s32 0, %v4217
  %v4219 = vrot.slane %v4214, %v4218
  %4221 = vmatprep.subr.mxu0 0.0
  %4222 = vmatpush1.msra.mxu0 %v4212
  %4223 = vmatprep.subr.mxu0 0.0
  %4224 = vmatpush1.msra.mxu0 %v4213
  %4225 = vmatprep.subr.mxu0 0.0
  %4226 = vmatpush1.msra.mxu0 0.0
  %4227 = vmatprep.subr.mxu0 0.0
  %4228 = vmatpush1.msra.mxu0 0.0
  %4229 = vmatprep.subr.mxu0 0.0
  %4230 = vmatpush1.msra.mxu0 0.0
  %4231 = vmatprep.subr.mxu0 0.0
  %4232 = vmatpush1.msra.mxu0 0.0
  %4233 = vmatprep.subr.mxu0 0.0
  %4234 = vmatpush1.msra.mxu0 0.0
  %4235 = vmatprep.subr.mxu0 0.0
  %4236 = vmatpush1.msra.mxu0 0.0
  %4237 = vmatprep.subr.mxu0 0.0
  %4238 = vmatpush1.msra.mxu0 0.0
  %4239 = vmatprep.subr.mxu0 0.0
  %4240 = vmatpush1.msra.mxu0 0.0
  %4241 = vmatprep.subr.mxu0 0.0
  %4242 = vmatpush1.msra.mxu0 0.0
  %4243 = vmatprep.subr.mxu0 0.0
  %4244 = vmatpush1.msra.mxu0 0.0
  %4245 = vmatprep.subr.mxu0 0.0
  %4246 = vmatpush1.msra.mxu0 0.0
  %4247 = vmatprep.subr.mxu0 0.0
  %4248 = vmatpush1.msra.mxu0 0.0
  %4249 = vmatprep.subr.mxu0 0.0
  %4250 = vmatpush1.msra.mxu0 0.0
  %4251 = vmatprep.subr.mxu0 0.0
  %4252 = vmatpush1.msra.mxu0 0.0
  %4253 = vmatprep.subr.mxu0 0.0
  %4254 = vmatpush1.msra.mxu0 0.0
  %4255 = vmatprep.subr.mxu0 0.0
  %4256 = vmatpush1.msra.mxu0 0.0
  %4257 = vmatprep.subr.mxu0 0.0
  %4258 = vmatpush1.msra.mxu0 0.0
  %4259 = vmatprep.subr.mxu0 0.0
  %4260 = vmatpush1.msra.mxu0 0.0
  %4261 = vmatprep.subr.mxu0 0.0
  %4262 = vmatpush1.msra.mxu0 0.0
  %4263 = vmatprep.subr.mxu0 0.0
  %4264 = vmatpush1.msra.mxu0 0.0
  %4265 = vmatprep.subr.mxu0 0.0
  %4266 = vmatpush1.msra.mxu0 0.0
  %4267 = vmatprep.subr.mxu0 0.0
  %4268 = vmatpush1.msra.mxu0 0.0
  %4269 = vmatprep.subr.mxu0 0.0
  %4270 = vmatpush1.msra.mxu0 0.0
  %4271 = vmatprep.subr.mxu0 0.0
  %4272 = vmatpush1.msra.mxu0 0.0
  %4273 = vmatprep.subr.mxu0 0.0
  %4274 = vmatpush1.msra.mxu0 0.0
  %4275 = vmatprep.subr.mxu0 0.0
  %4276 = vmatpush1.msra.mxu0 0.0
  %4277 = vmatprep.subr.mxu0 0.0
  %4278 = vmatpush1.msra.mxu0 0.0
  %4279 = vmatprep.subr.mxu0 0.0
  %4280 = vmatpush1.msra.mxu0 0.0
  %4281 = vmatprep.subr.mxu0 0.0
  %4282 = vmatpush1.msra.mxu0 0.0
  %4283 = vmatprep.subr.mxu0 0.0
  %4284 = vmatpush1.msra.mxu0 0.0
  %4285 = vmatprep.mubr.f32.mxu0 0.0
  %4286 = vmatmul.mubr.f32.gmra.mrb[0].mxu0 %v4124
  %v4287 = vpop.f32.mrb[0].mxu0
  %v4288 = vadd.f32 %v4219, %v4287
  %v4289 = vpop.f32.mrb[0].mxu0
  %4290 = vmatprep.mubr.f32.mxu0 0.0
  %4291 = vmatmul.mubr.f32.gmra.mrb[0].mxu0 %v4127
  %v4292 = vpop.f32.mrb[0].mxu0
  %v4293 = vadd.f32 %v4219, %v4292
  %v4294 = vpop.f32.mrb[0].mxu0
  %4295 = vmatprep.mubr.f32.mxu0 0.0
  %4296 = vmatmul.mubr.f32.gmra.mrb[0].mxu0 %v4130
  %v4297 = vpop.f32.mrb[0].mxu0
  %v4298 = vadd.f32 %v4219, %v4297
  %v4299 = vpop.f32.mrb[0].mxu0
  %4300 = vdwg.mxu0
  %v4301 = vld [vmem:[%s45] sm:$0xff]
  %v4302 = vld [vmem:[%s45 + $0x8] sm:$0xff]
  %4303 = vmatprep.subr.mxu0 0.0
  %4304 = vmatpush1.msra.mxu0 %v4301
  %4305 = vmatprep.subr.mxu0 0.0
  %4306 = vmatpush1.msra.mxu0 %v4302
  %4307 = vmatprep.subr.mxu0 0.0
  %4308 = vmatpush1.msra.mxu0 0.0
  %4309 = vmatprep.subr.mxu0 0.0
  %4310 = vmatpush1.msra.mxu0 0.0
  %4311 = vmatprep.subr.mxu0 0.0
  %4312 = vmatpush1.msra.mxu0 0.0
  %4313 = vmatprep.subr.mxu0 0.0
  %4314 = vmatpush1.msra.mxu0 0.0
  %4315 = vmatprep.subr.mxu0 0.0
  %4316 = vmatpush1.msra.mxu0 0.0
  %4317 = vmatprep.subr.mxu0 0.0
  %4318 = vmatpush1.msra.mxu0 0.0
  %4319 = vmatprep.subr.mxu0 0.0
  %4320 = vmatpush1.msra.mxu0 0.0
  %4321 = vmatprep.subr.mxu0 0.0
  %4322 = vmatpush1.msra.mxu0 0.0
  %4323 = vmatprep.subr.mxu0 0.0
  %4324 = vmatpush1.msra.mxu0 0.0
  %4325 = vmatprep.subr.mxu0 0.0
  %4326 = vmatpush1.msra.mxu0 0.0
  %4327 = vmatprep.subr.mxu0 0.0
  %4328 = vmatpush1.msra.mxu0 0.0
  %4329 = vmatprep.subr.mxu0 0.0
  %4330 = vmatpush1.msra.mxu0 0.0
  %4331 = vmatprep.subr.mxu0 0.0
  %4332 = vmatpush1.msra.mxu0 0.0
  %4333 = vmatprep.subr.mxu0 0.0
  %4334 = vmatpush1.msra.mxu0 0.0
  %4335 = vmatprep.subr.mxu0 0.0
  %4336 = vmatpush1.msra.mxu0 0.0
  %4337 = vmatprep.subr.mxu0 0.0
  %4338 = vmatpush1.msra.mxu0 0.0
  %4339 = vmatprep.subr.mxu0 0.0
  %4340 = vmatpush1.msra.mxu0 0.0
  %4341 = vmatprep.subr.mxu0 0.0
  %4342 = vmatpush1.msra.mxu0 0.0
  %4343 = vmatprep.subr.mxu0 0.0
  %4344 = vmatpush1.msra.mxu0 0.0
  %4345 = vmatprep.subr.mxu0 0.0
  %4346 = vmatpush1.msra.mxu0 0.0
  %4347 = vmatprep.subr.mxu0 0.0
  %4348 = vmatpush1.msra.mxu0 0.0
  %4349 = vmatprep.subr.mxu0 0.0
  %4350 = vmatpush1.msra.mxu0 0.0
  %4351 = vmatprep.subr.mxu0 0.0
  %4352 = vmatpush1.msra.mxu0 0.0
  %4353 = vmatprep.subr.mxu0 0.0
  %4354 = vmatpush1.msra.mxu0 0.0
  %4355 = vmatprep.subr.mxu0 0.0
  %4356 = vmatpush1.msra.mxu0 0.0
  %4357 = vmatprep.subr.mxu0 0.0
  %4358 = vmatpush1.msra.mxu0 0.0
  %4359 = vmatprep.subr.mxu0 0.0
  %4360 = vmatpush1.msra.mxu0 0.0
  %4361 = vmatprep.subr.mxu0 0.0
  %4362 = vmatpush1.msra.mxu0 0.0
  %4363 = vmatprep.subr.mxu0 0.0
  %4364 = vmatpush1.msra.mxu0 0.0
  %4365 = vmatprep.subr.mxu0 0.0
  %4366 = vmatpush1.msra.mxu0 0.0
  %4367 = vmatprep.mubr.f32.mxu0 0.0
  %4368 = vmatmul.mubr.f32.gmra.mrb[0].mxu0 %v4124
  %v4369 = vpop.f32.mrb[0].mxu0
  %v4370 = vadd.f32 0.0, %v4369
  %v4371 = vpop.f32.mrb[0].mxu0
  %4372 = vmatprep.mubr.f32.mxu0 0.0
  %4373 = vmatmul.mubr.f32.gmra.mrb[0].mxu0 %v4127
  %v4374 = vpop.f32.mrb[0].mxu0
  %v4375 = vadd.f32 0.0, %v4374
  %v4376 = vpop.f32.mrb[0].mxu0
  %4377 = vmatprep.mubr.f32.mxu0 0.0
  %4378 = vmatmul.mubr.f32.gmra.mrb[0].mxu0 %v4130
  %v4379 = vpop.f32.mrb[0].mxu0
  %v4380 = vadd.f32 0.0, %v4379
  %v4381 = vpop.f32.mrb[0].mxu0
  %4382 = vdwg.mxu0
  %v4383 = vld [vmem:[%s53] sm:$0x1]
  %v4385 = vlaneseq
  %v4386 = vshrl.u32 %v4385, 7
  %v4387 = vsub.s32 0, %v4386
  %v4388 = vrot.slane %v4383, %v4387
  %v4390 = vmul.f32 %v4118, %v4388
  %v4391 = vmul.f32 %v4119, %v4388
  %v4392 = vmul.f32 %v4120, %v4388
  %v4393 = vsel %vm146, %v4390, 0.0
  %4394 = vadd.xlane.f32.xlu0 %v4393
  %v4395 = vpop.xlane.xlu0 %4394
  %v4396 = vsel %vm146, %v4391, 0.0
  %4397 = vadd.xlane.f32.xlu0 %v4396
  %v4398 = vpop.xlane.xlu0 %4397
  %v4399 = vsel %vm146, %v4392, 0.0
  %4400 = vadd.xlane.f32.xlu0 %v4399
  %v4401 = vpop.xlane.xlu0 %4400
  %v4402 = vld [vmem:[%s25] sm:$0xff]
  %v4403 = vld [vmem:[%s25 + $0x8] sm:$0xff]
  %v4404 = vld [vmem:[%s25 + $0x10] sm:$0xff]
  %v4405 = vld [vmem:[%s25 + $0x18] sm:$0xff]
  %v4406 = vsel %vm287, %v4402, 0.0
  %v4407 = vsel %vm287, %v4403, 0.0
  %v4408 = vadd.f32 %v4406, %v4407
  %v4409 = vsel %vm287, %v4404, 0.0
  %v4410 = vadd.f32 %v4408, %v4409
  %v4411 = vsel %vm287, %v4405, 0.0
  %v4412 = vadd.f32 %v4410, %v4411
  %v4413 = vrot.slane %v4412, 4
  %v4414 = vadd.f32 %v4412, %v4413
  %v4415 = vrot.slane %v4414, 2
  %v4416 = vadd.f32 %v4414, %v4415
  %v4417 = vrot.slane %v4416, 1
  %v4418 = vadd.f32 %v4416, %v4417
  %v4419 = vlaneseq
  %v4420 = vshrl.u32 %v4419, 7
  %v4421 = vsub.s32 0, %v4420
  %v4422 = vrot.slane %v128, %v4421
  %4424 = vbcast.lane.b32.xlu0 %v4422, 256
  %v4425 = vpop.permute.xlu0 %4424
  %v4426 = vlaneseq
  %v4427 = vshrl.u32 %v4426, 7
  %v4428 = vsub.s32 1, %v4427
  %v4429 = vrot.slane %v128, %v4428
  %4431 = vbcast.lane.b32.xlu0 %v4429, 256
  %v4432 = vpop.permute.xlu0 %4431
  %v4433 = vlaneseq
  %v4434 = vshrl.u32 %v4433, 7
  %v4435 = vsub.s32 2, %v4434
  %v4436 = vrot.slane %v128, %v4435
  %4438 = vbcast.lane.b32.xlu0 %v4436, 256
  %v4439 = vpop.permute.xlu0 %4438
  %v4440 = vlaneseq
  %v4441 = vshrl.u32 %v4440, 7
  %v4442 = vsub.s32 3, %v4441
  %v4443 = vrot.slane %v128, %v4442
  %4445 = vbcast.lane.b32.xlu0 %v4443, 256
  %v4446 = vpop.permute.xlu0 %4445
  %v4447 = vlaneseq
  %v4448 = vshrl.u32 %v4447, 7
  %v4449 = vsub.s32 4, %v4448
  %v4450 = vrot.slane %v128, %v4449
  %4452 = vbcast.lane.b32.xlu0 %v4450, 256
  %v4453 = vpop.permute.xlu0 %4452
  %v4454 = vlaneseq
  %v4455 = vshrl.u32 %v4454, 7
  %v4456 = vsub.s32 5, %v4455
  %v4457 = vrot.slane %v128, %v4456
  %4459 = vbcast.lane.b32.xlu0 %v4457, 256
  %v4460 = vpop.permute.xlu0 %4459
  %v4461 = vlaneseq
  %v4462 = vshrl.u32 %v4461, 7
  %v4463 = vsub.s32 6, %v4462
  %v4464 = vrot.slane %v128, %v4463
  %4466 = vbcast.lane.b32.xlu0 %v4464, 256
  %v4467 = vpop.permute.xlu0 %4466
  %v4468 = vlaneseq
  %v4469 = vshrl.u32 %v4468, 7
  %v4470 = vsub.s32 7, %v4469
  %v4471 = vrot.slane %v128, %v4470
  %4473 = vbcast.lane.b32.xlu0 %v4471, 256
  %v4474 = vpop.permute.xlu0 %4473
  %v4475 = vlaneseq
  %v4476 = vand.u32 %v4475, 127
  %vm4477 = vcmp.eq.s32.totalorder %v4425, %v4476
  %vm4478 = vcmp.eq.s32.totalorder %v4432, %v4476
  %vm4479 = vcmp.eq.s32.totalorder %v4439, %v4476
  %vm4480 = vcmp.eq.s32.totalorder %v4446, %v4476
  %vm4481 = vcmp.eq.s32.totalorder %v4453, %v4476
  %vm4482 = vcmp.eq.s32.totalorder %v4460, %v4476
  %vm4483 = vcmp.eq.s32.totalorder %v4467, %v4476
  %vm4484 = vcmp.eq.s32.totalorder %v4474, %v4476
  %v4485 = vsel %vm4477, 1, 0
  %v4486 = vsel %vm4478, 1, 0
  %v4487 = vsel %vm4479, 1, 0
  %v4488 = vsel %vm4480, 1, 0
  %v4489 = vsel %vm4481, 1, 0
  %v4490 = vsel %vm4482, 1, 0
  %v4491 = vsel %vm4483, 1, 0
  %v4492 = vsel %vm4484, 1, 0
  %v4493 = vcvt.s32.f32 %v4485
  %v4494 = vcvt.s32.f32 %v4486
  %v4495 = vcvt.s32.f32 %v4487
  %v4496 = vcvt.s32.f32 %v4488
  %v4497 = vcvt.s32.f32 %v4489
  %v4498 = vcvt.s32.f32 %v4490
  %v4499 = vcvt.s32.f32 %v4491
  %v4500 = vcvt.s32.f32 %v4492
  %4501 = vset.pattern.permute.xlu0 0
  %4502 = vperm.xlu0 %4501, %v127
  %v4503 = vpop.permute.xlu0 %4502
  %vm4504 = vcmp.ge.s32.totalorder %v4476, %v4503
  %v4505 = vld [vmem:[%s35] sm:$0xff]
  %v4506 = vld [vmem:[%s35 + $0x8] sm:$0xff]
  %v4507 = vld [vmem:[%s35 + $0x10] sm:$0xff]
  %v4508 = vld [vmem:[%s35 + $0x18] sm:$0xff]
  %v4509 = vld [vmem:[%s37] sm:$0xff]
  %v4510 = vld [vmem:[%s37 + $0x8] sm:$0xff]
  %v4511 = vld [vmem:[%s37 + $0x10] sm:$0xff]
  %v4512 = vld [vmem:[%s37 + $0x18] sm:$0xff]
  %v4513 = vld [vmem:[%s41] sm:$0x1]
  %v4514 = vld [vmem:[%s27] sm:$0x1]
  %v4515 = vld [vmem:[%s29] sm:$0x1]
  %v4516 = vld [vmem:[#allocation2] sm:$0x1]
  %v4517 = vld [vmem:[%s43] sm:$0xff]
  %v4518 = vld [vmem:[%s43 + $0x8] sm:$0xff]
  %v4519 = vld [vmem:[%s43 + $0x10] sm:$0xff]
  %v4520 = vld [vmem:[%s43 + $0x18] sm:$0xff]
  %v4521 = vld [vmem:[%s43 + $0x20] sm:$0xff]
  %v4522 = vld [vmem:[%s43 + $0x28] sm:$0xff]
  %v4523 = vld [vmem:[%s43 + $0x30] sm:$0xff]
  %v4524 = vld [vmem:[%s43 + $0x38] sm:$0xff]
  %v4525 = vld [vmem:[%s47] sm:$0x1]
  %v4526 = vld [vmem:[%s49] sm:$0x1]
  %v4527 = vld [vmem:[%s51] sm:$0x1]
  %v4528 = vld [vmem:[#allocation3] sm:$0x1]
  %v4530 = vcombine.high %v4199, %v4199
  %v4532 = vunpack.c.l.s4 1966171168
  %v4533 = vunpack.c.0.s8 %v4532
  %v4534 = vlaneseq
  %v4535 = vshrl.u32 %v4534, 7
  %v4536 = vsub.s32 %v4533, %v4535
  %v4537 = vrot.slane %v4199, %v4536
  %v4539 = vunpack.c.l.s4 1966171168
  %v4540 = vunpack.c.0.s8 %v4539
  %v4541 = vlaneseq
  %v4542 = vshrl.u32 %v4541, 7
  %v4543 = vsub.s32 %v4540, %v4542
  %v4544 = vrot.slane %v4530, %v4543
  %v4545 = vcombine.high %v4537, %v4537
  %v4546 = vcombine.high %v4544, %v4544
  %v4548 = vunpack.c.l.s4 1966171168
  %v4549 = vunpack.c.0.s8 %v4548
  %v4550 = vlaneseq
  %v4551 = vshrl.u32 %v4550, 7
  %v4552 = vsub.s32 %v4549, %v4551
  %v4553 = vrot.slane %v4537, %v4552
  %v4555 = vunpack.c.l.s4 1966171168
  %v4556 = vunpack.c.0.s8 %v4555
  %v4557 = vlaneseq
  %v4558 = vshrl.u32 %v4557, 7
  %v4559 = vsub.s32 %v4556, %v4558
  %v4560 = vrot.slane %v4544, %v4559
  %v4562 = vunpack.c.l.s4 1966171168
  %v4563 = vunpack.c.0.s8 %v4562
  %v4564 = vlaneseq
  %v4565 = vshrl.u32 %v4564, 7
  %v4566 = vsub.s32 %v4563, %v4565
  %v4567 = vrot.slane %v4545, %v4566
  %v4569 = vunpack.c.l.s4 1966171168
  %v4570 = vunpack.c.0.s8 %v4569
  %v4571 = vlaneseq
  %v4572 = vshrl.u32 %v4571, 7
  %v4573 = vsub.s32 %v4570, %v4572
  %v4574 = vrot.slane %v4546, %v4573
  %v4575 = vcombine.high %v4553, %v4553
  %v4576 = vcombine.high %v4560, %v4560
  %v4577 = vcombine.high %v4567, %v4567
  %v4578 = vcombine.high %v4574, %v4574
  %v4579 = vlaneseq
  %v4580 = vshrl.u32 %v4579, 7
  %v4581 = vsub.s32 0, %v4580
  %v4582 = vrot.slane %v4553, %v4581
  %v4583 = vlaneseq
  %v4584 = vshrl.u32 %v4583, 7
  %v4585 = vsub.s32 0, %v4584
  %v4586 = vrot.slane %v4567, %v4585
  %v4587 = vlaneseq
  %v4588 = vshrl.u32 %v4587, 7
  %v4589 = vsub.s32 0, %v4588
  %v4590 = vrot.slane %v4575, %v4589
  %v4591 = vlaneseq
  %v4592 = vshrl.u32 %v4591, 7
  %v4593 = vsub.s32 0, %v4592
  %v4594 = vrot.slane %v4577, %v4593
  %v4595 = vlaneseq
  %v4596 = vshrl.u32 %v4595, 7
  %v4597 = vsub.s32 0, %v4596
  %v4598 = vrot.slane %v4560, %v4597
  %v4599 = vlaneseq
  %v4600 = vshrl.u32 %v4599, 7
  %v4601 = vsub.s32 0, %v4600
  %v4602 = vrot.slane %v4574, %v4601
  %v4603 = vlaneseq
  %v4604 = vshrl.u32 %v4603, 7
  %v4605 = vsub.s32 0, %v4604
  %v4606 = vrot.slane %v4576, %v4605
  %v4607 = vlaneseq
  %v4608 = vshrl.u32 %v4607, 7
  %v4609 = vsub.s32 0, %v4608
  %v4610 = vrot.slane %v4578, %v4609
  %v4619 = vadd.f32 %v4080, %v4582
  %v4620 = vadd.f32 %v4085, %v4586
  %v4621 = vadd.f32 %v4090, %v4590
  %v4622 = vadd.f32 %v4095, %v4594
  %v4623 = vadd.f32 %v4100, %v4598
  %v4624 = vadd.f32 %v4105, %v4602
  %v4625 = vadd.f32 %v4110, %v4606
  %v4626 = vadd.f32 %v4115, %v4610
  %v4627 = vmul.f32 %v4418, 0.0
  %v4628 = vadd.f32 %v4619, %v4627
  %v4629 = vadd.f32 %v4620, %v4627
  %v4630 = vadd.f32 %v4621, %v4627
  %v4631 = vadd.f32 %v4622, %v4627
  %v4632 = vadd.f32 %v4623, %v4627
  %v4633 = vadd.f32 %v4624, %v4627
  %v4634 = vadd.f32 %v4625, %v4627
  %v4635 = vadd.f32 %v4626, %v4627
  %v4637 = vlaneseq
  %v4638 = vshrl.u32 %v4637, 7
  %v4639 = vsub.s32 0, %v4638
  %v4640 = vrot.slane %v4514, %v4639
  %v4642 = vadd.f32 %v4628, %v4640
  %v4643 = vadd.f32 %v4629, %v4640
  %v4644 = vadd.f32 %v4630, %v4640
  %v4645 = vadd.f32 %v4631, %v4640
  %v4646 = vadd.f32 %v4632, %v4640
  %v4647 = vadd.f32 %v4633, %v4640
  %v4648 = vadd.f32 %v4634, %v4640
  %v4649 = vadd.f32 %v4635, %v4640
  %v4650 = vtanh.pop %v4642
  %v4651 = vtanh.pop %v4643
  %v4652 = vtanh.pop %v4644
  %v4653 = vtanh.pop %v4645
  %v4654 = vtanh.pop %v4646
  %v4655 = vtanh.pop %v4647
  %v4656 = vtanh.pop %v4648
  %v4657 = vtanh.pop %v4649
  %v4659 = vlaneseq
  %v4660 = vshrl.u32 %v4659, 7
  %v4661 = vsub.s32 0, %v4660
  %v4662 = vrot.slane %v4515, %v4661
  %v4664 = vmul.f32 %v4650, %v4662
  %v4665 = vmul.f32 %v4651, %v4662
  %v4666 = vmul.f32 %v4652, %v4662
  %v4667 = vmul.f32 %v4653, %v4662
  %v4668 = vmul.f32 %v4654, %v4662
  %v4669 = vmul.f32 %v4655, %v4662
  %v4670 = vmul.f32 %v4656, %v4662
  %v4671 = vmul.f32 %v4657, %v4662
  %v4672 = vsel %vm287, %v4664, 0.0
  %4673 = vadd.xlane.f32.xlu0 %v4672
  %v4674 = vpop.xlane.xlu0 %4673
  %v4675 = vsel %vm287, %v4665, 0.0
  %4676 = vadd.xlane.f32.xlu0 %v4675
  %v4677 = vpop.xlane.xlu0 %4676
  %v4678 = vsel %vm287, %v4666, 0.0
  %4679 = vadd.xlane.f32.xlu0 %v4678
  %v4680 = vpop.xlane.xlu0 %4679
  %v4681 = vsel %vm287, %v4667, 0.0
  %4682 = vadd.xlane.f32.xlu0 %v4681
  %v4683 = vpop.xlane.xlu0 %4682
  %v4684 = vsel %vm287, %v4668, 0.0
  %4685 = vadd.xlane.f32.xlu0 %v4684
  %v4686 = vpop.xlane.xlu0 %4685
  %v4687 = vsel %vm287, %v4669, 0.0
  %4688 = vadd.xlane.f32.xlu0 %v4687
  %v4689 = vpop.xlane.xlu0 %4688
  %v4690 = vsel %vm287, %v4670, 0.0
  %4691 = vadd.xlane.f32.xlu0 %v4690
  %v4692 = vpop.xlane.xlu0 %4691
  %v4693 = vsel %vm287, %v4671, 0.0
  %4694 = vadd.xlane.f32.xlu0 %v4693
  %v4695 = vpop.xlane.xlu0 %4694
  %v4697 = vlaneseq
  %v4698 = vshrl.u32 %v4697, 7
  %v4699 = vsub.s32 0, %v4698
  %v4700 = vrot.slane %v4516, %v4699
  %4701 = vset.pattern.permute.xlu0 0
  %4702 = vperm.xlu0 %4701, %v4700
  %v4703 = vpop.permute.xlu0 %4702
  %v4705 = vadd.f32 %v4674, %v4703
  %v4706 = vadd.f32 %v4677, %v4703
  %v4707 = vadd.f32 %v4680, %v4703
  %v4708 = vadd.f32 %v4683, %v4703
  %v4709 = vadd.f32 %v4686, %v4703
  %v4710 = vadd.f32 %v4689, %v4703
  %v4711 = vadd.f32 %v4692, %v4703
  %v4712 = vadd.f32 %v4695, %v4703
  %v4721 = vlaneseq
  %v4722 = vshrl.u32 %v4721, 7
  %v4723 = vsub.s32 %v4476, %v4722
  %v4724 = vrot.slane %v4705, %v4723
  %v4725 = vlaneseq
  %v4726 = vshrl.u32 %v4725, 7
  %v4727 = vsub.s32 %v4476, %v4726
  %v4728 = vrot.slane %v4706, %v4727
  %v4729 = vlaneseq
  %v4730 = vshrl.u32 %v4729, 7
  %v4731 = vsub.s32 %v4476, %v4730
  %v4732 = vrot.slane %v4707, %v4731
  %v4733 = vlaneseq
  %v4734 = vshrl.u32 %v4733, 7
  %v4735 = vsub.s32 %v4476, %v4734
  %v4736 = vrot.slane %v4708, %v4735
  %v4737 = vlaneseq
  %v4738 = vshrl.u32 %v4737, 7
  %v4739 = vsub.s32 %v4476, %v4738
  %v4740 = vrot.slane %v4709, %v4739
  %v4741 = vlaneseq
  %v4742 = vshrl.u32 %v4741, 7
  %v4743 = vsub.s32 %v4476, %v4742
  %v4744 = vrot.slane %v4710, %v4743
  %v4745 = vlaneseq
  %v4746 = vshrl.u32 %v4745, 7
  %v4747 = vsub.s32 %v4476, %v4746
  %v4748 = vrot.slane %v4711, %v4747
  %v4749 = vlaneseq
  %v4750 = vshrl.u32 %v4749, 7
  %v4751 = vsub.s32 %v4476, %v4750
  %v4752 = vrot.slane %v4712, %v4751
  %v4753 = vsel %vm592, %v4728, %v4724
  %v4754 = vsel %vm595, %v4732, %v4753
  %v4755 = vsel %vm598, %v4736, %v4754
  %v4756 = vsel %vm601, %v4740, %v4755
  %v4757 = vsel %vm604, %v4744, %v4756
  %v4758 = vsel %vm607, %v4748, %v4757
  %v4759 = vsel %vm610, %v4752, %v4758
  %v4761 = vsel %vm4504, -1e+30, %v4759
  %vm4762 = vcmask 64512
  %v4763 = vsel %vm4762, %v4761, -inf
  %4764 = vmax.xlane.f32.xlu0 %v4763
  %v4765 = vpop.xlane.xlu0 %4764
  %v4766 = vsub.f32 %v4761, %v4765
  %v4767 = vmul.f32 %v4766, 1.442695
  %v4768 = vpow.pop %v4767
  %v4769 = vsel %vm4762, %v4768, 0.0
  %4770 = vadd.xlane.f32.xlu0 %v4769
  %v4771 = vpop.xlane.xlu0 %4770
  %v4772 = vrcp.pop %v4771
  %v4773 = vmul.f32 %v4768, %v4772
  %v4774 = vadd.f32 %v4773, 0.0
  %v4775 = vlaneseq
  %v4776 = vshrl.u32 %v4775, 7
  %v4777 = vsub.s32 0, %v4776
  %v4778 = vrot.slane %v4773, %v4777
  %4780 = vbcast.lane.b32.xlu0 %v4778, 256
  %v4781 = vpop.permute.xlu0 %4780
  %v4782 = vlaneseq
  %v4783 = vshrl.u32 %v4782, 7
  %v4784 = vsub.s32 1, %v4783
  %v4785 = vrot.slane %v4773, %v4784
  %4787 = vbcast.lane.b32.xlu0 %v4785, 256
  %v4788 = vpop.permute.xlu0 %4787
  %v4789 = vlaneseq
  %v4790 = vshrl.u32 %v4789, 7
  %v4791 = vsub.s32 2, %v4790
  %v4792 = vrot.slane %v4773, %v4791
  %4794 = vbcast.lane.b32.xlu0 %v4792, 256
  %v4795 = vpop.permute.xlu0 %4794
  %v4796 = vlaneseq
  %v4797 = vshrl.u32 %v4796, 7
  %v4798 = vsub.s32 3, %v4797
  %v4799 = vrot.slane %v4773, %v4798
  %4801 = vbcast.lane.b32.xlu0 %v4799, 256
  %v4802 = vpop.permute.xlu0 %4801
  %v4803 = vlaneseq
  %v4804 = vshrl.u32 %v4803, 7
  %v4805 = vsub.s32 4, %v4804
  %v4806 = vrot.slane %v4773, %v4805
  %4808 = vbcast.lane.b32.xlu0 %v4806, 256
  %v4809 = vpop.permute.xlu0 %4808
  %v4810 = vlaneseq
  %v4811 = vshrl.u32 %v4810, 7
  %v4812 = vsub.s32 5, %v4811
  %v4813 = vrot.slane %v4773, %v4812
  %4815 = vbcast.lane.b32.xlu0 %v4813, 256
  %v4816 = vpop.permute.xlu0 %4815
  %v4817 = vlaneseq
  %v4818 = vshrl.u32 %v4817, 7
  %v4819 = vsub.s32 6, %v4818
  %v4820 = vrot.slane %v4773, %v4819
  %4822 = vbcast.lane.b32.xlu0 %v4820, 256
  %v4823 = vpop.permute.xlu0 %4822
  %v4824 = vlaneseq
  %v4825 = vshrl.u32 %v4824, 7
  %v4826 = vsub.s32 7, %v4825
  %v4827 = vrot.slane %v4773, %v4826
  %4829 = vbcast.lane.b32.xlu0 %v4827, 256
  %v4830 = vpop.permute.xlu0 %4829
  %v4831 = vmul.f32 %v4781, %v3977
  %v4832 = vmul.f32 %v4788, %v3978
  %v4833 = vmul.f32 %v4795, %v3979
  %v4834 = vmul.f32 %v4802, %v3980
  %v4835 = vmul.f32 %v4809, %v3981
  %v4836 = vmul.f32 %v4816, %v3982
  %v4837 = vmul.f32 %v4823, %v3983
  %v4838 = vmul.f32 %v4830, %v3984
  %v4839 = vsel %vm287, %v4831, 0.0
  %v4840 = vrot.slane %v4839, 4
  %v4841 = vadd.f32 %v4839, %v4840
  %v4842 = vrot.slane %v4841, 2
  %v4843 = vadd.f32 %v4841, %v4842
  %v4844 = vrot.slane %v4843, 1
  %v4845 = vadd.f32 %v4843, %v4844
  %v4846 = vsel %vm287, %v4832, 0.0
  %v4847 = vrot.slane %v4846, 4
  %v4848 = vadd.f32 %v4846, %v4847
  %v4849 = vrot.slane %v4848, 2
  %v4850 = vadd.f32 %v4848, %v4849
  %v4851 = vrot.slane %v4850, 1
  %v4852 = vadd.f32 %v4850, %v4851
  %v4853 = vsel %vm287, %v4833, 0.0
  %v4854 = vrot.slane %v4853, 4
  %v4855 = vadd.f32 %v4853, %v4854
  %v4856 = vrot.slane %v4855, 2
  %v4857 = vadd.f32 %v4855, %v4856
  %v4858 = vrot.slane %v4857, 1
  %v4859 = vadd.f32 %v4857, %v4858
  %v4860 = vsel %vm287, %v4834, 0.0
  %v4861 = vrot.slane %v4860, 4
  %v4862 = vadd.f32 %v4860, %v4861
  %v4863 = vrot.slane %v4862, 2
  %v4864 = vadd.f32 %v4862, %v4863
  %v4865 = vrot.slane %v4864, 1
  %v4866 = vadd.f32 %v4864, %v4865
  %v4867 = vsel %vm287, %v4835, 0.0
  %v4868 = vrot.slane %v4867, 4
  %v4869 = vadd.f32 %v4867, %v4868
  %v4870 = vrot.slane %v4869, 2
  %v4871 = vadd.f32 %v4869, %v4870
  %v4872 = vrot.slane %v4871, 1
  %v4873 = vadd.f32 %v4871, %v4872
  %v4874 = vsel %vm287, %v4836, 0.0
  %v4875 = vrot.slane %v4874, 4
  %v4876 = vadd.f32 %v4874, %v4875
  %v4877 = vrot.slane %v4876, 2
  %v4878 = vadd.f32 %v4876, %v4877
  %v4879 = vrot.slane %v4878, 1
  %v4880 = vadd.f32 %v4878, %v4879
  %v4881 = vsel %vm287, %v4837, 0.0
  %v4882 = vrot.slane %v4881, 4
  %v4883 = vadd.f32 %v4881, %v4882
  %v4884 = vrot.slane %v4883, 2
  %v4885 = vadd.f32 %v4883, %v4884
  %v4886 = vrot.slane %v4885, 1
  %v4887 = vadd.f32 %v4885, %v4886
  %v4888 = vsel %vm287, %v4838, 0.0
  %v4889 = vrot.slane %v4888, 4
  %v4890 = vadd.f32 %v4888, %v4889
  %v4891 = vrot.slane %v4890, 2
  %v4892 = vadd.f32 %v4890, %v4891
  %v4893 = vrot.slane %v4892, 1
  %v4894 = vadd.f32 %v4892, %v4893
  %v4895 = vmul.f32 %v4781, %v4493
  %v4896 = vmul.f32 %v4788, %v4494
  %v4897 = vmul.f32 %v4795, %v4495
  %v4898 = vmul.f32 %v4802, %v4496
  %v4899 = vmul.f32 %v4809, %v4497
  %v4900 = vmul.f32 %v4816, %v4498
  %v4901 = vmul.f32 %v4823, %v4499
  %v4902 = vmul.f32 %v4830, %v4500
  %v4903 = vrot.slane %v4895, 4
  %v4904 = vadd.f32 %v4895, %v4903
  %v4905 = vrot.slane %v4904, 2
  %v4906 = vadd.f32 %v4904, %v4905
  %v4907 = vrot.slane %v4906, 1
  %v4908 = vadd.f32 %v4906, %v4907
  %v4909 = vrot.slane %v4896, 4
  %v4910 = vadd.f32 %v4896, %v4909
  %v4911 = vrot.slane %v4910, 2
  %v4912 = vadd.f32 %v4910, %v4911
  %v4913 = vrot.slane %v4912, 1
  %v4914 = vadd.f32 %v4912, %v4913
  %v4915 = vrot.slane %v4897, 4
  %v4916 = vadd.f32 %v4897, %v4915
  %v4917 = vrot.slane %v4916, 2
  %v4918 = vadd.f32 %v4916, %v4917
  %v4919 = vrot.slane %v4918, 1
  %v4920 = vadd.f32 %v4918, %v4919
  %v4921 = vrot.slane %v4898, 4
  %v4922 = vadd.f32 %v4898, %v4921
  %v4923 = vrot.slane %v4922, 2
  %v4924 = vadd.f32 %v4922, %v4923
  %v4925 = vrot.slane %v4924, 1
  %v4926 = vadd.f32 %v4924, %v4925
  %v4927 = vrot.slane %v4899, 4
  %v4928 = vadd.f32 %v4899, %v4927
  %v4929 = vrot.slane %v4928, 2
  %v4930 = vadd.f32 %v4928, %v4929
  %v4931 = vrot.slane %v4930, 1
  %v4932 = vadd.f32 %v4930, %v4931
  %v4933 = vrot.slane %v4900, 4
  %v4934 = vadd.f32 %v4900, %v4933
  %v4935 = vrot.slane %v4934, 2
  %v4936 = vadd.f32 %v4934, %v4935
  %v4937 = vrot.slane %v4936, 1
  %v4938 = vadd.f32 %v4936, %v4937
  %v4939 = vrot.slane %v4901, 4
  %v4940 = vadd.f32 %v4901, %v4939
  %v4941 = vrot.slane %v4940, 2
  %v4942 = vadd.f32 %v4940, %v4941
  %v4943 = vrot.slane %v4942, 1
  %v4944 = vadd.f32 %v4942, %v4943
  %v4945 = vrot.slane %v4902, 4
  %v4946 = vadd.f32 %v4902, %v4945
  %v4947 = vrot.slane %v4946, 2
  %v4948 = vadd.f32 %v4946, %v4947
  %v4949 = vrot.slane %v4948, 1
  %v4950 = vadd.f32 %v4948, %v4949
  %v4959 = vsel %vm592, %v4852, %v4845
  %v4960 = vsel %vm595, %v4859, %v4959
  %v4961 = vsel %vm598, %v4866, %v4960
  %v4962 = vsel %vm601, %v4873, %v4961
  %v4963 = vsel %vm604, %v4880, %v4962
  %v4964 = vsel %vm607, %v4887, %v4963
  %v4965 = vsel %vm610, %v4894, %v4964
  %v4966 = vsel %vm287, %v4965, 0
  %4968 = vmatprep.subr.mxu0 0.0
  %4969 = vmatpush1.msra.mxu0 %v4505
  %4970 = vmatprep.subr.mxu0 0.0
  %4971 = vmatpush1.msra.mxu0 %v4506
  %4972 = vmatprep.subr.mxu0 0.0
  %4973 = vmatpush1.msra.mxu0 %v4507
  %4974 = vmatprep.subr.mxu0 0.0
  %4975 = vmatpush1.msra.mxu0 %v4508
  %4976 = vmatprep.subr.mxu0 0.0
  %4977 = vmatpush1.msra.mxu0 0.0
  %4978 = vmatprep.subr.mxu0 0.0
  %4979 = vmatpush1.msra.mxu0 0.0
  %4980 = vmatprep.subr.mxu0 0.0
  %4981 = vmatpush1.msra.mxu0 0.0
  %4982 = vmatprep.subr.mxu0 0.0
  %4983 = vmatpush1.msra.mxu0 0.0
  %4984 = vmatprep.subr.mxu0 0.0
  %4985 = vmatpush1.msra.mxu0 0.0
  %4986 = vmatprep.subr.mxu0 0.0
  %4987 = vmatpush1.msra.mxu0 0.0
  %4988 = vmatprep.subr.mxu0 0.0
  %4989 = vmatpush1.msra.mxu0 0.0
  %4990 = vmatprep.subr.mxu0 0.0
  %4991 = vmatpush1.msra.mxu0 0.0
  %4992 = vmatprep.subr.mxu0 0.0
  %4993 = vmatpush1.msra.mxu0 0.0
  %4994 = vmatprep.subr.mxu0 0.0
  %4995 = vmatpush1.msra.mxu0 0.0
  %4996 = vmatprep.subr.mxu0 0.0
  %4997 = vmatpush1.msra.mxu0 0.0
  %4998 = vmatprep.subr.mxu0 0.0
  %4999 = vmatpush1.msra.mxu0 0.0
  %5000 = vmatprep.subr.mxu0 0.0
  %5001 = vmatpush1.msra.mxu0 0.0
  %5002 = vmatprep.subr.mxu0 0.0
  %5003 = vmatpush1.msra.mxu0 0.0
  %5004 = vmatprep.subr.mxu0 0.0
  %5005 = vmatpush1.msra.mxu0 0.0
  %5006 = vmatprep.subr.mxu0 0.0
  %5007 = vmatpush1.msra.mxu0 0.0
  %5008 = vmatprep.subr.mxu0 0.0
  %5009 = vmatpush1.msra.mxu0 0.0
  %5010 = vmatprep.subr.mxu0 0.0
  %5011 = vmatpush1.msra.mxu0 0.0
  %5012 = vmatprep.subr.mxu0 0.0
  %5013 = vmatpush1.msra.mxu0 0.0
  %5014 = vmatprep.subr.mxu0 0.0
  %5015 = vmatpush1.msra.mxu0 0.0
  %5016 = vmatprep.subr.mxu0 0.0
  %5017 = vmatpush1.msra.mxu0 0.0
  %5018 = vmatprep.subr.mxu0 0.0
  %5019 = vmatpush1.msra.mxu0 0.0
  %5020 = vmatprep.subr.mxu0 0.0
  %5021 = vmatpush1.msra.mxu0 0.0
  %5022 = vmatprep.subr.mxu0 0.0
  %5023 = vmatpush1.msra.mxu0 0.0
  %5024 = vmatprep.subr.mxu0 0.0
  %5025 = vmatpush1.msra.mxu0 0.0
  %5026 = vmatprep.subr.mxu0 0.0
  %5027 = vmatpush1.msra.mxu0 0.0
  %5028 = vmatprep.subr.mxu0 0.0
  %5029 = vmatpush1.msra.mxu0 0.0
  %5030 = vmatprep.subr.mxu0 0.0
  %5031 = vmatpush1.msra.mxu0 0.0
  %5032 = vmatprep.mubr.f32.mxu0 0.0
  %5033 = vmatmul.mubr.f32.gmra.mrb[0].mxu0 %v4966
  %v5034 = vpop.f32.mrb[0].mxu0
  %v5035 = vadd.f32 0.0, %v5034
  %v5036 = vpop.f32.mrb[0].mxu0
  %5037 = vdwg.mxu0
  %v5038 = vadd.f32 %v4288, %v5035
  %v5040 = vlaneseq
  %v5041 = vshrl.u32 %v5040, 7
  %v5042 = vsub.s32 0, %v5041
  %v5043 = vrot.slane %v4513, %v5042
  %v5046 = vsel %vm287, %v3085, 0
  %5048 = vmatprep.subr.mxu0 0.0
  %5049 = vmatpush1.msra.mxu0 %v4509
  %5050 = vmatprep.subr.mxu0 0.0
  %5051 = vmatpush1.msra.mxu0 %v4510
  %5052 = vmatprep.subr.mxu0 0.0
  %5053 = vmatpush1.msra.mxu0 %v4511
  %5054 = vmatprep.subr.mxu0 0.0
  %5055 = vmatpush1.msra.mxu0 %v4512
  %5056 = vmatprep.subr.mxu0 0.0
  %5057 = vmatpush1.msra.mxu0 0.0
  %5058 = vmatprep.subr.mxu0 0.0
  %5059 = vmatpush1.msra.mxu0 0.0
  %5060 = vmatprep.subr.mxu0 0.0
  %5061 = vmatpush1.msra.mxu0 0.0
  %5062 = vmatprep.subr.mxu0 0.0
  %5063 = vmatpush1.msra.mxu0 0.0
  %5064 = vmatprep.subr.mxu0 0.0
  %5065 = vmatpush1.msra.mxu0 0.0
  %5066 = vmatprep.subr.mxu0 0.0
  %5067 = vmatpush1.msra.mxu0 0.0
  %5068 = vmatprep.subr.mxu0 0.0
  %5069 = vmatpush1.msra.mxu0 0.0
  %5070 = vmatprep.subr.mxu0 0.0
  %5071 = vmatpush1.msra.mxu0 0.0
  %5072 = vmatprep.subr.mxu0 0.0
  %5073 = vmatpush1.msra.mxu0 0.0
  %5074 = vmatprep.subr.mxu0 0.0
  %5075 = vmatpush1.msra.mxu0 0.0
  %5076 = vmatprep.subr.mxu0 0.0
  %5077 = vmatpush1.msra.mxu0 0.0
  %5078 = vmatprep.subr.mxu0 0.0
  %5079 = vmatpush1.msra.mxu0 0.0
  %5080 = vmatprep.subr.mxu0 0.0
  %5081 = vmatpush1.msra.mxu0 0.0
  %5082 = vmatprep.subr.mxu0 0.0
  %5083 = vmatpush1.msra.mxu0 0.0
  %5084 = vmatprep.subr.mxu0 0.0
  %5085 = vmatpush1.msra.mxu0 0.0
  %5086 = vmatprep.subr.mxu0 0.0
  %5087 = vmatpush1.msra.mxu0 0.0
  %5088 = vmatprep.subr.mxu0 0.0
  %5089 = vmatpush1.msra.mxu0 0.0
  %5090 = vmatprep.subr.mxu0 0.0
  %5091 = vmatpush1.msra.mxu0 0.0
  %5092 = vmatprep.subr.mxu0 0.0
  %5093 = vmatpush1.msra.mxu0 0.0
  %5094 = vmatprep.subr.mxu0 0.0
  %5095 = vmatpush1.msra.mxu0 0.0
  %5096 = vmatprep.subr.mxu0 0.0
  %5097 = vmatpush1.msra.mxu0 0.0
  %5098 = vmatprep.subr.mxu0 0.0
  %5099 = vmatpush1.msra.mxu0 0.0
  %5100 = vmatprep.subr.mxu0 0.0
  %5101 = vmatpush1.msra.mxu0 0.0
  %5102 = vmatprep.subr.mxu0 0.0
  %5103 = vmatpush1.msra.mxu0 0.0
  %5104 = vmatprep.subr.mxu0 0.0
  %5105 = vmatpush1.msra.mxu0 0.0
  %5106 = vmatprep.subr.mxu0 0.0
  %5107 = vmatpush1.msra.mxu0 0.0
  %5108 = vmatprep.subr.mxu0 0.0
  %5109 = vmatpush1.msra.mxu0 0.0
  %5110 = vmatprep.subr.mxu0 0.0
  %5111 = vmatpush1.msra.mxu0 0.0
  %5112 = vmatprep.mubr.f32.mxu0 0.0
  %5113 = vmatmul.mubr.f32.gmra.mrb[0].mxu0 %v5046
  %v5114 = vpop.f32.mrb[0].mxu0
  %v5115 = vadd.f32 %v5043, %v5114
  %v5116 = vpop.f32.mrb[0].mxu0
  %5117 = vdwg.mxu0
  %v5118 = vadd.f32 %v5038, %v5115
  %v5119 = vxor.u32 %v5118, 2147483648
  %v5120 = vmul.f32 %v5119, 1.442695
  %v5121 = vpow.pop %v5120
  %v5122 = vadd.f32 %v5121, 1.0
  %v5123 = vrcp.pop %v5122
  %v5124 = vmul.f32 1.0, %v5123
  %5126 = vrot.lane.b32.xlu0 %v5115, 64
  %v5127 = vpop.permute.xlu0 %5126
  %v5129 = vmul.f32 %v5124, %v5127
  %5131 = vrot.lane.b32.xlu0 %v5129, 64
  %v5132 = vpop.permute.xlu0 %5131
  %v5134 = vadd.f32 %v5038, %v5132
  %v5135 = vtanh.pop %v5134
  %v5136 = vsub.f32 1.0, %v5124
  %5138 = vrot.lane.b32.xlu0 %v5135, 96
  %v5139 = vpop.permute.xlu0 %5138
  %v5141 = vmul.f32 %v5136, %v5139
  %5142 = vrot.lane.b32.xlu0 %v3085, 32
  %v5143 = vpop.permute.xlu0 %5142
  %v5145 = vmul.f32 %v5124, %v5143
  %v5146 = vadd.f32 %v5141, %v5145
  %5148 = vrot.lane.b32.xlu0 %v5146, 96
  %v5149 = vpop.permute.xlu0 %5148
  %5151 = vrot.lane.b32.xlu0 %v4965, 32
  %v5152 = vpop.permute.xlu0 %5151
  %v5154 = vsel %vm287, %v5149, %v5152
  %vm5155 = vcmask 523264
  %v5157 = vsel %vm5155, %v5154, 0
  %5159 = vmatprep.subr.mxu0 0.0
  %5160 = vmatpush1.msra.mxu0 %v4517
  %5161 = vmatprep.subr.mxu0 0.0
  %5162 = vmatpush1.msra.mxu0 %v4518
  %5163 = vmatprep.subr.mxu0 0.0
  %5164 = vmatpush1.msra.mxu0 %v4519
  %5165 = vmatprep.subr.mxu0 0.0
  %5166 = vmatpush1.msra.mxu0 %v4520
  %5167 = vmatprep.subr.mxu0 0.0
  %5168 = vmatpush1.msra.mxu0 %v4521
  %5169 = vmatprep.subr.mxu0 0.0
  %5170 = vmatpush1.msra.mxu0 %v4522
  %5171 = vmatprep.subr.mxu0 0.0
  %5172 = vmatpush1.msra.mxu0 %v4523
  %5173 = vmatprep.subr.mxu0 0.0
  %5174 = vmatpush1.msra.mxu0 %v4524
  %5175 = vmatprep.subr.mxu0 0.0
  %5176 = vmatpush1.msra.mxu0 0.0
  %5177 = vmatprep.subr.mxu0 0.0
  %5178 = vmatpush1.msra.mxu0 0.0
  %5179 = vmatprep.subr.mxu0 0.0
  %5180 = vmatpush1.msra.mxu0 0.0
  %5181 = vmatprep.subr.mxu0 0.0
  %5182 = vmatpush1.msra.mxu0 0.0
  %5183 = vmatprep.subr.mxu0 0.0
  %5184 = vmatpush1.msra.mxu0 0.0
  %5185 = vmatprep.subr.mxu0 0.0
  %5186 = vmatpush1.msra.mxu0 0.0
  %5187 = vmatprep.subr.mxu0 0.0
  %5188 = vmatpush1.msra.mxu0 0.0
  %5189 = vmatprep.subr.mxu0 0.0
  %5190 = vmatpush1.msra.mxu0 0.0
  %5191 = vmatprep.subr.mxu0 0.0
  %5192 = vmatpush1.msra.mxu0 0.0
  %5193 = vmatprep.subr.mxu0 0.0
  %5194 = vmatpush1.msra.mxu0 0.0
  %5195 = vmatprep.subr.mxu0 0.0
  %5196 = vmatpush1.msra.mxu0 0.0
  %5197 = vmatprep.subr.mxu0 0.0
  %5198 = vmatpush1.msra.mxu0 0.0
  %5199 = vmatprep.subr.mxu0 0.0
  %5200 = vmatpush1.msra.mxu0 0.0
  %5201 = vmatprep.subr.mxu0 0.0
  %5202 = vmatpush1.msra.mxu0 0.0
  %5203 = vmatprep.subr.mxu0 0.0
  %5204 = vmatpush1.msra.mxu0 0.0
  %5205 = vmatprep.subr.mxu0 0.0
  %5206 = vmatpush1.msra.mxu0 0.0
  %5207 = vmatprep.subr.mxu0 0.0
  %5208 = vmatpush1.msra.mxu0 0.0
  %5209 = vmatprep.subr.mxu0 0.0
  %5210 = vmatpush1.msra.mxu0 0.0
  %5211 = vmatprep.subr.mxu0 0.0
  %5212 = vmatpush1.msra.mxu0 0.0
  %5213 = vmatprep.subr.mxu0 0.0
  %5214 = vmatpush1.msra.mxu0 0.0
  %5215 = vmatprep.subr.mxu0 0.0
  %5216 = vmatpush1.msra.mxu0 0.0
  %5217 = vmatprep.subr.mxu0 0.0
  %5218 = vmatpush1.msra.mxu0 0.0
  %5219 = vmatprep.subr.mxu0 0.0
  %5220 = vmatpush1.msra.mxu0 0.0
  %5221 = vmatprep.subr.mxu0 0.0
  %5222 = vmatpush1.msra.mxu0 0.0
  %5223 = vmatprep.mubr.f32.mxu0 0.0
  %5224 = vmatmul.mubr.f32.gmra.mrb[0].mxu0 %v5157
  %v5225 = vpop.f32.mrb[0].mxu0
  %v5226 = vadd.f32 %v4370, %v5225
  %v5227 = vpop.f32.mrb[0].mxu0
  %5228 = vdwg.mxu0
  %v5230 = vlaneseq
  %v5231 = vshrl.u32 %v5230, 7
  %v5232 = vsub.s32 0, %v5231
  %v5233 = vrot.slane %v4525, %v5232
  %v5235 = vadd.f32 %v5226, %v5233
  %v5237 = vlaneseq
  %v5238 = vshrl.u32 %v5237, 7
  %v5239 = vsub.s32 0, %v5238
  %v5240 = vrot.slane %v4526, %v5239
  %5241 = vrot.lane.b32.xlu0 %v5240, 32
  %v5242 = vpop.permute.xlu0 %5241
  %v5244 = vmul.f32 %v5146, %v5242
  %5246 = vrot.lane.b32.xlu0 %v5244, 96
  %v5247 = vpop.permute.xlu0 %5246
  %v5249 = vsel %vm287, %v5247, 0.0
  %5250 = vadd.xlane.f32.xlu0 %v5249
  %v5251 = vpop.xlane.xlu0 %5250
  %v5253 = vlaneseq
  %v5254 = vshrl.u32 %v5253, 7
  %v5255 = vsub.s32 0, %v5254
  %v5256 = vrot.slane %v4527, %v5255
  %v5258 = vmul.f32 %v4845, %v5256
  %v5259 = vmul.f32 %v4852, %v5256
  %v5260 = vmul.f32 %v4859, %v5256
  %v5261 = vmul.f32 %v4866, %v5256
  %v5262 = vmul.f32 %v4873, %v5256
  %v5263 = vmul.f32 %v4880, %v5256
  %v5264 = vmul.f32 %v4887, %v5256
  %v5265 = vmul.f32 %v4894, %v5256
  %v5274 = vrot.slane %v5259, 7
  %v5275 = vsel %vm592, %v5274, %v5258
  %v5276 = vrot.slane %v5260, 6
  %v5277 = vsel %vm595, %v5276, %v5275
  %v5278 = vrot.slane %v5261, 5
  %v5279 = vsel %vm598, %v5278, %v5277
  %v5280 = vrot.slane %v5262, 4
  %v5281 = vsel %vm601, %v5280, %v5279
  %v5282 = vrot.slane %v5263, 3
  %v5283 = vsel %vm604, %v5282, %v5281
  %v5284 = vrot.slane %v5264, 2
  %v5285 = vsel %vm607, %v5284, %v5283
  %v5286 = vrot.slane %v5265, 1
  %v5287 = vsel %vm610, %v5286, %v5285
  %v5289 = vsel %vm287, %v5287, 0.0
  %5290 = vadd.xlane.f32.xlu0 %v5289
  %v5291 = vpop.xlane.xlu0 %5290
  %v5292 = vadd.f32 %v5251, %v5291
  %v5293 = vadd.f32 %v5292, %v4395
  %v5295 = vlaneseq
  %v5296 = vshrl.u32 %v5295, 7
  %v5297 = vsub.s32 0, %v5296
  %v5298 = vrot.slane %v4528, %v5297
  %v5300 = vadd.f32 %v5293, %v5298
  %v5301 = vxor.u32 %v5300, 2147483648
  %v5302 = vmul.f32 %v5301, 1.442695
  %v5303 = vpow.pop %v5302
  %v5304 = vadd.f32 %v5303, 1.0
  %v5305 = vrcp.pop %v5304
  %v5306 = vmul.f32 1.0, %v5305
  %v5307 = vmax.f32 %v5306, 0.001
  %v5308 = vmin.f32 %v5307, 0.999
  %5310 = vset.pattern.permute.xlu0 0
  %5311 = vperm.xlu0 %5310, %v5308
  %v5312 = vpop.permute.xlu0 %5311
  %v5314 = vmul.f32 %v5312, %v5235
  %v5315 = vsub.f32 1.0, %v5308
  %5317 = vset.pattern.permute.xlu0 0
  %5318 = vperm.xlu0 %5317, %v5315
  %v5319 = vpop.permute.xlu0 %5318
  %v5329 = vsel %vm592, %v4914, %v4908
  %v5330 = vsel %vm595, %v4920, %v5329
  %v5331 = vsel %vm598, %v4926, %v5330
  %v5332 = vsel %vm601, %v4932, %v5331
  %v5333 = vsel %vm604, %v4938, %v5332
  %v5334 = vsel %vm607, %v4944, %v5333
  %v5335 = vsel %vm610, %v4950, %v5334
  %v5337 = vmul.f32 %v5319, %v5335
  %v5338 = vadd.f32 %v5314, %v5337
  %v5340 = vcombine.high %v5338, %v5338
  %v5342 = vunpack.c.l.s4 1966171168
  %v5343 = vunpack.c.0.s8 %v5342
  %v5344 = vlaneseq
  %v5345 = vshrl.u32 %v5344, 7
  %v5346 = vsub.s32 %v5343, %v5345
  %v5347 = vrot.slane %v5338, %v5346
  %v5349 = vunpack.c.l.s4 1966171168
  %v5350 = vunpack.c.0.s8 %v5349
  %v5351 = vlaneseq
  %v5352 = vshrl.u32 %v5351, 7
  %v5353 = vsub.s32 %v5350, %v5352
  %v5354 = vrot.slane %v5340, %v5353
  %v5355 = vcombine.high %v5347, %v5347
  %v5356 = vcombine.high %v5354, %v5354
  %v5358 = vunpack.c.l.s4 1966171168
  %v5359 = vunpack.c.0.s8 %v5358
  %v5360 = vlaneseq
  %v5361 = vshrl.u32 %v5360, 7
  %v5362 = vsub.s32 %v5359, %v5361
  %v5363 = vrot.slane %v5347, %v5362
  %v5365 = vunpack.c.l.s4 1966171168
  %v5366 = vunpack.c.0.s8 %v5365
  %v5367 = vlaneseq
  %v5368 = vshrl.u32 %v5367, 7
  %v5369 = vsub.s32 %v5366, %v5368
  %v5370 = vrot.slane %v5354, %v5369
  %v5372 = vunpack.c.l.s4 1966171168
  %v5373 = vunpack.c.0.s8 %v5372
  %v5374 = vlaneseq
  %v5375 = vshrl.u32 %v5374, 7
  %v5376 = vsub.s32 %v5373, %v5375
  %v5377 = vrot.slane %v5355, %v5376
  %v5379 = vunpack.c.l.s4 1966171168
  %v5380 = vunpack.c.0.s8 %v5379
  %v5381 = vlaneseq
  %v5382 = vshrl.u32 %v5381, 7
  %v5383 = vsub.s32 %v5380, %v5382
  %v5384 = vrot.slane %v5356, %v5383
  %v5385 = vcombine.high %v5363, %v5363
  %v5386 = vcombine.high %v5370, %v5370
  %v5387 = vcombine.high %v5377, %v5377
  %v5388 = vcombine.high %v5384, %v5384
  %5397 = vst [vmem:[%s57] sm:$0x1] %v5363
  %5398 = vst [vmem:[%s57 + $0x4] sm:$0x1] %v5377
  %5399 = vst [vmem:[%s57 + $0x8] sm:$0x1] %v5385
  %5400 = vst [vmem:[%s57 + $0xc] sm:$0x1] %v5387
  %5401 = vst [vmem:[%s57 + $0x10] sm:$0x1] %v5370
  %5402 = vst [vmem:[%s57 + $0x14] sm:$0x1] %v5384
  %5403 = vst [vmem:[%s57 + $0x18] sm:$0x1] %v5386
  %5404 = vst [vmem:[%s57 + $0x1c] sm:$0x1] %v5388
  %v5406 = vcombine.high %v4204, %v4204
  %v5408 = vunpack.c.l.s4 1966171168
  %v5409 = vunpack.c.0.s8 %v5408
  %v5410 = vlaneseq
  %v5411 = vshrl.u32 %v5410, 7
  %v5412 = vsub.s32 %v5409, %v5411
  %v5413 = vrot.slane %v4204, %v5412
  %v5415 = vunpack.c.l.s4 1966171168
  %v5416 = vunpack.c.0.s8 %v5415
  %v5417 = vlaneseq
  %v5418 = vshrl.u32 %v5417, 7
  %v5419 = vsub.s32 %v5416, %v5418
  %v5420 = vrot.slane %v5406, %v5419
  %v5421 = vcombine.high %v5413, %v5413
  %v5422 = vcombine.high %v5420, %v5420
  %v5424 = vunpack.c.l.s4 1966171168
  %v5425 = vunpack.c.0.s8 %v5424
  %v5426 = vlaneseq
  %v5427 = vshrl.u32 %v5426, 7
  %v5428 = vsub.s32 %v5425, %v5427
  %v5429 = vrot.slane %v5413, %v5428
  %v5431 = vunpack.c.l.s4 1966171168
  %v5432 = vunpack.c.0.s8 %v5431
  %v5433 = vlaneseq
  %v5434 = vshrl.u32 %v5433, 7
  %v5435 = vsub.s32 %v5432, %v5434
  %v5436 = vrot.slane %v5420, %v5435
  %v5438 = vunpack.c.l.s4 1966171168
  %v5439 = vunpack.c.0.s8 %v5438
  %v5440 = vlaneseq
  %v5441 = vshrl.u32 %v5440, 7
  %v5442 = vsub.s32 %v5439, %v5441
  %v5443 = vrot.slane %v5421, %v5442
  %v5445 = vunpack.c.l.s4 1966171168
  %v5446 = vunpack.c.0.s8 %v5445
  %v5447 = vlaneseq
  %v5448 = vshrl.u32 %v5447, 7
  %v5449 = vsub.s32 %v5446, %v5448
  %v5450 = vrot.slane %v5422, %v5449
  %v5451 = vcombine.high %v5429, %v5429
  %v5452 = vcombine.high %v5436, %v5436
  %v5453 = vcombine.high %v5443, %v5443
  %v5454 = vcombine.high %v5450, %v5450
  %v5455 = vlaneseq
  %v5456 = vshrl.u32 %v5455, 7
  %v5457 = vsub.s32 0, %v5456
  %v5458 = vrot.slane %v5429, %v5457
  %v5459 = vlaneseq
  %v5460 = vshrl.u32 %v5459, 7
  %v5461 = vsub.s32 0, %v5460
  %v5462 = vrot.slane %v5443, %v5461
  %v5463 = vlaneseq
  %v5464 = vshrl.u32 %v5463, 7
  %v5465 = vsub.s32 0, %v5464
  %v5466 = vrot.slane %v5451, %v5465
  %v5467 = vlaneseq
  %v5468 = vshrl.u32 %v5467, 7
  %v5469 = vsub.s32 0, %v5468
  %v5470 = vrot.slane %v5453, %v5469
  %v5471 = vlaneseq
  %v5472 = vshrl.u32 %v5471, 7
  %v5473 = vsub.s32 0, %v5472
  %v5474 = vrot.slane %v5436, %v5473
  %v5475 = vlaneseq
  %v5476 = vshrl.u32 %v5475, 7
  %v5477 = vsub.s32 0, %v5476
  %v5478 = vrot.slane %v5450, %v5477
  %v5479 = vlaneseq
  %v5480 = vshrl.u32 %v5479, 7
  %v5481 = vsub.s32 0, %v5480
  %v5482 = vrot.slane %v5452, %v5481
  %v5483 = vlaneseq
  %v5484 = vshrl.u32 %v5483, 7
  %v5485 = vsub.s32 0, %v5484
  %v5486 = vrot.slane %v5454, %v5485
  %v5495 = vadd.f32 %v4080, %v5458
  %v5496 = vadd.f32 %v4085, %v5462
  %v5497 = vadd.f32 %v4090, %v5466
  %v5498 = vadd.f32 %v4095, %v5470
  %v5499 = vadd.f32 %v4100, %v5474
  %v5500 = vadd.f32 %v4105, %v5478
  %v5501 = vadd.f32 %v4110, %v5482
  %v5502 = vadd.f32 %v4115, %v5486
  %v5503 = vlaneseq
  %v5504 = vshrl.u32 %v5503, 7
  %v5505 = vsub.s32 0, %v5504
  %v5506 = vrot.slane %v4774, %v5505
  %5508 = vbcast.lane.b32.xlu0 %v5506, 256
  %v5509 = vpop.permute.xlu0 %5508
  %v5510 = vlaneseq
  %v5511 = vshrl.u32 %v5510, 7
  %v5512 = vsub.s32 1, %v5511
  %v5513 = vrot.slane %v4774, %v5512
  %5515 = vbcast.lane.b32.xlu0 %v5513, 256
  %v5516 = vpop.permute.xlu0 %5515
  %v5517 = vlaneseq
  %v5518 = vshrl.u32 %v5517, 7
  %v5519 = vsub.s32 2, %v5518
  %v5520 = vrot.slane %v4774, %v5519
  %5522 = vbcast.lane.b32.xlu0 %v5520, 256
  %v5523 = vpop.permute.xlu0 %5522
  %v5524 = vlaneseq
  %v5525 = vshrl.u32 %v5524, 7
  %v5526 = vsub.s32 3, %v5525
  %v5527 = vrot.slane %v4774, %v5526
  %5529 = vbcast.lane.b32.xlu0 %v5527, 256
  %v5530 = vpop.permute.xlu0 %5529
  %v5531 = vlaneseq
  %v5532 = vshrl.u32 %v5531, 7
  %v5533 = vsub.s32 4, %v5532
  %v5534 = vrot.slane %v4774, %v5533
  %5536 = vbcast.lane.b32.xlu0 %v5534, 256
  %v5537 = vpop.permute.xlu0 %5536
  %v5538 = vlaneseq
  %v5539 = vshrl.u32 %v5538, 7
  %v5540 = vsub.s32 5, %v5539
  %v5541 = vrot.slane %v4774, %v5540
  %5543 = vbcast.lane.b32.xlu0 %v5541, 256
  %v5544 = vpop.permute.xlu0 %5543
  %v5545 = vlaneseq
  %v5546 = vshrl.u32 %v5545, 7
  %v5547 = vsub.s32 6, %v5546
  %v5548 = vrot.slane %v4774, %v5547
  %5550 = vbcast.lane.b32.xlu0 %v5548, 256
  %v5551 = vpop.permute.xlu0 %5550
  %v5552 = vlaneseq
  %v5553 = vshrl.u32 %v5552, 7
  %v5554 = vsub.s32 7, %v5553
  %v5555 = vrot.slane %v4774, %v5554
  %5557 = vbcast.lane.b32.xlu0 %v5555, 256
  %v5558 = vpop.permute.xlu0 %5557
  %v5559 = vmul.f32 %v5509, %v4418
  %v5560 = vmul.f32 %v5516, %v4418
  %v5561 = vmul.f32 %v5523, %v4418
  %v5562 = vmul.f32 %v5530, %v4418
  %v5563 = vmul.f32 %v5537, %v4418
  %v5564 = vmul.f32 %v5544, %v4418
  %v5565 = vmul.f32 %v5551, %v4418
  %v5566 = vmul.f32 %v5558, %v4418
  %v5567 = vadd.f32 %v5495, %v5559
  %v5568 = vadd.f32 %v5496, %v5560
  %v5569 = vadd.f32 %v5497, %v5561
  %v5570 = vadd.f32 %v5498, %v5562
  %v5571 = vadd.f32 %v5499, %v5563
  %v5572 = vadd.f32 %v5500, %v5564
  %v5573 = vadd.f32 %v5501, %v5565
  %v5574 = vadd.f32 %v5502, %v5566
  %v5575 = vadd.f32 %v5567, %v4640
  %v5576 = vadd.f32 %v5568, %v4640
  %v5577 = vadd.f32 %v5569, %v4640
  %v5578 = vadd.f32 %v5570, %v4640
  %v5579 = vadd.f32 %v5571, %v4640
  %v5580 = vadd.f32 %v5572, %v4640
  %v5581 = vadd.f32 %v5573, %v4640
  %v5582 = vadd.f32 %v5574, %v4640
  %v5583 = vtanh.pop %v5575
  %v5584 = vtanh.pop %v5576
  %v5585 = vtanh.pop %v5577
  %v5586 = vtanh.pop %v5578
  %v5587 = vtanh.pop %v5579
  %v5588 = vtanh.pop %v5580
  %v5589 = vtanh.pop %v5581
  %v5590 = vtanh.pop %v5582
  %v5591 = vmul.f32 %v5583, %v4662
  %v5592 = vmul.f32 %v5584, %v4662
  %v5593 = vmul.f32 %v5585, %v4662
  %v5594 = vmul.f32 %v5586, %v4662
  %v5595 = vmul.f32 %v5587, %v4662
  %v5596 = vmul.f32 %v5588, %v4662
  %v5597 = vmul.f32 %v5589, %v4662
  %v5598 = vmul.f32 %v5590, %v4662
  %v5599 = vsel %vm287, %v5591, 0.0
  %5600 = vadd.xlane.f32.xlu0 %v5599
  %v5601 = vpop.xlane.xlu0 %5600
  %v5602 = vsel %vm287, %v5592, 0.0
  %5603 = vadd.xlane.f32.xlu0 %v5602
  %v5604 = vpop.xlane.xlu0 %5603
  %v5605 = vsel %vm287, %v5593, 0.0
  %5606 = vadd.xlane.f32.xlu0 %v5605
  %v5607 = vpop.xlane.xlu0 %5606
  %v5608 = vsel %vm287, %v5594, 0.0
  %5609 = vadd.xlane.f32.xlu0 %v5608
  %v5610 = vpop.xlane.xlu0 %5609
  %v5611 = vsel %vm287, %v5595, 0.0
  %5612 = vadd.xlane.f32.xlu0 %v5611
  %v5613 = vpop.xlane.xlu0 %5612
  %v5614 = vsel %vm287, %v5596, 0.0
  %5615 = vadd.xlane.f32.xlu0 %v5614
  %v5616 = vpop.xlane.xlu0 %5615
  %v5617 = vsel %vm287, %v5597, 0.0
  %5618 = vadd.xlane.f32.xlu0 %v5617
  %v5619 = vpop.xlane.xlu0 %5618
  %v5620 = vsel %vm287, %v5598, 0.0
  %5621 = vadd.xlane.f32.xlu0 %v5620
  %v5622 = vpop.xlane.xlu0 %5621
  %v5623 = vadd.f32 %v5601, %v4703
  %v5624 = vadd.f32 %v5604, %v4703
  %v5625 = vadd.f32 %v5607, %v4703
  %v5626 = vadd.f32 %v5610, %v4703
  %v5627 = vadd.f32 %v5613, %v4703
  %v5628 = vadd.f32 %v5616, %v4703
  %v5629 = vadd.f32 %v5619, %v4703
  %v5630 = vadd.f32 %v5622, %v4703
  %v5639 = vlaneseq
  %v5640 = vshrl.u32 %v5639, 7
  %v5641 = vsub.s32 %v4476, %v5640
  %v5642 = vrot.slane %v5623, %v5641
  %v5643 = vlaneseq
  %v5644 = vshrl.u32 %v5643, 7
  %v5645 = vsub.s32 %v4476, %v5644
  %v5646 = vrot.slane %v5624, %v5645
  %v5647 = vlaneseq
  %v5648 = vshrl.u32 %v5647, 7
  %v5649 = vsub.s32 %v4476, %v5648
  %v5650 = vrot.slane %v5625, %v5649
  %v5651 = vlaneseq
  %v5652 = vshrl.u32 %v5651, 7
  %v5653 = vsub.s32 %v4476, %v5652
  %v5654 = vrot.slane %v5626, %v5653
  %v5655 = vlaneseq
  %v5656 = vshrl.u32 %v5655, 7
  %v5657 = vsub.s32 %v4476, %v5656
  %v5658 = vrot.slane %v5627, %v5657
  %v5659 = vlaneseq
  %v5660 = vshrl.u32 %v5659, 7
  %v5661 = vsub.s32 %v4476, %v5660
  %v5662 = vrot.slane %v5628, %v5661
  %v5663 = vlaneseq
  %v5664 = vshrl.u32 %v5663, 7
  %v5665 = vsub.s32 %v4476, %v5664
  %v5666 = vrot.slane %v5629, %v5665
  %v5667 = vlaneseq
  %v5668 = vshrl.u32 %v5667, 7
  %v5669 = vsub.s32 %v4476, %v5668
  %v5670 = vrot.slane %v5630, %v5669
  %v5671 = vsel %vm592, %v5646, %v5642
  %v5672 = vsel %vm595, %v5650, %v5671
  %v5673 = vsel %vm598, %v5654, %v5672
  %v5674 = vsel %vm601, %v5658, %v5673
  %v5675 = vsel %vm604, %v5662, %v5674
  %v5676 = vsel %vm607, %v5666, %v5675
  %v5677 = vsel %vm610, %v5670, %v5676
  %v5679 = vsel %vm4504, -1e+30, %v5677
  %v5680 = vsel %vm4762, %v5679, -inf
  %5681 = vmax.xlane.f32.xlu0 %v5680
  %v5682 = vpop.xlane.xlu0 %5681
  %v5683 = vsub.f32 %v5679, %v5682
  %v5684 = vmul.f32 %v5683, 1.442695
  %v5685 = vpow.pop %v5684
  %v5686 = vsel %vm4762, %v5685, 0.0
  %5687 = vadd.xlane.f32.xlu0 %v5686
  %v5688 = vpop.xlane.xlu0 %5687
  %v5689 = vrcp.pop %v5688
  %v5690 = vmul.f32 %v5685, %v5689
  %v5691 = vadd.f32 %v4774, %v5690
  %v5692 = vlaneseq
  %v5693 = vshrl.u32 %v5692, 7
  %v5694 = vsub.s32 0, %v5693
  %v5695 = vrot.slane %v5690, %v5694
  %5697 = vbcast.lane.b32.xlu0 %v5695, 256
  %v5698 = vpop.permute.xlu0 %5697
  %v5699 = vlaneseq
  %v5700 = vshrl.u32 %v5699, 7
  %v5701 = vsub.s32 1, %v5700
  %v5702 = vrot.slane %v5690, %v5701
  %5704 = vbcast.lane.b32.xlu0 %v5702, 256
  %v5705 = vpop.permute.xlu0 %5704
  %v5706 = vlaneseq
  %v5707 = vshrl.u32 %v5706, 7
  %v5708 = vsub.s32 2, %v5707
  %v5709 = vrot.slane %v5690, %v5708
  %5711 = vbcast.lane.b32.xlu0 %v5709, 256
  %v5712 = vpop.permute.xlu0 %5711
  %v5713 = vlaneseq
  %v5714 = vshrl.u32 %v5713, 7
  %v5715 = vsub.s32 3, %v5714
  %v5716 = vrot.slane %v5690, %v5715
  %5718 = vbcast.lane.b32.xlu0 %v5716, 256
  %v5719 = vpop.permute.xlu0 %5718
  %v5720 = vlaneseq
  %v5721 = vshrl.u32 %v5720, 7
  %v5722 = vsub.s32 4, %v5721
  %v5723 = vrot.slane %v5690, %v5722
  %5725 = vbcast.lane.b32.xlu0 %v5723, 256
  %v5726 = vpop.permute.xlu0 %5725
  %v5727 = vlaneseq
  %v5728 = vshrl.u32 %v5727, 7
  %v5729 = vsub.s32 5, %v5728
  %v5730 = vrot.slane %v5690, %v5729
  %5732 = vbcast.lane.b32.xlu0 %v5730, 256
  %v5733 = vpop.permute.xlu0 %5732
  %v5734 = vlaneseq
  %v5735 = vshrl.u32 %v5734, 7
  %v5736 = vsub.s32 6, %v5735
  %v5737 = vrot.slane %v5690, %v5736
  %5739 = vbcast.lane.b32.xlu0 %v5737, 256
  %v5740 = vpop.permute.xlu0 %5739
  %v5741 = vlaneseq
  %v5742 = vshrl.u32 %v5741, 7
  %v5743 = vsub.s32 7, %v5742
  %v5744 = vrot.slane %v5690, %v5743
  %5746 = vbcast.lane.b32.xlu0 %v5744, 256
  %v5747 = vpop.permute.xlu0 %5746
  %v5748 = vmul.f32 %v5698, %v3977
  %v5749 = vmul.f32 %v5705, %v3978
  %v5750 = vmul.f32 %v5712, %v3979
  %v5751 = vmul.f32 %v5719, %v3980
  %v5752 = vmul.f32 %v5726, %v3981
  %v5753 = vmul.f32 %v5733, %v3982
  %v5754 = vmul.f32 %v5740, %v3983
  %v5755 = vmul.f32 %v5747, %v3984
  %v5756 = vsel %vm287, %v5748, 0.0
  %v5757 = vrot.slane %v5756, 4
  %v5758 = vadd.f32 %v5756, %v5757
  %v5759 = vrot.slane %v5758, 2
  %v5760 = vadd.f32 %v5758, %v5759
  %v5761 = vrot.slane %v5760, 1
  %v5762 = vadd.f32 %v5760, %v5761
  %v5763 = vsel %vm287, %v5749, 0.0
  %v5764 = vrot.slane %v5763, 4
  %v5765 = vadd.f32 %v5763, %v5764
  %v5766 = vrot.slane %v5765, 2
  %v5767 = vadd.f32 %v5765, %v5766
  %v5768 = vrot.slane %v5767, 1
  %v5769 = vadd.f32 %v5767, %v5768
  %v5770 = vsel %vm287, %v5750, 0.0
  %v5771 = vrot.slane %v5770, 4
  %v5772 = vadd.f32 %v5770, %v5771
  %v5773 = vrot.slane %v5772, 2
  %v5774 = vadd.f32 %v5772, %v5773
  %v5775 = vrot.slane %v5774, 1
  %v5776 = vadd.f32 %v5774, %v5775
  %v5777 = vsel %vm287, %v5751, 0.0
  %v5778 = vrot.slane %v5777, 4
  %v5779 = vadd.f32 %v5777, %v5778
  %v5780 = vrot.slane %v5779, 2
  %v5781 = vadd.f32 %v5779, %v5780
  %v5782 = vrot.slane %v5781, 1
  %v5783 = vadd.f32 %v5781, %v5782
  %v5784 = vsel %vm287, %v5752, 0.0
  %v5785 = vrot.slane %v5784, 4
  %v5786 = vadd.f32 %v5784, %v5785
  %v5787 = vrot.slane %v5786, 2
  %v5788 = vadd.f32 %v5786, %v5787
  %v5789 = vrot.slane %v5788, 1
  %v5790 = vadd.f32 %v5788, %v5789
  %v5791 = vsel %vm287, %v5753, 0.0
  %v5792 = vrot.slane %v5791, 4
  %v5793 = vadd.f32 %v5791, %v5792
  %v5794 = vrot.slane %v5793, 2
  %v5795 = vadd.f32 %v5793, %v5794
  %v5796 = vrot.slane %v5795, 1
  %v5797 = vadd.f32 %v5795, %v5796
  %v5798 = vsel %vm287, %v5754, 0.0
  %v5799 = vrot.slane %v5798, 4
  %v5800 = vadd.f32 %v5798, %v5799
  %v5801 = vrot.slane %v5800, 2
  %v5802 = vadd.f32 %v5800, %v5801
  %v5803 = vrot.slane %v5802, 1
  %v5804 = vadd.f32 %v5802, %v5803
  %v5805 = vsel %vm287, %v5755, 0.0
  %v5806 = vrot.slane %v5805, 4
  %v5807 = vadd.f32 %v5805, %v5806
  %v5808 = vrot.slane %v5807, 2
  %v5809 = vadd.f32 %v5807, %v5808
  %v5810 = vrot.slane %v5809, 1
  %v5811 = vadd.f32 %v5809, %v5810
  %v5812 = vmul.f32 %v5698, %v4493
  %v5813 = vmul.f32 %v5705, %v4494
  %v5814 = vmul.f32 %v5712, %v4495
  %v5815 = vmul.f32 %v5719, %v4496
  %v5816 = vmul.f32 %v5726, %v4497
  %v5817 = vmul.f32 %v5733, %v4498
  %v5818 = vmul.f32 %v5740, %v4499
  %v5819 = vmul.f32 %v5747, %v4500
  %v5820 = vrot.slane %v5812, 4
  %v5821 = vadd.f32 %v5812, %v5820
  %v5822 = vrot.slane %v5821, 2
  %v5823 = vadd.f32 %v5821, %v5822
  %v5824 = vrot.slane %v5823, 1
  %v5825 = vadd.f32 %v5823, %v5824
  %v5826 = vrot.slane %v5813, 4
  %v5827 = vadd.f32 %v5813, %v5826
  %v5828 = vrot.slane %v5827, 2
  %v5829 = vadd.f32 %v5827, %v5828
  %v5830 = vrot.slane %v5829, 1
  %v5831 = vadd.f32 %v5829, %v5830
  %v5832 = vrot.slane %v5814, 4
  %v5833 = vadd.f32 %v5814, %v5832
  %v5834 = vrot.slane %v5833, 2
  %v5835 = vadd.f32 %v5833, %v5834
  %v5836 = vrot.slane %v5835, 1
  %v5837 = vadd.f32 %v5835, %v5836
  %v5838 = vrot.slane %v5815, 4
  %v5839 = vadd.f32 %v5815, %v5838
  %v5840 = vrot.slane %v5839, 2
  %v5841 = vadd.f32 %v5839, %v5840
  %v5842 = vrot.slane %v5841, 1
  %v5843 = vadd.f32 %v5841, %v5842
  %v5844 = vrot.slane %v5816, 4
  %v5845 = vadd.f32 %v5816, %v5844
  %v5846 = vrot.slane %v5845, 2
  %v5847 = vadd.f32 %v5845, %v5846
  %v5848 = vrot.slane %v5847, 1
  %v5849 = vadd.f32 %v5847, %v5848
  %v5850 = vrot.slane %v5817, 4
  %v5851 = vadd.f32 %v5817, %v5850
  %v5852 = vrot.slane %v5851, 2
  %v5853 = vadd.f32 %v5851, %v5852
  %v5854 = vrot.slane %v5853, 1
  %v5855 = vadd.f32 %v5853, %v5854
  %v5856 = vrot.slane %v5818, 4
  %v5857 = vadd.f32 %v5818, %v5856
  %v5858 = vrot.slane %v5857, 2
  %v5859 = vadd.f32 %v5857, %v5858
  %v5860 = vrot.slane %v5859, 1
  %v5861 = vadd.f32 %v5859, %v5860
  %v5862 = vrot.slane %v5819, 4
  %v5863 = vadd.f32 %v5819, %v5862
  %v5864 = vrot.slane %v5863, 2
  %v5865 = vadd.f32 %v5863, %v5864
  %v5866 = vrot.slane %v5865, 1
  %v5867 = vadd.f32 %v5865, %v5866
  %v5876 = vsel %vm592, %v5769, %v5762
  %v5877 = vsel %vm595, %v5776, %v5876
  %v5878 = vsel %vm598, %v5783, %v5877
  %v5879 = vsel %vm601, %v5790, %v5878
  %v5880 = vsel %vm604, %v5797, %v5879
  %v5881 = vsel %vm607, %v5804, %v5880
  %v5882 = vsel %vm610, %v5811, %v5881
  %v5883 = vsel %vm287, %v5882, 0
  %5885 = vmatprep.subr.mxu0 0.0
  %5886 = vmatpush1.msra.mxu0 %v4505
  %5887 = vmatprep.subr.mxu0 0.0
  %5888 = vmatpush1.msra.mxu0 %v4506
  %5889 = vmatprep.subr.mxu0 0.0
  %5890 = vmatpush1.msra.mxu0 %v4507
  %5891 = vmatprep.subr.mxu0 0.0
  %5892 = vmatpush1.msra.mxu0 %v4508
  %5893 = vmatprep.subr.mxu0 0.0
  %5894 = vmatpush1.msra.mxu0 0.0
  %5895 = vmatprep.subr.mxu0 0.0
  %5896 = vmatpush1.msra.mxu0 0.0
  %5897 = vmatprep.subr.mxu0 0.0
  %5898 = vmatpush1.msra.mxu0 0.0
  %5899 = vmatprep.subr.mxu0 0.0
  %5900 = vmatpush1.msra.mxu0 0.0
  %5901 = vmatprep.subr.mxu0 0.0
  %5902 = vmatpush1.msra.mxu0 0.0
  %5903 = vmatprep.subr.mxu0 0.0
  %5904 = vmatpush1.msra.mxu0 0.0
  %5905 = vmatprep.subr.mxu0 0.0
  %5906 = vmatpush1.msra.mxu0 0.0
  %5907 = vmatprep.subr.mxu0 0.0
  %5908 = vmatpush1.msra.mxu0 0.0
  %5909 = vmatprep.subr.mxu0 0.0
  %5910 = vmatpush1.msra.mxu0 0.0
  %5911 = vmatprep.subr.mxu0 0.0
  %5912 = vmatpush1.msra.mxu0 0.0
  %5913 = vmatprep.subr.mxu0 0.0
  %5914 = vmatpush1.msra.mxu0 0.0
  %5915 = vmatprep.subr.mxu0 0.0
  %5916 = vmatpush1.msra.mxu0 0.0
  %5917 = vmatprep.subr.mxu0 0.0
  %5918 = vmatpush1.msra.mxu0 0.0
  %5919 = vmatprep.subr.mxu0 0.0
  %5920 = vmatpush1.msra.mxu0 0.0
  %5921 = vmatprep.subr.mxu0 0.0
  %5922 = vmatpush1.msra.mxu0 0.0
  %5923 = vmatprep.subr.mxu0 0.0
  %5924 = vmatpush1.msra.mxu0 0.0
  %5925 = vmatprep.subr.mxu0 0.0
  %5926 = vmatpush1.msra.mxu0 0.0
  %5927 = vmatprep.subr.mxu0 0.0
  %5928 = vmatpush1.msra.mxu0 0.0
  %5929 = vmatprep.subr.mxu0 0.0
  %5930 = vmatpush1.msra.mxu0 0.0
  %5931 = vmatprep.subr.mxu0 0.0
  %5932 = vmatpush1.msra.mxu0 0.0
  %5933 = vmatprep.subr.mxu0 0.0
  %5934 = vmatpush1.msra.mxu0 0.0
  %5935 = vmatprep.subr.mxu0 0.0
  %5936 = vmatpush1.msra.mxu0 0.0
  %5937 = vmatprep.subr.mxu0 0.0
  %5938 = vmatpush1.msra.mxu0 0.0
  %5939 = vmatprep.subr.mxu0 0.0
  %5940 = vmatpush1.msra.mxu0 0.0
  %5941 = vmatprep.subr.mxu0 0.0
  %5942 = vmatpush1.msra.mxu0 0.0
  %5943 = vmatprep.subr.mxu0 0.0
  %5944 = vmatpush1.msra.mxu0 0.0
  %5945 = vmatprep.subr.mxu0 0.0
  %5946 = vmatpush1.msra.mxu0 0.0
  %5947 = vmatprep.subr.mxu0 0.0
  %5948 = vmatpush1.msra.mxu0 0.0
  %5949 = vmatprep.mubr.f32.mxu0 0.0
  %5950 = vmatmul.mubr.f32.gmra.mrb[0].mxu0 %v5883
  %v5951 = vpop.f32.mrb[0].mxu0
  %v5952 = vadd.f32 0.0, %v5951
  %v5953 = vpop.f32.mrb[0].mxu0
  %5954 = vdwg.mxu0
  %v5955 = vadd.f32 %v4293, %v5952
  %v5956 = vsel %vm287, %v5149, 0
  %5958 = vmatprep.subr.mxu0 0.0
  %5959 = vmatpush1.msra.mxu0 %v4509
  %5960 = vmatprep.subr.mxu0 0.0
  %5961 = vmatpush1.msra.mxu0 %v4510
  %5962 = vmatprep.subr.mxu0 0.0
  %5963 = vmatpush1.msra.mxu0 %v4511
  %5964 = vmatprep.subr.mxu0 0.0
  %5965 = vmatpush1.msra.mxu0 %v4512
  %5966 = vmatprep.subr.mxu0 0.0
  %5967 = vmatpush1.msra.mxu0 0.0
  %5968 = vmatprep.subr.mxu0 0.0
  %5969 = vmatpush1.msra.mxu0 0.0
  %5970 = vmatprep.subr.mxu0 0.0
  %5971 = vmatpush1.msra.mxu0 0.0
  %5972 = vmatprep.subr.mxu0 0.0
  %5973 = vmatpush1.msra.mxu0 0.0
  %5974 = vmatprep.subr.mxu0 0.0
  %5975 = vmatpush1.msra.mxu0 0.0
  %5976 = vmatprep.subr.mxu0 0.0
  %5977 = vmatpush1.msra.mxu0 0.0
  %5978 = vmatprep.subr.mxu0 0.0
  %5979 = vmatpush1.msra.mxu0 0.0
  %5980 = vmatprep.subr.mxu0 0.0
  %5981 = vmatpush1.msra.mxu0 0.0
  %5982 = vmatprep.subr.mxu0 0.0
  %5983 = vmatpush1.msra.mxu0 0.0
  %5984 = vmatprep.subr.mxu0 0.0
  %5985 = vmatpush1.msra.mxu0 0.0
  %5986 = vmatprep.subr.mxu0 0.0
  %5987 = vmatpush1.msra.mxu0 0.0
  %5988 = vmatprep.subr.mxu0 0.0
  %5989 = vmatpush1.msra.mxu0 0.0
  %5990 = vmatprep.subr.mxu0 0.0
  %5991 = vmatpush1.msra.mxu0 0.0
  %5992 = vmatprep.subr.mxu0 0.0
  %5993 = vmatpush1.msra.mxu0 0.0
  %5994 = vmatprep.subr.mxu0 0.0
  %5995 = vmatpush1.msra.mxu0 0.0
  %5996 = vmatprep.subr.mxu0 0.0
  %5997 = vmatpush1.msra.mxu0 0.0
  %5998 = vmatprep.subr.mxu0 0.0
  %5999 = vmatpush1.msra.mxu0 0.0
  %6000 = vmatprep.subr.mxu0 0.0
  %6001 = vmatpush1.msra.mxu0 0.0
  %6002 = vmatprep.subr.mxu0 0.0
  %6003 = vmatpush1.msra.mxu0 0.0
  %6004 = vmatprep.subr.mxu0 0.0
  %6005 = vmatpush1.msra.mxu0 0.0
  %6006 = vmatprep.subr.mxu0 0.0
  %6007 = vmatpush1.msra.mxu0 0.0
  %6008 = vmatprep.subr.mxu0 0.0
  %6009 = vmatpush1.msra.mxu0 0.0
  %6010 = vmatprep.subr.mxu0 0.0
  %6011 = vmatpush1.msra.mxu0 0.0
  %6012 = vmatprep.subr.mxu0 0.0
  %6013 = vmatpush1.msra.mxu0 0.0
  %6014 = vmatprep.subr.mxu0 0.0
  %6015 = vmatpush1.msra.mxu0 0.0
  %6016 = vmatprep.subr.mxu0 0.0
  %6017 = vmatpush1.msra.mxu0 0.0
  %6018 = vmatprep.subr.mxu0 0.0
  %6019 = vmatpush1.msra.mxu0 0.0
  %6020 = vmatprep.subr.mxu0 0.0
  %6021 = vmatpush1.msra.mxu0 0.0
  %6022 = vmatprep.mubr.f32.mxu0 0.0
  %6023 = vmatmul.mubr.f32.gmra.mrb[0].mxu0 %v5956
  %v6024 = vpop.f32.mrb[0].mxu0
  %v6025 = vadd.f32 %v5043, %v6024
  %v6026 = vpop.f32.mrb[0].mxu0
  %6027 = vdwg.mxu0
  %v6028 = vadd.f32 %v5955, %v6025
  %v6029 = vxor.u32 %v6028, 2147483648
  %v6030 = vmul.f32 %v6029, 1.442695
  %v6031 = vpow.pop %v6030
  %v6032 = vadd.f32 %v6031, 1.0
  %v6033 = vrcp.pop %v6032
  %v6034 = vmul.f32 1.0, %v6033
  %6036 = vrot.lane.b32.xlu0 %v6025, 64
  %v6037 = vpop.permute.xlu0 %6036
  %v6039 = vmul.f32 %v6034, %v6037
  %6041 = vrot.lane.b32.xlu0 %v6039, 64
  %v6042 = vpop.permute.xlu0 %6041
  %v6044 = vadd.f32 %v5955, %v6042
  %v6045 = vtanh.pop %v6044
  %v6046 = vsub.f32 1.0, %v6034
  %6048 = vrot.lane.b32.xlu0 %v6045, 96
  %v6049 = vpop.permute.xlu0 %6048
  %v6051 = vmul.f32 %v6046, %v6049
  %v6052 = vmul.f32 %v6034, %v5146
  %v6053 = vadd.f32 %v6051, %v6052
  %6055 = vrot.lane.b32.xlu0 %v6053, 96
  %v6056 = vpop.permute.xlu0 %6055
  %6058 = vrot.lane.b32.xlu0 %v5882, 32
  %v6059 = vpop.permute.xlu0 %6058
  %v6061 = vsel %vm287, %v6056, %v6059
  %v6063 = vsel %vm5155, %v6061, 0
  %6065 = vmatprep.subr.mxu0 0.0
  %6066 = vmatpush1.msra.mxu0 %v4517
  %6067 = vmatprep.subr.mxu0 0.0
  %6068 = vmatpush1.msra.mxu0 %v4518
  %6069 = vmatprep.subr.mxu0 0.0
  %6070 = vmatpush1.msra.mxu0 %v4519
  %6071 = vmatprep.subr.mxu0 0.0
  %6072 = vmatpush1.msra.mxu0 %v4520
  %6073 = vmatprep.subr.mxu0 0.0
  %6074 = vmatpush1.msra.mxu0 %v4521
  %6075 = vmatprep.subr.mxu0 0.0
  %6076 = vmatpush1.msra.mxu0 %v4522
  %6077 = vmatprep.subr.mxu0 0.0
  %6078 = vmatpush1.msra.mxu0 %v4523
  %6079 = vmatprep.subr.mxu0 0.0
  %6080 = vmatpush1.msra.mxu0 %v4524
  %6081 = vmatprep.subr.mxu0 0.0
  %6082 = vmatpush1.msra.mxu0 0.0
  %6083 = vmatprep.subr.mxu0 0.0
  %6084 = vmatpush1.msra.mxu0 0.0
  %6085 = vmatprep.subr.mxu0 0.0
  %6086 = vmatpush1.msra.mxu0 0.0
  %6087 = vmatprep.subr.mxu0 0.0
  %6088 = vmatpush1.msra.mxu0 0.0
  %6089 = vmatprep.subr.mxu0 0.0
  %6090 = vmatpush1.msra.mxu0 0.0
  %6091 = vmatprep.subr.mxu0 0.0
  %6092 = vmatpush1.msra.mxu0 0.0
  %6093 = vmatprep.subr.mxu0 0.0
  %6094 = vmatpush1.msra.mxu0 0.0
  %6095 = vmatprep.subr.mxu0 0.0
  %6096 = vmatpush1.msra.mxu0 0.0
  %6097 = vmatprep.subr.mxu0 0.0
  %6098 = vmatpush1.msra.mxu0 0.0
  %6099 = vmatprep.subr.mxu0 0.0
  %6100 = vmatpush1.msra.mxu0 0.0
  %6101 = vmatprep.subr.mxu0 0.0
  %6102 = vmatpush1.msra.mxu0 0.0
  %6103 = vmatprep.subr.mxu0 0.0
  %6104 = vmatpush1.msra.mxu0 0.0
  %6105 = vmatprep.subr.mxu0 0.0
  %6106 = vmatpush1.msra.mxu0 0.0
  %6107 = vmatprep.subr.mxu0 0.0
  %6108 = vmatpush1.msra.mxu0 0.0
  %6109 = vmatprep.subr.mxu0 0.0
  %6110 = vmatpush1.msra.mxu0 0.0
  %6111 = vmatprep.subr.mxu0 0.0
  %6112 = vmatpush1.msra.mxu0 0.0
  %6113 = vmatprep.subr.mxu0 0.0
  %6114 = vmatpush1.msra.mxu0 0.0
  %6115 = vmatprep.subr.mxu0 0.0
  %6116 = vmatpush1.msra.mxu0 0.0
  %6117 = vmatprep.subr.mxu0 0.0
  %6118 = vmatpush1.msra.mxu0 0.0
  %6119 = vmatprep.subr.mxu0 0.0
  %6120 = vmatpush1.msra.mxu0 0.0
  %6121 = vmatprep.subr.mxu0 0.0
  %6122 = vmatpush1.msra.mxu0 0.0
  %6123 = vmatprep.subr.mxu0 0.0
  %6124 = vmatpush1.msra.mxu0 0.0
  %6125 = vmatprep.subr.mxu0 0.0
  %6126 = vmatpush1.msra.mxu0 0.0
  %6127 = vmatprep.subr.mxu0 0.0
  %6128 = vmatpush1.msra.mxu0 0.0
  %6129 = vmatprep.mubr.f32.mxu0 0.0
  %6130 = vmatmul.mubr.f32.gmra.mrb[0].mxu0 %v6063
  %v6131 = vpop.f32.mrb[0].mxu0
  %v6132 = vadd.f32 %v4375, %v6131
  %v6133 = vpop.f32.mrb[0].mxu0
  %6134 = vdwg.mxu0
  %v6135 = vadd.f32 %v6132, %v5233
  %v6136 = vmul.f32 %v6053, %v5242
  %6138 = vrot.lane.b32.xlu0 %v6136, 96
  %v6139 = vpop.permute.xlu0 %6138
  %v6141 = vsel %vm287, %v6139, 0.0
  %6142 = vadd.xlane.f32.xlu0 %v6141
  %v6143 = vpop.xlane.xlu0 %6142
  %v6144 = vmul.f32 %v5762, %v5256
  %v6145 = vmul.f32 %v5769, %v5256
  %v6146 = vmul.f32 %v5776, %v5256
  %v6147 = vmul.f32 %v5783, %v5256
  %v6148 = vmul.f32 %v5790, %v5256
  %v6149 = vmul.f32 %v5797, %v5256
  %v6150 = vmul.f32 %v5804, %v5256
  %v6151 = vmul.f32 %v5811, %v5256
  %v6160 = vrot.slane %v6145, 7
  %v6161 = vsel %vm592, %v6160, %v6144
  %v6162 = vrot.slane %v6146, 6
  %v6163 = vsel %vm595, %v6162, %v6161
  %v6164 = vrot.slane %v6147, 5
  %v6165 = vsel %vm598, %v6164, %v6163
  %v6166 = vrot.slane %v6148, 4
  %v6167 = vsel %vm601, %v6166, %v6165
  %v6168 = vrot.slane %v6149, 3
  %v6169 = vsel %vm604, %v6168, %v6167
  %v6170 = vrot.slane %v6150, 2
  %v6171 = vsel %vm607, %v6170, %v6169
  %v6172 = vrot.slane %v6151, 1
  %v6173 = vsel %vm610, %v6172, %v6171
  %v6175 = vsel %vm287, %v6173, 0.0
  %6176 = vadd.xlane.f32.xlu0 %v6175
  %v6177 = vpop.xlane.xlu0 %6176
  %v6178 = vadd.f32 %v6143, %v6177
  %v6179 = vadd.f32 %v6178, %v4398
  %v6180 = vadd.f32 %v6179, %v5298
  %v6181 = vxor.u32 %v6180, 2147483648
  %v6182 = vmul.f32 %v6181, 1.442695
  %v6183 = vpow.pop %v6182
  %v6184 = vadd.f32 %v6183, 1.0
  %v6185 = vrcp.pop %v6184
  %v6186 = vmul.f32 1.0, %v6185
  %v6187 = vmax.f32 %v6186, 0.001
  %v6188 = vmin.f32 %v6187, 0.999
  %6190 = vset.pattern.permute.xlu0 0
  %6191 = vperm.xlu0 %6190, %v6188
  %v6192 = vpop.permute.xlu0 %6191
  %v6194 = vmul.f32 %v6192, %v6135
  %v6195 = vsub.f32 1.0, %v6188
  %6197 = vset.pattern.permute.xlu0 0
  %6198 = vperm.xlu0 %6197, %v6195
  %v6199 = vpop.permute.xlu0 %6198
  %v6209 = vsel %vm592, %v5831, %v5825
  %v6210 = vsel %vm595, %v5837, %v6209
  %v6211 = vsel %vm598, %v5843, %v6210
  %v6212 = vsel %vm601, %v5849, %v6211
  %v6213 = vsel %vm604, %v5855, %v6212
  %v6214 = vsel %vm607, %v5861, %v6213
  %v6215 = vsel %vm610, %v5867, %v6214
  %v6217 = vmul.f32 %v6199, %v6215
  %v6218 = vadd.f32 %v6194, %v6217
  %v6220 = vcombine.high %v6218, %v6218
  %v6222 = vunpack.c.l.s4 1966171168
  %v6223 = vunpack.c.0.s8 %v6222
  %v6224 = vlaneseq
  %v6225 = vshrl.u32 %v6224, 7
  %v6226 = vsub.s32 %v6223, %v6225
  %v6227 = vrot.slane %v6218, %v6226
  %v6229 = vunpack.c.l.s4 1966171168
  %v6230 = vunpack.c.0.s8 %v6229
  %v6231 = vlaneseq
  %v6232 = vshrl.u32 %v6231, 7
  %v6233 = vsub.s32 %v6230, %v6232
  %v6234 = vrot.slane %v6220, %v6233
  %v6235 = vcombine.high %v6227, %v6227
  %v6236 = vcombine.high %v6234, %v6234
  %v6238 = vunpack.c.l.s4 1966171168
  %v6239 = vunpack.c.0.s8 %v6238
  %v6240 = vlaneseq
  %v6241 = vshrl.u32 %v6240, 7
  %v6242 = vsub.s32 %v6239, %v6241
  %v6243 = vrot.slane %v6227, %v6242
  %v6245 = vunpack.c.l.s4 1966171168
  %v6246 = vunpack.c.0.s8 %v6245
  %v6247 = vlaneseq
  %v6248 = vshrl.u32 %v6247, 7
  %v6249 = vsub.s32 %v6246, %v6248
  %v6250 = vrot.slane %v6234, %v6249
  %v6252 = vunpack.c.l.s4 1966171168
  %v6253 = vunpack.c.0.s8 %v6252
  %v6254 = vlaneseq
  %v6255 = vshrl.u32 %v6254, 7
  %v6256 = vsub.s32 %v6253, %v6255
  %v6257 = vrot.slane %v6235, %v6256
  %v6259 = vunpack.c.l.s4 1966171168
  %v6260 = vunpack.c.0.s8 %v6259
  %v6261 = vlaneseq
  %v6262 = vshrl.u32 %v6261, 7
  %v6263 = vsub.s32 %v6260, %v6262
  %v6264 = vrot.slane %v6236, %v6263
  %v6265 = vcombine.high %v6243, %v6243
  %v6266 = vcombine.high %v6250, %v6250
  %v6267 = vcombine.high %v6257, %v6257
  %v6268 = vcombine.high %v6264, %v6264
  %6277 = vst [vmem:[%s57 + $0x1] sm:$0x1] %v6243
  %6278 = vst [vmem:[%s57 + $0x5] sm:$0x1] %v6257
  %6279 = vst [vmem:[%s57 + $0x9] sm:$0x1] %v6265
  %6280 = vst [vmem:[%s57 + $0xd] sm:$0x1] %v6267
  %6281 = vst [vmem:[%s57 + $0x11] sm:$0x1] %v6250
  %6282 = vst [vmem:[%s57 + $0x15] sm:$0x1] %v6264
  %6283 = vst [vmem:[%s57 + $0x19] sm:$0x1] %v6266
  %6284 = vst [vmem:[%s57 + $0x1d] sm:$0x1] %v6268
  %v6286 = vcombine.high %v4209, %v4209
  %v6288 = vunpack.c.l.s4 1966171168
  %v6289 = vunpack.c.0.s8 %v6288
  %v6290 = vlaneseq
  %v6291 = vshrl.u32 %v6290, 7
  %v6292 = vsub.s32 %v6289, %v6291
  %v6293 = vrot.slane %v4209, %v6292
  %v6295 = vunpack.c.l.s4 1966171168
  %v6296 = vunpack.c.0.s8 %v6295
  %v6297 = vlaneseq
  %v6298 = vshrl.u32 %v6297, 7
  %v6299 = vsub.s32 %v6296, %v6298
  %v6300 = vrot.slane %v6286, %v6299
  %v6301 = vcombine.high %v6293, %v6293
  %v6302 = vcombine.high %v6300, %v6300
  %v6304 = vunpack.c.l.s4 1966171168
  %v6305 = vunpack.c.0.s8 %v6304
  %v6306 = vlaneseq
  %v6307 = vshrl.u32 %v6306, 7
  %v6308 = vsub.s32 %v6305, %v6307
  %v6309 = vrot.slane %v6293, %v6308
  %v6311 = vunpack.c.l.s4 1966171168
  %v6312 = vunpack.c.0.s8 %v6311
  %v6313 = vlaneseq
  %v6314 = vshrl.u32 %v6313, 7
  %v6315 = vsub.s32 %v6312, %v6314
  %v6316 = vrot.slane %v6300, %v6315
  %v6318 = vunpack.c.l.s4 1966171168
  %v6319 = vunpack.c.0.s8 %v6318
  %v6320 = vlaneseq
  %v6321 = vshrl.u32 %v6320, 7
  %v6322 = vsub.s32 %v6319, %v6321
  %v6323 = vrot.slane %v6301, %v6322
  %v6325 = vunpack.c.l.s4 1966171168
  %v6326 = vunpack.c.0.s8 %v6325
  %v6327 = vlaneseq
  %v6328 = vshrl.u32 %v6327, 7
  %v6329 = vsub.s32 %v6326, %v6328
  %v6330 = vrot.slane %v6302, %v6329
  %v6331 = vcombine.high %v6309, %v6309
  %v6332 = vcombine.high %v6316, %v6316
  %v6333 = vcombine.high %v6323, %v6323
  %v6334 = vcombine.high %v6330, %v6330
  %v6335 = vlaneseq
  %v6336 = vshrl.u32 %v6335, 7
  %v6337 = vsub.s32 0, %v6336
  %v6338 = vrot.slane %v6309, %v6337
  %v6339 = vlaneseq
  %v6340 = vshrl.u32 %v6339, 7
  %v6341 = vsub.s32 0, %v6340
  %v6342 = vrot.slane %v6323, %v6341
  %v6343 = vlaneseq
  %v6344 = vshrl.u32 %v6343, 7
  %v6345 = vsub.s32 0, %v6344
  %v6346 = vrot.slane %v6331, %v6345
  %v6347 = vlaneseq
  %v6348 = vshrl.u32 %v6347, 7
  %v6349 = vsub.s32 0, %v6348
  %v6350 = vrot.slane %v6333, %v6349
  %v6351 = vlaneseq
  %v6352 = vshrl.u32 %v6351, 7
  %v6353 = vsub.s32 0, %v6352
  %v6354 = vrot.slane %v6316, %v6353
  %v6355 = vlaneseq
  %v6356 = vshrl.u32 %v6355, 7
  %v6357 = vsub.s32 0, %v6356
  %v6358 = vrot.slane %v6330, %v6357
  %v6359 = vlaneseq
  %v6360 = vshrl.u32 %v6359, 7
  %v6361 = vsub.s32 0, %v6360
  %v6362 = vrot.slane %v6332, %v6361
  %v6363 = vlaneseq
  %v6364 = vshrl.u32 %v6363, 7
  %v6365 = vsub.s32 0, %v6364
  %v6366 = vrot.slane %v6334, %v6365
  %v6375 = vadd.f32 %v4080, %v6338
  %v6376 = vadd.f32 %v4085, %v6342
  %v6377 = vadd.f32 %v4090, %v6346
  %v6378 = vadd.f32 %v4095, %v6350
  %v6379 = vadd.f32 %v4100, %v6354
  %v6380 = vadd.f32 %v4105, %v6358
  %v6381 = vadd.f32 %v4110, %v6362
  %v6382 = vadd.f32 %v4115, %v6366
  %v6383 = vlaneseq
  %v6384 = vshrl.u32 %v6383, 7
  %v6385 = vsub.s32 0, %v6384
  %v6386 = vrot.slane %v5691, %v6385
  %6388 = vbcast.lane.b32.xlu0 %v6386, 256
  %v6389 = vpop.permute.xlu0 %6388
  %v6390 = vlaneseq
  %v6391 = vshrl.u32 %v6390, 7
  %v6392 = vsub.s32 1, %v6391
  %v6393 = vrot.slane %v5691, %v6392
  %6395 = vbcast.lane.b32.xlu0 %v6393, 256
  %v6396 = vpop.permute.xlu0 %6395
  %v6397 = vlaneseq
  %v6398 = vshrl.u32 %v6397, 7
  %v6399 = vsub.s32 2, %v6398
  %v6400 = vrot.slane %v5691, %v6399
  %6402 = vbcast.lane.b32.xlu0 %v6400, 256
  %v6403 = vpop.permute.xlu0 %6402
  %v6404 = vlaneseq
  %v6405 = vshrl.u32 %v6404, 7
  %v6406 = vsub.s32 3, %v6405
  %v6407 = vrot.slane %v5691, %v6406
  %6409 = vbcast.lane.b32.xlu0 %v6407, 256
  %v6410 = vpop.permute.xlu0 %6409
  %v6411 = vlaneseq
  %v6412 = vshrl.u32 %v6411, 7
  %v6413 = vsub.s32 4, %v6412
  %v6414 = vrot.slane %v5691, %v6413
  %6416 = vbcast.lane.b32.xlu0 %v6414, 256
  %v6417 = vpop.permute.xlu0 %6416
  %v6418 = vlaneseq
  %v6419 = vshrl.u32 %v6418, 7
  %v6420 = vsub.s32 5, %v6419
  %v6421 = vrot.slane %v5691, %v6420
  %6423 = vbcast.lane.b32.xlu0 %v6421, 256
  %v6424 = vpop.permute.xlu0 %6423
  %v6425 = vlaneseq
  %v6426 = vshrl.u32 %v6425, 7
  %v6427 = vsub.s32 6, %v6426
  %v6428 = vrot.slane %v5691, %v6427
  %6430 = vbcast.lane.b32.xlu0 %v6428, 256
  %v6431 = vpop.permute.xlu0 %6430
  %v6432 = vlaneseq
  %v6433 = vshrl.u32 %v6432, 7
  %v6434 = vsub.s32 7, %v6433
  %v6435 = vrot.slane %v5691, %v6434
  %6437 = vbcast.lane.b32.xlu0 %v6435, 256
  %v6438 = vpop.permute.xlu0 %6437
  %v6439 = vmul.f32 %v6389, %v4418
  %v6440 = vmul.f32 %v6396, %v4418
  %v6441 = vmul.f32 %v6403, %v4418
  %v6442 = vmul.f32 %v6410, %v4418
  %v6443 = vmul.f32 %v6417, %v4418
  %v6444 = vmul.f32 %v6424, %v4418
  %v6445 = vmul.f32 %v6431, %v4418
  %v6446 = vmul.f32 %v6438, %v4418
  %v6447 = vadd.f32 %v6375, %v6439
  %v6448 = vadd.f32 %v6376, %v6440
  %v6449 = vadd.f32 %v6377, %v6441
  %v6450 = vadd.f32 %v6378, %v6442
  %v6451 = vadd.f32 %v6379, %v6443
  %v6452 = vadd.f32 %v6380, %v6444
  %v6453 = vadd.f32 %v6381, %v6445
  %v6454 = vadd.f32 %v6382, %v6446
  %v6455 = vadd.f32 %v6447, %v4640
  %v6456 = vadd.f32 %v6448, %v4640
  %v6457 = vadd.f32 %v6449, %v4640
  %v6458 = vadd.f32 %v6450, %v4640
  %v6459 = vadd.f32 %v6451, %v4640
  %v6460 = vadd.f32 %v6452, %v4640
  %v6461 = vadd.f32 %v6453, %v4640
  %v6462 = vadd.f32 %v6454, %v4640
  %v6463 = vtanh.pop %v6455
  %v6464 = vtanh.pop %v6456
  %v6465 = vtanh.pop %v6457
  %v6466 = vtanh.pop %v6458
  %v6467 = vtanh.pop %v6459
  %v6468 = vtanh.pop %v6460
  %v6469 = vtanh.pop %v6461
  %v6470 = vtanh.pop %v6462
  %v6471 = vmul.f32 %v6463, %v4662
  %v6472 = vmul.f32 %v6464, %v4662
  %v6473 = vmul.f32 %v6465, %v4662
  %v6474 = vmul.f32 %v6466, %v4662
  %v6475 = vmul.f32 %v6467, %v4662
  %v6476 = vmul.f32 %v6468, %v4662
  %v6477 = vmul.f32 %v6469, %v4662
  %v6478 = vmul.f32 %v6470, %v4662
  %v6479 = vsel %vm287, %v6471, 0.0
  %6480 = vadd.xlane.f32.xlu0 %v6479
  %v6481 = vpop.xlane.xlu0 %6480
  %v6482 = vsel %vm287, %v6472, 0.0
  %6483 = vadd.xlane.f32.xlu0 %v6482
  %v6484 = vpop.xlane.xlu0 %6483
  %v6485 = vsel %vm287, %v6473, 0.0
  %6486 = vadd.xlane.f32.xlu0 %v6485
  %v6487 = vpop.xlane.xlu0 %6486
  %v6488 = vsel %vm287, %v6474, 0.0
  %6489 = vadd.xlane.f32.xlu0 %v6488
  %v6490 = vpop.xlane.xlu0 %6489
  %v6491 = vsel %vm287, %v6475, 0.0
  %6492 = vadd.xlane.f32.xlu0 %v6491
  %v6493 = vpop.xlane.xlu0 %6492
  %v6494 = vsel %vm287, %v6476, 0.0
  %6495 = vadd.xlane.f32.xlu0 %v6494
  %v6496 = vpop.xlane.xlu0 %6495
  %v6497 = vsel %vm287, %v6477, 0.0
  %6498 = vadd.xlane.f32.xlu0 %v6497
  %v6499 = vpop.xlane.xlu0 %6498
  %v6500 = vsel %vm287, %v6478, 0.0
  %6501 = vadd.xlane.f32.xlu0 %v6500
  %v6502 = vpop.xlane.xlu0 %6501
  %v6503 = vadd.f32 %v6481, %v4703
  %v6504 = vadd.f32 %v6484, %v4703
  %v6505 = vadd.f32 %v6487, %v4703
  %v6506 = vadd.f32 %v6490, %v4703
  %v6507 = vadd.f32 %v6493, %v4703
  %v6508 = vadd.f32 %v6496, %v4703
  %v6509 = vadd.f32 %v6499, %v4703
  %v6510 = vadd.f32 %v6502, %v4703
  %v6519 = vlaneseq
  %v6520 = vshrl.u32 %v6519, 7
  %v6521 = vsub.s32 %v4476, %v6520
  %v6522 = vrot.slane %v6503, %v6521
  %v6523 = vlaneseq
  %v6524 = vshrl.u32 %v6523, 7
  %v6525 = vsub.s32 %v4476, %v6524
  %v6526 = vrot.slane %v6504, %v6525
  %v6527 = vlaneseq
  %v6528 = vshrl.u32 %v6527, 7
  %v6529 = vsub.s32 %v4476, %v6528
  %v6530 = vrot.slane %v6505, %v6529
  %v6531 = vlaneseq
  %v6532 = vshrl.u32 %v6531, 7
  %v6533 = vsub.s32 %v4476, %v6532
  %v6534 = vrot.slane %v6506, %v6533
  %v6535 = vlaneseq
  %v6536 = vshrl.u32 %v6535, 7
  %v6537 = vsub.s32 %v4476, %v6536
  %v6538 = vrot.slane %v6507, %v6537
  %v6539 = vlaneseq
  %v6540 = vshrl.u32 %v6539, 7
  %v6541 = vsub.s32 %v4476, %v6540
  %v6542 = vrot.slane %v6508, %v6541
  %v6543 = vlaneseq
  %v6544 = vshrl.u32 %v6543, 7
  %v6545 = vsub.s32 %v4476, %v6544
  %v6546 = vrot.slane %v6509, %v6545
  %v6547 = vlaneseq
  %v6548 = vshrl.u32 %v6547, 7
  %v6549 = vsub.s32 %v4476, %v6548
  %v6550 = vrot.slane %v6510, %v6549
  %v6551 = vsel %vm592, %v6526, %v6522
  %v6552 = vsel %vm595, %v6530, %v6551
  %v6553 = vsel %vm598, %v6534, %v6552
  %v6554 = vsel %vm601, %v6538, %v6553
  %v6555 = vsel %vm604, %v6542, %v6554
  %v6556 = vsel %vm607, %v6546, %v6555
  %v6557 = vsel %vm610, %v6550, %v6556
  %v6559 = vsel %vm4504, -1e+30, %v6557
  %v6560 = vsel %vm4762, %v6559, -inf
  %6561 = vmax.xlane.f32.xlu0 %v6560
  %v6562 = vpop.xlane.xlu0 %6561
  %v6563 = vsub.f32 %v6559, %v6562
  %v6564 = vmul.f32 %v6563, 1.442695
  %v6565 = vpow.pop %v6564
  %v6566 = vsel %vm4762, %v6565, 0.0
  %6567 = vadd.xlane.f32.xlu0 %v6566
  %v6568 = vpop.xlane.xlu0 %6567
  %v6569 = vrcp.pop %v6568
  %v6570 = vmul.f32 %v6565, %v6569
  %v6571 = vadd.f32 %v5691, %v6570
  %v6572 = vlaneseq
  %v6573 = vshrl.u32 %v6572, 7
  %v6574 = vsub.s32 0, %v6573
  %v6575 = vrot.slane %v6570, %v6574
  %6577 = vbcast.lane.b32.xlu0 %v6575, 256
  %v6578 = vpop.permute.xlu0 %6577
  %v6579 = vlaneseq
  %v6580 = vshrl.u32 %v6579, 7
  %v6581 = vsub.s32 1, %v6580
  %v6582 = vrot.slane %v6570, %v6581
  %6584 = vbcast.lane.b32.xlu0 %v6582, 256
  %v6585 = vpop.permute.xlu0 %6584
  %v6586 = vlaneseq
  %v6587 = vshrl.u32 %v6586, 7
  %v6588 = vsub.s32 2, %v6587
  %v6589 = vrot.slane %v6570, %v6588
  %6591 = vbcast.lane.b32.xlu0 %v6589, 256
  %v6592 = vpop.permute.xlu0 %6591
  %v6593 = vlaneseq
  %v6594 = vshrl.u32 %v6593, 7
  %v6595 = vsub.s32 3, %v6594
  %v6596 = vrot.slane %v6570, %v6595
  %6598 = vbcast.lane.b32.xlu0 %v6596, 256
  %v6599 = vpop.permute.xlu0 %6598
  %v6600 = vlaneseq
  %v6601 = vshrl.u32 %v6600, 7
  %v6602 = vsub.s32 4, %v6601
  %v6603 = vrot.slane %v6570, %v6602
  %6605 = vbcast.lane.b32.xlu0 %v6603, 256
  %v6606 = vpop.permute.xlu0 %6605
  %v6607 = vlaneseq
  %v6608 = vshrl.u32 %v6607, 7
  %v6609 = vsub.s32 5, %v6608
  %v6610 = vrot.slane %v6570, %v6609
  %6612 = vbcast.lane.b32.xlu0 %v6610, 256
  %v6613 = vpop.permute.xlu0 %6612
  %v6614 = vlaneseq
  %v6615 = vshrl.u32 %v6614, 7
  %v6616 = vsub.s32 6, %v6615
  %v6617 = vrot.slane %v6570, %v6616
  %6619 = vbcast.lane.b32.xlu0 %v6617, 256
  %v6620 = vpop.permute.xlu0 %6619
  %v6621 = vlaneseq
  %v6622 = vshrl.u32 %v6621, 7
  %v6623 = vsub.s32 7, %v6622
  %v6624 = vrot.slane %v6570, %v6623
  %6626 = vbcast.lane.b32.xlu0 %v6624, 256
  %v6627 = vpop.permute.xlu0 %6626
  %v6628 = vmul.f32 %v6578, %v3977
  %v6629 = vmul.f32 %v6585, %v3978
  %v6630 = vmul.f32 %v6592, %v3979
  %v6631 = vmul.f32 %v6599, %v3980
  %v6632 = vmul.f32 %v6606, %v3981
  %v6633 = vmul.f32 %v6613, %v3982
  %v6634 = vmul.f32 %v6620, %v3983
  %v6635 = vmul.f32 %v6627, %v3984
  %v6636 = vsel %vm287, %v6628, 0.0
  %v6637 = vrot.slane %v6636, 4
  %v6638 = vadd.f32 %v6636, %v6637
  %v6639 = vrot.slane %v6638, 2
  %v6640 = vadd.f32 %v6638, %v6639
  %v6641 = vrot.slane %v6640, 1
  %v6642 = vadd.f32 %v6640, %v6641
  %v6643 = vsel %vm287, %v6629, 0.0
  %v6644 = vrot.slane %v6643, 4
  %v6645 = vadd.f32 %v6643, %v6644
  %v6646 = vrot.slane %v6645, 2
  %v6647 = vadd.f32 %v6645, %v6646
  %v6648 = vrot.slane %v6647, 1
  %v6649 = vadd.f32 %v6647, %v6648
  %v6650 = vsel %vm287, %v6630, 0.0
  %v6651 = vrot.slane %v6650, 4
  %v6652 = vadd.f32 %v6650, %v6651
  %v6653 = vrot.slane %v6652, 2
  %v6654 = vadd.f32 %v6652, %v6653
  %v6655 = vrot.slane %v6654, 1
  %v6656 = vadd.f32 %v6654, %v6655
  %v6657 = vsel %vm287, %v6631, 0.0
  %v6658 = vrot.slane %v6657, 4
  %v6659 = vadd.f32 %v6657, %v6658
  %v6660 = vrot.slane %v6659, 2
  %v6661 = vadd.f32 %v6659, %v6660
  %v6662 = vrot.slane %v6661, 1
  %v6663 = vadd.f32 %v6661, %v6662
  %v6664 = vsel %vm287, %v6632, 0.0
  %v6665 = vrot.slane %v6664, 4
  %v6666 = vadd.f32 %v6664, %v6665
  %v6667 = vrot.slane %v6666, 2
  %v6668 = vadd.f32 %v6666, %v6667
  %v6669 = vrot.slane %v6668, 1
  %v6670 = vadd.f32 %v6668, %v6669
  %v6671 = vsel %vm287, %v6633, 0.0
  %v6672 = vrot.slane %v6671, 4
  %v6673 = vadd.f32 %v6671, %v6672
  %v6674 = vrot.slane %v6673, 2
  %v6675 = vadd.f32 %v6673, %v6674
  %v6676 = vrot.slane %v6675, 1
  %v6677 = vadd.f32 %v6675, %v6676
  %v6678 = vsel %vm287, %v6634, 0.0
  %v6679 = vrot.slane %v6678, 4
  %v6680 = vadd.f32 %v6678, %v6679
  %v6681 = vrot.slane %v6680, 2
  %v6682 = vadd.f32 %v6680, %v6681
  %v6683 = vrot.slane %v6682, 1
  %v6684 = vadd.f32 %v6682, %v6683
  %v6685 = vsel %vm287, %v6635, 0.0
  %v6686 = vrot.slane %v6685, 4
  %v6687 = vadd.f32 %v6685, %v6686
  %v6688 = vrot.slane %v6687, 2
  %v6689 = vadd.f32 %v6687, %v6688
  %v6690 = vrot.slane %v6689, 1
  %v6691 = vadd.f32 %v6689, %v6690
  %v6692 = vmul.f32 %v6578, %v4493
  %v6693 = vmul.f32 %v6585, %v4494
  %v6694 = vmul.f32 %v6592, %v4495
  %v6695 = vmul.f32 %v6599, %v4496
  %v6696 = vmul.f32 %v6606, %v4497
  %v6697 = vmul.f32 %v6613, %v4498
  %v6698 = vmul.f32 %v6620, %v4499
  %v6699 = vmul.f32 %v6627, %v4500
  %v6700 = vrot.slane %v6692, 4
  %v6701 = vadd.f32 %v6692, %v6700
  %v6702 = vrot.slane %v6701, 2
  %v6703 = vadd.f32 %v6701, %v6702
  %v6704 = vrot.slane %v6703, 1
  %v6705 = vadd.f32 %v6703, %v6704
  %v6706 = vrot.slane %v6693, 4
  %v6707 = vadd.f32 %v6693, %v6706
  %v6708 = vrot.slane %v6707, 2
  %v6709 = vadd.f32 %v6707, %v6708
  %v6710 = vrot.slane %v6709, 1
  %v6711 = vadd.f32 %v6709, %v6710
  %v6712 = vrot.slane %v6694, 4
  %v6713 = vadd.f32 %v6694, %v6712
  %v6714 = vrot.slane %v6713, 2
  %v6715 = vadd.f32 %v6713, %v6714
  %v6716 = vrot.slane %v6715, 1
  %v6717 = vadd.f32 %v6715, %v6716
  %v6718 = vrot.slane %v6695, 4
  %v6719 = vadd.f32 %v6695, %v6718
  %v6720 = vrot.slane %v6719, 2
  %v6721 = vadd.f32 %v6719, %v6720
  %v6722 = vrot.slane %v6721, 1
  %v6723 = vadd.f32 %v6721, %v6722
  %v6724 = vrot.slane %v6696, 4
  %v6725 = vadd.f32 %v6696, %v6724
  %v6726 = vrot.slane %v6725, 2
  %v6727 = vadd.f32 %v6725, %v6726
  %v6728 = vrot.slane %v6727, 1
  %v6729 = vadd.f32 %v6727, %v6728
  %v6730 = vrot.slane %v6697, 4
  %v6731 = vadd.f32 %v6697, %v6730
  %v6732 = vrot.slane %v6731, 2
  %v6733 = vadd.f32 %v6731, %v6732
  %v6734 = vrot.slane %v6733, 1
  %v6735 = vadd.f32 %v6733, %v6734
  %v6736 = vrot.slane %v6698, 4
  %v6737 = vadd.f32 %v6698, %v6736
  %v6738 = vrot.slane %v6737, 2
  %v6739 = vadd.f32 %v6737, %v6738
  %v6740 = vrot.slane %v6739, 1
  %v6741 = vadd.f32 %v6739, %v6740
  %v6742 = vrot.slane %v6699, 4
  %v6743 = vadd.f32 %v6699, %v6742
  %v6744 = vrot.slane %v6743, 2
  %v6745 = vadd.f32 %v6743, %v6744
  %v6746 = vrot.slane %v6745, 1
  %v6747 = vadd.f32 %v6745, %v6746
  %v6756 = vsel %vm592, %v6649, %v6642
  %v6757 = vsel %vm595, %v6656, %v6756
  %v6758 = vsel %vm598, %v6663, %v6757
  %v6759 = vsel %vm601, %v6670, %v6758
  %v6760 = vsel %vm604, %v6677, %v6759
  %v6761 = vsel %vm607, %v6684, %v6760
  %v6762 = vsel %vm610, %v6691, %v6761
  %v6763 = vsel %vm287, %v6762, 0
  %6765 = vmatprep.subr.mxu0 0.0
  %6766 = vmatpush1.msra.mxu0 %v4505
  %6767 = vmatprep.subr.mxu0 0.0
  %6768 = vmatpush1.msra.mxu0 %v4506
  %6769 = vmatprep.subr.mxu0 0.0
  %6770 = vmatpush1.msra.mxu0 %v4507
  %6771 = vmatprep.subr.mxu0 0.0
  %6772 = vmatpush1.msra.mxu0 %v4508
  %6773 = vmatprep.subr.mxu0 0.0
  %6774 = vmatpush1.msra.mxu0 0.0
  %6775 = vmatprep.subr.mxu0 0.0
  %6776 = vmatpush1.msra.mxu0 0.0
  %6777 = vmatprep.subr.mxu0 0.0
  %6778 = vmatpush1.msra.mxu0 0.0
  %6779 = vmatprep.subr.mxu0 0.0
  %6780 = vmatpush1.msra.mxu0 0.0
  %6781 = vmatprep.subr.mxu0 0.0
  %6782 = vmatpush1.msra.mxu0 0.0
  %6783 = vmatprep.subr.mxu0 0.0
  %6784 = vmatpush1.msra.mxu0 0.0
  %6785 = vmatprep.subr.mxu0 0.0
  %6786 = vmatpush1.msra.mxu0 0.0
  %6787 = vmatprep.subr.mxu0 0.0
  %6788 = vmatpush1.msra.mxu0 0.0
  %6789 = vmatprep.subr.mxu0 0.0
  %6790 = vmatpush1.msra.mxu0 0.0
  %6791 = vmatprep.subr.mxu0 0.0
  %6792 = vmatpush1.msra.mxu0 0.0
  %6793 = vmatprep.subr.mxu0 0.0
  %6794 = vmatpush1.msra.mxu0 0.0
  %6795 = vmatprep.subr.mxu0 0.0
  %6796 = vmatpush1.msra.mxu0 0.0
  %6797 = vmatprep.subr.mxu0 0.0
  %6798 = vmatpush1.msra.mxu0 0.0
  %6799 = vmatprep.subr.mxu0 0.0
  %6800 = vmatpush1.msra.mxu0 0.0
  %6801 = vmatprep.subr.mxu0 0.0
  %6802 = vmatpush1.msra.mxu0 0.0
  %6803 = vmatprep.subr.mxu0 0.0
  %6804 = vmatpush1.msra.mxu0 0.0
  %6805 = vmatprep.subr.mxu0 0.0
  %6806 = vmatpush1.msra.mxu0 0.0
  %6807 = vmatprep.subr.mxu0 0.0
  %6808 = vmatpush1.msra.mxu0 0.0
  %6809 = vmatprep.subr.mxu0 0.0
  %6810 = vmatpush1.msra.mxu0 0.0
  %6811 = vmatprep.subr.mxu0 0.0
  %6812 = vmatpush1.msra.mxu0 0.0
  %6813 = vmatprep.subr.mxu0 0.0
  %6814 = vmatpush1.msra.mxu0 0.0
  %6815 = vmatprep.subr.mxu0 0.0
  %6816 = vmatpush1.msra.mxu0 0.0
  %6817 = vmatprep.subr.mxu0 0.0
  %6818 = vmatpush1.msra.mxu0 0.0
  %6819 = vmatprep.subr.mxu0 0.0
  %6820 = vmatpush1.msra.mxu0 0.0
  %6821 = vmatprep.subr.mxu0 0.0
  %6822 = vmatpush1.msra.mxu0 0.0
  %6823 = vmatprep.subr.mxu0 0.0
  %6824 = vmatpush1.msra.mxu0 0.0
  %6825 = vmatprep.subr.mxu0 0.0
  %6826 = vmatpush1.msra.mxu0 0.0
  %6827 = vmatprep.subr.mxu0 0.0
  %6828 = vmatpush1.msra.mxu0 0.0
  %6829 = vmatprep.mubr.f32.mxu0 0.0
  %6830 = vmatmul.mubr.f32.gmra.mrb[0].mxu0 %v6763
  %v6831 = vpop.f32.mrb[0].mxu0
  %v6832 = vadd.f32 0.0, %v6831
  %v6833 = vpop.f32.mrb[0].mxu0
  %6834 = vdwg.mxu0
  %v6835 = vadd.f32 %v4298, %v6832
  %v6836 = vsel %vm287, %v6056, 0
  %6838 = vmatprep.subr.mxu0 0.0
  %6839 = vmatpush1.msra.mxu0 %v4509
  %6840 = vmatprep.subr.mxu0 0.0
  %6841 = vmatpush1.msra.mxu0 %v4510
  %6842 = vmatprep.subr.mxu0 0.0
  %6843 = vmatpush1.msra.mxu0 %v4511
  %6844 = vmatprep.subr.mxu0 0.0
  %6845 = vmatpush1.msra.mxu0 %v4512
  %6846 = vmatprep.subr.mxu0 0.0
  %6847 = vmatpush1.msra.mxu0 0.0
  %6848 = vmatprep.subr.mxu0 0.0
  %6849 = vmatpush1.msra.mxu0 0.0
  %6850 = vmatprep.subr.mxu0 0.0
  %6851 = vmatpush1.msra.mxu0 0.0
  %6852 = vmatprep.subr.mxu0 0.0
  %6853 = vmatpush1.msra.mxu0 0.0
  %6854 = vmatprep.subr.mxu0 0.0
  %6855 = vmatpush1.msra.mxu0 0.0
  %6856 = vmatprep.subr.mxu0 0.0
  %6857 = vmatpush1.msra.mxu0 0.0
  %6858 = vmatprep.subr.mxu0 0.0
  %6859 = vmatpush1.msra.mxu0 0.0
  %6860 = vmatprep.subr.mxu0 0.0
  %6861 = vmatpush1.msra.mxu0 0.0
  %6862 = vmatprep.subr.mxu0 0.0
  %6863 = vmatpush1.msra.mxu0 0.0
  %6864 = vmatprep.subr.mxu0 0.0
  %6865 = vmatpush1.msra.mxu0 0.0
  %6866 = vmatprep.subr.mxu0 0.0
  %6867 = vmatpush1.msra.mxu0 0.0
  %6868 = vmatprep.subr.mxu0 0.0
  %6869 = vmatpush1.msra.mxu0 0.0
  %6870 = vmatprep.subr.mxu0 0.0
  %6871 = vmatpush1.msra.mxu0 0.0
  %6872 = vmatprep.subr.mxu0 0.0
  %6873 = vmatpush1.msra.mxu0 0.0
  %6874 = vmatprep.subr.mxu0 0.0
  %6875 = vmatpush1.msra.mxu0 0.0
  %6876 = vmatprep.subr.mxu0 0.0
  %6877 = vmatpush1.msra.mxu0 0.0
  %6878 = vmatprep.subr.mxu0 0.0
  %6879 = vmatpush1.msra.mxu0 0.0
  %6880 = vmatprep.subr.mxu0 0.0
  %6881 = vmatpush1.msra.mxu0 0.0
  %6882 = vmatprep.subr.mxu0 0.0
  %6883 = vmatpush1.msra.mxu0 0.0
  %6884 = vmatprep.subr.mxu0 0.0
  %6885 = vmatpush1.msra.mxu0 0.0
  %6886 = vmatprep.subr.mxu0 0.0
  %6887 = vmatpush1.msra.mxu0 0.0
  %6888 = vmatprep.subr.mxu0 0.0
  %6889 = vmatpush1.msra.mxu0 0.0
  %6890 = vmatprep.subr.mxu0 0.0
  %6891 = vmatpush1.msra.mxu0 0.0
  %6892 = vmatprep.subr.mxu0 0.0
  %6893 = vmatpush1.msra.mxu0 0.0
  %6894 = vmatprep.subr.mxu0 0.0
  %6895 = vmatpush1.msra.mxu0 0.0
  %6896 = vmatprep.subr.mxu0 0.0
  %6897 = vmatpush1.msra.mxu0 0.0
  %6898 = vmatprep.subr.mxu0 0.0
  %6899 = vmatpush1.msra.mxu0 0.0
  %6900 = vmatprep.subr.mxu0 0.0
  %6901 = vmatpush1.msra.mxu0 0.0
  %6902 = vmatprep.mubr.f32.mxu0 0.0
  %6903 = vmatmul.mubr.f32.gmra.mrb[0].mxu0 %v6836
  %v6904 = vpop.f32.mrb[0].mxu0
  %v6905 = vadd.f32 %v5043, %v6904
  %v6906 = vpop.f32.mrb[0].mxu0
  %6907 = vdwg.mxu0
  %v6908 = vadd.f32 %v6835, %v6905
  %v6909 = vxor.u32 %v6908, 2147483648
  %v6910 = vmul.f32 %v6909, 1.442695
  %v6911 = vpow.pop %v6910
  %v6912 = vadd.f32 %v6911, 1.0
  %v6913 = vrcp.pop %v6912
  %v6914 = vmul.f32 1.0, %v6913
  %6916 = vrot.lane.b32.xlu0 %v6905, 64
  %v6917 = vpop.permute.xlu0 %6916
  %v6919 = vmul.f32 %v6914, %v6917
  %6921 = vrot.lane.b32.xlu0 %v6919, 64
  %v6922 = vpop.permute.xlu0 %6921
  %v6924 = vadd.f32 %v6835, %v6922
  %v6925 = vtanh.pop %v6924
  %v6926 = vsub.f32 1.0, %v6914
  %6928 = vrot.lane.b32.xlu0 %v6925, 96
  %v6929 = vpop.permute.xlu0 %6928
  %v6931 = vmul.f32 %v6926, %v6929
  %v6932 = vmul.f32 %v6914, %v6053
  %v6933 = vadd.f32 %v6931, %v6932
  %6935 = vrot.lane.b32.xlu0 %v6933, 96
  %v6936 = vpop.permute.xlu0 %6935
  %6938 = vrot.lane.b32.xlu0 %v6762, 32
  %v6939 = vpop.permute.xlu0 %6938
  %v6941 = vsel %vm287, %v6936, %v6939
  %v6943 = vsel %vm5155, %v6941, 0
  %6945 = vmatprep.subr.mxu0 0.0
  %6946 = vmatpush1.msra.mxu0 %v4517
  %6947 = vmatprep.subr.mxu0 0.0
  %6948 = vmatpush1.msra.mxu0 %v4518
  %6949 = vmatprep.subr.mxu0 0.0
  %6950 = vmatpush1.msra.mxu0 %v4519
  %6951 = vmatprep.subr.mxu0 0.0
  %6952 = vmatpush1.msra.mxu0 %v4520
  %6953 = vmatprep.subr.mxu0 0.0
  %6954 = vmatpush1.msra.mxu0 %v4521
  %6955 = vmatprep.subr.mxu0 0.0
  %6956 = vmatpush1.msra.mxu0 %v4522
  %6957 = vmatprep.subr.mxu0 0.0
  %6958 = vmatpush1.msra.mxu0 %v4523
  %6959 = vmatprep.subr.mxu0 0.0
  %6960 = vmatpush1.msra.mxu0 %v4524
  %6961 = vmatprep.subr.mxu0 0.0
  %6962 = vmatpush1.msra.mxu0 0.0
  %6963 = vmatprep.subr.mxu0 0.0
  %6964 = vmatpush1.msra.mxu0 0.0
  %6965 = vmatprep.subr.mxu0 0.0
  %6966 = vmatpush1.msra.mxu0 0.0
  %6967 = vmatprep.subr.mxu0 0.0
  %6968 = vmatpush1.msra.mxu0 0.0
  %6969 = vmatprep.subr.mxu0 0.0
  %6970 = vmatpush1.msra.mxu0 0.0
  %6971 = vmatprep.subr.mxu0 0.0
  %6972 = vmatpush1.msra.mxu0 0.0
  %6973 = vmatprep.subr.mxu0 0.0
  %6974 = vmatpush1.msra.mxu0 0.0
  %6975 = vmatprep.subr.mxu0 0.0
  %6976 = vmatpush1.msra.mxu0 0.0
  %6977 = vmatprep.subr.mxu0 0.0
  %6978 = vmatpush1.msra.mxu0 0.0
  %6979 = vmatprep.subr.mxu0 0.0
  %6980 = vmatpush1.msra.mxu0 0.0
  %6981 = vmatprep.subr.mxu0 0.0
  %6982 = vmatpush1.msra.mxu0 0.0
  %6983 = vmatprep.subr.mxu0 0.0
  %6984 = vmatpush1.msra.mxu0 0.0
  %6985 = vmatprep.subr.mxu0 0.0
  %6986 = vmatpush1.msra.mxu0 0.0
  %6987 = vmatprep.subr.mxu0 0.0
  %6988 = vmatpush1.msra.mxu0 0.0
  %6989 = vmatprep.subr.mxu0 0.0
  %6990 = vmatpush1.msra.mxu0 0.0
  %6991 = vmatprep.subr.mxu0 0.0
  %6992 = vmatpush1.msra.mxu0 0.0
  %6993 = vmatprep.subr.mxu0 0.0
  %6994 = vmatpush1.msra.mxu0 0.0
  %6995 = vmatprep.subr.mxu0 0.0
  %6996 = vmatpush1.msra.mxu0 0.0
  %6997 = vmatprep.subr.mxu0 0.0
  %6998 = vmatpush1.msra.mxu0 0.0
  %6999 = vmatprep.subr.mxu0 0.0
  %7000 = vmatpush1.msra.mxu0 0.0
  %7001 = vmatprep.subr.mxu0 0.0
  %7002 = vmatpush1.msra.mxu0 0.0
  %7003 = vmatprep.subr.mxu0 0.0
  %7004 = vmatpush1.msra.mxu0 0.0
  %7005 = vmatprep.subr.mxu0 0.0
  %7006 = vmatpush1.msra.mxu0 0.0
  %7007 = vmatprep.subr.mxu0 0.0
  %7008 = vmatpush1.msra.mxu0 0.0
  %7009 = vmatprep.mubr.f32.mxu0 0.0
  %7010 = vmatmul.mubr.f32.gmra.mrb[0].mxu0 %v6943
  %v7011 = vpop.f32.mrb[0].mxu0
  %v7012 = vadd.f32 %v4380, %v7011
  %v7013 = vpop.f32.mrb[0].mxu0
  %7014 = vdwg.mxu0
  %v7015 = vadd.f32 %v7012, %v5233
  %v7016 = vmul.f32 %v6933, %v5242
  %7018 = vrot.lane.b32.xlu0 %v7016, 96
  %v7019 = vpop.permute.xlu0 %7018
  %v7021 = vsel %vm287, %v7019, 0.0
  %7022 = vadd.xlane.f32.xlu0 %v7021
  %v7023 = vpop.xlane.xlu0 %7022
  %v7024 = vmul.f32 %v6642, %v5256
  %v7025 = vmul.f32 %v6649, %v5256
  %v7026 = vmul.f32 %v6656, %v5256
  %v7027 = vmul.f32 %v6663, %v5256
  %v7028 = vmul.f32 %v6670, %v5256
  %v7029 = vmul.f32 %v6677, %v5256
  %v7030 = vmul.f32 %v6684, %v5256
  %v7031 = vmul.f32 %v6691, %v5256
  %v7040 = vrot.slane %v7025, 7
  %v7041 = vsel %vm592, %v7040, %v7024
  %v7042 = vrot.slane %v7026, 6
  %v7043 = vsel %vm595, %v7042, %v7041
  %v7044 = vrot.slane %v7027, 5
  %v7045 = vsel %vm598, %v7044, %v7043
  %v7046 = vrot.slane %v7028, 4
  %v7047 = vsel %vm601, %v7046, %v7045
  %v7048 = vrot.slane %v7029, 3
  %v7049 = vsel %vm604, %v7048, %v7047
  %v7050 = vrot.slane %v7030, 2
  %v7051 = vsel %vm607, %v7050, %v7049
  %v7052 = vrot.slane %v7031, 1
  %v7053 = vsel %vm610, %v7052, %v7051
  %v7055 = vsel %vm287, %v7053, 0.0
  %7056 = vadd.xlane.f32.xlu0 %v7055
  %v7057 = vpop.xlane.xlu0 %7056
  %v7058 = vadd.f32 %v7023, %v7057
  %v7059 = vadd.f32 %v7058, %v4401
  %v7060 = vadd.f32 %v7059, %v5298
  %v7061 = vxor.u32 %v7060, 2147483648
  %v7062 = vmul.f32 %v7061, 1.442695
  %v7063 = vpow.pop %v7062
  %v7064 = vadd.f32 %v7063, 1.0
  %v7065 = vrcp.pop %v7064
  %v7066 = vmul.f32 1.0, %v7065
  %v7067 = vmax.f32 %v7066, 0.001
  %v7068 = vmin.f32 %v7067, 0.999
  %7070 = vset.pattern.permute.xlu0 0
  %7071 = vperm.xlu0 %7070, %v7068
  %v7072 = vpop.permute.xlu0 %7071
  %v7074 = vmul.f32 %v7072, %v7015
  %v7075 = vsub.f32 1.0, %v7068
  %7077 = vset.pattern.permute.xlu0 0
  %7078 = vperm.xlu0 %7077, %v7075
  %v7079 = vpop.permute.xlu0 %7078
  %v7089 = vsel %vm592, %v6711, %v6705
  %v7090 = vsel %vm595, %v6717, %v7089
  %v7091 = vsel %vm598, %v6723, %v7090
  %v7092 = vsel %vm601, %v6729, %v7091
  %v7093 = vsel %vm604, %v6735, %v7092
  %v7094 = vsel %vm607, %v6741, %v7093
  %v7095 = vsel %vm610, %v6747, %v7094
  %v7097 = vmul.f32 %v7079, %v7095
  %v7098 = vadd.f32 %v7074, %v7097
  %v7100 = vcombine.high %v7098, %v7098
  %v7102 = vunpack.c.l.s4 1966171168
  %v7103 = vunpack.c.0.s8 %v7102
  %v7104 = vlaneseq
  %v7105 = vshrl.u32 %v7104, 7
  %v7106 = vsub.s32 %v7103, %v7105
  %v7107 = vrot.slane %v7098, %v7106
  %v7109 = vunpack.c.l.s4 1966171168
  %v7110 = vunpack.c.0.s8 %v7109
  %v7111 = vlaneseq
  %v7112 = vshrl.u32 %v7111, 7
  %v7113 = vsub.s32 %v7110, %v7112
  %v7114 = vrot.slane %v7100, %v7113
  %v7115 = vcombine.high %v7107, %v7107
  %v7116 = vcombine.high %v7114, %v7114
  %v7118 = vunpack.c.l.s4 1966171168
  %v7119 = vunpack.c.0.s8 %v7118
  %v7120 = vlaneseq
  %v7121 = vshrl.u32 %v7120, 7
  %v7122 = vsub.s32 %v7119, %v7121
  %v7123 = vrot.slane %v7107, %v7122
  %v7125 = vunpack.c.l.s4 1966171168
  %v7126 = vunpack.c.0.s8 %v7125
  %v7127 = vlaneseq
  %v7128 = vshrl.u32 %v7127, 7
  %v7129 = vsub.s32 %v7126, %v7128
  %v7130 = vrot.slane %v7114, %v7129
  %v7132 = vunpack.c.l.s4 1966171168
  %v7133 = vunpack.c.0.s8 %v7132
  %v7134 = vlaneseq
  %v7135 = vshrl.u32 %v7134, 7
  %v7136 = vsub.s32 %v7133, %v7135
  %v7137 = vrot.slane %v7115, %v7136
  %v7139 = vunpack.c.l.s4 1966171168
  %v7140 = vunpack.c.0.s8 %v7139
  %v7141 = vlaneseq
  %v7142 = vshrl.u32 %v7141, 7
  %v7143 = vsub.s32 %v7140, %v7142
  %v7144 = vrot.slane %v7116, %v7143
  %v7145 = vcombine.high %v7123, %v7123
  %v7146 = vcombine.high %v7130, %v7130
  %v7147 = vcombine.high %v7137, %v7137
  %v7148 = vcombine.high %v7144, %v7144
  %7157 = vst [vmem:[%s57 + $0x2] sm:$0x1] %v7123
  %7158 = vst [vmem:[%s57 + $0x6] sm:$0x1] %v7137
  %7159 = vst [vmem:[%s57 + $0xa] sm:$0x1] %v7145
  %7160 = vst [vmem:[%s57 + $0xe] sm:$0x1] %v7147
  %7161 = vst [vmem:[%s57 + $0x12] sm:$0x1] %v7130
  %7162 = vst [vmem:[%s57 + $0x16] sm:$0x1] %v7144
  %7163 = vst [vmem:[%s57 + $0x1a] sm:$0x1] %v7146
  %7164 = vst [vmem:[%s57 + $0x1e] sm:$0x1] %v7148
  %7165 = vst [vmem:[%s57 + $0x3] sm:$0x1] 0.0
  %7166 = vst [vmem:[%s57 + $0x7] sm:$0x1] 0.0
  %7167 = vst [vmem:[%s57 + $0xb] sm:$0x1] 0.0
  %7168 = vst [vmem:[%s57 + $0xf] sm:$0x1] 0.0
  %7169 = vst [vmem:[%s57 + $0x13] sm:$0x1] 0.0
  %7170 = vst [vmem:[%s57 + $0x17] sm:$0x1] 0.0
  %7171 = vst [vmem:[%s57 + $0x1b] sm:$0x1] 0.0
  %7172 = vst [vmem:[%s57 + $0x1f] sm:$0x1] 0.0
  %7173 = vst.msk [vmem:[%s59] sm:$0xff] %vm4762, %v6570
  %7174 = vst.msk [vmem:[%s61] sm:$0xff] %vm4762, %v6571
  // Predicated region
  $region114: #{pgn_forward.1} parent=0 // pred_check
    _
  $region115: #{pgn_forward.1} parent=0 // pred_check_branch
    %7176 = sbr.rel (0) target = $region117
  $region116: #{pgn_forward.1} parent=0 // pred_region
    _
  $region117: #{pgn_forward.1} parent=0 // pred_fallthru
    _
  // Predicated region
  $region118: #{pgn_forward.1} parent=0 // pred_check
    _
  $region119: #{pgn_forward.1} parent=0 // pred_check_branch
    %7178 = sbr.rel (0) target = $region121
  $region120: #{pgn_forward.1} parent=0 // pred_region
    _
  $region121: #{pgn_forward.1} parent=0 // pred_fallthru
    _
  // Predicated region
  $region122: #{pgn_forward.1} parent=0 // pred_check
    _
  $region123: #{pgn_forward.1} parent=0 // pred_check_branch
    %7180 = sbr.rel (0) target = $region125
  $region124: #{pgn_forward.1} parent=0 // pred_region
    _
  $region125: #{pgn_forward.1} parent=0 // pred_fallthru
    _
  // Predicated region
  $region126: #{pgn_forward.1} parent=0 // pred_check
    _
  $region127: #{pgn_forward.1} parent=0 // pred_check_branch
    %7182 = sbr.rel (0) target = $region129
  $region128: #{pgn_forward.1} parent=0 // pred_region
    _
  $region129: #{pgn_forward.1} parent=0 // pred_fallthru
    _
  // Predicated region
  $region130: #{pgn_forward.1} parent=0 // pred_check
    _
  $region131: #{pgn_forward.1} parent=0 // pred_check_branch
    %7184 = sbr.rel (0) target = $region133
  $region132: #{pgn_forward.1} parent=0 // pred_region
    _
  $region133: #{pgn_forward.1} parent=0 // pred_fallthru
    _
  // Predicated region
  $region134: #{pgn_forward.1} parent=0 // pred_check
    _
  $region135: #{pgn_forward.1} parent=0 // pred_check_branch
    %7186 = sbr.rel (0) target = $region137
  $region136: #{pgn_forward.1} parent=0 // pred_region
    _
  $region137: #{pgn_forward.1} parent=0 // pred_fallthru
    _

</llo_original>
